<compile_context>
chip_gen: v5e
topology: v5e:2x2
jax: 0.10.0
libtpu: 0.0.40
codegen_flags: <defaults>
</compile_context>

<pallas_src>
import math
import functools
from types import SimpleNamespace

import jax
import jax.numpy as jnp
from jax.experimental import pallas as pl
from jax.experimental.pallas import tpu as pltpu

DEG2RAD = math.pi / 180.0
LANES = 128

# polar_to_pix() is invoked with its *default* constants in the reference
# (the validity mask does not depend on args) -- reproduce them verbatim.
P2P_RMAX_SQ = 10.0 * 10.0
P2P_RMIN_SQ = 0.1 * 0.1
TAN_HALF_BMAX = math.tan(130.0 * DEG2RAD / 2.0)


def _pix_to_polar(x, y, *, w, h, bmax_rad, rmax, rmin):
    # CtoFCriterion.pix_to_polar
    bearing = (w - x) * (bmax_rad / w) - bmax_rad / 2.0
    rng = (rmax - rmin) / h * (h - y) + rmin
    return bearing, rng


def _fused_kernel(rt_ref,
                  x1_ref, y1_ref,
                  x2c_ref, y2c_ref, x2f_ref, y2f_ref,
                  xlc_ref, ylc_ref, xlf_ref, ylf_ref,
                  acc_ref, *,
                  w, h, bmax_rad, rmax, rmin,
                  cphi, sphi, n_valid, sub, steps_per_core):
    core = pl.program_id(0)
    step = pl.program_id(1)

    @pl.when(step == 0)
    def _init():
        acc_ref[...] = jnp.zeros_like(acc_ref)

    # Padding weight: 1.0 for real points, 0.0 for tail padding of the point axis.
    base = (core * steps_per_core + step) * (sub * LANES)
    sub_idx = jax.lax.broadcasted_iota(jnp.int32, (sub, LANES), 0)
    lane_idx = jax.lax.broadcasted_iota(jnp.int32, (sub, LANES), 1)
    wt = jnp.where(base + sub_idx * LANES + lane_idx < n_valid, 1.0, 0.0)
    wt = wt.astype(jnp.float32)

    p2p = functools.partial(_pix_to_polar, w=w, h=h, bmax_rad=bmax_rad,
                            rmax=rmax, rmin=rmin)

    B = x1_ref.shape[0]
    S = len(cphi)

    partials = None
    for b in range(B):
        # ---- query-point polar + arc pre-factors (shared by both epipolar terms)
        b1, d1 = p2p(x1_ref[b], y1_ref[b])
        cb1 = jnp.cos(b1)
        sb1 = jnp.sin(b1)
        cxy = d1 * cb1            # d1 * cos(b1)
        sxy = d1 * sb1            # d1 * sin(b1)
        nz = -d1                  # multiplies sin(phi)

        o = b * 12                # per-batch [R | t] scalars from SMEM
        r00 = rt_ref[o + 0]; r01 = rt_ref[o + 1]; r02 = rt_ref[o + 2]
        r10 = rt_ref[o + 3]; r11 = rt_ref[o + 4]; r12 = rt_ref[o + 5]
        r20 = rt_ref[o + 6]; r21 = rt_ref[o + 7]; r22 = rt_ref[o + 8]
        tx = rt_ref[o + 9]; ty = rt_ref[o + 10]; tz = rt_ref[o + 11]

        ax = r00 * cxy + r01 * sxy; bx = r02 * nz
        ay = r10 * cxy + r11 * sxy; by = r12 * nz
        az = r20 * cxy + r21 * sxy; bz = r22 * nz

        # ---- predicted-match polar (coarse / fine epipolar targets)
        b2c, d2c = p2p(x2c_ref[b], y2c_ref[b])
        cb2c = jnp.cos(b2c); sb2c = jnp.sin(b2c); d2c_sq = d2c * d2c
        b2f, d2f = p2p(x2f_ref[b], y2f_ref[b])
        cb2f = jnp.cos(b2f); sb2f = jnp.sin(b2f); d2f_sq = d2f * d2f

        min_c = min_f = valid = None
        for s in range(S):                      # unrolled: cphi/sphi are constants
            cps = cphi[s]; sps = sphi[s]
            qx = cps * ax + sps * bx + tx
            qy = cps * ay + sps * by + ty
            qz = cps * az + sps * bz + tz
            rxy_sq = qx * qx + qy * qy
            sumsq = rxy_sq + qz * qz
            # range_t / sqrt(qx^2+qy^2); eps guards the degenerate (always masked)
            # qx = qy = 0 case the reference handles via atan2.
            ratio = jnp.sqrt(sumsq * pl.reciprocal(rxy_sq + 1e-20, approx=True))

            # mask_invalid_points with polar_to_pix defaults, derived exactly:
            #   u in [0,512) <=> qx>0 and -qx*tan(bmax/2) < qy <= qx*tan(bmax/2)
            #   v in [0,512) <=> rmin^2 < qx^2+qy^2+qz^2 <= rmax^2
            thr = qx * TAN_HALF_BMAX
            m = ((qx > 0.0) & (qy <= thr) & (qy > -thr)
                 & (sumsq > P2P_RMIN_SQ) & (sumsq <= P2P_RMAX_SQ))

            dist_c = sumsq + d2c_sq - (2.0 * d2c) * (ratio * (cb2c * qx + sb2c * qy))
            dist_f = sumsq + d2f_sq - (2.0 * d2f) * (ratio * (cb2f * qx + sb2f * qy))
            if s == 0:
                min_c, min_f, valid = dist_c, dist_f, m
            else:
                min_c = jnp.minimum(min_c, dist_c)
                min_f = jnp.minimum(min_f, dist_f)
                valid = valid & m

        maskw = jnp.where(valid, wt, 0.0)       # "all samples valid" * padding wt

        # ---- cycle-consistency distances (double deg2rad kept verbatim: the
        #      reference applies deg2rad to bearings that are already radians).
        blc, dlc = p2p(xlc_ref[b], ylc_ref[b])
        euc_c = d1 * d1 + dlc * dlc - 2.0 * d1 * dlc * jnp.cos(DEG2RAD * (blc - b1))
        blf, dlf = p2p(xlf_ref[b], ylf_ref[b])
        euc_f = d1 * d1 + dlf * dlf - 2.0 * d1 * dlf * jnp.cos(DEG2RAD * (blf - b1))

        contrib = (min_c * maskw, min_f * maskw, maskw, euc_c * wt, euc_f * wt)
        if partials is None:
            partials = list(contrib)
        else:
            partials = [p + q for p, q in zip(partials, contrib)]

    for q in range(5):
        acc_ref[q] += partials[q]


def _pack_planes(coord, n_pad):
    """[B, N, 2] -> x/y planes of shape [B, n_pad//128, 128] float32 (zero padded)."""
    B, N, _ = coord.shape
    c = coord.astype(jnp.float32)
    x = c[..., 0]
    y = c[..., 1]
    if n_pad != N:
        x = jnp.pad(x, ((0, 0), (0, n_pad - N)))
        y = jnp.pad(y, ((0, 0), (0, n_pad - N)))
    return x.reshape(B, n_pad // LANES, LANES), y.reshape(B, n_pad // LANES, LANES)


def cto_f_criterion_forward(args, coord1, data, T1, T2, pose, im_size, im1, im2,
                            *, sub=8, ncores=2):
    h, w = im1.shape[2], im1.shape[3]      # both coarse & fine branches read im1
    max_dist = float(args.range_max) ** 2
    B, N, _ = coord1.shape
    S = int(args.num_samples)

    # get_rel_pose (glue): relPose = T2 @ inv(T1); pack row-major R + t for SMEM.
    rel = jnp.matmul(T2, jnp.linalg.inv(T1)).astype(jnp.float32)
    rt = jnp.concatenate([rel[:, :3, :3].reshape(B, 9), rel[:, :3, 3]], axis=1)
    rt = rt.reshape(B * 12)

    # sampled_phi is fully static -> bake cos/sin as trace-time constants.
    vf = float(args.vertical_fov)
    phi = [(-vf / 2.0 + k * (vf / (S - 1))) if S > 1 else (-vf / 2.0)
           for k in range(S)]
    cphi = tuple(math.cos(DEG2RAD * p) for p in phi)
    sphi = tuple(math.sin(DEG2RAD * p) for p in phi)

    # Point tiling: blocks of (B, sub, 128) points; pad the point axis so the
    # grid splits evenly over `ncores` parallel core-steps (v7x megacore).
    tile_pts = sub * LANES
    n_tiles = -(-N // tile_pts)
    n_tiles = -(-n_tiles // ncores) * ncores
    steps_per_core = n_tiles // ncores
    n_pad = n_tiles * tile_pts

    planes = []
    for c_arr in (coord1, data['coord2_ec'], data['coord2_ef'],
                  data['coord1_lc'], data['coord1_lf']):
        planes.extend(_pack_planes(c_arr, n_pad))

    coord_spec = pl.BlockSpec((B, sub, LANES),
                              lambda c, i: (0, c * steps_per_core + i, 0))
    rt_spec = pl.BlockSpec(memory_space=pltpu.MemorySpace.SMEM)
    acc_spec = pl.BlockSpec((5, sub, LANES), lambda c, i: (c, 0, 0))

    kernel = functools.partial(
        _fused_kernel,
        w=float(w), h=float(h),
        bmax_rad=float(args.horizontal_fov) * DEG2RAD,
        rmax=float(args.range_max), rmin=float(args.range_start),
        cphi=cphi, sphi=sphi,
        n_valid=N, sub=sub, steps_per_core=steps_per_core)

    acc = pl.pallas_call(
        kernel,
        grid_spec=pltpu.PrefetchScalarGridSpec(
            num_scalar_prefetch=0,
            grid=(ncores, steps_per_core),
            in_specs=[rt_spec] + [coord_spec] * 10,
            out_specs=acc_spec),
        out_shape=jax.ShapeDtypeStruct((ncores * 5, sub, LANES), jnp.float32),
        compiler_params=pltpu.CompilerParams(
            dimension_semantics=("parallel", "arbitrary")),
    )(rt, *planes)

    sums = jnp.sum(acc.reshape(ncores, 5, sub * LANES), axis=(0, 2))   # [5]
    n_pts = jnp.float32(B * N)

    # Masked mean over valid points (NaN if no point valid, matching torch).
    eloss_c = sums[0] / sums[2] / max_dist
    eloss_f = sums[1] / sums[2] / max_dist
    closs_c = sums[3] / n_pts / max_dist
    closs_f = sums[4] / n_pts / max_dist

    w_cc = args.w_cycle_coarse
    w_cf = args.w_cycle_coarse          # reference sets w_cf from w_cycle_coarse too
    loss = (args.w_epipolar_coarse * eloss_c + args.w_epipolar_fine * eloss_f
            + w_cc * closs_c + w_cf * closs_f)
    std_loss = jnp.float32(1.0)
    return loss, eloss_c, eloss_f, closs_c, closs_f, std_loss


if __name__ == "__main__":
    args = SimpleNamespace(
        w_epipolar_coarse=1.0, w_epipolar_fine=1.0, w_cycle_coarse=0.1,
        w_std=0.0, std=False,
        range_max=10.0, range_start=0.1, range_end=10.0,
        horizontal_fov=130.0, vertical_fov=20.0, num_samples=16,
        th_epipolar=1.0, th_cycle=0.25)

    B, N = 2, 1792          # not a multiple of the 1024-point tile -> exercises padding
    H_IM, W_IM = 64, 64

    key = jax.random.PRNGKey(0)
    k1, k2, k3, k4, k5 = jax.random.split(key, 5)

    def rand_coords(k):
        xy = jax.random.uniform(k, (B, N, 2), dtype=jnp.float32)
        return xy * jnp.array([W_IM - 1.0, H_IM - 1.0], dtype=jnp.float32)

    coord1 = rand_coords(k1)
    data = {
        'coord2_ec': rand_coords(k2),
        'coord2_ef': rand_coords(k3),
        'coord1_lc': rand_coords(k4),
        'coord1_lf': rand_coords(k5),
        'coarse_h': H_IM, 'coarse_w': W_IM,
        'fine_h': H_IM, 'fine_w': W_IM,
    }

    def make_pose(angle, tx, ty, tz):
        c, s = math.cos(angle), math.sin(angle)
        return jnp.array([[c, -s, 0.0, tx],
                          [s,  c, 0.0, ty],
                          [0.0, 0.0, 1.0, tz],
                          [0.0, 0.0, 0.0, 1.0]], dtype=jnp.float32)

    T1 = jnp.stack([make_pose(0.00, 0.0, 0.0, 0.00),
                    make_pose(0.05, 0.1, 0.0, 0.00)])
    T2 = jnp.stack([make_pose(0.10, 0.2, 0.05, 0.00),
                    make_pose(0.15, 0.3, 0.05, 0.02)])

    im1 = jnp.zeros((B, 1, H_IM, W_IM), dtype=jnp.float32)
    im2 = jnp.zeros((B, 1, H_IM, W_IM), dtype=jnp.float32)

    outs = cto_f_criterion_forward(args, coord1, data, T1, T2,
                                   pose=None, im_size=(H_IM, W_IM),
                                   im1=im1, im2=im2)
    outs = jax.block_until_ready(outs)
    vals = [float(v) for v in outs]
    if not all(math.isfinite(v) for v in vals):
        raise RuntimeError(f"non-finite outputs: {vals}")
    print("KERNEL_OK")
</pallas_src>

<mosaic_0001>
module attributes {stable_mosaic.version = 11 : i64} {
  func.func @_fused_kernel(%arg0: i32, %arg1: i32, %arg2: memref<24xf32, #tpu.memory_space<smem>>, %arg3: memref<2x8x128xf32, #tpu.memory_space<vmem>>, %arg4: memref<2x8x128xf32, #tpu.memory_space<vmem>>, %arg5: memref<2x8x128xf32, #tpu.memory_space<vmem>>, %arg6: memref<2x8x128xf32, #tpu.memory_space<vmem>>, %arg7: memref<2x8x128xf32, #tpu.memory_space<vmem>>, %arg8: memref<2x8x128xf32, #tpu.memory_space<vmem>>, %arg9: memref<2x8x128xf32, #tpu.memory_space<vmem>>, %arg10: memref<2x8x128xf32, #tpu.memory_space<vmem>>, %arg11: memref<2x8x128xf32, #tpu.memory_space<vmem>>, %arg12: memref<2x8x128xf32, #tpu.memory_space<vmem>>, %arg13: memref<5x8x128xf32, #tpu.memory_space<vmem>>) attributes {dimension_semantics = [#tpu.dimension_semantics<parallel>, #tpu.dimension_semantics<arbitrary>], iteration_bounds = array<i64: 2, 1>, scalar_prefetch = 0 : i64, scratch_operands = 0 : i64, tpu.core_type = #tpu.core_type<tc>, window_params = [{transform_indices = @transform_0, window_bounds = array<i64: 24>}, {transform_indices = @transform_1, window_bounds = array<i64: 2, 8, 128>}, {transform_indices = @transform_2, window_bounds = array<i64: 2, 8, 128>}, {transform_indices = @transform_3, window_bounds = array<i64: 2, 8, 128>}, {transform_indices = @transform_4, window_bounds = array<i64: 2, 8, 128>}, {transform_indices = @transform_5, window_bounds = array<i64: 2, 8, 128>}, {transform_indices = @transform_6, window_bounds = array<i64: 2, 8, 128>}, {transform_indices = @transform_7, window_bounds = array<i64: 2, 8, 128>}, {transform_indices = @transform_8, window_bounds = array<i64: 2, 8, 128>}, {transform_indices = @transform_9, window_bounds = array<i64: 2, 8, 128>}, {transform_indices = @transform_10, window_bounds = array<i64: 2, 8, 128>}, {transform_indices = @transform_11, window_bounds = array<i64: 5, 8, 128>}]} {
    %c0_i32 = arith.constant 0 : i32
    %0 = arith.cmpi eq, %arg1, %c0_i32 : i32
    %1 = arith.extui %0 : i1 to i32
    %c0_i32_0 = arith.constant 0 : i32
    %2 = arith.cmpi ne, %1, %c0_i32_0 : i32
    scf.if %2 {
      %cst_612 = arith.constant 0.000000e+00 : f32
      %2533 = vector.broadcast %cst_612 : f32 to vector<5x8x128xf32>
      %c0_613 = arith.constant 0 : index
      %c0_614 = arith.constant 0 : index
      %c0_615 = arith.constant 0 : index
      %2534 = vector.load %arg13[%c0_613, %c0_614, %c0_615] : memref<5x8x128xf32, #tpu.memory_space<vmem>>, vector<5x8x128xf32>
      tpu.vector_store %arg13[%c0_613, %c0_614, %c0_615], %2533 {strides = array<i32>} : memref<5x8x128xf32, #tpu.memory_space<vmem>>, vector<5x8x128xf32>,
    } else {
    }
    %c1_i32 = arith.constant 1 : i32
    %3 = arith.muli %arg0, %c1_i32 : i32
    %4 = arith.addi %3, %arg1 : i32
    %c1024_i32 = arith.constant 1024 : i32
    %5 = arith.muli %4, %c1024_i32 : i32
    %6 = tpu.iota {dimensions = array<i32: 0>} : vector<8x128xi32>
    %7 = tpu.iota {dimensions = array<i32: 1>} : vector<8x128xi32>
    %c128_i32 = arith.constant 128 : i32
    %8 = vector.broadcast %c128_i32 : i32 to vector<8x128xi32>
    %9 = arith.muli %6, %8 : vector<8x128xi32>
    %10 = vector.broadcast %5 : i32 to vector<8x128xi32>
    %11 = arith.addi %10, %9 : vector<8x128xi32>
    %12 = arith.addi %11, %7 : vector<8x128xi32>
    %c1792_i32 = arith.constant 1792 : i32
    %13 = vector.broadcast %c1792_i32 : i32 to vector<8x128xi32>
    %14 = arith.cmpi slt, %12, %13 : vector<8x128xi32>
    %cst = arith.constant 1.000000e+00 : f32
    %cst_1 = arith.constant 0.000000e+00 : f32
    %15 = vector.broadcast %cst : f32 to vector<8x128xf32>
    %16 = vector.broadcast %cst_1 : f32 to vector<8x128xf32>
    %17 = arith.select %14, %15, %16 : vector<8x128xi1>, vector<8x128xf32>
    %c0 = arith.constant 0 : index
    %c0_2 = arith.constant 0 : index
    %c0_3 = arith.constant 0 : index
    %18 = vector.load %arg3[%c0, %c0_2, %c0_3] : memref<2x8x128xf32, #tpu.memory_space<vmem>>, vector<1x8x128xf32>
    %19 = vector.shape_cast %18 : vector<1x8x128xf32> to vector<8x128xf32>
    %c0_4 = arith.constant 0 : index
    %c0_5 = arith.constant 0 : index
    %c0_6 = arith.constant 0 : index
    %20 = vector.load %arg4[%c0_4, %c0_5, %c0_6] : memref<2x8x128xf32, #tpu.memory_space<vmem>>, vector<1x8x128xf32>
    %21 = vector.shape_cast %20 : vector<1x8x128xf32> to vector<8x128xf32>
    %cst_7 = arith.constant 6.400000e+01 : f32
    %22 = vector.broadcast %cst_7 : f32 to vector<8x128xf32>
    %23 = arith.subf %22, %19 : vector<8x128xf32>
    %cst_8 = arith.constant 3.545200e-02 : f32
    %24 = vector.broadcast %cst_8 : f32 to vector<8x128xf32>
    %25 = arith.mulf %23, %24 : vector<8x128xf32>
    %cst_9 = arith.constant 1.13446403 : f32
    %26 = vector.broadcast %cst_9 : f32 to vector<8x128xf32>
    %27 = arith.subf %25, %26 : vector<8x128xf32>
    %cst_10 = arith.constant 6.400000e+01 : f32
    %28 = vector.broadcast %cst_10 : f32 to vector<8x128xf32>
    %29 = arith.subf %28, %21 : vector<8x128xf32>
    %cst_11 = arith.constant 0.154687494 : f32
    %30 = vector.broadcast %cst_11 : f32 to vector<8x128xf32>
    %31 = arith.mulf %30, %29 : vector<8x128xf32>
    %cst_12 = arith.constant 1.000000e-01 : f32
    %32 = vector.broadcast %cst_12 : f32 to vector<8x128xf32>
    %33 = arith.addf %31, %32 : vector<8x128xf32>
    %34 = math.cos %27 : vector<8x128xf32>
    %35 = math.sin %27 : vector<8x128xf32>
    %36 = arith.mulf %33, %34 : vector<8x128xf32>
    %37 = arith.mulf %33, %35 : vector<8x128xf32>
    %cst_13 = arith.constant 0.000000e+00 : f32
    %38 = vector.broadcast %cst_13 : f32 to vector<8x128xf32>
    %39 = arith.subf %38, %33 : vector<8x128xf32>
    %c0_14 = arith.constant 0 : index
    %40 = memref.load %arg2[%c0_14] : memref<24xf32, #tpu.memory_space<smem>>
    %c1 = arith.constant 1 : index
    %41 = memref.load %arg2[%c1] : memref<24xf32, #tpu.memory_space<smem>>
    %c2 = arith.constant 2 : index
    %42 = memref.load %arg2[%c2] : memref<24xf32, #tpu.memory_space<smem>>
    %c3 = arith.constant 3 : index
    %43 = memref.load %arg2[%c3] : memref<24xf32, #tpu.memory_space<smem>>
    %c4 = arith.constant 4 : index
    %44 = memref.load %arg2[%c4] : memref<24xf32, #tpu.memory_space<smem>>
    %c5 = arith.constant 5 : index
    %45 = memref.load %arg2[%c5] : memref<24xf32, #tpu.memory_space<smem>>
    %c6 = arith.constant 6 : index
    %46 = memref.load %arg2[%c6] : memref<24xf32, #tpu.memory_space<smem>>
    %c7 = arith.constant 7 : index
    %47 = memref.load %arg2[%c7] : memref<24xf32, #tpu.memory_space<smem>>
    %c8 = arith.constant 8 : index
    %48 = memref.load %arg2[%c8] : memref<24xf32, #tpu.memory_space<smem>>
    %c9 = arith.constant 9 : index
    %49 = memref.load %arg2[%c9] : memref<24xf32, #tpu.memory_space<smem>>
    %c10 = arith.constant 10 : index
    %50 = memref.load %arg2[%c10] : memref<24xf32, #tpu.memory_space<smem>>
    %c11 = arith.constant 11 : index
    %51 = memref.load %arg2[%c11] : memref<24xf32, #tpu.memory_space<smem>>
    %52 = vector.broadcast %40 : f32 to vector<8x128xf32>
    %53 = arith.mulf %52, %36 : vector<8x128xf32>
    %54 = vector.broadcast %41 : f32 to vector<8x128xf32>
    %55 = arith.mulf %54, %37 : vector<8x128xf32>
    %56 = arith.addf %53, %55 : vector<8x128xf32>
    %57 = vector.broadcast %42 : f32 to vector<8x128xf32>
    %58 = arith.mulf %57, %39 : vector<8x128xf32>
    %59 = vector.broadcast %43 : f32 to vector<8x128xf32>
    %60 = arith.mulf %59, %36 : vector<8x128xf32>
    %61 = vector.broadcast %44 : f32 to vector<8x128xf32>
    %62 = arith.mulf %61, %37 : vector<8x128xf32>
    %63 = arith.addf %60, %62 : vector<8x128xf32>
    %64 = vector.broadcast %45 : f32 to vector<8x128xf32>
    %65 = arith.mulf %64, %39 : vector<8x128xf32>
    %66 = vector.broadcast %46 : f32 to vector<8x128xf32>
    %67 = arith.mulf %66, %36 : vector<8x128xf32>
    %68 = vector.broadcast %47 : f32 to vector<8x128xf32>
    %69 = arith.mulf %68, %37 : vector<8x128xf32>
    %70 = arith.addf %67, %69 : vector<8x128xf32>
    %71 = vector.broadcast %48 : f32 to vector<8x128xf32>
    %72 = arith.mulf %71, %39 : vector<8x128xf32>
    %c0_15 = arith.constant 0 : index
    %c0_16 = arith.constant 0 : index
    %c0_17 = arith.constant 0 : index
    %73 = vector.load %arg5[%c0_15, %c0_16, %c0_17] : memref<2x8x128xf32, #tpu.memory_space<vmem>>, vector<1x8x128xf32>
    %74 = vector.shape_cast %73 : vector<1x8x128xf32> to vector<8x128xf32>
    %c0_18 = arith.constant 0 : index
    %c0_19 = arith.constant 0 : index
    %c0_20 = arith.constant 0 : index
    %75 = vector.load %arg6[%c0_18, %c0_19, %c0_20] : memref<2x8x128xf32, #tpu.memory_space<vmem>>, vector<1x8x128xf32>
    %76 = vector.shape_cast %75 : vector<1x8x128xf32> to vector<8x128xf32>
    %cst_21 = arith.constant 6.400000e+01 : f32
    %77 = vector.broadcast %cst_21 : f32 to vector<8x128xf32>
    %78 = arith.subf %77, %74 : vector<8x128xf32>
    %cst_22 = arith.constant 3.545200e-02 : f32
    %79 = vector.broadcast %cst_22 : f32 to vector<8x128xf32>
    %80 = arith.mulf %78, %79 : vector<8x128xf32>
    %cst_23 = arith.constant 1.13446403 : f32
    %81 = vector.broadcast %cst_23 : f32 to vector<8x128xf32>
    %82 = arith.subf %80, %81 : vector<8x128xf32>
    %cst_24 = arith.constant 6.400000e+01 : f32
    %83 = vector.broadcast %cst_24 : f32 to vector<8x128xf32>
    %84 = arith.subf %83, %76 : vector<8x128xf32>
    %cst_25 = arith.constant 0.154687494 : f32
    %85 = vector.broadcast %cst_25 : f32 to vector<8x128xf32>
    %86 = arith.mulf %85, %84 : vector<8x128xf32>
    %cst_26 = arith.constant 1.000000e-01 : f32
    %87 = vector.broadcast %cst_26 : f32 to vector<8x128xf32>
    %88 = arith.addf %86, %87 : vector<8x128xf32>
    %89 = math.cos %82 : vector<8x128xf32>
    %90 = math.sin %82 : vector<8x128xf32>
    %91 = arith.mulf %88, %88 : vector<8x128xf32>
    %c0_27 = arith.constant 0 : index
    %c0_28 = arith.constant 0 : index
    %c0_29 = arith.constant 0 : index
    %92 = vector.load %arg7[%c0_27, %c0_28, %c0_29] : memref<2x8x128xf32, #tpu.memory_space<vmem>>, vector<1x8x128xf32>
    %93 = vector.shape_cast %92 : vector<1x8x128xf32> to vector<8x128xf32>
    %c0_30 = arith.constant 0 : index
    %c0_31 = arith.constant 0 : index
    %c0_32 = arith.constant 0 : index
    %94 = vector.load %arg8[%c0_30, %c0_31, %c0_32] : memref<2x8x128xf32, #tpu.memory_space<vmem>>, vector<1x8x128xf32>
    %95 = vector.shape_cast %94 : vector<1x8x128xf32> to vector<8x128xf32>
    %cst_33 = arith.constant 6.400000e+01 : f32
    %96 = vector.broadcast %cst_33 : f32 to vector<8x128xf32>
    %97 = arith.subf %96, %93 : vector<8x128xf32>
    %cst_34 = arith.constant 3.545200e-02 : f32
    %98 = vector.broadcast %cst_34 : f32 to vector<8x128xf32>
    %99 = arith.mulf %97, %98 : vector<8x128xf32>
    %cst_35 = arith.constant 1.13446403 : f32
    %100 = vector.broadcast %cst_35 : f32 to vector<8x128xf32>
    %101 = arith.subf %99, %100 : vector<8x128xf32>
    %cst_36 = arith.constant 6.400000e+01 : f32
    %102 = vector.broadcast %cst_36 : f32 to vector<8x128xf32>
    %103 = arith.subf %102, %95 : vector<8x128xf32>
    %cst_37 = arith.constant 0.154687494 : f32
    %104 = vector.broadcast %cst_37 : f32 to vector<8x128xf32>
    %105 = arith.mulf %104, %103 : vector<8x128xf32>
    %cst_38 = arith.constant 1.000000e-01 : f32
    %106 = vector.broadcast %cst_38 : f32 to vector<8x128xf32>
    %107 = arith.addf %105, %106 : vector<8x128xf32>
    %108 = math.cos %101 : vector<8x128xf32>
    %109 = math.sin %101 : vector<8x128xf32>
    %110 = arith.mulf %107, %107 : vector<8x128xf32>
    %cst_39 = arith.constant 0.984807729 : f32
    %111 = vector.broadcast %cst_39 : f32 to vector<8x128xf32>
    %112 = arith.mulf %111, %56 : vector<8x128xf32>
    %cst_40 = arith.constant -0.173648179 : f32
    %113 = vector.broadcast %cst_40 : f32 to vector<8x128xf32>
    %114 = arith.mulf %113, %58 : vector<8x128xf32>
    %115 = arith.addf %112, %114 : vector<8x128xf32>
    %116 = vector.broadcast %49 : f32 to vector<8x128xf32>
    %117 = arith.addf %115, %116 : vector<8x128xf32>
    %cst_41 = arith.constant 0.984807729 : f32
    %118 = vector.broadcast %cst_41 : f32 to vector<8x128xf32>
    %119 = arith.mulf %118, %63 : vector<8x128xf32>
    %cst_42 = arith.constant -0.173648179 : f32
    %120 = vector.broadcast %cst_42 : f32 to vector<8x128xf32>
    %121 = arith.mulf %120, %65 : vector<8x128xf32>
    %122 = arith.addf %119, %121 : vector<8x128xf32>
    %123 = vector.broadcast %50 : f32 to vector<8x128xf32>
    %124 = arith.addf %122, %123 : vector<8x128xf32>
    %cst_43 = arith.constant 0.984807729 : f32
    %125 = vector.broadcast %cst_43 : f32 to vector<8x128xf32>
    %126 = arith.mulf %125, %70 : vector<8x128xf32>
    %cst_44 = arith.constant -0.173648179 : f32
    %127 = vector.broadcast %cst_44 : f32 to vector<8x128xf32>
    %128 = arith.mulf %127, %72 : vector<8x128xf32>
    %129 = arith.addf %126, %128 : vector<8x128xf32>
    %130 = vector.broadcast %51 : f32 to vector<8x128xf32>
    %131 = arith.addf %129, %130 : vector<8x128xf32>
    %132 = arith.mulf %117, %117 : vector<8x128xf32>
    %133 = arith.mulf %124, %124 : vector<8x128xf32>
    %134 = arith.addf %132, %133 : vector<8x128xf32>
    %135 = arith.mulf %131, %131 : vector<8x128xf32>
    %136 = arith.addf %134, %135 : vector<8x128xf32>
    %cst_45 = arith.constant 9.99999968E-21 : f32
    %137 = vector.broadcast %cst_45 : f32 to vector<8x128xf32>
    %138 = arith.addf %134, %137 : vector<8x128xf32>
    %139 = tpu.reciprocal %138 {approx = true} : vector<8x128xf32> -> vector<8x128xf32>
    %140 = arith.mulf %136, %139 : vector<8x128xf32>
    %141 = math.sqrt %140 : vector<8x128xf32>
    %cst_46 = arith.constant 2.14450693 : f32
    %142 = vector.broadcast %cst_46 : f32 to vector<8x128xf32>
    %143 = arith.mulf %117, %142 : vector<8x128xf32>
    %cst_47 = arith.constant 0.000000e+00 : f32
    %144 = vector.broadcast %cst_47 : f32 to vector<8x128xf32>
    %145 = arith.cmpf ogt, %117, %144 : vector<8x128xf32>
    %146 = arith.cmpf ole, %124, %143 : vector<8x128xf32>
    %147 = arith.andi %145, %146 : vector<8x128xi1>
    %cst_48 = arith.constant 0.000000e+00 : f32
    %148 = vector.broadcast %cst_48 : f32 to vector<8x128xf32>
    %149 = arith.subf %148, %143 : vector<8x128xf32>
    %150 = arith.cmpf ogt, %124, %149 : vector<8x128xf32>
    %151 = arith.andi %147, %150 : vector<8x128xi1>
    %cst_49 = arith.constant 0.00999999977 : f32
    %152 = vector.broadcast %cst_49 : f32 to vector<8x128xf32>
    %153 = arith.cmpf ogt, %136, %152 : vector<8x128xf32>
    %154 = arith.andi %151, %153 : vector<8x128xi1>
    %cst_50 = arith.constant 1.000000e+02 : f32
    %155 = vector.broadcast %cst_50 : f32 to vector<8x128xf32>
    %156 = arith.cmpf ole, %136, %155 : vector<8x128xf32>
    %157 = arith.andi %154, %156 : vector<8x128xi1>
    %158 = arith.addf %136, %91 : vector<8x128xf32>
    %cst_51 = arith.constant 2.000000e+00 : f32
    %159 = vector.broadcast %cst_51 : f32 to vector<8x128xf32>
    %160 = arith.mulf %159, %88 : vector<8x128xf32>
    %161 = arith.mulf %89, %117 : vector<8x128xf32>
    %162 = arith.mulf %90, %124 : vector<8x128xf32>
    %163 = arith.addf %161, %162 : vector<8x128xf32>
    %164 = arith.mulf %141, %163 : vector<8x128xf32>
    %165 = arith.mulf %160, %164 : vector<8x128xf32>
    %166 = arith.subf %158, %165 : vector<8x128xf32>
    %167 = arith.addf %136, %110 : vector<8x128xf32>
    %cst_52 = arith.constant 2.000000e+00 : f32
    %168 = vector.broadcast %cst_52 : f32 to vector<8x128xf32>
    %169 = arith.mulf %168, %107 : vector<8x128xf32>
    %170 = arith.mulf %108, %117 : vector<8x128xf32>
    %171 = arith.mulf %109, %124 : vector<8x128xf32>
    %172 = arith.addf %170, %171 : vector<8x128xf32>
    %173 = arith.mulf %141, %172 : vector<8x128xf32>
    %174 = arith.mulf %169, %173 : vector<8x128xf32>
    %175 = arith.subf %167, %174 : vector<8x128xf32>
    %cst_53 = arith.constant 0.988581717 : f32
    %176 = vector.broadcast %cst_53 : f32 to vector<8x128xf32>
    %177 = arith.mulf %176, %56 : vector<8x128xf32>
    %cst_54 = arith.constant -0.150685713 : f32
    %178 = vector.broadcast %cst_54 : f32 to vector<8x128xf32>
    %179 = arith.mulf %178, %58 : vector<8x128xf32>
    %180 = arith.addf %177, %179 : vector<8x128xf32>
    %181 = vector.broadcast %49 : f32 to vector<8x128xf32>
    %182 = arith.addf %180, %181 : vector<8x128xf32>
    %cst_55 = arith.constant 0.988581717 : f32
    %183 = vector.broadcast %cst_55 : f32 to vector<8x128xf32>
    %184 = arith.mulf %183, %63 : vector<8x128xf32>
    %cst_56 = arith.constant -0.150685713 : f32
    %185 = vector.broadcast %cst_56 : f32 to vector<8x128xf32>
    %186 = arith.mulf %185, %65 : vector<8x128xf32>
    %187 = arith.addf %184, %186 : vector<8x128xf32>
    %188 = vector.broadcast %50 : f32 to vector<8x128xf32>
    %189 = arith.addf %187, %188 : vector<8x128xf32>
    %cst_57 = arith.constant 0.988581717 : f32
    %190 = vector.broadcast %cst_57 : f32 to vector<8x128xf32>
    %191 = arith.mulf %190, %70 : vector<8x128xf32>
    %cst_58 = arith.constant -0.150685713 : f32
    %192 = vector.broadcast %cst_58 : f32 to vector<8x128xf32>
    %193 = arith.mulf %192, %72 : vector<8x128xf32>
    %194 = arith.addf %191, %193 : vector<8x128xf32>
    %195 = vector.broadcast %51 : f32 to vector<8x128xf32>
    %196 = arith.addf %194, %195 : vector<8x128xf32>
    %197 = arith.mulf %182, %182 : vector<8x128xf32>
    %198 = arith.mulf %189, %189 : vector<8x128xf32>
    %199 = arith.addf %197, %198 : vector<8x128xf32>
    %200 = arith.mulf %196, %196 : vector<8x128xf32>
    %201 = arith.addf %199, %200 : vector<8x128xf32>
    %cst_59 = arith.constant 9.99999968E-21 : f32
    %202 = vector.broadcast %cst_59 : f32 to vector<8x128xf32>
    %203 = arith.addf %199, %202 : vector<8x128xf32>
    %204 = tpu.reciprocal %203 {approx = true} : vector<8x128xf32> -> vector<8x128xf32>
    %205 = arith.mulf %201, %204 : vector<8x128xf32>
    %206 = math.sqrt %205 : vector<8x128xf32>
    %cst_60 = arith.constant 2.14450693 : f32
    %207 = vector.broadcast %cst_60 : f32 to vector<8x128xf32>
    %208 = arith.mulf %182, %207 : vector<8x128xf32>
    %cst_61 = arith.constant 0.000000e+00 : f32
    %209 = vector.broadcast %cst_61 : f32 to vector<8x128xf32>
    %210 = arith.cmpf ogt, %182, %209 : vector<8x128xf32>
    %211 = arith.cmpf ole, %189, %208 : vector<8x128xf32>
    %212 = arith.andi %210, %211 : vector<8x128xi1>
    %cst_62 = arith.constant 0.000000e+00 : f32
    %213 = vector.broadcast %cst_62 : f32 to vector<8x128xf32>
    %214 = arith.subf %213, %208 : vector<8x128xf32>
    %215 = arith.cmpf ogt, %189, %214 : vector<8x128xf32>
    %216 = arith.andi %212, %215 : vector<8x128xi1>
    %cst_63 = arith.constant 0.00999999977 : f32
    %217 = vector.broadcast %cst_63 : f32 to vector<8x128xf32>
    %218 = arith.cmpf ogt, %201, %217 : vector<8x128xf32>
    %219 = arith.andi %216, %218 : vector<8x128xi1>
    %cst_64 = arith.constant 1.000000e+02 : f32
    %220 = vector.broadcast %cst_64 : f32 to vector<8x128xf32>
    %221 = arith.cmpf ole, %201, %220 : vector<8x128xf32>
    %222 = arith.andi %219, %221 : vector<8x128xi1>
    %223 = arith.addf %201, %91 : vector<8x128xf32>
    %cst_65 = arith.constant 2.000000e+00 : f32
    %224 = vector.broadcast %cst_65 : f32 to vector<8x128xf32>
    %225 = arith.mulf %224, %88 : vector<8x128xf32>
    %226 = arith.mulf %89, %182 : vector<8x128xf32>
    %227 = arith.mulf %90, %189 : vector<8x128xf32>
    %228 = arith.addf %226, %227 : vector<8x128xf32>
    %229 = arith.mulf %206, %228 : vector<8x128xf32>
    %230 = arith.mulf %225, %229 : vector<8x128xf32>
    %231 = arith.subf %223, %230 : vector<8x128xf32>
    %232 = arith.addf %201, %110 : vector<8x128xf32>
    %cst_66 = arith.constant 2.000000e+00 : f32
    %233 = vector.broadcast %cst_66 : f32 to vector<8x128xf32>
    %234 = arith.mulf %233, %107 : vector<8x128xf32>
    %235 = arith.mulf %108, %182 : vector<8x128xf32>
    %236 = arith.mulf %109, %189 : vector<8x128xf32>
    %237 = arith.addf %235, %236 : vector<8x128xf32>
    %238 = arith.mulf %206, %237 : vector<8x128xf32>
    %239 = arith.mulf %234, %238 : vector<8x128xf32>
    %240 = arith.subf %232, %239 : vector<8x128xf32>
    %241 = arith.minimumf %166, %231 : vector<8x128xf32>
    %242 = arith.minimumf %175, %240 : vector<8x128xf32>
    %243 = arith.andi %157, %222 : vector<8x128xi1>
    %cst_67 = arith.constant 0.991820335 : f32
    %244 = vector.broadcast %cst_67 : f32 to vector<8x128xf32>
    %245 = arith.mulf %244, %56 : vector<8x128xf32>
    %cst_68 = arith.constant -0.127641648 : f32
    %246 = vector.broadcast %cst_68 : f32 to vector<8x128xf32>
    %247 = arith.mulf %246, %58 : vector<8x128xf32>
    %248 = arith.addf %245, %247 : vector<8x128xf32>
    %249 = vector.broadcast %49 : f32 to vector<8x128xf32>
    %250 = arith.addf %248, %249 : vector<8x128xf32>
    %cst_69 = arith.constant 0.991820335 : f32
    %251 = vector.broadcast %cst_69 : f32 to vector<8x128xf32>
    %252 = arith.mulf %251, %63 : vector<8x128xf32>
    %cst_70 = arith.constant -0.127641648 : f32
    %253 = vector.broadcast %cst_70 : f32 to vector<8x128xf32>
    %254 = arith.mulf %253, %65 : vector<8x128xf32>
    %255 = arith.addf %252, %254 : vector<8x128xf32>
    %256 = vector.broadcast %50 : f32 to vector<8x128xf32>
    %257 = arith.addf %255, %256 : vector<8x128xf32>
    %cst_71 = arith.constant 0.991820335 : f32
    %258 = vector.broadcast %cst_71 : f32 to vector<8x128xf32>
    %259 = arith.mulf %258, %70 : vector<8x128xf32>
    %cst_72 = arith.constant -0.127641648 : f32
    %260 = vector.broadcast %cst_72 : f32 to vector<8x128xf32>
    %261 = arith.mulf %260, %72 : vector<8x128xf32>
    %262 = arith.addf %259, %261 : vector<8x128xf32>
    %263 = vector.broadcast %51 : f32 to vector<8x128xf32>
    %264 = arith.addf %262, %263 : vector<8x128xf32>
    %265 = arith.mulf %250, %250 : vector<8x128xf32>
    %266 = arith.mulf %257, %257 : vector<8x128xf32>
    %267 = arith.addf %265, %266 : vector<8x128xf32>
    %268 = arith.mulf %264, %264 : vector<8x128xf32>
    %269 = arith.addf %267, %268 : vector<8x128xf32>
    %cst_73 = arith.constant 9.99999968E-21 : f32
    %270 = vector.broadcast %cst_73 : f32 to vector<8x128xf32>
    %271 = arith.addf %267, %270 : vector<8x128xf32>
    %272 = tpu.reciprocal %271 {approx = true} : vector<8x128xf32> -> vector<8x128xf32>
    %273 = arith.mulf %269, %272 : vector<8x128xf32>
    %274 = math.sqrt %273 : vector<8x128xf32>
    %cst_74 = arith.constant 2.14450693 : f32
    %275 = vector.broadcast %cst_74 : f32 to vector<8x128xf32>
    %276 = arith.mulf %250, %275 : vector<8x128xf32>
    %cst_75 = arith.constant 0.000000e+00 : f32
    %277 = vector.broadcast %cst_75 : f32 to vector<8x128xf32>
    %278 = arith.cmpf ogt, %250, %277 : vector<8x128xf32>
    %279 = arith.cmpf ole, %257, %276 : vector<8x128xf32>
    %280 = arith.andi %278, %279 : vector<8x128xi1>
    %cst_76 = arith.constant 0.000000e+00 : f32
    %281 = vector.broadcast %cst_76 : f32 to vector<8x128xf32>
    %282 = arith.subf %281, %276 : vector<8x128xf32>
    %283 = arith.cmpf ogt, %257, %282 : vector<8x128xf32>
    %284 = arith.andi %280, %283 : vector<8x128xi1>
    %cst_77 = arith.constant 0.00999999977 : f32
    %285 = vector.broadcast %cst_77 : f32 to vector<8x128xf32>
    %286 = arith.cmpf ogt, %269, %285 : vector<8x128xf32>
    %287 = arith.andi %284, %286 : vector<8x128xi1>
    %cst_78 = arith.constant 1.000000e+02 : f32
    %288 = vector.broadcast %cst_78 : f32 to vector<8x128xf32>
    %289 = arith.cmpf ole, %269, %288 : vector<8x128xf32>
    %290 = arith.andi %287, %289 : vector<8x128xi1>
    %291 = arith.addf %269, %91 : vector<8x128xf32>
    %cst_79 = arith.constant 2.000000e+00 : f32
    %292 = vector.broadcast %cst_79 : f32 to vector<8x128xf32>
    %293 = arith.mulf %292, %88 : vector<8x128xf32>
    %294 = arith.mulf %89, %250 : vector<8x128xf32>
    %295 = arith.mulf %90, %257 : vector<8x128xf32>
    %296 = arith.addf %294, %295 : vector<8x128xf32>
    %297 = arith.mulf %274, %296 : vector<8x128xf32>
    %298 = arith.mulf %293, %297 : vector<8x128xf32>
    %299 = arith.subf %291, %298 : vector<8x128xf32>
    %300 = arith.addf %269, %110 : vector<8x128xf32>
    %cst_80 = arith.constant 2.000000e+00 : f32
    %301 = vector.broadcast %cst_80 : f32 to vector<8x128xf32>
    %302 = arith.mulf %301, %107 : vector<8x128xf32>
    %303 = arith.mulf %108, %250 : vector<8x128xf32>
    %304 = arith.mulf %109, %257 : vector<8x128xf32>
    %305 = arith.addf %303, %304 : vector<8x128xf32>
    %306 = arith.mulf %274, %305 : vector<8x128xf32>
    %307 = arith.mulf %302, %306 : vector<8x128xf32>
    %308 = arith.subf %300, %307 : vector<8x128xf32>
    %309 = arith.minimumf %241, %299 : vector<8x128xf32>
    %310 = arith.minimumf %242, %308 : vector<8x128xf32>
    %311 = arith.andi %243, %290 : vector<8x128xi1>
    %cst_81 = arith.constant 0.994521915 : f32
    %312 = vector.broadcast %cst_81 : f32 to vector<8x128xf32>
    %313 = arith.mulf %312, %56 : vector<8x128xf32>
    %cst_82 = arith.constant -0.104528464 : f32
    %314 = vector.broadcast %cst_82 : f32 to vector<8x128xf32>
    %315 = arith.mulf %314, %58 : vector<8x128xf32>
    %316 = arith.addf %313, %315 : vector<8x128xf32>
    %317 = vector.broadcast %49 : f32 to vector<8x128xf32>
    %318 = arith.addf %316, %317 : vector<8x128xf32>
    %cst_83 = arith.constant 0.994521915 : f32
    %319 = vector.broadcast %cst_83 : f32 to vector<8x128xf32>
    %320 = arith.mulf %319, %63 : vector<8x128xf32>
    %cst_84 = arith.constant -0.104528464 : f32
    %321 = vector.broadcast %cst_84 : f32 to vector<8x128xf32>
    %322 = arith.mulf %321, %65 : vector<8x128xf32>
    %323 = arith.addf %320, %322 : vector<8x128xf32>
    %324 = vector.broadcast %50 : f32 to vector<8x128xf32>
    %325 = arith.addf %323, %324 : vector<8x128xf32>
    %cst_85 = arith.constant 0.994521915 : f32
    %326 = vector.broadcast %cst_85 : f32 to vector<8x128xf32>
    %327 = arith.mulf %326, %70 : vector<8x128xf32>
    %cst_86 = arith.constant -0.104528464 : f32
    %328 = vector.broadcast %cst_86 : f32 to vector<8x128xf32>
    %329 = arith.mulf %328, %72 : vector<8x128xf32>
    %330 = arith.addf %327, %329 : vector<8x128xf32>
    %331 = vector.broadcast %51 : f32 to vector<8x128xf32>
    %332 = arith.addf %330, %331 : vector<8x128xf32>
    %333 = arith.mulf %318, %318 : vector<8x128xf32>
    %334 = arith.mulf %325, %325 : vector<8x128xf32>
    %335 = arith.addf %333, %334 : vector<8x128xf32>
    %336 = arith.mulf %332, %332 : vector<8x128xf32>
    %337 = arith.addf %335, %336 : vector<8x128xf32>
    %cst_87 = arith.constant 9.99999968E-21 : f32
    %338 = vector.broadcast %cst_87 : f32 to vector<8x128xf32>
    %339 = arith.addf %335, %338 : vector<8x128xf32>
    %340 = tpu.reciprocal %339 {approx = true} : vector<8x128xf32> -> vector<8x128xf32>
    %341 = arith.mulf %337, %340 : vector<8x128xf32>
    %342 = math.sqrt %341 : vector<8x128xf32>
    %cst_88 = arith.constant 2.14450693 : f32
    %343 = vector.broadcast %cst_88 : f32 to vector<8x128xf32>
    %344 = arith.mulf %318, %343 : vector<8x128xf32>
    %cst_89 = arith.constant 0.000000e+00 : f32
    %345 = vector.broadcast %cst_89 : f32 to vector<8x128xf32>
    %346 = arith.cmpf ogt, %318, %345 : vector<8x128xf32>
    %347 = arith.cmpf ole, %325, %344 : vector<8x128xf32>
    %348 = arith.andi %346, %347 : vector<8x128xi1>
    %cst_90 = arith.constant 0.000000e+00 : f32
    %349 = vector.broadcast %cst_90 : f32 to vector<8x128xf32>
    %350 = arith.subf %349, %344 : vector<8x128xf32>
    %351 = arith.cmpf ogt, %325, %350 : vector<8x128xf32>
    %352 = arith.andi %348, %351 : vector<8x128xi1>
    %cst_91 = arith.constant 0.00999999977 : f32
    %353 = vector.broadcast %cst_91 : f32 to vector<8x128xf32>
    %354 = arith.cmpf ogt, %337, %353 : vector<8x128xf32>
    %355 = arith.andi %352, %354 : vector<8x128xi1>
    %cst_92 = arith.constant 1.000000e+02 : f32
    %356 = vector.broadcast %cst_92 : f32 to vector<8x128xf32>
    %357 = arith.cmpf ole, %337, %356 : vector<8x128xf32>
    %358 = arith.andi %355, %357 : vector<8x128xi1>
    %359 = arith.addf %337, %91 : vector<8x128xf32>
    %cst_93 = arith.constant 2.000000e+00 : f32
    %360 = vector.broadcast %cst_93 : f32 to vector<8x128xf32>
    %361 = arith.mulf %360, %88 : vector<8x128xf32>
    %362 = arith.mulf %89, %318 : vector<8x128xf32>
    %363 = arith.mulf %90, %325 : vector<8x128xf32>
    %364 = arith.addf %362, %363 : vector<8x128xf32>
    %365 = arith.mulf %342, %364 : vector<8x128xf32>
    %366 = arith.mulf %361, %365 : vector<8x128xf32>
    %367 = arith.subf %359, %366 : vector<8x128xf32>
    %368 = arith.addf %337, %110 : vector<8x128xf32>
    %cst_94 = arith.constant 2.000000e+00 : f32
    %369 = vector.broadcast %cst_94 : f32 to vector<8x128xf32>
    %370 = arith.mulf %369, %107 : vector<8x128xf32>
    %371 = arith.mulf %108, %318 : vector<8x128xf32>
    %372 = arith.mulf %109, %325 : vector<8x128xf32>
    %373 = arith.addf %371, %372 : vector<8x128xf32>
    %374 = arith.mulf %342, %373 : vector<8x128xf32>
    %375 = arith.mulf %370, %374 : vector<8x128xf32>
    %376 = arith.subf %368, %375 : vector<8x128xf32>
    %377 = arith.minimumf %309, %367 : vector<8x128xf32>
    %378 = arith.minimumf %310, %376 : vector<8x128xf32>
    %379 = arith.andi %311, %358 : vector<8x128xi1>
    %cst_95 = arith.constant 0.996684908 : f32
    %380 = vector.broadcast %cst_95 : f32 to vector<8x128xf32>
    %381 = arith.mulf %380, %56 : vector<8x128xf32>
    %cst_96 = arith.constant -0.0813586711 : f32
    %382 = vector.broadcast %cst_96 : f32 to vector<8x128xf32>
    %383 = arith.mulf %382, %58 : vector<8x128xf32>
    %384 = arith.addf %381, %383 : vector<8x128xf32>
    %385 = vector.broadcast %49 : f32 to vector<8x128xf32>
    %386 = arith.addf %384, %385 : vector<8x128xf32>
    %cst_97 = arith.constant 0.996684908 : f32
    %387 = vector.broadcast %cst_97 : f32 to vector<8x128xf32>
    %388 = arith.mulf %387, %63 : vector<8x128xf32>
    %cst_98 = arith.constant -0.0813586711 : f32
    %389 = vector.broadcast %cst_98 : f32 to vector<8x128xf32>
    %390 = arith.mulf %389, %65 : vector<8x128xf32>
    %391 = arith.addf %388, %390 : vector<8x128xf32>
    %392 = vector.broadcast %50 : f32 to vector<8x128xf32>
    %393 = arith.addf %391, %392 : vector<8x128xf32>
    %cst_99 = arith.constant 0.996684908 : f32
    %394 = vector.broadcast %cst_99 : f32 to vector<8x128xf32>
    %395 = arith.mulf %394, %70 : vector<8x128xf32>
    %cst_100 = arith.constant -0.0813586711 : f32
    %396 = vector.broadcast %cst_100 : f32 to vector<8x128xf32>
    %397 = arith.mulf %396, %72 : vector<8x128xf32>
    %398 = arith.addf %395, %397 : vector<8x128xf32>
    %399 = vector.broadcast %51 : f32 to vector<8x128xf32>
    %400 = arith.addf %398, %399 : vector<8x128xf32>
    %401 = arith.mulf %386, %386 : vector<8x128xf32>
    %402 = arith.mulf %393, %393 : vector<8x128xf32>
    %403 = arith.addf %401, %402 : vector<8x128xf32>
    %404 = arith.mulf %400, %400 : vector<8x128xf32>
    %405 = arith.addf %403, %404 : vector<8x128xf32>
    %cst_101 = arith.constant 9.99999968E-21 : f32
    %406 = vector.broadcast %cst_101 : f32 to vector<8x128xf32>
    %407 = arith.addf %403, %406 : vector<8x128xf32>
    %408 = tpu.reciprocal %407 {approx = true} : vector<8x128xf32> -> vector<8x128xf32>
    %409 = arith.mulf %405, %408 : vector<8x128xf32>
    %410 = math.sqrt %409 : vector<8x128xf32>
    %cst_102 = arith.constant 2.14450693 : f32
    %411 = vector.broadcast %cst_102 : f32 to vector<8x128xf32>
    %412 = arith.mulf %386, %411 : vector<8x128xf32>
    %cst_103 = arith.constant 0.000000e+00 : f32
    %413 = vector.broadcast %cst_103 : f32 to vector<8x128xf32>
    %414 = arith.cmpf ogt, %386, %413 : vector<8x128xf32>
    %415 = arith.cmpf ole, %393, %412 : vector<8x128xf32>
    %416 = arith.andi %414, %415 : vector<8x128xi1>
    %cst_104 = arith.constant 0.000000e+00 : f32
    %417 = vector.broadcast %cst_104 : f32 to vector<8x128xf32>
    %418 = arith.subf %417, %412 : vector<8x128xf32>
    %419 = arith.cmpf ogt, %393, %418 : vector<8x128xf32>
    %420 = arith.andi %416, %419 : vector<8x128xi1>
    %cst_105 = arith.constant 0.00999999977 : f32
    %421 = vector.broadcast %cst_105 : f32 to vector<8x128xf32>
    %422 = arith.cmpf ogt, %405, %421 : vector<8x128xf32>
    %423 = arith.andi %420, %422 : vector<8x128xi1>
    %cst_106 = arith.constant 1.000000e+02 : f32
    %424 = vector.broadcast %cst_106 : f32 to vector<8x128xf32>
    %425 = arith.cmpf ole, %405, %424 : vector<8x128xf32>
    %426 = arith.andi %423, %425 : vector<8x128xi1>
    %427 = arith.addf %405, %91 : vector<8x128xf32>
    %cst_107 = arith.constant 2.000000e+00 : f32
    %428 = vector.broadcast %cst_107 : f32 to vector<8x128xf32>
    %429 = arith.mulf %428, %88 : vector<8x128xf32>
    %430 = arith.mulf %89, %386 : vector<8x128xf32>
    %431 = arith.mulf %90, %393 : vector<8x128xf32>
    %432 = arith.addf %430, %431 : vector<8x128xf32>
    %433 = arith.mulf %410, %432 : vector<8x128xf32>
    %434 = arith.mulf %429, %433 : vector<8x128xf32>
    %435 = arith.subf %427, %434 : vector<8x128xf32>
    %436 = arith.addf %405, %110 : vector<8x128xf32>
    %cst_108 = arith.constant 2.000000e+00 : f32
    %437 = vector.broadcast %cst_108 : f32 to vector<8x128xf32>
    %438 = arith.mulf %437, %107 : vector<8x128xf32>
    %439 = arith.mulf %108, %386 : vector<8x128xf32>
    %440 = arith.mulf %109, %393 : vector<8x128xf32>
    %441 = arith.addf %439, %440 : vector<8x128xf32>
    %442 = arith.mulf %410, %441 : vector<8x128xf32>
    %443 = arith.mulf %438, %442 : vector<8x128xf32>
    %444 = arith.subf %436, %443 : vector<8x128xf32>
    %445 = arith.minimumf %377, %435 : vector<8x128xf32>
    %446 = arith.minimumf %378, %444 : vector<8x128xf32>
    %447 = arith.andi %379, %426 : vector<8x128xi1>
    %cst_109 = arith.constant 0.998308181 : f32
    %448 = vector.broadcast %cst_109 : f32 to vector<8x128xf32>
    %449 = arith.mulf %448, %56 : vector<8x128xf32>
    %cst_110 = arith.constant -0.0581448302 : f32
    %450 = vector.broadcast %cst_110 : f32 to vector<8x128xf32>
    %451 = arith.mulf %450, %58 : vector<8x128xf32>
    %452 = arith.addf %449, %451 : vector<8x128xf32>
    %453 = vector.broadcast %49 : f32 to vector<8x128xf32>
    %454 = arith.addf %452, %453 : vector<8x128xf32>
    %cst_111 = arith.constant 0.998308181 : f32
    %455 = vector.broadcast %cst_111 : f32 to vector<8x128xf32>
    %456 = arith.mulf %455, %63 : vector<8x128xf32>
    %cst_112 = arith.constant -0.0581448302 : f32
    %457 = vector.broadcast %cst_112 : f32 to vector<8x128xf32>
    %458 = arith.mulf %457, %65 : vector<8x128xf32>
    %459 = arith.addf %456, %458 : vector<8x128xf32>
    %460 = vector.broadcast %50 : f32 to vector<8x128xf32>
    %461 = arith.addf %459, %460 : vector<8x128xf32>
    %cst_113 = arith.constant 0.998308181 : f32
    %462 = vector.broadcast %cst_113 : f32 to vector<8x128xf32>
    %463 = arith.mulf %462, %70 : vector<8x128xf32>
    %cst_114 = arith.constant -0.0581448302 : f32
    %464 = vector.broadcast %cst_114 : f32 to vector<8x128xf32>
    %465 = arith.mulf %464, %72 : vector<8x128xf32>
    %466 = arith.addf %463, %465 : vector<8x128xf32>
    %467 = vector.broadcast %51 : f32 to vector<8x128xf32>
    %468 = arith.addf %466, %467 : vector<8x128xf32>
    %469 = arith.mulf %454, %454 : vector<8x128xf32>
    %470 = arith.mulf %461, %461 : vector<8x128xf32>
    %471 = arith.addf %469, %470 : vector<8x128xf32>
    %472 = arith.mulf %468, %468 : vector<8x128xf32>
    %473 = arith.addf %471, %472 : vector<8x128xf32>
    %cst_115 = arith.constant 9.99999968E-21 : f32
    %474 = vector.broadcast %cst_115 : f32 to vector<8x128xf32>
    %475 = arith.addf %471, %474 : vector<8x128xf32>
    %476 = tpu.reciprocal %475 {approx = true} : vector<8x128xf32> -> vector<8x128xf32>
    %477 = arith.mulf %473, %476 : vector<8x128xf32>
    %478 = math.sqrt %477 : vector<8x128xf32>
    %cst_116 = arith.constant 2.14450693 : f32
    %479 = vector.broadcast %cst_116 : f32 to vector<8x128xf32>
    %480 = arith.mulf %454, %479 : vector<8x128xf32>
    %cst_117 = arith.constant 0.000000e+00 : f32
    %481 = vector.broadcast %cst_117 : f32 to vector<8x128xf32>
    %482 = arith.cmpf ogt, %454, %481 : vector<8x128xf32>
    %483 = arith.cmpf ole, %461, %480 : vector<8x128xf32>
    %484 = arith.andi %482, %483 : vector<8x128xi1>
    %cst_118 = arith.constant 0.000000e+00 : f32
    %485 = vector.broadcast %cst_118 : f32 to vector<8x128xf32>
    %486 = arith.subf %485, %480 : vector<8x128xf32>
    %487 = arith.cmpf ogt, %461, %486 : vector<8x128xf32>
    %488 = arith.andi %484, %487 : vector<8x128xi1>
    %cst_119 = arith.constant 0.00999999977 : f32
    %489 = vector.broadcast %cst_119 : f32 to vector<8x128xf32>
    %490 = arith.cmpf ogt, %473, %489 : vector<8x128xf32>
    %491 = arith.andi %488, %490 : vector<8x128xi1>
    %cst_120 = arith.constant 1.000000e+02 : f32
    %492 = vector.broadcast %cst_120 : f32 to vector<8x128xf32>
    %493 = arith.cmpf ole, %473, %492 : vector<8x128xf32>
    %494 = arith.andi %491, %493 : vector<8x128xi1>
    %495 = arith.addf %473, %91 : vector<8x128xf32>
    %cst_121 = arith.constant 2.000000e+00 : f32
    %496 = vector.broadcast %cst_121 : f32 to vector<8x128xf32>
    %497 = arith.mulf %496, %88 : vector<8x128xf32>
    %498 = arith.mulf %89, %454 : vector<8x128xf32>
    %499 = arith.mulf %90, %461 : vector<8x128xf32>
    %500 = arith.addf %498, %499 : vector<8x128xf32>
    %501 = arith.mulf %478, %500 : vector<8x128xf32>
    %502 = arith.mulf %497, %501 : vector<8x128xf32>
    %503 = arith.subf %495, %502 : vector<8x128xf32>
    %504 = arith.addf %473, %110 : vector<8x128xf32>
    %cst_122 = arith.constant 2.000000e+00 : f32
    %505 = vector.broadcast %cst_122 : f32 to vector<8x128xf32>
    %506 = arith.mulf %505, %107 : vector<8x128xf32>
    %507 = arith.mulf %108, %454 : vector<8x128xf32>
    %508 = arith.mulf %109, %461 : vector<8x128xf32>
    %509 = arith.addf %507, %508 : vector<8x128xf32>
    %510 = arith.mulf %478, %509 : vector<8x128xf32>
    %511 = arith.mulf %506, %510 : vector<8x128xf32>
    %512 = arith.subf %504, %511 : vector<8x128xf32>
    %513 = arith.minimumf %445, %503 : vector<8x128xf32>
    %514 = arith.minimumf %446, %512 : vector<8x128xf32>
    %515 = arith.andi %447, %494 : vector<8x128xi1>
    %cst_123 = arith.constant 0.99939084 : f32
    %516 = vector.broadcast %cst_123 : f32 to vector<8x128xf32>
    %517 = arith.mulf %516, %56 : vector<8x128xf32>
    %cst_124 = arith.constant -0.0348994955 : f32
    %518 = vector.broadcast %cst_124 : f32 to vector<8x128xf32>
    %519 = arith.mulf %518, %58 : vector<8x128xf32>
    %520 = arith.addf %517, %519 : vector<8x128xf32>
    %521 = vector.broadcast %49 : f32 to vector<8x128xf32>
    %522 = arith.addf %520, %521 : vector<8x128xf32>
    %cst_125 = arith.constant 0.99939084 : f32
    %523 = vector.broadcast %cst_125 : f32 to vector<8x128xf32>
    %524 = arith.mulf %523, %63 : vector<8x128xf32>
    %cst_126 = arith.constant -0.0348994955 : f32
    %525 = vector.broadcast %cst_126 : f32 to vector<8x128xf32>
    %526 = arith.mulf %525, %65 : vector<8x128xf32>
    %527 = arith.addf %524, %526 : vector<8x128xf32>
    %528 = vector.broadcast %50 : f32 to vector<8x128xf32>
    %529 = arith.addf %527, %528 : vector<8x128xf32>
    %cst_127 = arith.constant 0.99939084 : f32
    %530 = vector.broadcast %cst_127 : f32 to vector<8x128xf32>
    %531 = arith.mulf %530, %70 : vector<8x128xf32>
    %cst_128 = arith.constant -0.0348994955 : f32
    %532 = vector.broadcast %cst_128 : f32 to vector<8x128xf32>
    %533 = arith.mulf %532, %72 : vector<8x128xf32>
    %534 = arith.addf %531, %533 : vector<8x128xf32>
    %535 = vector.broadcast %51 : f32 to vector<8x128xf32>
    %536 = arith.addf %534, %535 : vector<8x128xf32>
    %537 = arith.mulf %522, %522 : vector<8x128xf32>
    %538 = arith.mulf %529, %529 : vector<8x128xf32>
    %539 = arith.addf %537, %538 : vector<8x128xf32>
    %540 = arith.mulf %536, %536 : vector<8x128xf32>
    %541 = arith.addf %539, %540 : vector<8x128xf32>
    %cst_129 = arith.constant 9.99999968E-21 : f32
    %542 = vector.broadcast %cst_129 : f32 to vector<8x128xf32>
    %543 = arith.addf %539, %542 : vector<8x128xf32>
    %544 = tpu.reciprocal %543 {approx = true} : vector<8x128xf32> -> vector<8x128xf32>
    %545 = arith.mulf %541, %544 : vector<8x128xf32>
    %546 = math.sqrt %545 : vector<8x128xf32>
    %cst_130 = arith.constant 2.14450693 : f32
    %547 = vector.broadcast %cst_130 : f32 to vector<8x128xf32>
    %548 = arith.mulf %522, %547 : vector<8x128xf32>
    %cst_131 = arith.constant 0.000000e+00 : f32
    %549 = vector.broadcast %cst_131 : f32 to vector<8x128xf32>
    %550 = arith.cmpf ogt, %522, %549 : vector<8x128xf32>
    %551 = arith.cmpf ole, %529, %548 : vector<8x128xf32>
    %552 = arith.andi %550, %551 : vector<8x128xi1>
    %cst_132 = arith.constant 0.000000e+00 : f32
    %553 = vector.broadcast %cst_132 : f32 to vector<8x128xf32>
    %554 = arith.subf %553, %548 : vector<8x128xf32>
    %555 = arith.cmpf ogt, %529, %554 : vector<8x128xf32>
    %556 = arith.andi %552, %555 : vector<8x128xi1>
    %cst_133 = arith.constant 0.00999999977 : f32
    %557 = vector.broadcast %cst_133 : f32 to vector<8x128xf32>
    %558 = arith.cmpf ogt, %541, %557 : vector<8x128xf32>
    %559 = arith.andi %556, %558 : vector<8x128xi1>
    %cst_134 = arith.constant 1.000000e+02 : f32
    %560 = vector.broadcast %cst_134 : f32 to vector<8x128xf32>
    %561 = arith.cmpf ole, %541, %560 : vector<8x128xf32>
    %562 = arith.andi %559, %561 : vector<8x128xi1>
    %563 = arith.addf %541, %91 : vector<8x128xf32>
    %cst_135 = arith.constant 2.000000e+00 : f32
    %564 = vector.broadcast %cst_135 : f32 to vector<8x128xf32>
    %565 = arith.mulf %564, %88 : vector<8x128xf32>
    %566 = arith.mulf %89, %522 : vector<8x128xf32>
    %567 = arith.mulf %90, %529 : vector<8x128xf32>
    %568 = arith.addf %566, %567 : vector<8x128xf32>
    %569 = arith.mulf %546, %568 : vector<8x128xf32>
    %570 = arith.mulf %565, %569 : vector<8x128xf32>
    %571 = arith.subf %563, %570 : vector<8x128xf32>
    %572 = arith.addf %541, %110 : vector<8x128xf32>
    %cst_136 = arith.constant 2.000000e+00 : f32
    %573 = vector.broadcast %cst_136 : f32 to vector<8x128xf32>
    %574 = arith.mulf %573, %107 : vector<8x128xf32>
    %575 = arith.mulf %108, %522 : vector<8x128xf32>
    %576 = arith.mulf %109, %529 : vector<8x128xf32>
    %577 = arith.addf %575, %576 : vector<8x128xf32>
    %578 = arith.mulf %546, %577 : vector<8x128xf32>
    %579 = arith.mulf %574, %578 : vector<8x128xf32>
    %580 = arith.subf %572, %579 : vector<8x128xf32>
    %581 = arith.minimumf %513, %571 : vector<8x128xf32>
    %582 = arith.minimumf %514, %580 : vector<8x128xf32>
    %583 = arith.andi %515, %562 : vector<8x128xi1>
    %cst_137 = arith.constant 0.999932289 : f32
    %584 = vector.broadcast %cst_137 : f32 to vector<8x128xf32>
    %585 = arith.mulf %584, %56 : vector<8x128xf32>
    %cst_138 = arith.constant -0.0116352662 : f32
    %586 = vector.broadcast %cst_138 : f32 to vector<8x128xf32>
    %587 = arith.mulf %586, %58 : vector<8x128xf32>
    %588 = arith.addf %585, %587 : vector<8x128xf32>
    %589 = vector.broadcast %49 : f32 to vector<8x128xf32>
    %590 = arith.addf %588, %589 : vector<8x128xf32>
    %cst_139 = arith.constant 0.999932289 : f32
    %591 = vector.broadcast %cst_139 : f32 to vector<8x128xf32>
    %592 = arith.mulf %591, %63 : vector<8x128xf32>
    %cst_140 = arith.constant -0.0116352662 : f32
    %593 = vector.broadcast %cst_140 : f32 to vector<8x128xf32>
    %594 = arith.mulf %593, %65 : vector<8x128xf32>
    %595 = arith.addf %592, %594 : vector<8x128xf32>
    %596 = vector.broadcast %50 : f32 to vector<8x128xf32>
    %597 = arith.addf %595, %596 : vector<8x128xf32>
    %cst_141 = arith.constant 0.999932289 : f32
    %598 = vector.broadcast %cst_141 : f32 to vector<8x128xf32>
    %599 = arith.mulf %598, %70 : vector<8x128xf32>
    %cst_142 = arith.constant -0.0116352662 : f32
    %600 = vector.broadcast %cst_142 : f32 to vector<8x128xf32>
    %601 = arith.mulf %600, %72 : vector<8x128xf32>
    %602 = arith.addf %599, %601 : vector<8x128xf32>
    %603 = vector.broadcast %51 : f32 to vector<8x128xf32>
    %604 = arith.addf %602, %603 : vector<8x128xf32>
    %605 = arith.mulf %590, %590 : vector<8x128xf32>
    %606 = arith.mulf %597, %597 : vector<8x128xf32>
    %607 = arith.addf %605, %606 : vector<8x128xf32>
    %608 = arith.mulf %604, %604 : vector<8x128xf32>
    %609 = arith.addf %607, %608 : vector<8x128xf32>
    %cst_143 = arith.constant 9.99999968E-21 : f32
    %610 = vector.broadcast %cst_143 : f32 to vector<8x128xf32>
    %611 = arith.addf %607, %610 : vector<8x128xf32>
    %612 = tpu.reciprocal %611 {approx = true} : vector<8x128xf32> -> vector<8x128xf32>
    %613 = arith.mulf %609, %612 : vector<8x128xf32>
    %614 = math.sqrt %613 : vector<8x128xf32>
    %cst_144 = arith.constant 2.14450693 : f32
    %615 = vector.broadcast %cst_144 : f32 to vector<8x128xf32>
    %616 = arith.mulf %590, %615 : vector<8x128xf32>
    %cst_145 = arith.constant 0.000000e+00 : f32
    %617 = vector.broadcast %cst_145 : f32 to vector<8x128xf32>
    %618 = arith.cmpf ogt, %590, %617 : vector<8x128xf32>
    %619 = arith.cmpf ole, %597, %616 : vector<8x128xf32>
    %620 = arith.andi %618, %619 : vector<8x128xi1>
    %cst_146 = arith.constant 0.000000e+00 : f32
    %621 = vector.broadcast %cst_146 : f32 to vector<8x128xf32>
    %622 = arith.subf %621, %616 : vector<8x128xf32>
    %623 = arith.cmpf ogt, %597, %622 : vector<8x128xf32>
    %624 = arith.andi %620, %623 : vector<8x128xi1>
    %cst_147 = arith.constant 0.00999999977 : f32
    %625 = vector.broadcast %cst_147 : f32 to vector<8x128xf32>
    %626 = arith.cmpf ogt, %609, %625 : vector<8x128xf32>
    %627 = arith.andi %624, %626 : vector<8x128xi1>
    %cst_148 = arith.constant 1.000000e+02 : f32
    %628 = vector.broadcast %cst_148 : f32 to vector<8x128xf32>
    %629 = arith.cmpf ole, %609, %628 : vector<8x128xf32>
    %630 = arith.andi %627, %629 : vector<8x128xi1>
    %631 = arith.addf %609, %91 : vector<8x128xf32>
    %cst_149 = arith.constant 2.000000e+00 : f32
    %632 = vector.broadcast %cst_149 : f32 to vector<8x128xf32>
    %633 = arith.mulf %632, %88 : vector<8x128xf32>
    %634 = arith.mulf %89, %590 : vector<8x128xf32>
    %635 = arith.mulf %90, %597 : vector<8x128xf32>
    %636 = arith.addf %634, %635 : vector<8x128xf32>
    %637 = arith.mulf %614, %636 : vector<8x128xf32>
    %638 = arith.mulf %633, %637 : vector<8x128xf32>
    %639 = arith.subf %631, %638 : vector<8x128xf32>
    %640 = arith.addf %609, %110 : vector<8x128xf32>
    %cst_150 = arith.constant 2.000000e+00 : f32
    %641 = vector.broadcast %cst_150 : f32 to vector<8x128xf32>
    %642 = arith.mulf %641, %107 : vector<8x128xf32>
    %643 = arith.mulf %108, %590 : vector<8x128xf32>
    %644 = arith.mulf %109, %597 : vector<8x128xf32>
    %645 = arith.addf %643, %644 : vector<8x128xf32>
    %646 = arith.mulf %614, %645 : vector<8x128xf32>
    %647 = arith.mulf %642, %646 : vector<8x128xf32>
    %648 = arith.subf %640, %647 : vector<8x128xf32>
    %649 = arith.minimumf %581, %639 : vector<8x128xf32>
    %650 = arith.minimumf %582, %648 : vector<8x128xf32>
    %651 = arith.andi %583, %630 : vector<8x128xi1>
    %cst_151 = arith.constant 0.999932289 : f32
    %652 = vector.broadcast %cst_151 : f32 to vector<8x128xf32>
    %653 = arith.mulf %652, %56 : vector<8x128xf32>
    %cst_152 = arith.constant 0.0116352662 : f32
    %654 = vector.broadcast %cst_152 : f32 to vector<8x128xf32>
    %655 = arith.mulf %654, %58 : vector<8x128xf32>
    %656 = arith.addf %653, %655 : vector<8x128xf32>
    %657 = vector.broadcast %49 : f32 to vector<8x128xf32>
    %658 = arith.addf %656, %657 : vector<8x128xf32>
    %cst_153 = arith.constant 0.999932289 : f32
    %659 = vector.broadcast %cst_153 : f32 to vector<8x128xf32>
    %660 = arith.mulf %659, %63 : vector<8x128xf32>
    %cst_154 = arith.constant 0.0116352662 : f32
    %661 = vector.broadcast %cst_154 : f32 to vector<8x128xf32>
    %662 = arith.mulf %661, %65 : vector<8x128xf32>
    %663 = arith.addf %660, %662 : vector<8x128xf32>
    %664 = vector.broadcast %50 : f32 to vector<8x128xf32>
    %665 = arith.addf %663, %664 : vector<8x128xf32>
    %cst_155 = arith.constant 0.999932289 : f32
    %666 = vector.broadcast %cst_155 : f32 to vector<8x128xf32>
    %667 = arith.mulf %666, %70 : vector<8x128xf32>
    %cst_156 = arith.constant 0.0116352662 : f32
    %668 = vector.broadcast %cst_156 : f32 to vector<8x128xf32>
    %669 = arith.mulf %668, %72 : vector<8x128xf32>
    %670 = arith.addf %667, %669 : vector<8x128xf32>
    %671 = vector.broadcast %51 : f32 to vector<8x128xf32>
    %672 = arith.addf %670, %671 : vector<8x128xf32>
    %673 = arith.mulf %658, %658 : vector<8x128xf32>
    %674 = arith.mulf %665, %665 : vector<8x128xf32>
    %675 = arith.addf %673, %674 : vector<8x128xf32>
    %676 = arith.mulf %672, %672 : vector<8x128xf32>
    %677 = arith.addf %675, %676 : vector<8x128xf32>
    %cst_157 = arith.constant 9.99999968E-21 : f32
    %678 = vector.broadcast %cst_157 : f32 to vector<8x128xf32>
    %679 = arith.addf %675, %678 : vector<8x128xf32>
    %680 = tpu.reciprocal %679 {approx = true} : vector<8x128xf32> -> vector<8x128xf32>
    %681 = arith.mulf %677, %680 : vector<8x128xf32>
    %682 = math.sqrt %681 : vector<8x128xf32>
    %cst_158 = arith.constant 2.14450693 : f32
    %683 = vector.broadcast %cst_158 : f32 to vector<8x128xf32>
    %684 = arith.mulf %658, %683 : vector<8x128xf32>
    %cst_159 = arith.constant 0.000000e+00 : f32
    %685 = vector.broadcast %cst_159 : f32 to vector<8x128xf32>
    %686 = arith.cmpf ogt, %658, %685 : vector<8x128xf32>
    %687 = arith.cmpf ole, %665, %684 : vector<8x128xf32>
    %688 = arith.andi %686, %687 : vector<8x128xi1>
    %cst_160 = arith.constant 0.000000e+00 : f32
    %689 = vector.broadcast %cst_160 : f32 to vector<8x128xf32>
    %690 = arith.subf %689, %684 : vector<8x128xf32>
    %691 = arith.cmpf ogt, %665, %690 : vector<8x128xf32>
    %692 = arith.andi %688, %691 : vector<8x128xi1>
    %cst_161 = arith.constant 0.00999999977 : f32
    %693 = vector.broadcast %cst_161 : f32 to vector<8x128xf32>
    %694 = arith.cmpf ogt, %677, %693 : vector<8x128xf32>
    %695 = arith.andi %692, %694 : vector<8x128xi1>
    %cst_162 = arith.constant 1.000000e+02 : f32
    %696 = vector.broadcast %cst_162 : f32 to vector<8x128xf32>
    %697 = arith.cmpf ole, %677, %696 : vector<8x128xf32>
    %698 = arith.andi %695, %697 : vector<8x128xi1>
    %699 = arith.addf %677, %91 : vector<8x128xf32>
    %cst_163 = arith.constant 2.000000e+00 : f32
    %700 = vector.broadcast %cst_163 : f32 to vector<8x128xf32>
    %701 = arith.mulf %700, %88 : vector<8x128xf32>
    %702 = arith.mulf %89, %658 : vector<8x128xf32>
    %703 = arith.mulf %90, %665 : vector<8x128xf32>
    %704 = arith.addf %702, %703 : vector<8x128xf32>
    %705 = arith.mulf %682, %704 : vector<8x128xf32>
    %706 = arith.mulf %701, %705 : vector<8x128xf32>
    %707 = arith.subf %699, %706 : vector<8x128xf32>
    %708 = arith.addf %677, %110 : vector<8x128xf32>
    %cst_164 = arith.constant 2.000000e+00 : f32
    %709 = vector.broadcast %cst_164 : f32 to vector<8x128xf32>
    %710 = arith.mulf %709, %107 : vector<8x128xf32>
    %711 = arith.mulf %108, %658 : vector<8x128xf32>
    %712 = arith.mulf %109, %665 : vector<8x128xf32>
    %713 = arith.addf %711, %712 : vector<8x128xf32>
    %714 = arith.mulf %682, %713 : vector<8x128xf32>
    %715 = arith.mulf %710, %714 : vector<8x128xf32>
    %716 = arith.subf %708, %715 : vector<8x128xf32>
    %717 = arith.minimumf %649, %707 : vector<8x128xf32>
    %718 = arith.minimumf %650, %716 : vector<8x128xf32>
    %719 = arith.andi %651, %698 : vector<8x128xi1>
    %cst_165 = arith.constant 0.99939084 : f32
    %720 = vector.broadcast %cst_165 : f32 to vector<8x128xf32>
    %721 = arith.mulf %720, %56 : vector<8x128xf32>
    %cst_166 = arith.constant 0.0348994955 : f32
    %722 = vector.broadcast %cst_166 : f32 to vector<8x128xf32>
    %723 = arith.mulf %722, %58 : vector<8x128xf32>
    %724 = arith.addf %721, %723 : vector<8x128xf32>
    %725 = vector.broadcast %49 : f32 to vector<8x128xf32>
    %726 = arith.addf %724, %725 : vector<8x128xf32>
    %cst_167 = arith.constant 0.99939084 : f32
    %727 = vector.broadcast %cst_167 : f32 to vector<8x128xf32>
    %728 = arith.mulf %727, %63 : vector<8x128xf32>
    %cst_168 = arith.constant 0.0348994955 : f32
    %729 = vector.broadcast %cst_168 : f32 to vector<8x128xf32>
    %730 = arith.mulf %729, %65 : vector<8x128xf32>
    %731 = arith.addf %728, %730 : vector<8x128xf32>
    %732 = vector.broadcast %50 : f32 to vector<8x128xf32>
    %733 = arith.addf %731, %732 : vector<8x128xf32>
    %cst_169 = arith.constant 0.99939084 : f32
    %734 = vector.broadcast %cst_169 : f32 to vector<8x128xf32>
    %735 = arith.mulf %734, %70 : vector<8x128xf32>
    %cst_170 = arith.constant 0.0348994955 : f32
    %736 = vector.broadcast %cst_170 : f32 to vector<8x128xf32>
    %737 = arith.mulf %736, %72 : vector<8x128xf32>
    %738 = arith.addf %735, %737 : vector<8x128xf32>
    %739 = vector.broadcast %51 : f32 to vector<8x128xf32>
    %740 = arith.addf %738, %739 : vector<8x128xf32>
    %741 = arith.mulf %726, %726 : vector<8x128xf32>
    %742 = arith.mulf %733, %733 : vector<8x128xf32>
    %743 = arith.addf %741, %742 : vector<8x128xf32>
    %744 = arith.mulf %740, %740 : vector<8x128xf32>
    %745 = arith.addf %743, %744 : vector<8x128xf32>
    %cst_171 = arith.constant 9.99999968E-21 : f32
    %746 = vector.broadcast %cst_171 : f32 to vector<8x128xf32>
    %747 = arith.addf %743, %746 : vector<8x128xf32>
    %748 = tpu.reciprocal %747 {approx = true} : vector<8x128xf32> -> vector<8x128xf32>
    %749 = arith.mulf %745, %748 : vector<8x128xf32>
    %750 = math.sqrt %749 : vector<8x128xf32>
    %cst_172 = arith.constant 2.14450693 : f32
    %751 = vector.broadcast %cst_172 : f32 to vector<8x128xf32>
    %752 = arith.mulf %726, %751 : vector<8x128xf32>
    %cst_173 = arith.constant 0.000000e+00 : f32
    %753 = vector.broadcast %cst_173 : f32 to vector<8x128xf32>
    %754 = arith.cmpf ogt, %726, %753 : vector<8x128xf32>
    %755 = arith.cmpf ole, %733, %752 : vector<8x128xf32>
    %756 = arith.andi %754, %755 : vector<8x128xi1>
    %cst_174 = arith.constant 0.000000e+00 : f32
    %757 = vector.broadcast %cst_174 : f32 to vector<8x128xf32>
    %758 = arith.subf %757, %752 : vector<8x128xf32>
    %759 = arith.cmpf ogt, %733, %758 : vector<8x128xf32>
    %760 = arith.andi %756, %759 : vector<8x128xi1>
    %cst_175 = arith.constant 0.00999999977 : f32
    %761 = vector.broadcast %cst_175 : f32 to vector<8x128xf32>
    %762 = arith.cmpf ogt, %745, %761 : vector<8x128xf32>
    %763 = arith.andi %760, %762 : vector<8x128xi1>
    %cst_176 = arith.constant 1.000000e+02 : f32
    %764 = vector.broadcast %cst_176 : f32 to vector<8x128xf32>
    %765 = arith.cmpf ole, %745, %764 : vector<8x128xf32>
    %766 = arith.andi %763, %765 : vector<8x128xi1>
    %767 = arith.addf %745, %91 : vector<8x128xf32>
    %cst_177 = arith.constant 2.000000e+00 : f32
    %768 = vector.broadcast %cst_177 : f32 to vector<8x128xf32>
    %769 = arith.mulf %768, %88 : vector<8x128xf32>
    %770 = arith.mulf %89, %726 : vector<8x128xf32>
    %771 = arith.mulf %90, %733 : vector<8x128xf32>
    %772 = arith.addf %770, %771 : vector<8x128xf32>
    %773 = arith.mulf %750, %772 : vector<8x128xf32>
    %774 = arith.mulf %769, %773 : vector<8x128xf32>
    %775 = arith.subf %767, %774 : vector<8x128xf32>
    %776 = arith.addf %745, %110 : vector<8x128xf32>
    %cst_178 = arith.constant 2.000000e+00 : f32
    %777 = vector.broadcast %cst_178 : f32 to vector<8x128xf32>
    %778 = arith.mulf %777, %107 : vector<8x128xf32>
    %779 = arith.mulf %108, %726 : vector<8x128xf32>
    %780 = arith.mulf %109, %733 : vector<8x128xf32>
    %781 = arith.addf %779, %780 : vector<8x128xf32>
    %782 = arith.mulf %750, %781 : vector<8x128xf32>
    %783 = arith.mulf %778, %782 : vector<8x128xf32>
    %784 = arith.subf %776, %783 : vector<8x128xf32>
    %785 = arith.minimumf %717, %775 : vector<8x128xf32>
    %786 = arith.minimumf %718, %784 : vector<8x128xf32>
    %787 = arith.andi %719, %766 : vector<8x128xi1>
    %cst_179 = arith.constant 0.998308181 : f32
    %788 = vector.broadcast %cst_179 : f32 to vector<8x128xf32>
    %789 = arith.mulf %788, %56 : vector<8x128xf32>
    %cst_180 = arith.constant 0.0581448302 : f32
    %790 = vector.broadcast %cst_180 : f32 to vector<8x128xf32>
    %791 = arith.mulf %790, %58 : vector<8x128xf32>
    %792 = arith.addf %789, %791 : vector<8x128xf32>
    %793 = vector.broadcast %49 : f32 to vector<8x128xf32>
    %794 = arith.addf %792, %793 : vector<8x128xf32>
    %cst_181 = arith.constant 0.998308181 : f32
    %795 = vector.broadcast %cst_181 : f32 to vector<8x128xf32>
    %796 = arith.mulf %795, %63 : vector<8x128xf32>
    %cst_182 = arith.constant 0.0581448302 : f32
    %797 = vector.broadcast %cst_182 : f32 to vector<8x128xf32>
    %798 = arith.mulf %797, %65 : vector<8x128xf32>
    %799 = arith.addf %796, %798 : vector<8x128xf32>
    %800 = vector.broadcast %50 : f32 to vector<8x128xf32>
    %801 = arith.addf %799, %800 : vector<8x128xf32>
    %cst_183 = arith.constant 0.998308181 : f32
    %802 = vector.broadcast %cst_183 : f32 to vector<8x128xf32>
    %803 = arith.mulf %802, %70 : vector<8x128xf32>
    %cst_184 = arith.constant 0.0581448302 : f32
    %804 = vector.broadcast %cst_184 : f32 to vector<8x128xf32>
    %805 = arith.mulf %804, %72 : vector<8x128xf32>
    %806 = arith.addf %803, %805 : vector<8x128xf32>
    %807 = vector.broadcast %51 : f32 to vector<8x128xf32>
    %808 = arith.addf %806, %807 : vector<8x128xf32>
    %809 = arith.mulf %794, %794 : vector<8x128xf32>
    %810 = arith.mulf %801, %801 : vector<8x128xf32>
    %811 = arith.addf %809, %810 : vector<8x128xf32>
    %812 = arith.mulf %808, %808 : vector<8x128xf32>
    %813 = arith.addf %811, %812 : vector<8x128xf32>
    %cst_185 = arith.constant 9.99999968E-21 : f32
    %814 = vector.broadcast %cst_185 : f32 to vector<8x128xf32>
    %815 = arith.addf %811, %814 : vector<8x128xf32>
    %816 = tpu.reciprocal %815 {approx = true} : vector<8x128xf32> -> vector<8x128xf32>
    %817 = arith.mulf %813, %816 : vector<8x128xf32>
    %818 = math.sqrt %817 : vector<8x128xf32>
    %cst_186 = arith.constant 2.14450693 : f32
    %819 = vector.broadcast %cst_186 : f32 to vector<8x128xf32>
    %820 = arith.mulf %794, %819 : vector<8x128xf32>
    %cst_187 = arith.constant 0.000000e+00 : f32
    %821 = vector.broadcast %cst_187 : f32 to vector<8x128xf32>
    %822 = arith.cmpf ogt, %794, %821 : vector<8x128xf32>
    %823 = arith.cmpf ole, %801, %820 : vector<8x128xf32>
    %824 = arith.andi %822, %823 : vector<8x128xi1>
    %cst_188 = arith.constant 0.000000e+00 : f32
    %825 = vector.broadcast %cst_188 : f32 to vector<8x128xf32>
    %826 = arith.subf %825, %820 : vector<8x128xf32>
    %827 = arith.cmpf ogt, %801, %826 : vector<8x128xf32>
    %828 = arith.andi %824, %827 : vector<8x128xi1>
    %cst_189 = arith.constant 0.00999999977 : f32
    %829 = vector.broadcast %cst_189 : f32 to vector<8x128xf32>
    %830 = arith.cmpf ogt, %813, %829 : vector<8x128xf32>
    %831 = arith.andi %828, %830 : vector<8x128xi1>
    %cst_190 = arith.constant 1.000000e+02 : f32
    %832 = vector.broadcast %cst_190 : f32 to vector<8x128xf32>
    %833 = arith.cmpf ole, %813, %832 : vector<8x128xf32>
    %834 = arith.andi %831, %833 : vector<8x128xi1>
    %835 = arith.addf %813, %91 : vector<8x128xf32>
    %cst_191 = arith.constant 2.000000e+00 : f32
    %836 = vector.broadcast %cst_191 : f32 to vector<8x128xf32>
    %837 = arith.mulf %836, %88 : vector<8x128xf32>
    %838 = arith.mulf %89, %794 : vector<8x128xf32>
    %839 = arith.mulf %90, %801 : vector<8x128xf32>
    %840 = arith.addf %838, %839 : vector<8x128xf32>
    %841 = arith.mulf %818, %840 : vector<8x128xf32>
    %842 = arith.mulf %837, %841 : vector<8x128xf32>
    %843 = arith.subf %835, %842 : vector<8x128xf32>
    %844 = arith.addf %813, %110 : vector<8x128xf32>
    %cst_192 = arith.constant 2.000000e+00 : f32
    %845 = vector.broadcast %cst_192 : f32 to vector<8x128xf32>
    %846 = arith.mulf %845, %107 : vector<8x128xf32>
    %847 = arith.mulf %108, %794 : vector<8x128xf32>
    %848 = arith.mulf %109, %801 : vector<8x128xf32>
    %849 = arith.addf %847, %848 : vector<8x128xf32>
    %850 = arith.mulf %818, %849 : vector<8x128xf32>
    %851 = arith.mulf %846, %850 : vector<8x128xf32>
    %852 = arith.subf %844, %851 : vector<8x128xf32>
    %853 = arith.minimumf %785, %843 : vector<8x128xf32>
    %854 = arith.minimumf %786, %852 : vector<8x128xf32>
    %855 = arith.andi %787, %834 : vector<8x128xi1>
    %cst_193 = arith.constant 0.996684908 : f32
    %856 = vector.broadcast %cst_193 : f32 to vector<8x128xf32>
    %857 = arith.mulf %856, %56 : vector<8x128xf32>
    %cst_194 = arith.constant 0.0813586711 : f32
    %858 = vector.broadcast %cst_194 : f32 to vector<8x128xf32>
    %859 = arith.mulf %858, %58 : vector<8x128xf32>
    %860 = arith.addf %857, %859 : vector<8x128xf32>
    %861 = vector.broadcast %49 : f32 to vector<8x128xf32>
    %862 = arith.addf %860, %861 : vector<8x128xf32>
    %cst_195 = arith.constant 0.996684908 : f32
    %863 = vector.broadcast %cst_195 : f32 to vector<8x128xf32>
    %864 = arith.mulf %863, %63 : vector<8x128xf32>
    %cst_196 = arith.constant 0.0813586711 : f32
    %865 = vector.broadcast %cst_196 : f32 to vector<8x128xf32>
    %866 = arith.mulf %865, %65 : vector<8x128xf32>
    %867 = arith.addf %864, %866 : vector<8x128xf32>
    %868 = vector.broadcast %50 : f32 to vector<8x128xf32>
    %869 = arith.addf %867, %868 : vector<8x128xf32>
    %cst_197 = arith.constant 0.996684908 : f32
    %870 = vector.broadcast %cst_197 : f32 to vector<8x128xf32>
    %871 = arith.mulf %870, %70 : vector<8x128xf32>
    %cst_198 = arith.constant 0.0813586711 : f32
    %872 = vector.broadcast %cst_198 : f32 to vector<8x128xf32>
    %873 = arith.mulf %872, %72 : vector<8x128xf32>
    %874 = arith.addf %871, %873 : vector<8x128xf32>
    %875 = vector.broadcast %51 : f32 to vector<8x128xf32>
    %876 = arith.addf %874, %875 : vector<8x128xf32>
    %877 = arith.mulf %862, %862 : vector<8x128xf32>
    %878 = arith.mulf %869, %869 : vector<8x128xf32>
    %879 = arith.addf %877, %878 : vector<8x128xf32>
    %880 = arith.mulf %876, %876 : vector<8x128xf32>
    %881 = arith.addf %879, %880 : vector<8x128xf32>
    %cst_199 = arith.constant 9.99999968E-21 : f32
    %882 = vector.broadcast %cst_199 : f32 to vector<8x128xf32>
    %883 = arith.addf %879, %882 : vector<8x128xf32>
    %884 = tpu.reciprocal %883 {approx = true} : vector<8x128xf32> -> vector<8x128xf32>
    %885 = arith.mulf %881, %884 : vector<8x128xf32>
    %886 = math.sqrt %885 : vector<8x128xf32>
    %cst_200 = arith.constant 2.14450693 : f32
    %887 = vector.broadcast %cst_200 : f32 to vector<8x128xf32>
    %888 = arith.mulf %862, %887 : vector<8x128xf32>
    %cst_201 = arith.constant 0.000000e+00 : f32
    %889 = vector.broadcast %cst_201 : f32 to vector<8x128xf32>
    %890 = arith.cmpf ogt, %862, %889 : vector<8x128xf32>
    %891 = arith.cmpf ole, %869, %888 : vector<8x128xf32>
    %892 = arith.andi %890, %891 : vector<8x128xi1>
    %cst_202 = arith.constant 0.000000e+00 : f32
    %893 = vector.broadcast %cst_202 : f32 to vector<8x128xf32>
    %894 = arith.subf %893, %888 : vector<8x128xf32>
    %895 = arith.cmpf ogt, %869, %894 : vector<8x128xf32>
    %896 = arith.andi %892, %895 : vector<8x128xi1>
    %cst_203 = arith.constant 0.00999999977 : f32
    %897 = vector.broadcast %cst_203 : f32 to vector<8x128xf32>
    %898 = arith.cmpf ogt, %881, %897 : vector<8x128xf32>
    %899 = arith.andi %896, %898 : vector<8x128xi1>
    %cst_204 = arith.constant 1.000000e+02 : f32
    %900 = vector.broadcast %cst_204 : f32 to vector<8x128xf32>
    %901 = arith.cmpf ole, %881, %900 : vector<8x128xf32>
    %902 = arith.andi %899, %901 : vector<8x128xi1>
    %903 = arith.addf %881, %91 : vector<8x128xf32>
    %cst_205 = arith.constant 2.000000e+00 : f32
    %904 = vector.broadcast %cst_205 : f32 to vector<8x128xf32>
    %905 = arith.mulf %904, %88 : vector<8x128xf32>
    %906 = arith.mulf %89, %862 : vector<8x128xf32>
    %907 = arith.mulf %90, %869 : vector<8x128xf32>
    %908 = arith.addf %906, %907 : vector<8x128xf32>
    %909 = arith.mulf %886, %908 : vector<8x128xf32>
    %910 = arith.mulf %905, %909 : vector<8x128xf32>
    %911 = arith.subf %903, %910 : vector<8x128xf32>
    %912 = arith.addf %881, %110 : vector<8x128xf32>
    %cst_206 = arith.constant 2.000000e+00 : f32
    %913 = vector.broadcast %cst_206 : f32 to vector<8x128xf32>
    %914 = arith.mulf %913, %107 : vector<8x128xf32>
    %915 = arith.mulf %108, %862 : vector<8x128xf32>
    %916 = arith.mulf %109, %869 : vector<8x128xf32>
    %917 = arith.addf %915, %916 : vector<8x128xf32>
    %918 = arith.mulf %886, %917 : vector<8x128xf32>
    %919 = arith.mulf %914, %918 : vector<8x128xf32>
    %920 = arith.subf %912, %919 : vector<8x128xf32>
    %921 = arith.minimumf %853, %911 : vector<8x128xf32>
    %922 = arith.minimumf %854, %920 : vector<8x128xf32>
    %923 = arith.andi %855, %902 : vector<8x128xi1>
    %cst_207 = arith.constant 0.994521915 : f32
    %924 = vector.broadcast %cst_207 : f32 to vector<8x128xf32>
    %925 = arith.mulf %924, %56 : vector<8x128xf32>
    %cst_208 = arith.constant 0.104528464 : f32
    %926 = vector.broadcast %cst_208 : f32 to vector<8x128xf32>
    %927 = arith.mulf %926, %58 : vector<8x128xf32>
    %928 = arith.addf %925, %927 : vector<8x128xf32>
    %929 = vector.broadcast %49 : f32 to vector<8x128xf32>
    %930 = arith.addf %928, %929 : vector<8x128xf32>
    %cst_209 = arith.constant 0.994521915 : f32
    %931 = vector.broadcast %cst_209 : f32 to vector<8x128xf32>
    %932 = arith.mulf %931, %63 : vector<8x128xf32>
    %cst_210 = arith.constant 0.104528464 : f32
    %933 = vector.broadcast %cst_210 : f32 to vector<8x128xf32>
    %934 = arith.mulf %933, %65 : vector<8x128xf32>
    %935 = arith.addf %932, %934 : vector<8x128xf32>
    %936 = vector.broadcast %50 : f32 to vector<8x128xf32>
    %937 = arith.addf %935, %936 : vector<8x128xf32>
    %cst_211 = arith.constant 0.994521915 : f32
    %938 = vector.broadcast %cst_211 : f32 to vector<8x128xf32>
    %939 = arith.mulf %938, %70 : vector<8x128xf32>
    %cst_212 = arith.constant 0.104528464 : f32
    %940 = vector.broadcast %cst_212 : f32 to vector<8x128xf32>
    %941 = arith.mulf %940, %72 : vector<8x128xf32>
    %942 = arith.addf %939, %941 : vector<8x128xf32>
    %943 = vector.broadcast %51 : f32 to vector<8x128xf32>
    %944 = arith.addf %942, %943 : vector<8x128xf32>
    %945 = arith.mulf %930, %930 : vector<8x128xf32>
    %946 = arith.mulf %937, %937 : vector<8x128xf32>
    %947 = arith.addf %945, %946 : vector<8x128xf32>
    %948 = arith.mulf %944, %944 : vector<8x128xf32>
    %949 = arith.addf %947, %948 : vector<8x128xf32>
    %cst_213 = arith.constant 9.99999968E-21 : f32
    %950 = vector.broadcast %cst_213 : f32 to vector<8x128xf32>
    %951 = arith.addf %947, %950 : vector<8x128xf32>
    %952 = tpu.reciprocal %951 {approx = true} : vector<8x128xf32> -> vector<8x128xf32>
    %953 = arith.mulf %949, %952 : vector<8x128xf32>
    %954 = math.sqrt %953 : vector<8x128xf32>
    %cst_214 = arith.constant 2.14450693 : f32
    %955 = vector.broadcast %cst_214 : f32 to vector<8x128xf32>
    %956 = arith.mulf %930, %955 : vector<8x128xf32>
    %cst_215 = arith.constant 0.000000e+00 : f32
    %957 = vector.broadcast %cst_215 : f32 to vector<8x128xf32>
    %958 = arith.cmpf ogt, %930, %957 : vector<8x128xf32>
    %959 = arith.cmpf ole, %937, %956 : vector<8x128xf32>
    %960 = arith.andi %958, %959 : vector<8x128xi1>
    %cst_216 = arith.constant 0.000000e+00 : f32
    %961 = vector.broadcast %cst_216 : f32 to vector<8x128xf32>
    %962 = arith.subf %961, %956 : vector<8x128xf32>
    %963 = arith.cmpf ogt, %937, %962 : vector<8x128xf32>
    %964 = arith.andi %960, %963 : vector<8x128xi1>
    %cst_217 = arith.constant 0.00999999977 : f32
    %965 = vector.broadcast %cst_217 : f32 to vector<8x128xf32>
    %966 = arith.cmpf ogt, %949, %965 : vector<8x128xf32>
    %967 = arith.andi %964, %966 : vector<8x128xi1>
    %cst_218 = arith.constant 1.000000e+02 : f32
    %968 = vector.broadcast %cst_218 : f32 to vector<8x128xf32>
    %969 = arith.cmpf ole, %949, %968 : vector<8x128xf32>
    %970 = arith.andi %967, %969 : vector<8x128xi1>
    %971 = arith.addf %949, %91 : vector<8x128xf32>
    %cst_219 = arith.constant 2.000000e+00 : f32
    %972 = vector.broadcast %cst_219 : f32 to vector<8x128xf32>
    %973 = arith.mulf %972, %88 : vector<8x128xf32>
    %974 = arith.mulf %89, %930 : vector<8x128xf32>
    %975 = arith.mulf %90, %937 : vector<8x128xf32>
    %976 = arith.addf %974, %975 : vector<8x128xf32>
    %977 = arith.mulf %954, %976 : vector<8x128xf32>
    %978 = arith.mulf %973, %977 : vector<8x128xf32>
    %979 = arith.subf %971, %978 : vector<8x128xf32>
    %980 = arith.addf %949, %110 : vector<8x128xf32>
    %cst_220 = arith.constant 2.000000e+00 : f32
    %981 = vector.broadcast %cst_220 : f32 to vector<8x128xf32>
    %982 = arith.mulf %981, %107 : vector<8x128xf32>
    %983 = arith.mulf %108, %930 : vector<8x128xf32>
    %984 = arith.mulf %109, %937 : vector<8x128xf32>
    %985 = arith.addf %983, %984 : vector<8x128xf32>
    %986 = arith.mulf %954, %985 : vector<8x128xf32>
    %987 = arith.mulf %982, %986 : vector<8x128xf32>
    %988 = arith.subf %980, %987 : vector<8x128xf32>
    %989 = arith.minimumf %921, %979 : vector<8x128xf32>
    %990 = arith.minimumf %922, %988 : vector<8x128xf32>
    %991 = arith.andi %923, %970 : vector<8x128xi1>
    %cst_221 = arith.constant 0.991820335 : f32
    %992 = vector.broadcast %cst_221 : f32 to vector<8x128xf32>
    %993 = arith.mulf %992, %56 : vector<8x128xf32>
    %cst_222 = arith.constant 0.127641648 : f32
    %994 = vector.broadcast %cst_222 : f32 to vector<8x128xf32>
    %995 = arith.mulf %994, %58 : vector<8x128xf32>
    %996 = arith.addf %993, %995 : vector<8x128xf32>
    %997 = vector.broadcast %49 : f32 to vector<8x128xf32>
    %998 = arith.addf %996, %997 : vector<8x128xf32>
    %cst_223 = arith.constant 0.991820335 : f32
    %999 = vector.broadcast %cst_223 : f32 to vector<8x128xf32>
    %1000 = arith.mulf %999, %63 : vector<8x128xf32>
    %cst_224 = arith.constant 0.127641648 : f32
    %1001 = vector.broadcast %cst_224 : f32 to vector<8x128xf32>
    %1002 = arith.mulf %1001, %65 : vector<8x128xf32>
    %1003 = arith.addf %1000, %1002 : vector<8x128xf32>
    %1004 = vector.broadcast %50 : f32 to vector<8x128xf32>
    %1005 = arith.addf %1003, %1004 : vector<8x128xf32>
    %cst_225 = arith.constant 0.991820335 : f32
    %1006 = vector.broadcast %cst_225 : f32 to vector<8x128xf32>
    %1007 = arith.mulf %1006, %70 : vector<8x128xf32>
    %cst_226 = arith.constant 0.127641648 : f32
    %1008 = vector.broadcast %cst_226 : f32 to vector<8x128xf32>
    %1009 = arith.mulf %1008, %72 : vector<8x128xf32>
    %1010 = arith.addf %1007, %1009 : vector<8x128xf32>
    %1011 = vector.broadcast %51 : f32 to vector<8x128xf32>
    %1012 = arith.addf %1010, %1011 : vector<8x128xf32>
    %1013 = arith.mulf %998, %998 : vector<8x128xf32>
    %1014 = arith.mulf %1005, %1005 : vector<8x128xf32>
    %1015 = arith.addf %1013, %1014 : vector<8x128xf32>
    %1016 = arith.mulf %1012, %1012 : vector<8x128xf32>
    %1017 = arith.addf %1015, %1016 : vector<8x128xf32>
    %cst_227 = arith.constant 9.99999968E-21 : f32
    %1018 = vector.broadcast %cst_227 : f32 to vector<8x128xf32>
    %1019 = arith.addf %1015, %1018 : vector<8x128xf32>
    %1020 = tpu.reciprocal %1019 {approx = true} : vector<8x128xf32> -> vector<8x128xf32>
    %1021 = arith.mulf %1017, %1020 : vector<8x128xf32>
    %1022 = math.sqrt %1021 : vector<8x128xf32>
    %cst_228 = arith.constant 2.14450693 : f32
    %1023 = vector.broadcast %cst_228 : f32 to vector<8x128xf32>
    %1024 = arith.mulf %998, %1023 : vector<8x128xf32>
    %cst_229 = arith.constant 0.000000e+00 : f32
    %1025 = vector.broadcast %cst_229 : f32 to vector<8x128xf32>
    %1026 = arith.cmpf ogt, %998, %1025 : vector<8x128xf32>
    %1027 = arith.cmpf ole, %1005, %1024 : vector<8x128xf32>
    %1028 = arith.andi %1026, %1027 : vector<8x128xi1>
    %cst_230 = arith.constant 0.000000e+00 : f32
    %1029 = vector.broadcast %cst_230 : f32 to vector<8x128xf32>
    %1030 = arith.subf %1029, %1024 : vector<8x128xf32>
    %1031 = arith.cmpf ogt, %1005, %1030 : vector<8x128xf32>
    %1032 = arith.andi %1028, %1031 : vector<8x128xi1>
    %cst_231 = arith.constant 0.00999999977 : f32
    %1033 = vector.broadcast %cst_231 : f32 to vector<8x128xf32>
    %1034 = arith.cmpf ogt, %1017, %1033 : vector<8x128xf32>
    %1035 = arith.andi %1032, %1034 : vector<8x128xi1>
    %cst_232 = arith.constant 1.000000e+02 : f32
    %1036 = vector.broadcast %cst_232 : f32 to vector<8x128xf32>
    %1037 = arith.cmpf ole, %1017, %1036 : vector<8x128xf32>
    %1038 = arith.andi %1035, %1037 : vector<8x128xi1>
    %1039 = arith.addf %1017, %91 : vector<8x128xf32>
    %cst_233 = arith.constant 2.000000e+00 : f32
    %1040 = vector.broadcast %cst_233 : f32 to vector<8x128xf32>
    %1041 = arith.mulf %1040, %88 : vector<8x128xf32>
    %1042 = arith.mulf %89, %998 : vector<8x128xf32>
    %1043 = arith.mulf %90, %1005 : vector<8x128xf32>
    %1044 = arith.addf %1042, %1043 : vector<8x128xf32>
    %1045 = arith.mulf %1022, %1044 : vector<8x128xf32>
    %1046 = arith.mulf %1041, %1045 : vector<8x128xf32>
    %1047 = arith.subf %1039, %1046 : vector<8x128xf32>
    %1048 = arith.addf %1017, %110 : vector<8x128xf32>
    %cst_234 = arith.constant 2.000000e+00 : f32
    %1049 = vector.broadcast %cst_234 : f32 to vector<8x128xf32>
    %1050 = arith.mulf %1049, %107 : vector<8x128xf32>
    %1051 = arith.mulf %108, %998 : vector<8x128xf32>
    %1052 = arith.mulf %109, %1005 : vector<8x128xf32>
    %1053 = arith.addf %1051, %1052 : vector<8x128xf32>
    %1054 = arith.mulf %1022, %1053 : vector<8x128xf32>
    %1055 = arith.mulf %1050, %1054 : vector<8x128xf32>
    %1056 = arith.subf %1048, %1055 : vector<8x128xf32>
    %1057 = arith.minimumf %989, %1047 : vector<8x128xf32>
    %1058 = arith.minimumf %990, %1056 : vector<8x128xf32>
    %1059 = arith.andi %991, %1038 : vector<8x128xi1>
    %cst_235 = arith.constant 0.988581717 : f32
    %1060 = vector.broadcast %cst_235 : f32 to vector<8x128xf32>
    %1061 = arith.mulf %1060, %56 : vector<8x128xf32>
    %cst_236 = arith.constant 0.150685713 : f32
    %1062 = vector.broadcast %cst_236 : f32 to vector<8x128xf32>
    %1063 = arith.mulf %1062, %58 : vector<8x128xf32>
    %1064 = arith.addf %1061, %1063 : vector<8x128xf32>
    %1065 = vector.broadcast %49 : f32 to vector<8x128xf32>
    %1066 = arith.addf %1064, %1065 : vector<8x128xf32>
    %cst_237 = arith.constant 0.988581717 : f32
    %1067 = vector.broadcast %cst_237 : f32 to vector<8x128xf32>
    %1068 = arith.mulf %1067, %63 : vector<8x128xf32>
    %cst_238 = arith.constant 0.150685713 : f32
    %1069 = vector.broadcast %cst_238 : f32 to vector<8x128xf32>
    %1070 = arith.mulf %1069, %65 : vector<8x128xf32>
    %1071 = arith.addf %1068, %1070 : vector<8x128xf32>
    %1072 = vector.broadcast %50 : f32 to vector<8x128xf32>
    %1073 = arith.addf %1071, %1072 : vector<8x128xf32>
    %cst_239 = arith.constant 0.988581717 : f32
    %1074 = vector.broadcast %cst_239 : f32 to vector<8x128xf32>
    %1075 = arith.mulf %1074, %70 : vector<8x128xf32>
    %cst_240 = arith.constant 0.150685713 : f32
    %1076 = vector.broadcast %cst_240 : f32 to vector<8x128xf32>
    %1077 = arith.mulf %1076, %72 : vector<8x128xf32>
    %1078 = arith.addf %1075, %1077 : vector<8x128xf32>
    %1079 = vector.broadcast %51 : f32 to vector<8x128xf32>
    %1080 = arith.addf %1078, %1079 : vector<8x128xf32>
    %1081 = arith.mulf %1066, %1066 : vector<8x128xf32>
    %1082 = arith.mulf %1073, %1073 : vector<8x128xf32>
    %1083 = arith.addf %1081, %1082 : vector<8x128xf32>
    %1084 = arith.mulf %1080, %1080 : vector<8x128xf32>
    %1085 = arith.addf %1083, %1084 : vector<8x128xf32>
    %cst_241 = arith.constant 9.99999968E-21 : f32
    %1086 = vector.broadcast %cst_241 : f32 to vector<8x128xf32>
    %1087 = arith.addf %1083, %1086 : vector<8x128xf32>
    %1088 = tpu.reciprocal %1087 {approx = true} : vector<8x128xf32> -> vector<8x128xf32>
    %1089 = arith.mulf %1085, %1088 : vector<8x128xf32>
    %1090 = math.sqrt %1089 : vector<8x128xf32>
    %cst_242 = arith.constant 2.14450693 : f32
    %1091 = vector.broadcast %cst_242 : f32 to vector<8x128xf32>
    %1092 = arith.mulf %1066, %1091 : vector<8x128xf32>
    %cst_243 = arith.constant 0.000000e+00 : f32
    %1093 = vector.broadcast %cst_243 : f32 to vector<8x128xf32>
    %1094 = arith.cmpf ogt, %1066, %1093 : vector<8x128xf32>
    %1095 = arith.cmpf ole, %1073, %1092 : vector<8x128xf32>
    %1096 = arith.andi %1094, %1095 : vector<8x128xi1>
    %cst_244 = arith.constant 0.000000e+00 : f32
    %1097 = vector.broadcast %cst_244 : f32 to vector<8x128xf32>
    %1098 = arith.subf %1097, %1092 : vector<8x128xf32>
    %1099 = arith.cmpf ogt, %1073, %1098 : vector<8x128xf32>
    %1100 = arith.andi %1096, %1099 : vector<8x128xi1>
    %cst_245 = arith.constant 0.00999999977 : f32
    %1101 = vector.broadcast %cst_245 : f32 to vector<8x128xf32>
    %1102 = arith.cmpf ogt, %1085, %1101 : vector<8x128xf32>
    %1103 = arith.andi %1100, %1102 : vector<8x128xi1>
    %cst_246 = arith.constant 1.000000e+02 : f32
    %1104 = vector.broadcast %cst_246 : f32 to vector<8x128xf32>
    %1105 = arith.cmpf ole, %1085, %1104 : vector<8x128xf32>
    %1106 = arith.andi %1103, %1105 : vector<8x128xi1>
    %1107 = arith.addf %1085, %91 : vector<8x128xf32>
    %cst_247 = arith.constant 2.000000e+00 : f32
    %1108 = vector.broadcast %cst_247 : f32 to vector<8x128xf32>
    %1109 = arith.mulf %1108, %88 : vector<8x128xf32>
    %1110 = arith.mulf %89, %1066 : vector<8x128xf32>
    %1111 = arith.mulf %90, %1073 : vector<8x128xf32>
    %1112 = arith.addf %1110, %1111 : vector<8x128xf32>
    %1113 = arith.mulf %1090, %1112 : vector<8x128xf32>
    %1114 = arith.mulf %1109, %1113 : vector<8x128xf32>
    %1115 = arith.subf %1107, %1114 : vector<8x128xf32>
    %1116 = arith.addf %1085, %110 : vector<8x128xf32>
    %cst_248 = arith.constant 2.000000e+00 : f32
    %1117 = vector.broadcast %cst_248 : f32 to vector<8x128xf32>
    %1118 = arith.mulf %1117, %107 : vector<8x128xf32>
    %1119 = arith.mulf %108, %1066 : vector<8x128xf32>
    %1120 = arith.mulf %109, %1073 : vector<8x128xf32>
    %1121 = arith.addf %1119, %1120 : vector<8x128xf32>
    %1122 = arith.mulf %1090, %1121 : vector<8x128xf32>
    %1123 = arith.mulf %1118, %1122 : vector<8x128xf32>
    %1124 = arith.subf %1116, %1123 : vector<8x128xf32>
    %1125 = arith.minimumf %1057, %1115 : vector<8x128xf32>
    %1126 = arith.minimumf %1058, %1124 : vector<8x128xf32>
    %1127 = arith.andi %1059, %1106 : vector<8x128xi1>
    %cst_249 = arith.constant 0.984807729 : f32
    %1128 = vector.broadcast %cst_249 : f32 to vector<8x128xf32>
    %1129 = arith.mulf %1128, %56 : vector<8x128xf32>
    %cst_250 = arith.constant 0.173648179 : f32
    %1130 = vector.broadcast %cst_250 : f32 to vector<8x128xf32>
    %1131 = arith.mulf %1130, %58 : vector<8x128xf32>
    %1132 = arith.addf %1129, %1131 : vector<8x128xf32>
    %1133 = vector.broadcast %49 : f32 to vector<8x128xf32>
    %1134 = arith.addf %1132, %1133 : vector<8x128xf32>
    %cst_251 = arith.constant 0.984807729 : f32
    %1135 = vector.broadcast %cst_251 : f32 to vector<8x128xf32>
    %1136 = arith.mulf %1135, %63 : vector<8x128xf32>
    %cst_252 = arith.constant 0.173648179 : f32
    %1137 = vector.broadcast %cst_252 : f32 to vector<8x128xf32>
    %1138 = arith.mulf %1137, %65 : vector<8x128xf32>
    %1139 = arith.addf %1136, %1138 : vector<8x128xf32>
    %1140 = vector.broadcast %50 : f32 to vector<8x128xf32>
    %1141 = arith.addf %1139, %1140 : vector<8x128xf32>
    %cst_253 = arith.constant 0.984807729 : f32
    %1142 = vector.broadcast %cst_253 : f32 to vector<8x128xf32>
    %1143 = arith.mulf %1142, %70 : vector<8x128xf32>
    %cst_254 = arith.constant 0.173648179 : f32
    %1144 = vector.broadcast %cst_254 : f32 to vector<8x128xf32>
    %1145 = arith.mulf %1144, %72 : vector<8x128xf32>
    %1146 = arith.addf %1143, %1145 : vector<8x128xf32>
    %1147 = vector.broadcast %51 : f32 to vector<8x128xf32>
    %1148 = arith.addf %1146, %1147 : vector<8x128xf32>
    %1149 = arith.mulf %1134, %1134 : vector<8x128xf32>
    %1150 = arith.mulf %1141, %1141 : vector<8x128xf32>
    %1151 = arith.addf %1149, %1150 : vector<8x128xf32>
    %1152 = arith.mulf %1148, %1148 : vector<8x128xf32>
    %1153 = arith.addf %1151, %1152 : vector<8x128xf32>
    %cst_255 = arith.constant 9.99999968E-21 : f32
    %1154 = vector.broadcast %cst_255 : f32 to vector<8x128xf32>
    %1155 = arith.addf %1151, %1154 : vector<8x128xf32>
    %1156 = tpu.reciprocal %1155 {approx = true} : vector<8x128xf32> -> vector<8x128xf32>
    %1157 = arith.mulf %1153, %1156 : vector<8x128xf32>
    %1158 = math.sqrt %1157 : vector<8x128xf32>
    %cst_256 = arith.constant 2.14450693 : f32
    %1159 = vector.broadcast %cst_256 : f32 to vector<8x128xf32>
    %1160 = arith.mulf %1134, %1159 : vector<8x128xf32>
    %cst_257 = arith.constant 0.000000e+00 : f32
    %1161 = vector.broadcast %cst_257 : f32 to vector<8x128xf32>
    %1162 = arith.cmpf ogt, %1134, %1161 : vector<8x128xf32>
    %1163 = arith.cmpf ole, %1141, %1160 : vector<8x128xf32>
    %1164 = arith.andi %1162, %1163 : vector<8x128xi1>
    %cst_258 = arith.constant 0.000000e+00 : f32
    %1165 = vector.broadcast %cst_258 : f32 to vector<8x128xf32>
    %1166 = arith.subf %1165, %1160 : vector<8x128xf32>
    %1167 = arith.cmpf ogt, %1141, %1166 : vector<8x128xf32>
    %1168 = arith.andi %1164, %1167 : vector<8x128xi1>
    %cst_259 = arith.constant 0.00999999977 : f32
    %1169 = vector.broadcast %cst_259 : f32 to vector<8x128xf32>
    %1170 = arith.cmpf ogt, %1153, %1169 : vector<8x128xf32>
    %1171 = arith.andi %1168, %1170 : vector<8x128xi1>
    %cst_260 = arith.constant 1.000000e+02 : f32
    %1172 = vector.broadcast %cst_260 : f32 to vector<8x128xf32>
    %1173 = arith.cmpf ole, %1153, %1172 : vector<8x128xf32>
    %1174 = arith.andi %1171, %1173 : vector<8x128xi1>
    %1175 = arith.addf %1153, %91 : vector<8x128xf32>
    %cst_261 = arith.constant 2.000000e+00 : f32
    %1176 = vector.broadcast %cst_261 : f32 to vector<8x128xf32>
    %1177 = arith.mulf %1176, %88 : vector<8x128xf32>
    %1178 = arith.mulf %89, %1134 : vector<8x128xf32>
    %1179 = arith.mulf %90, %1141 : vector<8x128xf32>
    %1180 = arith.addf %1178, %1179 : vector<8x128xf32>
    %1181 = arith.mulf %1158, %1180 : vector<8x128xf32>
    %1182 = arith.mulf %1177, %1181 : vector<8x128xf32>
    %1183 = arith.subf %1175, %1182 : vector<8x128xf32>
    %1184 = arith.addf %1153, %110 : vector<8x128xf32>
    %cst_262 = arith.constant 2.000000e+00 : f32
    %1185 = vector.broadcast %cst_262 : f32 to vector<8x128xf32>
    %1186 = arith.mulf %1185, %107 : vector<8x128xf32>
    %1187 = arith.mulf %108, %1134 : vector<8x128xf32>
    %1188 = arith.mulf %109, %1141 : vector<8x128xf32>
    %1189 = arith.addf %1187, %1188 : vector<8x128xf32>
    %1190 = arith.mulf %1158, %1189 : vector<8x128xf32>
    %1191 = arith.mulf %1186, %1190 : vector<8x128xf32>
    %1192 = arith.subf %1184, %1191 : vector<8x128xf32>
    %1193 = arith.minimumf %1125, %1183 : vector<8x128xf32>
    %1194 = arith.minimumf %1126, %1192 : vector<8x128xf32>
    %1195 = arith.andi %1127, %1174 : vector<8x128xi1>
    %cst_263 = arith.constant 0.000000e+00 : f32
    %1196 = vector.broadcast %cst_263 : f32 to vector<8x128xf32>
    %1197 = arith.select %1195, %17, %1196 : vector<8x128xi1>, vector<8x128xf32>
    %c0_264 = arith.constant 0 : index
    %c0_265 = arith.constant 0 : index
    %c0_266 = arith.constant 0 : index
    %1198 = vector.load %arg9[%c0_264, %c0_265, %c0_266] : memref<2x8x128xf32, #tpu.memory_space<vmem>>, vector<1x8x128xf32>
    %1199 = vector.shape_cast %1198 : vector<1x8x128xf32> to vector<8x128xf32>
    %c0_267 = arith.constant 0 : index
    %c0_268 = arith.constant 0 : index
    %c0_269 = arith.constant 0 : index
    %1200 = vector.load %arg10[%c0_267, %c0_268, %c0_269] : memref<2x8x128xf32, #tpu.memory_space<vmem>>, vector<1x8x128xf32>
    %1201 = vector.shape_cast %1200 : vector<1x8x128xf32> to vector<8x128xf32>
    %cst_270 = arith.constant 6.400000e+01 : f32
    %1202 = vector.broadcast %cst_270 : f32 to vector<8x128xf32>
    %1203 = arith.subf %1202, %1199 : vector<8x128xf32>
    %cst_271 = arith.constant 3.545200e-02 : f32
    %1204 = vector.broadcast %cst_271 : f32 to vector<8x128xf32>
    %1205 = arith.mulf %1203, %1204 : vector<8x128xf32>
    %cst_272 = arith.constant 1.13446403 : f32
    %1206 = vector.broadcast %cst_272 : f32 to vector<8x128xf32>
    %1207 = arith.subf %1205, %1206 : vector<8x128xf32>
    %cst_273 = arith.constant 6.400000e+01 : f32
    %1208 = vector.broadcast %cst_273 : f32 to vector<8x128xf32>
    %1209 = arith.subf %1208, %1201 : vector<8x128xf32>
    %cst_274 = arith.constant 0.154687494 : f32
    %1210 = vector.broadcast %cst_274 : f32 to vector<8x128xf32>
    %1211 = arith.mulf %1210, %1209 : vector<8x128xf32>
    %cst_275 = arith.constant 1.000000e-01 : f32
    %1212 = vector.broadcast %cst_275 : f32 to vector<8x128xf32>
    %1213 = arith.addf %1211, %1212 : vector<8x128xf32>
    %1214 = arith.mulf %33, %33 : vector<8x128xf32>
    %1215 = arith.mulf %1213, %1213 : vector<8x128xf32>
    %1216 = arith.addf %1214, %1215 : vector<8x128xf32>
    %cst_276 = arith.constant 2.000000e+00 : f32
    %1217 = vector.broadcast %cst_276 : f32 to vector<8x128xf32>
    %1218 = arith.mulf %1217, %33 : vector<8x128xf32>
    %1219 = arith.mulf %1218, %1213 : vector<8x128xf32>
    %1220 = arith.subf %1207, %27 : vector<8x128xf32>
    %cst_277 = arith.constant 0.0174532924 : f32
    %1221 = vector.broadcast %cst_277 : f32 to vector<8x128xf32>
    %1222 = arith.mulf %1221, %1220 : vector<8x128xf32>
    %1223 = math.cos %1222 : vector<8x128xf32>
    %1224 = arith.mulf %1219, %1223 : vector<8x128xf32>
    %1225 = arith.subf %1216, %1224 : vector<8x128xf32>
    %c0_278 = arith.constant 0 : index
    %c0_279 = arith.constant 0 : index
    %c0_280 = arith.constant 0 : index
    %1226 = vector.load %arg11[%c0_278, %c0_279, %c0_280] : memref<2x8x128xf32, #tpu.memory_space<vmem>>, vector<1x8x128xf32>
    %1227 = vector.shape_cast %1226 : vector<1x8x128xf32> to vector<8x128xf32>
    %c0_281 = arith.constant 0 : index
    %c0_282 = arith.constant 0 : index
    %c0_283 = arith.constant 0 : index
    %1228 = vector.load %arg12[%c0_281, %c0_282, %c0_283] : memref<2x8x128xf32, #tpu.memory_space<vmem>>, vector<1x8x128xf32>
    %1229 = vector.shape_cast %1228 : vector<1x8x128xf32> to vector<8x128xf32>
    %cst_284 = arith.constant 6.400000e+01 : f32
    %1230 = vector.broadcast %cst_284 : f32 to vector<8x128xf32>
    %1231 = arith.subf %1230, %1227 : vector<8x128xf32>
    %cst_285 = arith.constant 3.545200e-02 : f32
    %1232 = vector.broadcast %cst_285 : f32 to vector<8x128xf32>
    %1233 = arith.mulf %1231, %1232 : vector<8x128xf32>
    %cst_286 = arith.constant 1.13446403 : f32
    %1234 = vector.broadcast %cst_286 : f32 to vector<8x128xf32>
    %1235 = arith.subf %1233, %1234 : vector<8x128xf32>
    %cst_287 = arith.constant 6.400000e+01 : f32
    %1236 = vector.broadcast %cst_287 : f32 to vector<8x128xf32>
    %1237 = arith.subf %1236, %1229 : vector<8x128xf32>
    %cst_288 = arith.constant 0.154687494 : f32
    %1238 = vector.broadcast %cst_288 : f32 to vector<8x128xf32>
    %1239 = arith.mulf %1238, %1237 : vector<8x128xf32>
    %cst_289 = arith.constant 1.000000e-01 : f32
    %1240 = vector.broadcast %cst_289 : f32 to vector<8x128xf32>
    %1241 = arith.addf %1239, %1240 : vector<8x128xf32>
    %1242 = arith.mulf %33, %33 : vector<8x128xf32>
    %1243 = arith.mulf %1241, %1241 : vector<8x128xf32>
    %1244 = arith.addf %1242, %1243 : vector<8x128xf32>
    %cst_290 = arith.constant 2.000000e+00 : f32
    %1245 = vector.broadcast %cst_290 : f32 to vector<8x128xf32>
    %1246 = arith.mulf %1245, %33 : vector<8x128xf32>
    %1247 = arith.mulf %1246, %1241 : vector<8x128xf32>
    %1248 = arith.subf %1235, %27 : vector<8x128xf32>
    %cst_291 = arith.constant 0.0174532924 : f32
    %1249 = vector.broadcast %cst_291 : f32 to vector<8x128xf32>
    %1250 = arith.mulf %1249, %1248 : vector<8x128xf32>
    %1251 = math.cos %1250 : vector<8x128xf32>
    %1252 = arith.mulf %1247, %1251 : vector<8x128xf32>
    %1253 = arith.subf %1244, %1252 : vector<8x128xf32>
    %1254 = arith.mulf %1193, %1197 : vector<8x128xf32>
    %1255 = arith.mulf %1194, %1197 : vector<8x128xf32>
    %1256 = arith.mulf %1225, %17 : vector<8x128xf32>
    %1257 = arith.mulf %1253, %17 : vector<8x128xf32>
    %c1_292 = arith.constant 1 : index
    %c0_293 = arith.constant 0 : index
    %c0_294 = arith.constant 0 : index
    %1258 = vector.load %arg3[%c1_292, %c0_293, %c0_294] : memref<2x8x128xf32, #tpu.memory_space<vmem>>, vector<1x8x128xf32>
    %1259 = vector.shape_cast %1258 : vector<1x8x128xf32> to vector<8x128xf32>
    %c1_295 = arith.constant 1 : index
    %c0_296 = arith.constant 0 : index
    %c0_297 = arith.constant 0 : index
    %1260 = vector.load %arg4[%c1_295, %c0_296, %c0_297] : memref<2x8x128xf32, #tpu.memory_space<vmem>>, vector<1x8x128xf32>
    %1261 = vector.shape_cast %1260 : vector<1x8x128xf32> to vector<8x128xf32>
    %cst_298 = arith.constant 6.400000e+01 : f32
    %1262 = vector.broadcast %cst_298 : f32 to vector<8x128xf32>
    %1263 = arith.subf %1262, %1259 : vector<8x128xf32>
    %cst_299 = arith.constant 3.545200e-02 : f32
    %1264 = vector.broadcast %cst_299 : f32 to vector<8x128xf32>
    %1265 = arith.mulf %1263, %1264 : vector<8x128xf32>
    %cst_300 = arith.constant 1.13446403 : f32
    %1266 = vector.broadcast %cst_300 : f32 to vector<8x128xf32>
    %1267 = arith.subf %1265, %1266 : vector<8x128xf32>
    %cst_301 = arith.constant 6.400000e+01 : f32
    %1268 = vector.broadcast %cst_301 : f32 to vector<8x128xf32>
    %1269 = arith.subf %1268, %1261 : vector<8x128xf32>
    %cst_302 = arith.constant 0.154687494 : f32
    %1270 = vector.broadcast %cst_302 : f32 to vector<8x128xf32>
    %1271 = arith.mulf %1270, %1269 : vector<8x128xf32>
    %cst_303 = arith.constant 1.000000e-01 : f32
    %1272 = vector.broadcast %cst_303 : f32 to vector<8x128xf32>
    %1273 = arith.addf %1271, %1272 : vector<8x128xf32>
    %1274 = math.cos %1267 : vector<8x128xf32>
    %1275 = math.sin %1267 : vector<8x128xf32>
    %1276 = arith.mulf %1273, %1274 : vector<8x128xf32>
    %1277 = arith.mulf %1273, %1275 : vector<8x128xf32>
    %cst_304 = arith.constant 0.000000e+00 : f32
    %1278 = vector.broadcast %cst_304 : f32 to vector<8x128xf32>
    %1279 = arith.subf %1278, %1273 : vector<8x128xf32>
    %c12 = arith.constant 12 : index
    %1280 = memref.load %arg2[%c12] : memref<24xf32, #tpu.memory_space<smem>>
    %c13 = arith.constant 13 : index
    %1281 = memref.load %arg2[%c13] : memref<24xf32, #tpu.memory_space<smem>>
    %c14 = arith.constant 14 : index
    %1282 = memref.load %arg2[%c14] : memref<24xf32, #tpu.memory_space<smem>>
    %c15 = arith.constant 15 : index
    %1283 = memref.load %arg2[%c15] : memref<24xf32, #tpu.memory_space<smem>>
    %c16 = arith.constant 16 : index
    %1284 = memref.load %arg2[%c16] : memref<24xf32, #tpu.memory_space<smem>>
    %c17 = arith.constant 17 : index
    %1285 = memref.load %arg2[%c17] : memref<24xf32, #tpu.memory_space<smem>>
    %c18 = arith.constant 18 : index
    %1286 = memref.load %arg2[%c18] : memref<24xf32, #tpu.memory_space<smem>>
    %c19 = arith.constant 19 : index
    %1287 = memref.load %arg2[%c19] : memref<24xf32, #tpu.memory_space<smem>>
    %c20 = arith.constant 20 : index
    %1288 = memref.load %arg2[%c20] : memref<24xf32, #tpu.memory_space<smem>>
    %c21 = arith.constant 21 : index
    %1289 = memref.load %arg2[%c21] : memref<24xf32, #tpu.memory_space<smem>>
    %c22 = arith.constant 22 : index
    %1290 = memref.load %arg2[%c22] : memref<24xf32, #tpu.memory_space<smem>>
    %c23 = arith.constant 23 : index
    %1291 = memref.load %arg2[%c23] : memref<24xf32, #tpu.memory_space<smem>>
    %1292 = vector.broadcast %1280 : f32 to vector<8x128xf32>
    %1293 = arith.mulf %1292, %1276 : vector<8x128xf32>
    %1294 = vector.broadcast %1281 : f32 to vector<8x128xf32>
    %1295 = arith.mulf %1294, %1277 : vector<8x128xf32>
    %1296 = arith.addf %1293, %1295 : vector<8x128xf32>
    %1297 = vector.broadcast %1282 : f32 to vector<8x128xf32>
    %1298 = arith.mulf %1297, %1279 : vector<8x128xf32>
    %1299 = vector.broadcast %1283 : f32 to vector<8x128xf32>
    %1300 = arith.mulf %1299, %1276 : vector<8x128xf32>
    %1301 = vector.broadcast %1284 : f32 to vector<8x128xf32>
    %1302 = arith.mulf %1301, %1277 : vector<8x128xf32>
    %1303 = arith.addf %1300, %1302 : vector<8x128xf32>
    %1304 = vector.broadcast %1285 : f32 to vector<8x128xf32>
    %1305 = arith.mulf %1304, %1279 : vector<8x128xf32>
    %1306 = vector.broadcast %1286 : f32 to vector<8x128xf32>
    %1307 = arith.mulf %1306, %1276 : vector<8x128xf32>
    %1308 = vector.broadcast %1287 : f32 to vector<8x128xf32>
    %1309 = arith.mulf %1308, %1277 : vector<8x128xf32>
    %1310 = arith.addf %1307, %1309 : vector<8x128xf32>
    %1311 = vector.broadcast %1288 : f32 to vector<8x128xf32>
    %1312 = arith.mulf %1311, %1279 : vector<8x128xf32>
    %c1_305 = arith.constant 1 : index
    %c0_306 = arith.constant 0 : index
    %c0_307 = arith.constant 0 : index
    %1313 = vector.load %arg5[%c1_305, %c0_306, %c0_307] : memref<2x8x128xf32, #tpu.memory_space<vmem>>, vector<1x8x128xf32>
    %1314 = vector.shape_cast %1313 : vector<1x8x128xf32> to vector<8x128xf32>
    %c1_308 = arith.constant 1 : index
    %c0_309 = arith.constant 0 : index
    %c0_310 = arith.constant 0 : index
    %1315 = vector.load %arg6[%c1_308, %c0_309, %c0_310] : memref<2x8x128xf32, #tpu.memory_space<vmem>>, vector<1x8x128xf32>
    %1316 = vector.shape_cast %1315 : vector<1x8x128xf32> to vector<8x128xf32>
    %cst_311 = arith.constant 6.400000e+01 : f32
    %1317 = vector.broadcast %cst_311 : f32 to vector<8x128xf32>
    %1318 = arith.subf %1317, %1314 : vector<8x128xf32>
    %cst_312 = arith.constant 3.545200e-02 : f32
    %1319 = vector.broadcast %cst_312 : f32 to vector<8x128xf32>
    %1320 = arith.mulf %1318, %1319 : vector<8x128xf32>
    %cst_313 = arith.constant 1.13446403 : f32
    %1321 = vector.broadcast %cst_313 : f32 to vector<8x128xf32>
    %1322 = arith.subf %1320, %1321 : vector<8x128xf32>
    %cst_314 = arith.constant 6.400000e+01 : f32
    %1323 = vector.broadcast %cst_314 : f32 to vector<8x128xf32>
    %1324 = arith.subf %1323, %1316 : vector<8x128xf32>
    %cst_315 = arith.constant 0.154687494 : f32
    %1325 = vector.broadcast %cst_315 : f32 to vector<8x128xf32>
    %1326 = arith.mulf %1325, %1324 : vector<8x128xf32>
    %cst_316 = arith.constant 1.000000e-01 : f32
    %1327 = vector.broadcast %cst_316 : f32 to vector<8x128xf32>
    %1328 = arith.addf %1326, %1327 : vector<8x128xf32>
    %1329 = math.cos %1322 : vector<8x128xf32>
    %1330 = math.sin %1322 : vector<8x128xf32>
    %1331 = arith.mulf %1328, %1328 : vector<8x128xf32>
    %c1_317 = arith.constant 1 : index
    %c0_318 = arith.constant 0 : index
    %c0_319 = arith.constant 0 : index
    %1332 = vector.load %arg7[%c1_317, %c0_318, %c0_319] : memref<2x8x128xf32, #tpu.memory_space<vmem>>, vector<1x8x128xf32>
    %1333 = vector.shape_cast %1332 : vector<1x8x128xf32> to vector<8x128xf32>
    %c1_320 = arith.constant 1 : index
    %c0_321 = arith.constant 0 : index
    %c0_322 = arith.constant 0 : index
    %1334 = vector.load %arg8[%c1_320, %c0_321, %c0_322] : memref<2x8x128xf32, #tpu.memory_space<vmem>>, vector<1x8x128xf32>
    %1335 = vector.shape_cast %1334 : vector<1x8x128xf32> to vector<8x128xf32>
    %cst_323 = arith.constant 6.400000e+01 : f32
    %1336 = vector.broadcast %cst_323 : f32 to vector<8x128xf32>
    %1337 = arith.subf %1336, %1333 : vector<8x128xf32>
    %cst_324 = arith.constant 3.545200e-02 : f32
    %1338 = vector.broadcast %cst_324 : f32 to vector<8x128xf32>
    %1339 = arith.mulf %1337, %1338 : vector<8x128xf32>
    %cst_325 = arith.constant 1.13446403 : f32
    %1340 = vector.broadcast %cst_325 : f32 to vector<8x128xf32>
    %1341 = arith.subf %1339, %1340 : vector<8x128xf32>
    %cst_326 = arith.constant 6.400000e+01 : f32
    %1342 = vector.broadcast %cst_326 : f32 to vector<8x128xf32>
    %1343 = arith.subf %1342, %1335 : vector<8x128xf32>
    %cst_327 = arith.constant 0.154687494 : f32
    %1344 = vector.broadcast %cst_327 : f32 to vector<8x128xf32>
    %1345 = arith.mulf %1344, %1343 : vector<8x128xf32>
    %cst_328 = arith.constant 1.000000e-01 : f32
    %1346 = vector.broadcast %cst_328 : f32 to vector<8x128xf32>
    %1347 = arith.addf %1345, %1346 : vector<8x128xf32>
    %1348 = math.cos %1341 : vector<8x128xf32>
    %1349 = math.sin %1341 : vector<8x128xf32>
    %1350 = arith.mulf %1347, %1347 : vector<8x128xf32>
    %cst_329 = arith.constant 0.984807729 : f32
    %1351 = vector.broadcast %cst_329 : f32 to vector<8x128xf32>
    %1352 = arith.mulf %1351, %1296 : vector<8x128xf32>
    %cst_330 = arith.constant -0.173648179 : f32
    %1353 = vector.broadcast %cst_330 : f32 to vector<8x128xf32>
    %1354 = arith.mulf %1353, %1298 : vector<8x128xf32>
    %1355 = arith.addf %1352, %1354 : vector<8x128xf32>
    %1356 = vector.broadcast %1289 : f32 to vector<8x128xf32>
    %1357 = arith.addf %1355, %1356 : vector<8x128xf32>
    %cst_331 = arith.constant 0.984807729 : f32
    %1358 = vector.broadcast %cst_331 : f32 to vector<8x128xf32>
    %1359 = arith.mulf %1358, %1303 : vector<8x128xf32>
    %cst_332 = arith.constant -0.173648179 : f32
    %1360 = vector.broadcast %cst_332 : f32 to vector<8x128xf32>
    %1361 = arith.mulf %1360, %1305 : vector<8x128xf32>
    %1362 = arith.addf %1359, %1361 : vector<8x128xf32>
    %1363 = vector.broadcast %1290 : f32 to vector<8x128xf32>
    %1364 = arith.addf %1362, %1363 : vector<8x128xf32>
    %cst_333 = arith.constant 0.984807729 : f32
    %1365 = vector.broadcast %cst_333 : f32 to vector<8x128xf32>
    %1366 = arith.mulf %1365, %1310 : vector<8x128xf32>
    %cst_334 = arith.constant -0.173648179 : f32
    %1367 = vector.broadcast %cst_334 : f32 to vector<8x128xf32>
    %1368 = arith.mulf %1367, %1312 : vector<8x128xf32>
    %1369 = arith.addf %1366, %1368 : vector<8x128xf32>
    %1370 = vector.broadcast %1291 : f32 to vector<8x128xf32>
    %1371 = arith.addf %1369, %1370 : vector<8x128xf32>
    %1372 = arith.mulf %1357, %1357 : vector<8x128xf32>
    %1373 = arith.mulf %1364, %1364 : vector<8x128xf32>
    %1374 = arith.addf %1372, %1373 : vector<8x128xf32>
    %1375 = arith.mulf %1371, %1371 : vector<8x128xf32>
    %1376 = arith.addf %1374, %1375 : vector<8x128xf32>
    %cst_335 = arith.constant 9.99999968E-21 : f32
    %1377 = vector.broadcast %cst_335 : f32 to vector<8x128xf32>
    %1378 = arith.addf %1374, %1377 : vector<8x128xf32>
    %1379 = tpu.reciprocal %1378 {approx = true} : vector<8x128xf32> -> vector<8x128xf32>
    %1380 = arith.mulf %1376, %1379 : vector<8x128xf32>
    %1381 = math.sqrt %1380 : vector<8x128xf32>
    %cst_336 = arith.constant 2.14450693 : f32
    %1382 = vector.broadcast %cst_336 : f32 to vector<8x128xf32>
    %1383 = arith.mulf %1357, %1382 : vector<8x128xf32>
    %cst_337 = arith.constant 0.000000e+00 : f32
    %1384 = vector.broadcast %cst_337 : f32 to vector<8x128xf32>
    %1385 = arith.cmpf ogt, %1357, %1384 : vector<8x128xf32>
    %1386 = arith.cmpf ole, %1364, %1383 : vector<8x128xf32>
    %1387 = arith.andi %1385, %1386 : vector<8x128xi1>
    %cst_338 = arith.constant 0.000000e+00 : f32
    %1388 = vector.broadcast %cst_338 : f32 to vector<8x128xf32>
    %1389 = arith.subf %1388, %1383 : vector<8x128xf32>
    %1390 = arith.cmpf ogt, %1364, %1389 : vector<8x128xf32>
    %1391 = arith.andi %1387, %1390 : vector<8x128xi1>
    %cst_339 = arith.constant 0.00999999977 : f32
    %1392 = vector.broadcast %cst_339 : f32 to vector<8x128xf32>
    %1393 = arith.cmpf ogt, %1376, %1392 : vector<8x128xf32>
    %1394 = arith.andi %1391, %1393 : vector<8x128xi1>
    %cst_340 = arith.constant 1.000000e+02 : f32
    %1395 = vector.broadcast %cst_340 : f32 to vector<8x128xf32>
    %1396 = arith.cmpf ole, %1376, %1395 : vector<8x128xf32>
    %1397 = arith.andi %1394, %1396 : vector<8x128xi1>
    %1398 = arith.addf %1376, %1331 : vector<8x128xf32>
    %cst_341 = arith.constant 2.000000e+00 : f32
    %1399 = vector.broadcast %cst_341 : f32 to vector<8x128xf32>
    %1400 = arith.mulf %1399, %1328 : vector<8x128xf32>
    %1401 = arith.mulf %1329, %1357 : vector<8x128xf32>
    %1402 = arith.mulf %1330, %1364 : vector<8x128xf32>
    %1403 = arith.addf %1401, %1402 : vector<8x128xf32>
    %1404 = arith.mulf %1381, %1403 : vector<8x128xf32>
    %1405 = arith.mulf %1400, %1404 : vector<8x128xf32>
    %1406 = arith.subf %1398, %1405 : vector<8x128xf32>
    %1407 = arith.addf %1376, %1350 : vector<8x128xf32>
    %cst_342 = arith.constant 2.000000e+00 : f32
    %1408 = vector.broadcast %cst_342 : f32 to vector<8x128xf32>
    %1409 = arith.mulf %1408, %1347 : vector<8x128xf32>
    %1410 = arith.mulf %1348, %1357 : vector<8x128xf32>
    %1411 = arith.mulf %1349, %1364 : vector<8x128xf32>
    %1412 = arith.addf %1410, %1411 : vector<8x128xf32>
    %1413 = arith.mulf %1381, %1412 : vector<8x128xf32>
    %1414 = arith.mulf %1409, %1413 : vector<8x128xf32>
    %1415 = arith.subf %1407, %1414 : vector<8x128xf32>
    %cst_343 = arith.constant 0.988581717 : f32
    %1416 = vector.broadcast %cst_343 : f32 to vector<8x128xf32>
    %1417 = arith.mulf %1416, %1296 : vector<8x128xf32>
    %cst_344 = arith.constant -0.150685713 : f32
    %1418 = vector.broadcast %cst_344 : f32 to vector<8x128xf32>
    %1419 = arith.mulf %1418, %1298 : vector<8x128xf32>
    %1420 = arith.addf %1417, %1419 : vector<8x128xf32>
    %1421 = vector.broadcast %1289 : f32 to vector<8x128xf32>
    %1422 = arith.addf %1420, %1421 : vector<8x128xf32>
    %cst_345 = arith.constant 0.988581717 : f32
    %1423 = vector.broadcast %cst_345 : f32 to vector<8x128xf32>
    %1424 = arith.mulf %1423, %1303 : vector<8x128xf32>
    %cst_346 = arith.constant -0.150685713 : f32
    %1425 = vector.broadcast %cst_346 : f32 to vector<8x128xf32>
    %1426 = arith.mulf %1425, %1305 : vector<8x128xf32>
    %1427 = arith.addf %1424, %1426 : vector<8x128xf32>
    %1428 = vector.broadcast %1290 : f32 to vector<8x128xf32>
    %1429 = arith.addf %1427, %1428 : vector<8x128xf32>
    %cst_347 = arith.constant 0.988581717 : f32
    %1430 = vector.broadcast %cst_347 : f32 to vector<8x128xf32>
    %1431 = arith.mulf %1430, %1310 : vector<8x128xf32>
    %cst_348 = arith.constant -0.150685713 : f32
    %1432 = vector.broadcast %cst_348 : f32 to vector<8x128xf32>
    %1433 = arith.mulf %1432, %1312 : vector<8x128xf32>
    %1434 = arith.addf %1431, %1433 : vector<8x128xf32>
    %1435 = vector.broadcast %1291 : f32 to vector<8x128xf32>
    %1436 = arith.addf %1434, %1435 : vector<8x128xf32>
    %1437 = arith.mulf %1422, %1422 : vector<8x128xf32>
    %1438 = arith.mulf %1429, %1429 : vector<8x128xf32>
    %1439 = arith.addf %1437, %1438 : vector<8x128xf32>
    %1440 = arith.mulf %1436, %1436 : vector<8x128xf32>
    %1441 = arith.addf %1439, %1440 : vector<8x128xf32>
    %cst_349 = arith.constant 9.99999968E-21 : f32
    %1442 = vector.broadcast %cst_349 : f32 to vector<8x128xf32>
    %1443 = arith.addf %1439, %1442 : vector<8x128xf32>
    %1444 = tpu.reciprocal %1443 {approx = true} : vector<8x128xf32> -> vector<8x128xf32>
    %1445 = arith.mulf %1441, %1444 : vector<8x128xf32>
    %1446 = math.sqrt %1445 : vector<8x128xf32>
    %cst_350 = arith.constant 2.14450693 : f32
    %1447 = vector.broadcast %cst_350 : f32 to vector<8x128xf32>
    %1448 = arith.mulf %1422, %1447 : vector<8x128xf32>
    %cst_351 = arith.constant 0.000000e+00 : f32
    %1449 = vector.broadcast %cst_351 : f32 to vector<8x128xf32>
    %1450 = arith.cmpf ogt, %1422, %1449 : vector<8x128xf32>
    %1451 = arith.cmpf ole, %1429, %1448 : vector<8x128xf32>
    %1452 = arith.andi %1450, %1451 : vector<8x128xi1>
    %cst_352 = arith.constant 0.000000e+00 : f32
    %1453 = vector.broadcast %cst_352 : f32 to vector<8x128xf32>
    %1454 = arith.subf %1453, %1448 : vector<8x128xf32>
    %1455 = arith.cmpf ogt, %1429, %1454 : vector<8x128xf32>
    %1456 = arith.andi %1452, %1455 : vector<8x128xi1>
    %cst_353 = arith.constant 0.00999999977 : f32
    %1457 = vector.broadcast %cst_353 : f32 to vector<8x128xf32>
    %1458 = arith.cmpf ogt, %1441, %1457 : vector<8x128xf32>
    %1459 = arith.andi %1456, %1458 : vector<8x128xi1>
    %cst_354 = arith.constant 1.000000e+02 : f32
    %1460 = vector.broadcast %cst_354 : f32 to vector<8x128xf32>
    %1461 = arith.cmpf ole, %1441, %1460 : vector<8x128xf32>
    %1462 = arith.andi %1459, %1461 : vector<8x128xi1>
    %1463 = arith.addf %1441, %1331 : vector<8x128xf32>
    %cst_355 = arith.constant 2.000000e+00 : f32
    %1464 = vector.broadcast %cst_355 : f32 to vector<8x128xf32>
    %1465 = arith.mulf %1464, %1328 : vector<8x128xf32>
    %1466 = arith.mulf %1329, %1422 : vector<8x128xf32>
    %1467 = arith.mulf %1330, %1429 : vector<8x128xf32>
    %1468 = arith.addf %1466, %1467 : vector<8x128xf32>
    %1469 = arith.mulf %1446, %1468 : vector<8x128xf32>
    %1470 = arith.mulf %1465, %1469 : vector<8x128xf32>
    %1471 = arith.subf %1463, %1470 : vector<8x128xf32>
    %1472 = arith.addf %1441, %1350 : vector<8x128xf32>
    %cst_356 = arith.constant 2.000000e+00 : f32
    %1473 = vector.broadcast %cst_356 : f32 to vector<8x128xf32>
    %1474 = arith.mulf %1473, %1347 : vector<8x128xf32>
    %1475 = arith.mulf %1348, %1422 : vector<8x128xf32>
    %1476 = arith.mulf %1349, %1429 : vector<8x128xf32>
    %1477 = arith.addf %1475, %1476 : vector<8x128xf32>
    %1478 = arith.mulf %1446, %1477 : vector<8x128xf32>
    %1479 = arith.mulf %1474, %1478 : vector<8x128xf32>
    %1480 = arith.subf %1472, %1479 : vector<8x128xf32>
    %1481 = arith.minimumf %1406, %1471 : vector<8x128xf32>
    %1482 = arith.minimumf %1415, %1480 : vector<8x128xf32>
    %1483 = arith.andi %1397, %1462 : vector<8x128xi1>
    %cst_357 = arith.constant 0.991820335 : f32
    %1484 = vector.broadcast %cst_357 : f32 to vector<8x128xf32>
    %1485 = arith.mulf %1484, %1296 : vector<8x128xf32>
    %cst_358 = arith.constant -0.127641648 : f32
    %1486 = vector.broadcast %cst_358 : f32 to vector<8x128xf32>
    %1487 = arith.mulf %1486, %1298 : vector<8x128xf32>
    %1488 = arith.addf %1485, %1487 : vector<8x128xf32>
    %1489 = vector.broadcast %1289 : f32 to vector<8x128xf32>
    %1490 = arith.addf %1488, %1489 : vector<8x128xf32>
    %cst_359 = arith.constant 0.991820335 : f32
    %1491 = vector.broadcast %cst_359 : f32 to vector<8x128xf32>
    %1492 = arith.mulf %1491, %1303 : vector<8x128xf32>
    %cst_360 = arith.constant -0.127641648 : f32
    %1493 = vector.broadcast %cst_360 : f32 to vector<8x128xf32>
    %1494 = arith.mulf %1493, %1305 : vector<8x128xf32>
    %1495 = arith.addf %1492, %1494 : vector<8x128xf32>
    %1496 = vector.broadcast %1290 : f32 to vector<8x128xf32>
    %1497 = arith.addf %1495, %1496 : vector<8x128xf32>
    %cst_361 = arith.constant 0.991820335 : f32
    %1498 = vector.broadcast %cst_361 : f32 to vector<8x128xf32>
    %1499 = arith.mulf %1498, %1310 : vector<8x128xf32>
    %cst_362 = arith.constant -0.127641648 : f32
    %1500 = vector.broadcast %cst_362 : f32 to vector<8x128xf32>
    %1501 = arith.mulf %1500, %1312 : vector<8x128xf32>
    %1502 = arith.addf %1499, %1501 : vector<8x128xf32>
    %1503 = vector.broadcast %1291 : f32 to vector<8x128xf32>
    %1504 = arith.addf %1502, %1503 : vector<8x128xf32>
    %1505 = arith.mulf %1490, %1490 : vector<8x128xf32>
    %1506 = arith.mulf %1497, %1497 : vector<8x128xf32>
    %1507 = arith.addf %1505, %1506 : vector<8x128xf32>
    %1508 = arith.mulf %1504, %1504 : vector<8x128xf32>
    %1509 = arith.addf %1507, %1508 : vector<8x128xf32>
    %cst_363 = arith.constant 9.99999968E-21 : f32
    %1510 = vector.broadcast %cst_363 : f32 to vector<8x128xf32>
    %1511 = arith.addf %1507, %1510 : vector<8x128xf32>
    %1512 = tpu.reciprocal %1511 {approx = true} : vector<8x128xf32> -> vector<8x128xf32>
    %1513 = arith.mulf %1509, %1512 : vector<8x128xf32>
    %1514 = math.sqrt %1513 : vector<8x128xf32>
    %cst_364 = arith.constant 2.14450693 : f32
    %1515 = vector.broadcast %cst_364 : f32 to vector<8x128xf32>
    %1516 = arith.mulf %1490, %1515 : vector<8x128xf32>
    %cst_365 = arith.constant 0.000000e+00 : f32
    %1517 = vector.broadcast %cst_365 : f32 to vector<8x128xf32>
    %1518 = arith.cmpf ogt, %1490, %1517 : vector<8x128xf32>
    %1519 = arith.cmpf ole, %1497, %1516 : vector<8x128xf32>
    %1520 = arith.andi %1518, %1519 : vector<8x128xi1>
    %cst_366 = arith.constant 0.000000e+00 : f32
    %1521 = vector.broadcast %cst_366 : f32 to vector<8x128xf32>
    %1522 = arith.subf %1521, %1516 : vector<8x128xf32>
    %1523 = arith.cmpf ogt, %1497, %1522 : vector<8x128xf32>
    %1524 = arith.andi %1520, %1523 : vector<8x128xi1>
    %cst_367 = arith.constant 0.00999999977 : f32
    %1525 = vector.broadcast %cst_367 : f32 to vector<8x128xf32>
    %1526 = arith.cmpf ogt, %1509, %1525 : vector<8x128xf32>
    %1527 = arith.andi %1524, %1526 : vector<8x128xi1>
    %cst_368 = arith.constant 1.000000e+02 : f32
    %1528 = vector.broadcast %cst_368 : f32 to vector<8x128xf32>
    %1529 = arith.cmpf ole, %1509, %1528 : vector<8x128xf32>
    %1530 = arith.andi %1527, %1529 : vector<8x128xi1>
    %1531 = arith.addf %1509, %1331 : vector<8x128xf32>
    %cst_369 = arith.constant 2.000000e+00 : f32
    %1532 = vector.broadcast %cst_369 : f32 to vector<8x128xf32>
    %1533 = arith.mulf %1532, %1328 : vector<8x128xf32>
    %1534 = arith.mulf %1329, %1490 : vector<8x128xf32>
    %1535 = arith.mulf %1330, %1497 : vector<8x128xf32>
    %1536 = arith.addf %1534, %1535 : vector<8x128xf32>
    %1537 = arith.mulf %1514, %1536 : vector<8x128xf32>
    %1538 = arith.mulf %1533, %1537 : vector<8x128xf32>
    %1539 = arith.subf %1531, %1538 : vector<8x128xf32>
    %1540 = arith.addf %1509, %1350 : vector<8x128xf32>
    %cst_370 = arith.constant 2.000000e+00 : f32
    %1541 = vector.broadcast %cst_370 : f32 to vector<8x128xf32>
    %1542 = arith.mulf %1541, %1347 : vector<8x128xf32>
    %1543 = arith.mulf %1348, %1490 : vector<8x128xf32>
    %1544 = arith.mulf %1349, %1497 : vector<8x128xf32>
    %1545 = arith.addf %1543, %1544 : vector<8x128xf32>
    %1546 = arith.mulf %1514, %1545 : vector<8x128xf32>
    %1547 = arith.mulf %1542, %1546 : vector<8x128xf32>
    %1548 = arith.subf %1540, %1547 : vector<8x128xf32>
    %1549 = arith.minimumf %1481, %1539 : vector<8x128xf32>
    %1550 = arith.minimumf %1482, %1548 : vector<8x128xf32>
    %1551 = arith.andi %1483, %1530 : vector<8x128xi1>
    %cst_371 = arith.constant 0.994521915 : f32
    %1552 = vector.broadcast %cst_371 : f32 to vector<8x128xf32>
    %1553 = arith.mulf %1552, %1296 : vector<8x128xf32>
    %cst_372 = arith.constant -0.104528464 : f32
    %1554 = vector.broadcast %cst_372 : f32 to vector<8x128xf32>
    %1555 = arith.mulf %1554, %1298 : vector<8x128xf32>
    %1556 = arith.addf %1553, %1555 : vector<8x128xf32>
    %1557 = vector.broadcast %1289 : f32 to vector<8x128xf32>
    %1558 = arith.addf %1556, %1557 : vector<8x128xf32>
    %cst_373 = arith.constant 0.994521915 : f32
    %1559 = vector.broadcast %cst_373 : f32 to vector<8x128xf32>
    %1560 = arith.mulf %1559, %1303 : vector<8x128xf32>
    %cst_374 = arith.constant -0.104528464 : f32
    %1561 = vector.broadcast %cst_374 : f32 to vector<8x128xf32>
    %1562 = arith.mulf %1561, %1305 : vector<8x128xf32>
    %1563 = arith.addf %1560, %1562 : vector<8x128xf32>
    %1564 = vector.broadcast %1290 : f32 to vector<8x128xf32>
    %1565 = arith.addf %1563, %1564 : vector<8x128xf32>
    %cst_375 = arith.constant 0.994521915 : f32
    %1566 = vector.broadcast %cst_375 : f32 to vector<8x128xf32>
    %1567 = arith.mulf %1566, %1310 : vector<8x128xf32>
    %cst_376 = arith.constant -0.104528464 : f32
    %1568 = vector.broadcast %cst_376 : f32 to vector<8x128xf32>
    %1569 = arith.mulf %1568, %1312 : vector<8x128xf32>
    %1570 = arith.addf %1567, %1569 : vector<8x128xf32>
    %1571 = vector.broadcast %1291 : f32 to vector<8x128xf32>
    %1572 = arith.addf %1570, %1571 : vector<8x128xf32>
    %1573 = arith.mulf %1558, %1558 : vector<8x128xf32>
    %1574 = arith.mulf %1565, %1565 : vector<8x128xf32>
    %1575 = arith.addf %1573, %1574 : vector<8x128xf32>
    %1576 = arith.mulf %1572, %1572 : vector<8x128xf32>
    %1577 = arith.addf %1575, %1576 : vector<8x128xf32>
    %cst_377 = arith.constant 9.99999968E-21 : f32
    %1578 = vector.broadcast %cst_377 : f32 to vector<8x128xf32>
    %1579 = arith.addf %1575, %1578 : vector<8x128xf32>
    %1580 = tpu.reciprocal %1579 {approx = true} : vector<8x128xf32> -> vector<8x128xf32>
    %1581 = arith.mulf %1577, %1580 : vector<8x128xf32>
    %1582 = math.sqrt %1581 : vector<8x128xf32>
    %cst_378 = arith.constant 2.14450693 : f32
    %1583 = vector.broadcast %cst_378 : f32 to vector<8x128xf32>
    %1584 = arith.mulf %1558, %1583 : vector<8x128xf32>
    %cst_379 = arith.constant 0.000000e+00 : f32
    %1585 = vector.broadcast %cst_379 : f32 to vector<8x128xf32>
    %1586 = arith.cmpf ogt, %1558, %1585 : vector<8x128xf32>
    %1587 = arith.cmpf ole, %1565, %1584 : vector<8x128xf32>
    %1588 = arith.andi %1586, %1587 : vector<8x128xi1>
    %cst_380 = arith.constant 0.000000e+00 : f32
    %1589 = vector.broadcast %cst_380 : f32 to vector<8x128xf32>
    %1590 = arith.subf %1589, %1584 : vector<8x128xf32>
    %1591 = arith.cmpf ogt, %1565, %1590 : vector<8x128xf32>
    %1592 = arith.andi %1588, %1591 : vector<8x128xi1>
    %cst_381 = arith.constant 0.00999999977 : f32
    %1593 = vector.broadcast %cst_381 : f32 to vector<8x128xf32>
    %1594 = arith.cmpf ogt, %1577, %1593 : vector<8x128xf32>
    %1595 = arith.andi %1592, %1594 : vector<8x128xi1>
    %cst_382 = arith.constant 1.000000e+02 : f32
    %1596 = vector.broadcast %cst_382 : f32 to vector<8x128xf32>
    %1597 = arith.cmpf ole, %1577, %1596 : vector<8x128xf32>
    %1598 = arith.andi %1595, %1597 : vector<8x128xi1>
    %1599 = arith.addf %1577, %1331 : vector<8x128xf32>
    %cst_383 = arith.constant 2.000000e+00 : f32
    %1600 = vector.broadcast %cst_383 : f32 to vector<8x128xf32>
    %1601 = arith.mulf %1600, %1328 : vector<8x128xf32>
    %1602 = arith.mulf %1329, %1558 : vector<8x128xf32>
    %1603 = arith.mulf %1330, %1565 : vector<8x128xf32>
    %1604 = arith.addf %1602, %1603 : vector<8x128xf32>
    %1605 = arith.mulf %1582, %1604 : vector<8x128xf32>
    %1606 = arith.mulf %1601, %1605 : vector<8x128xf32>
    %1607 = arith.subf %1599, %1606 : vector<8x128xf32>
    %1608 = arith.addf %1577, %1350 : vector<8x128xf32>
    %cst_384 = arith.constant 2.000000e+00 : f32
    %1609 = vector.broadcast %cst_384 : f32 to vector<8x128xf32>
    %1610 = arith.mulf %1609, %1347 : vector<8x128xf32>
    %1611 = arith.mulf %1348, %1558 : vector<8x128xf32>
    %1612 = arith.mulf %1349, %1565 : vector<8x128xf32>
    %1613 = arith.addf %1611, %1612 : vector<8x128xf32>
    %1614 = arith.mulf %1582, %1613 : vector<8x128xf32>
    %1615 = arith.mulf %1610, %1614 : vector<8x128xf32>
    %1616 = arith.subf %1608, %1615 : vector<8x128xf32>
    %1617 = arith.minimumf %1549, %1607 : vector<8x128xf32>
    %1618 = arith.minimumf %1550, %1616 : vector<8x128xf32>
    %1619 = arith.andi %1551, %1598 : vector<8x128xi1>
    %cst_385 = arith.constant 0.996684908 : f32
    %1620 = vector.broadcast %cst_385 : f32 to vector<8x128xf32>
    %1621 = arith.mulf %1620, %1296 : vector<8x128xf32>
    %cst_386 = arith.constant -0.0813586711 : f32
    %1622 = vector.broadcast %cst_386 : f32 to vector<8x128xf32>
    %1623 = arith.mulf %1622, %1298 : vector<8x128xf32>
    %1624 = arith.addf %1621, %1623 : vector<8x128xf32>
    %1625 = vector.broadcast %1289 : f32 to vector<8x128xf32>
    %1626 = arith.addf %1624, %1625 : vector<8x128xf32>
    %cst_387 = arith.constant 0.996684908 : f32
    %1627 = vector.broadcast %cst_387 : f32 to vector<8x128xf32>
    %1628 = arith.mulf %1627, %1303 : vector<8x128xf32>
    %cst_388 = arith.constant -0.0813586711 : f32
    %1629 = vector.broadcast %cst_388 : f32 to vector<8x128xf32>
    %1630 = arith.mulf %1629, %1305 : vector<8x128xf32>
    %1631 = arith.addf %1628, %1630 : vector<8x128xf32>
    %1632 = vector.broadcast %1290 : f32 to vector<8x128xf32>
    %1633 = arith.addf %1631, %1632 : vector<8x128xf32>
    %cst_389 = arith.constant 0.996684908 : f32
    %1634 = vector.broadcast %cst_389 : f32 to vector<8x128xf32>
    %1635 = arith.mulf %1634, %1310 : vector<8x128xf32>
    %cst_390 = arith.constant -0.0813586711 : f32
    %1636 = vector.broadcast %cst_390 : f32 to vector<8x128xf32>
    %1637 = arith.mulf %1636, %1312 : vector<8x128xf32>
    %1638 = arith.addf %1635, %1637 : vector<8x128xf32>
    %1639 = vector.broadcast %1291 : f32 to vector<8x128xf32>
    %1640 = arith.addf %1638, %1639 : vector<8x128xf32>
    %1641 = arith.mulf %1626, %1626 : vector<8x128xf32>
    %1642 = arith.mulf %1633, %1633 : vector<8x128xf32>
    %1643 = arith.addf %1641, %1642 : vector<8x128xf32>
    %1644 = arith.mulf %1640, %1640 : vector<8x128xf32>
    %1645 = arith.addf %1643, %1644 : vector<8x128xf32>
    %cst_391 = arith.constant 9.99999968E-21 : f32
    %1646 = vector.broadcast %cst_391 : f32 to vector<8x128xf32>
    %1647 = arith.addf %1643, %1646 : vector<8x128xf32>
    %1648 = tpu.reciprocal %1647 {approx = true} : vector<8x128xf32> -> vector<8x128xf32>
    %1649 = arith.mulf %1645, %1648 : vector<8x128xf32>
    %1650 = math.sqrt %1649 : vector<8x128xf32>
    %cst_392 = arith.constant 2.14450693 : f32
    %1651 = vector.broadcast %cst_392 : f32 to vector<8x128xf32>
    %1652 = arith.mulf %1626, %1651 : vector<8x128xf32>
    %cst_393 = arith.constant 0.000000e+00 : f32
    %1653 = vector.broadcast %cst_393 : f32 to vector<8x128xf32>
    %1654 = arith.cmpf ogt, %1626, %1653 : vector<8x128xf32>
    %1655 = arith.cmpf ole, %1633, %1652 : vector<8x128xf32>
    %1656 = arith.andi %1654, %1655 : vector<8x128xi1>
    %cst_394 = arith.constant 0.000000e+00 : f32
    %1657 = vector.broadcast %cst_394 : f32 to vector<8x128xf32>
    %1658 = arith.subf %1657, %1652 : vector<8x128xf32>
    %1659 = arith.cmpf ogt, %1633, %1658 : vector<8x128xf32>
    %1660 = arith.andi %1656, %1659 : vector<8x128xi1>
    %cst_395 = arith.constant 0.00999999977 : f32
    %1661 = vector.broadcast %cst_395 : f32 to vector<8x128xf32>
    %1662 = arith.cmpf ogt, %1645, %1661 : vector<8x128xf32>
    %1663 = arith.andi %1660, %1662 : vector<8x128xi1>
    %cst_396 = arith.constant 1.000000e+02 : f32
    %1664 = vector.broadcast %cst_396 : f32 to vector<8x128xf32>
    %1665 = arith.cmpf ole, %1645, %1664 : vector<8x128xf32>
    %1666 = arith.andi %1663, %1665 : vector<8x128xi1>
    %1667 = arith.addf %1645, %1331 : vector<8x128xf32>
    %cst_397 = arith.constant 2.000000e+00 : f32
    %1668 = vector.broadcast %cst_397 : f32 to vector<8x128xf32>
    %1669 = arith.mulf %1668, %1328 : vector<8x128xf32>
    %1670 = arith.mulf %1329, %1626 : vector<8x128xf32>
    %1671 = arith.mulf %1330, %1633 : vector<8x128xf32>
    %1672 = arith.addf %1670, %1671 : vector<8x128xf32>
    %1673 = arith.mulf %1650, %1672 : vector<8x128xf32>
    %1674 = arith.mulf %1669, %1673 : vector<8x128xf32>
    %1675 = arith.subf %1667, %1674 : vector<8x128xf32>
    %1676 = arith.addf %1645, %1350 : vector<8x128xf32>
    %cst_398 = arith.constant 2.000000e+00 : f32
    %1677 = vector.broadcast %cst_398 : f32 to vector<8x128xf32>
    %1678 = arith.mulf %1677, %1347 : vector<8x128xf32>
    %1679 = arith.mulf %1348, %1626 : vector<8x128xf32>
    %1680 = arith.mulf %1349, %1633 : vector<8x128xf32>
    %1681 = arith.addf %1679, %1680 : vector<8x128xf32>
    %1682 = arith.mulf %1650, %1681 : vector<8x128xf32>
    %1683 = arith.mulf %1678, %1682 : vector<8x128xf32>
    %1684 = arith.subf %1676, %1683 : vector<8x128xf32>
    %1685 = arith.minimumf %1617, %1675 : vector<8x128xf32>
    %1686 = arith.minimumf %1618, %1684 : vector<8x128xf32>
    %1687 = arith.andi %1619, %1666 : vector<8x128xi1>
    %cst_399 = arith.constant 0.998308181 : f32
    %1688 = vector.broadcast %cst_399 : f32 to vector<8x128xf32>
    %1689 = arith.mulf %1688, %1296 : vector<8x128xf32>
    %cst_400 = arith.constant -0.0581448302 : f32
    %1690 = vector.broadcast %cst_400 : f32 to vector<8x128xf32>
    %1691 = arith.mulf %1690, %1298 : vector<8x128xf32>
    %1692 = arith.addf %1689, %1691 : vector<8x128xf32>
    %1693 = vector.broadcast %1289 : f32 to vector<8x128xf32>
    %1694 = arith.addf %1692, %1693 : vector<8x128xf32>
    %cst_401 = arith.constant 0.998308181 : f32
    %1695 = vector.broadcast %cst_401 : f32 to vector<8x128xf32>
    %1696 = arith.mulf %1695, %1303 : vector<8x128xf32>
    %cst_402 = arith.constant -0.0581448302 : f32
    %1697 = vector.broadcast %cst_402 : f32 to vector<8x128xf32>
    %1698 = arith.mulf %1697, %1305 : vector<8x128xf32>
    %1699 = arith.addf %1696, %1698 : vector<8x128xf32>
    %1700 = vector.broadcast %1290 : f32 to vector<8x128xf32>
    %1701 = arith.addf %1699, %1700 : vector<8x128xf32>
    %cst_403 = arith.constant 0.998308181 : f32
    %1702 = vector.broadcast %cst_403 : f32 to vector<8x128xf32>
    %1703 = arith.mulf %1702, %1310 : vector<8x128xf32>
    %cst_404 = arith.constant -0.0581448302 : f32
    %1704 = vector.broadcast %cst_404 : f32 to vector<8x128xf32>
    %1705 = arith.mulf %1704, %1312 : vector<8x128xf32>
    %1706 = arith.addf %1703, %1705 : vector<8x128xf32>
    %1707 = vector.broadcast %1291 : f32 to vector<8x128xf32>
    %1708 = arith.addf %1706, %1707 : vector<8x128xf32>
    %1709 = arith.mulf %1694, %1694 : vector<8x128xf32>
    %1710 = arith.mulf %1701, %1701 : vector<8x128xf32>
    %1711 = arith.addf %1709, %1710 : vector<8x128xf32>
    %1712 = arith.mulf %1708, %1708 : vector<8x128xf32>
    %1713 = arith.addf %1711, %1712 : vector<8x128xf32>
    %cst_405 = arith.constant 9.99999968E-21 : f32
    %1714 = vector.broadcast %cst_405 : f32 to vector<8x128xf32>
    %1715 = arith.addf %1711, %1714 : vector<8x128xf32>
    %1716 = tpu.reciprocal %1715 {approx = true} : vector<8x128xf32> -> vector<8x128xf32>
    %1717 = arith.mulf %1713, %1716 : vector<8x128xf32>
    %1718 = math.sqrt %1717 : vector<8x128xf32>
    %cst_406 = arith.constant 2.14450693 : f32
    %1719 = vector.broadcast %cst_406 : f32 to vector<8x128xf32>
    %1720 = arith.mulf %1694, %1719 : vector<8x128xf32>
    %cst_407 = arith.constant 0.000000e+00 : f32
    %1721 = vector.broadcast %cst_407 : f32 to vector<8x128xf32>
    %1722 = arith.cmpf ogt, %1694, %1721 : vector<8x128xf32>
    %1723 = arith.cmpf ole, %1701, %1720 : vector<8x128xf32>
    %1724 = arith.andi %1722, %1723 : vector<8x128xi1>
    %cst_408 = arith.constant 0.000000e+00 : f32
    %1725 = vector.broadcast %cst_408 : f32 to vector<8x128xf32>
    %1726 = arith.subf %1725, %1720 : vector<8x128xf32>
    %1727 = arith.cmpf ogt, %1701, %1726 : vector<8x128xf32>
    %1728 = arith.andi %1724, %1727 : vector<8x128xi1>
    %cst_409 = arith.constant 0.00999999977 : f32
    %1729 = vector.broadcast %cst_409 : f32 to vector<8x128xf32>
    %1730 = arith.cmpf ogt, %1713, %1729 : vector<8x128xf32>
    %1731 = arith.andi %1728, %1730 : vector<8x128xi1>
    %cst_410 = arith.constant 1.000000e+02 : f32
    %1732 = vector.broadcast %cst_410 : f32 to vector<8x128xf32>
    %1733 = arith.cmpf ole, %1713, %1732 : vector<8x128xf32>
    %1734 = arith.andi %1731, %1733 : vector<8x128xi1>
    %1735 = arith.addf %1713, %1331 : vector<8x128xf32>
    %cst_411 = arith.constant 2.000000e+00 : f32
    %1736 = vector.broadcast %cst_411 : f32 to vector<8x128xf32>
    %1737 = arith.mulf %1736, %1328 : vector<8x128xf32>
    %1738 = arith.mulf %1329, %1694 : vector<8x128xf32>
    %1739 = arith.mulf %1330, %1701 : vector<8x128xf32>
    %1740 = arith.addf %1738, %1739 : vector<8x128xf32>
    %1741 = arith.mulf %1718, %1740 : vector<8x128xf32>
    %1742 = arith.mulf %1737, %1741 : vector<8x128xf32>
    %1743 = arith.subf %1735, %1742 : vector<8x128xf32>
    %1744 = arith.addf %1713, %1350 : vector<8x128xf32>
    %cst_412 = arith.constant 2.000000e+00 : f32
    %1745 = vector.broadcast %cst_412 : f32 to vector<8x128xf32>
    %1746 = arith.mulf %1745, %1347 : vector<8x128xf32>
    %1747 = arith.mulf %1348, %1694 : vector<8x128xf32>
    %1748 = arith.mulf %1349, %1701 : vector<8x128xf32>
    %1749 = arith.addf %1747, %1748 : vector<8x128xf32>
    %1750 = arith.mulf %1718, %1749 : vector<8x128xf32>
    %1751 = arith.mulf %1746, %1750 : vector<8x128xf32>
    %1752 = arith.subf %1744, %1751 : vector<8x128xf32>
    %1753 = arith.minimumf %1685, %1743 : vector<8x128xf32>
    %1754 = arith.minimumf %1686, %1752 : vector<8x128xf32>
    %1755 = arith.andi %1687, %1734 : vector<8x128xi1>
    %cst_413 = arith.constant 0.99939084 : f32
    %1756 = vector.broadcast %cst_413 : f32 to vector<8x128xf32>
    %1757 = arith.mulf %1756, %1296 : vector<8x128xf32>
    %cst_414 = arith.constant -0.0348994955 : f32
    %1758 = vector.broadcast %cst_414 : f32 to vector<8x128xf32>
    %1759 = arith.mulf %1758, %1298 : vector<8x128xf32>
    %1760 = arith.addf %1757, %1759 : vector<8x128xf32>
    %1761 = vector.broadcast %1289 : f32 to vector<8x128xf32>
    %1762 = arith.addf %1760, %1761 : vector<8x128xf32>
    %cst_415 = arith.constant 0.99939084 : f32
    %1763 = vector.broadcast %cst_415 : f32 to vector<8x128xf32>
    %1764 = arith.mulf %1763, %1303 : vector<8x128xf32>
    %cst_416 = arith.constant -0.0348994955 : f32
    %1765 = vector.broadcast %cst_416 : f32 to vector<8x128xf32>
    %1766 = arith.mulf %1765, %1305 : vector<8x128xf32>
    %1767 = arith.addf %1764, %1766 : vector<8x128xf32>
    %1768 = vector.broadcast %1290 : f32 to vector<8x128xf32>
    %1769 = arith.addf %1767, %1768 : vector<8x128xf32>
    %cst_417 = arith.constant 0.99939084 : f32
    %1770 = vector.broadcast %cst_417 : f32 to vector<8x128xf32>
    %1771 = arith.mulf %1770, %1310 : vector<8x128xf32>
    %cst_418 = arith.constant -0.0348994955 : f32
    %1772 = vector.broadcast %cst_418 : f32 to vector<8x128xf32>
    %1773 = arith.mulf %1772, %1312 : vector<8x128xf32>
    %1774 = arith.addf %1771, %1773 : vector<8x128xf32>
    %1775 = vector.broadcast %1291 : f32 to vector<8x128xf32>
    %1776 = arith.addf %1774, %1775 : vector<8x128xf32>
    %1777 = arith.mulf %1762, %1762 : vector<8x128xf32>
    %1778 = arith.mulf %1769, %1769 : vector<8x128xf32>
    %1779 = arith.addf %1777, %1778 : vector<8x128xf32>
    %1780 = arith.mulf %1776, %1776 : vector<8x128xf32>
    %1781 = arith.addf %1779, %1780 : vector<8x128xf32>
    %cst_419 = arith.constant 9.99999968E-21 : f32
    %1782 = vector.broadcast %cst_419 : f32 to vector<8x128xf32>
    %1783 = arith.addf %1779, %1782 : vector<8x128xf32>
    %1784 = tpu.reciprocal %1783 {approx = true} : vector<8x128xf32> -> vector<8x128xf32>
    %1785 = arith.mulf %1781, %1784 : vector<8x128xf32>
    %1786 = math.sqrt %1785 : vector<8x128xf32>
    %cst_420 = arith.constant 2.14450693 : f32
    %1787 = vector.broadcast %cst_420 : f32 to vector<8x128xf32>
    %1788 = arith.mulf %1762, %1787 : vector<8x128xf32>
    %cst_421 = arith.constant 0.000000e+00 : f32
    %1789 = vector.broadcast %cst_421 : f32 to vector<8x128xf32>
    %1790 = arith.cmpf ogt, %1762, %1789 : vector<8x128xf32>
    %1791 = arith.cmpf ole, %1769, %1788 : vector<8x128xf32>
    %1792 = arith.andi %1790, %1791 : vector<8x128xi1>
    %cst_422 = arith.constant 0.000000e+00 : f32
    %1793 = vector.broadcast %cst_422 : f32 to vector<8x128xf32>
    %1794 = arith.subf %1793, %1788 : vector<8x128xf32>
    %1795 = arith.cmpf ogt, %1769, %1794 : vector<8x128xf32>
    %1796 = arith.andi %1792, %1795 : vector<8x128xi1>
    %cst_423 = arith.constant 0.00999999977 : f32
    %1797 = vector.broadcast %cst_423 : f32 to vector<8x128xf32>
    %1798 = arith.cmpf ogt, %1781, %1797 : vector<8x128xf32>
    %1799 = arith.andi %1796, %1798 : vector<8x128xi1>
    %cst_424 = arith.constant 1.000000e+02 : f32
    %1800 = vector.broadcast %cst_424 : f32 to vector<8x128xf32>
    %1801 = arith.cmpf ole, %1781, %1800 : vector<8x128xf32>
    %1802 = arith.andi %1799, %1801 : vector<8x128xi1>
    %1803 = arith.addf %1781, %1331 : vector<8x128xf32>
    %cst_425 = arith.constant 2.000000e+00 : f32
    %1804 = vector.broadcast %cst_425 : f32 to vector<8x128xf32>
    %1805 = arith.mulf %1804, %1328 : vector<8x128xf32>
    %1806 = arith.mulf %1329, %1762 : vector<8x128xf32>
    %1807 = arith.mulf %1330, %1769 : vector<8x128xf32>
    %1808 = arith.addf %1806, %1807 : vector<8x128xf32>
    %1809 = arith.mulf %1786, %1808 : vector<8x128xf32>
    %1810 = arith.mulf %1805, %1809 : vector<8x128xf32>
    %1811 = arith.subf %1803, %1810 : vector<8x128xf32>
    %1812 = arith.addf %1781, %1350 : vector<8x128xf32>
    %cst_426 = arith.constant 2.000000e+00 : f32
    %1813 = vector.broadcast %cst_426 : f32 to vector<8x128xf32>
    %1814 = arith.mulf %1813, %1347 : vector<8x128xf32>
    %1815 = arith.mulf %1348, %1762 : vector<8x128xf32>
    %1816 = arith.mulf %1349, %1769 : vector<8x128xf32>
    %1817 = arith.addf %1815, %1816 : vector<8x128xf32>
    %1818 = arith.mulf %1786, %1817 : vector<8x128xf32>
    %1819 = arith.mulf %1814, %1818 : vector<8x128xf32>
    %1820 = arith.subf %1812, %1819 : vector<8x128xf32>
    %1821 = arith.minimumf %1753, %1811 : vector<8x128xf32>
    %1822 = arith.minimumf %1754, %1820 : vector<8x128xf32>
    %1823 = arith.andi %1755, %1802 : vector<8x128xi1>
    %cst_427 = arith.constant 0.999932289 : f32
    %1824 = vector.broadcast %cst_427 : f32 to vector<8x128xf32>
    %1825 = arith.mulf %1824, %1296 : vector<8x128xf32>
    %cst_428 = arith.constant -0.0116352662 : f32
    %1826 = vector.broadcast %cst_428 : f32 to vector<8x128xf32>
    %1827 = arith.mulf %1826, %1298 : vector<8x128xf32>
    %1828 = arith.addf %1825, %1827 : vector<8x128xf32>
    %1829 = vector.broadcast %1289 : f32 to vector<8x128xf32>
    %1830 = arith.addf %1828, %1829 : vector<8x128xf32>
    %cst_429 = arith.constant 0.999932289 : f32
    %1831 = vector.broadcast %cst_429 : f32 to vector<8x128xf32>
    %1832 = arith.mulf %1831, %1303 : vector<8x128xf32>
    %cst_430 = arith.constant -0.0116352662 : f32
    %1833 = vector.broadcast %cst_430 : f32 to vector<8x128xf32>
    %1834 = arith.mulf %1833, %1305 : vector<8x128xf32>
    %1835 = arith.addf %1832, %1834 : vector<8x128xf32>
    %1836 = vector.broadcast %1290 : f32 to vector<8x128xf32>
    %1837 = arith.addf %1835, %1836 : vector<8x128xf32>
    %cst_431 = arith.constant 0.999932289 : f32
    %1838 = vector.broadcast %cst_431 : f32 to vector<8x128xf32>
    %1839 = arith.mulf %1838, %1310 : vector<8x128xf32>
    %cst_432 = arith.constant -0.0116352662 : f32
    %1840 = vector.broadcast %cst_432 : f32 to vector<8x128xf32>
    %1841 = arith.mulf %1840, %1312 : vector<8x128xf32>
    %1842 = arith.addf %1839, %1841 : vector<8x128xf32>
    %1843 = vector.broadcast %1291 : f32 to vector<8x128xf32>
    %1844 = arith.addf %1842, %1843 : vector<8x128xf32>
    %1845 = arith.mulf %1830, %1830 : vector<8x128xf32>
    %1846 = arith.mulf %1837, %1837 : vector<8x128xf32>
    %1847 = arith.addf %1845, %1846 : vector<8x128xf32>
    %1848 = arith.mulf %1844, %1844 : vector<8x128xf32>
    %1849 = arith.addf %1847, %1848 : vector<8x128xf32>
    %cst_433 = arith.constant 9.99999968E-21 : f32
    %1850 = vector.broadcast %cst_433 : f32 to vector<8x128xf32>
    %1851 = arith.addf %1847, %1850 : vector<8x128xf32>
    %1852 = tpu.reciprocal %1851 {approx = true} : vector<8x128xf32> -> vector<8x128xf32>
    %1853 = arith.mulf %1849, %1852 : vector<8x128xf32>
    %1854 = math.sqrt %1853 : vector<8x128xf32>
    %cst_434 = arith.constant 2.14450693 : f32
    %1855 = vector.broadcast %cst_434 : f32 to vector<8x128xf32>
    %1856 = arith.mulf %1830, %1855 : vector<8x128xf32>
    %cst_435 = arith.constant 0.000000e+00 : f32
    %1857 = vector.broadcast %cst_435 : f32 to vector<8x128xf32>
    %1858 = arith.cmpf ogt, %1830, %1857 : vector<8x128xf32>
    %1859 = arith.cmpf ole, %1837, %1856 : vector<8x128xf32>
    %1860 = arith.andi %1858, %1859 : vector<8x128xi1>
    %cst_436 = arith.constant 0.000000e+00 : f32
    %1861 = vector.broadcast %cst_436 : f32 to vector<8x128xf32>
    %1862 = arith.subf %1861, %1856 : vector<8x128xf32>
    %1863 = arith.cmpf ogt, %1837, %1862 : vector<8x128xf32>
    %1864 = arith.andi %1860, %1863 : vector<8x128xi1>
    %cst_437 = arith.constant 0.00999999977 : f32
    %1865 = vector.broadcast %cst_437 : f32 to vector<8x128xf32>
    %1866 = arith.cmpf ogt, %1849, %1865 : vector<8x128xf32>
    %1867 = arith.andi %1864, %1866 : vector<8x128xi1>
    %cst_438 = arith.constant 1.000000e+02 : f32
    %1868 = vector.broadcast %cst_438 : f32 to vector<8x128xf32>
    %1869 = arith.cmpf ole, %1849, %1868 : vector<8x128xf32>
    %1870 = arith.andi %1867, %1869 : vector<8x128xi1>
    %1871 = arith.addf %1849, %1331 : vector<8x128xf32>
    %cst_439 = arith.constant 2.000000e+00 : f32
    %1872 = vector.broadcast %cst_439 : f32 to vector<8x128xf32>
    %1873 = arith.mulf %1872, %1328 : vector<8x128xf32>
    %1874 = arith.mulf %1329, %1830 : vector<8x128xf32>
    %1875 = arith.mulf %1330, %1837 : vector<8x128xf32>
    %1876 = arith.addf %1874, %1875 : vector<8x128xf32>
    %1877 = arith.mulf %1854, %1876 : vector<8x128xf32>
    %1878 = arith.mulf %1873, %1877 : vector<8x128xf32>
    %1879 = arith.subf %1871, %1878 : vector<8x128xf32>
    %1880 = arith.addf %1849, %1350 : vector<8x128xf32>
    %cst_440 = arith.constant 2.000000e+00 : f32
    %1881 = vector.broadcast %cst_440 : f32 to vector<8x128xf32>
    %1882 = arith.mulf %1881, %1347 : vector<8x128xf32>
    %1883 = arith.mulf %1348, %1830 : vector<8x128xf32>
    %1884 = arith.mulf %1349, %1837 : vector<8x128xf32>
    %1885 = arith.addf %1883, %1884 : vector<8x128xf32>
    %1886 = arith.mulf %1854, %1885 : vector<8x128xf32>
    %1887 = arith.mulf %1882, %1886 : vector<8x128xf32>
    %1888 = arith.subf %1880, %1887 : vector<8x128xf32>
    %1889 = arith.minimumf %1821, %1879 : vector<8x128xf32>
    %1890 = arith.minimumf %1822, %1888 : vector<8x128xf32>
    %1891 = arith.andi %1823, %1870 : vector<8x128xi1>
    %cst_441 = arith.constant 0.999932289 : f32
    %1892 = vector.broadcast %cst_441 : f32 to vector<8x128xf32>
    %1893 = arith.mulf %1892, %1296 : vector<8x128xf32>
    %cst_442 = arith.constant 0.0116352662 : f32
    %1894 = vector.broadcast %cst_442 : f32 to vector<8x128xf32>
    %1895 = arith.mulf %1894, %1298 : vector<8x128xf32>
    %1896 = arith.addf %1893, %1895 : vector<8x128xf32>
    %1897 = vector.broadcast %1289 : f32 to vector<8x128xf32>
    %1898 = arith.addf %1896, %1897 : vector<8x128xf32>
    %cst_443 = arith.constant 0.999932289 : f32
    %1899 = vector.broadcast %cst_443 : f32 to vector<8x128xf32>
    %1900 = arith.mulf %1899, %1303 : vector<8x128xf32>
    %cst_444 = arith.constant 0.0116352662 : f32
    %1901 = vector.broadcast %cst_444 : f32 to vector<8x128xf32>
    %1902 = arith.mulf %1901, %1305 : vector<8x128xf32>
    %1903 = arith.addf %1900, %1902 : vector<8x128xf32>
    %1904 = vector.broadcast %1290 : f32 to vector<8x128xf32>
    %1905 = arith.addf %1903, %1904 : vector<8x128xf32>
    %cst_445 = arith.constant 0.999932289 : f32
    %1906 = vector.broadcast %cst_445 : f32 to vector<8x128xf32>
    %1907 = arith.mulf %1906, %1310 : vector<8x128xf32>
    %cst_446 = arith.constant 0.0116352662 : f32
    %1908 = vector.broadcast %cst_446 : f32 to vector<8x128xf32>
    %1909 = arith.mulf %1908, %1312 : vector<8x128xf32>
    %1910 = arith.addf %1907, %1909 : vector<8x128xf32>
    %1911 = vector.broadcast %1291 : f32 to vector<8x128xf32>
    %1912 = arith.addf %1910, %1911 : vector<8x128xf32>
    %1913 = arith.mulf %1898, %1898 : vector<8x128xf32>
    %1914 = arith.mulf %1905, %1905 : vector<8x128xf32>
    %1915 = arith.addf %1913, %1914 : vector<8x128xf32>
    %1916 = arith.mulf %1912, %1912 : vector<8x128xf32>
    %1917 = arith.addf %1915, %1916 : vector<8x128xf32>
    %cst_447 = arith.constant 9.99999968E-21 : f32
    %1918 = vector.broadcast %cst_447 : f32 to vector<8x128xf32>
    %1919 = arith.addf %1915, %1918 : vector<8x128xf32>
    %1920 = tpu.reciprocal %1919 {approx = true} : vector<8x128xf32> -> vector<8x128xf32>
    %1921 = arith.mulf %1917, %1920 : vector<8x128xf32>
    %1922 = math.sqrt %1921 : vector<8x128xf32>
    %cst_448 = arith.constant 2.14450693 : f32
    %1923 = vector.broadcast %cst_448 : f32 to vector<8x128xf32>
    %1924 = arith.mulf %1898, %1923 : vector<8x128xf32>
    %cst_449 = arith.constant 0.000000e+00 : f32
    %1925 = vector.broadcast %cst_449 : f32 to vector<8x128xf32>
    %1926 = arith.cmpf ogt, %1898, %1925 : vector<8x128xf32>
    %1927 = arith.cmpf ole, %1905, %1924 : vector<8x128xf32>
    %1928 = arith.andi %1926, %1927 : vector<8x128xi1>
    %cst_450 = arith.constant 0.000000e+00 : f32
    %1929 = vector.broadcast %cst_450 : f32 to vector<8x128xf32>
    %1930 = arith.subf %1929, %1924 : vector<8x128xf32>
    %1931 = arith.cmpf ogt, %1905, %1930 : vector<8x128xf32>
    %1932 = arith.andi %1928, %1931 : vector<8x128xi1>
    %cst_451 = arith.constant 0.00999999977 : f32
    %1933 = vector.broadcast %cst_451 : f32 to vector<8x128xf32>
    %1934 = arith.cmpf ogt, %1917, %1933 : vector<8x128xf32>
    %1935 = arith.andi %1932, %1934 : vector<8x128xi1>
    %cst_452 = arith.constant 1.000000e+02 : f32
    %1936 = vector.broadcast %cst_452 : f32 to vector<8x128xf32>
    %1937 = arith.cmpf ole, %1917, %1936 : vector<8x128xf32>
    %1938 = arith.andi %1935, %1937 : vector<8x128xi1>
    %1939 = arith.addf %1917, %1331 : vector<8x128xf32>
    %cst_453 = arith.constant 2.000000e+00 : f32
    %1940 = vector.broadcast %cst_453 : f32 to vector<8x128xf32>
    %1941 = arith.mulf %1940, %1328 : vector<8x128xf32>
    %1942 = arith.mulf %1329, %1898 : vector<8x128xf32>
    %1943 = arith.mulf %1330, %1905 : vector<8x128xf32>
    %1944 = arith.addf %1942, %1943 : vector<8x128xf32>
    %1945 = arith.mulf %1922, %1944 : vector<8x128xf32>
    %1946 = arith.mulf %1941, %1945 : vector<8x128xf32>
    %1947 = arith.subf %1939, %1946 : vector<8x128xf32>
    %1948 = arith.addf %1917, %1350 : vector<8x128xf32>
    %cst_454 = arith.constant 2.000000e+00 : f32
    %1949 = vector.broadcast %cst_454 : f32 to vector<8x128xf32>
    %1950 = arith.mulf %1949, %1347 : vector<8x128xf32>
    %1951 = arith.mulf %1348, %1898 : vector<8x128xf32>
    %1952 = arith.mulf %1349, %1905 : vector<8x128xf32>
    %1953 = arith.addf %1951, %1952 : vector<8x128xf32>
    %1954 = arith.mulf %1922, %1953 : vector<8x128xf32>
    %1955 = arith.mulf %1950, %1954 : vector<8x128xf32>
    %1956 = arith.subf %1948, %1955 : vector<8x128xf32>
    %1957 = arith.minimumf %1889, %1947 : vector<8x128xf32>
    %1958 = arith.minimumf %1890, %1956 : vector<8x128xf32>
    %1959 = arith.andi %1891, %1938 : vector<8x128xi1>
    %cst_455 = arith.constant 0.99939084 : f32
    %1960 = vector.broadcast %cst_455 : f32 to vector<8x128xf32>
    %1961 = arith.mulf %1960, %1296 : vector<8x128xf32>
    %cst_456 = arith.constant 0.0348994955 : f32
    %1962 = vector.broadcast %cst_456 : f32 to vector<8x128xf32>
    %1963 = arith.mulf %1962, %1298 : vector<8x128xf32>
    %1964 = arith.addf %1961, %1963 : vector<8x128xf32>
    %1965 = vector.broadcast %1289 : f32 to vector<8x128xf32>
    %1966 = arith.addf %1964, %1965 : vector<8x128xf32>
    %cst_457 = arith.constant 0.99939084 : f32
    %1967 = vector.broadcast %cst_457 : f32 to vector<8x128xf32>
    %1968 = arith.mulf %1967, %1303 : vector<8x128xf32>
    %cst_458 = arith.constant 0.0348994955 : f32
    %1969 = vector.broadcast %cst_458 : f32 to vector<8x128xf32>
    %1970 = arith.mulf %1969, %1305 : vector<8x128xf32>
    %1971 = arith.addf %1968, %1970 : vector<8x128xf32>
    %1972 = vector.broadcast %1290 : f32 to vector<8x128xf32>
    %1973 = arith.addf %1971, %1972 : vector<8x128xf32>
    %cst_459 = arith.constant 0.99939084 : f32
    %1974 = vector.broadcast %cst_459 : f32 to vector<8x128xf32>
    %1975 = arith.mulf %1974, %1310 : vector<8x128xf32>
    %cst_460 = arith.constant 0.0348994955 : f32
    %1976 = vector.broadcast %cst_460 : f32 to vector<8x128xf32>
    %1977 = arith.mulf %1976, %1312 : vector<8x128xf32>
    %1978 = arith.addf %1975, %1977 : vector<8x128xf32>
    %1979 = vector.broadcast %1291 : f32 to vector<8x128xf32>
    %1980 = arith.addf %1978, %1979 : vector<8x128xf32>
    %1981 = arith.mulf %1966, %1966 : vector<8x128xf32>
    %1982 = arith.mulf %1973, %1973 : vector<8x128xf32>
    %1983 = arith.addf %1981, %1982 : vector<8x128xf32>
    %1984 = arith.mulf %1980, %1980 : vector<8x128xf32>
    %1985 = arith.addf %1983, %1984 : vector<8x128xf32>
    %cst_461 = arith.constant 9.99999968E-21 : f32
    %1986 = vector.broadcast %cst_461 : f32 to vector<8x128xf32>
    %1987 = arith.addf %1983, %1986 : vector<8x128xf32>
    %1988 = tpu.reciprocal %1987 {approx = true} : vector<8x128xf32> -> vector<8x128xf32>
    %1989 = arith.mulf %1985, %1988 : vector<8x128xf32>
    %1990 = math.sqrt %1989 : vector<8x128xf32>
    %cst_462 = arith.constant 2.14450693 : f32
    %1991 = vector.broadcast %cst_462 : f32 to vector<8x128xf32>
    %1992 = arith.mulf %1966, %1991 : vector<8x128xf32>
    %cst_463 = arith.constant 0.000000e+00 : f32
    %1993 = vector.broadcast %cst_463 : f32 to vector<8x128xf32>
    %1994 = arith.cmpf ogt, %1966, %1993 : vector<8x128xf32>
    %1995 = arith.cmpf ole, %1973, %1992 : vector<8x128xf32>
    %1996 = arith.andi %1994, %1995 : vector<8x128xi1>
    %cst_464 = arith.constant 0.000000e+00 : f32
    %1997 = vector.broadcast %cst_464 : f32 to vector<8x128xf32>
    %1998 = arith.subf %1997, %1992 : vector<8x128xf32>
    %1999 = arith.cmpf ogt, %1973, %1998 : vector<8x128xf32>
    %2000 = arith.andi %1996, %1999 : vector<8x128xi1>
    %cst_465 = arith.constant 0.00999999977 : f32
    %2001 = vector.broadcast %cst_465 : f32 to vector<8x128xf32>
    %2002 = arith.cmpf ogt, %1985, %2001 : vector<8x128xf32>
    %2003 = arith.andi %2000, %2002 : vector<8x128xi1>
    %cst_466 = arith.constant 1.000000e+02 : f32
    %2004 = vector.broadcast %cst_466 : f32 to vector<8x128xf32>
    %2005 = arith.cmpf ole, %1985, %2004 : vector<8x128xf32>
    %2006 = arith.andi %2003, %2005 : vector<8x128xi1>
    %2007 = arith.addf %1985, %1331 : vector<8x128xf32>
    %cst_467 = arith.constant 2.000000e+00 : f32
    %2008 = vector.broadcast %cst_467 : f32 to vector<8x128xf32>
    %2009 = arith.mulf %2008, %1328 : vector<8x128xf32>
    %2010 = arith.mulf %1329, %1966 : vector<8x128xf32>
    %2011 = arith.mulf %1330, %1973 : vector<8x128xf32>
    %2012 = arith.addf %2010, %2011 : vector<8x128xf32>
    %2013 = arith.mulf %1990, %2012 : vector<8x128xf32>
    %2014 = arith.mulf %2009, %2013 : vector<8x128xf32>
    %2015 = arith.subf %2007, %2014 : vector<8x128xf32>
    %2016 = arith.addf %1985, %1350 : vector<8x128xf32>
    %cst_468 = arith.constant 2.000000e+00 : f32
    %2017 = vector.broadcast %cst_468 : f32 to vector<8x128xf32>
    %2018 = arith.mulf %2017, %1347 : vector<8x128xf32>
    %2019 = arith.mulf %1348, %1966 : vector<8x128xf32>
    %2020 = arith.mulf %1349, %1973 : vector<8x128xf32>
    %2021 = arith.addf %2019, %2020 : vector<8x128xf32>
    %2022 = arith.mulf %1990, %2021 : vector<8x128xf32>
    %2023 = arith.mulf %2018, %2022 : vector<8x128xf32>
    %2024 = arith.subf %2016, %2023 : vector<8x128xf32>
    %2025 = arith.minimumf %1957, %2015 : vector<8x128xf32>
    %2026 = arith.minimumf %1958, %2024 : vector<8x128xf32>
    %2027 = arith.andi %1959, %2006 : vector<8x128xi1>
    %cst_469 = arith.constant 0.998308181 : f32
    %2028 = vector.broadcast %cst_469 : f32 to vector<8x128xf32>
    %2029 = arith.mulf %2028, %1296 : vector<8x128xf32>
    %cst_470 = arith.constant 0.0581448302 : f32
    %2030 = vector.broadcast %cst_470 : f32 to vector<8x128xf32>
    %2031 = arith.mulf %2030, %1298 : vector<8x128xf32>
    %2032 = arith.addf %2029, %2031 : vector<8x128xf32>
    %2033 = vector.broadcast %1289 : f32 to vector<8x128xf32>
    %2034 = arith.addf %2032, %2033 : vector<8x128xf32>
    %cst_471 = arith.constant 0.998308181 : f32
    %2035 = vector.broadcast %cst_471 : f32 to vector<8x128xf32>
    %2036 = arith.mulf %2035, %1303 : vector<8x128xf32>
    %cst_472 = arith.constant 0.0581448302 : f32
    %2037 = vector.broadcast %cst_472 : f32 to vector<8x128xf32>
    %2038 = arith.mulf %2037, %1305 : vector<8x128xf32>
    %2039 = arith.addf %2036, %2038 : vector<8x128xf32>
    %2040 = vector.broadcast %1290 : f32 to vector<8x128xf32>
    %2041 = arith.addf %2039, %2040 : vector<8x128xf32>
    %cst_473 = arith.constant 0.998308181 : f32
    %2042 = vector.broadcast %cst_473 : f32 to vector<8x128xf32>
    %2043 = arith.mulf %2042, %1310 : vector<8x128xf32>
    %cst_474 = arith.constant 0.0581448302 : f32
    %2044 = vector.broadcast %cst_474 : f32 to vector<8x128xf32>
    %2045 = arith.mulf %2044, %1312 : vector<8x128xf32>
    %2046 = arith.addf %2043, %2045 : vector<8x128xf32>
    %2047 = vector.broadcast %1291 : f32 to vector<8x128xf32>
    %2048 = arith.addf %2046, %2047 : vector<8x128xf32>
    %2049 = arith.mulf %2034, %2034 : vector<8x128xf32>
    %2050 = arith.mulf %2041, %2041 : vector<8x128xf32>
    %2051 = arith.addf %2049, %2050 : vector<8x128xf32>
    %2052 = arith.mulf %2048, %2048 : vector<8x128xf32>
    %2053 = arith.addf %2051, %2052 : vector<8x128xf32>
    %cst_475 = arith.constant 9.99999968E-21 : f32
    %2054 = vector.broadcast %cst_475 : f32 to vector<8x128xf32>
    %2055 = arith.addf %2051, %2054 : vector<8x128xf32>
    %2056 = tpu.reciprocal %2055 {approx = true} : vector<8x128xf32> -> vector<8x128xf32>
    %2057 = arith.mulf %2053, %2056 : vector<8x128xf32>
    %2058 = math.sqrt %2057 : vector<8x128xf32>
    %cst_476 = arith.constant 2.14450693 : f32
    %2059 = vector.broadcast %cst_476 : f32 to vector<8x128xf32>
    %2060 = arith.mulf %2034, %2059 : vector<8x128xf32>
    %cst_477 = arith.constant 0.000000e+00 : f32
    %2061 = vector.broadcast %cst_477 : f32 to vector<8x128xf32>
    %2062 = arith.cmpf ogt, %2034, %2061 : vector<8x128xf32>
    %2063 = arith.cmpf ole, %2041, %2060 : vector<8x128xf32>
    %2064 = arith.andi %2062, %2063 : vector<8x128xi1>
    %cst_478 = arith.constant 0.000000e+00 : f32
    %2065 = vector.broadcast %cst_478 : f32 to vector<8x128xf32>
    %2066 = arith.subf %2065, %2060 : vector<8x128xf32>
    %2067 = arith.cmpf ogt, %2041, %2066 : vector<8x128xf32>
    %2068 = arith.andi %2064, %2067 : vector<8x128xi1>
    %cst_479 = arith.constant 0.00999999977 : f32
    %2069 = vector.broadcast %cst_479 : f32 to vector<8x128xf32>
    %2070 = arith.cmpf ogt, %2053, %2069 : vector<8x128xf32>
    %2071 = arith.andi %2068, %2070 : vector<8x128xi1>
    %cst_480 = arith.constant 1.000000e+02 : f32
    %2072 = vector.broadcast %cst_480 : f32 to vector<8x128xf32>
    %2073 = arith.cmpf ole, %2053, %2072 : vector<8x128xf32>
    %2074 = arith.andi %2071, %2073 : vector<8x128xi1>
    %2075 = arith.addf %2053, %1331 : vector<8x128xf32>
    %cst_481 = arith.constant 2.000000e+00 : f32
    %2076 = vector.broadcast %cst_481 : f32 to vector<8x128xf32>
    %2077 = arith.mulf %2076, %1328 : vector<8x128xf32>
    %2078 = arith.mulf %1329, %2034 : vector<8x128xf32>
    %2079 = arith.mulf %1330, %2041 : vector<8x128xf32>
    %2080 = arith.addf %2078, %2079 : vector<8x128xf32>
    %2081 = arith.mulf %2058, %2080 : vector<8x128xf32>
    %2082 = arith.mulf %2077, %2081 : vector<8x128xf32>
    %2083 = arith.subf %2075, %2082 : vector<8x128xf32>
    %2084 = arith.addf %2053, %1350 : vector<8x128xf32>
    %cst_482 = arith.constant 2.000000e+00 : f32
    %2085 = vector.broadcast %cst_482 : f32 to vector<8x128xf32>
    %2086 = arith.mulf %2085, %1347 : vector<8x128xf32>
    %2087 = arith.mulf %1348, %2034 : vector<8x128xf32>
    %2088 = arith.mulf %1349, %2041 : vector<8x128xf32>
    %2089 = arith.addf %2087, %2088 : vector<8x128xf32>
    %2090 = arith.mulf %2058, %2089 : vector<8x128xf32>
    %2091 = arith.mulf %2086, %2090 : vector<8x128xf32>
    %2092 = arith.subf %2084, %2091 : vector<8x128xf32>
    %2093 = arith.minimumf %2025, %2083 : vector<8x128xf32>
    %2094 = arith.minimumf %2026, %2092 : vector<8x128xf32>
    %2095 = arith.andi %2027, %2074 : vector<8x128xi1>
    %cst_483 = arith.constant 0.996684908 : f32
    %2096 = vector.broadcast %cst_483 : f32 to vector<8x128xf32>
    %2097 = arith.mulf %2096, %1296 : vector<8x128xf32>
    %cst_484 = arith.constant 0.0813586711 : f32
    %2098 = vector.broadcast %cst_484 : f32 to vector<8x128xf32>
    %2099 = arith.mulf %2098, %1298 : vector<8x128xf32>
    %2100 = arith.addf %2097, %2099 : vector<8x128xf32>
    %2101 = vector.broadcast %1289 : f32 to vector<8x128xf32>
    %2102 = arith.addf %2100, %2101 : vector<8x128xf32>
    %cst_485 = arith.constant 0.996684908 : f32
    %2103 = vector.broadcast %cst_485 : f32 to vector<8x128xf32>
    %2104 = arith.mulf %2103, %1303 : vector<8x128xf32>
    %cst_486 = arith.constant 0.0813586711 : f32
    %2105 = vector.broadcast %cst_486 : f32 to vector<8x128xf32>
    %2106 = arith.mulf %2105, %1305 : vector<8x128xf32>
    %2107 = arith.addf %2104, %2106 : vector<8x128xf32>
    %2108 = vector.broadcast %1290 : f32 to vector<8x128xf32>
    %2109 = arith.addf %2107, %2108 : vector<8x128xf32>
    %cst_487 = arith.constant 0.996684908 : f32
    %2110 = vector.broadcast %cst_487 : f32 to vector<8x128xf32>
    %2111 = arith.mulf %2110, %1310 : vector<8x128xf32>
    %cst_488 = arith.constant 0.0813586711 : f32
    %2112 = vector.broadcast %cst_488 : f32 to vector<8x128xf32>
    %2113 = arith.mulf %2112, %1312 : vector<8x128xf32>
    %2114 = arith.addf %2111, %2113 : vector<8x128xf32>
    %2115 = vector.broadcast %1291 : f32 to vector<8x128xf32>
    %2116 = arith.addf %2114, %2115 : vector<8x128xf32>
    %2117 = arith.mulf %2102, %2102 : vector<8x128xf32>
    %2118 = arith.mulf %2109, %2109 : vector<8x128xf32>
    %2119 = arith.addf %2117, %2118 : vector<8x128xf32>
    %2120 = arith.mulf %2116, %2116 : vector<8x128xf32>
    %2121 = arith.addf %2119, %2120 : vector<8x128xf32>
    %cst_489 = arith.constant 9.99999968E-21 : f32
    %2122 = vector.broadcast %cst_489 : f32 to vector<8x128xf32>
    %2123 = arith.addf %2119, %2122 : vector<8x128xf32>
    %2124 = tpu.reciprocal %2123 {approx = true} : vector<8x128xf32> -> vector<8x128xf32>
    %2125 = arith.mulf %2121, %2124 : vector<8x128xf32>
    %2126 = math.sqrt %2125 : vector<8x128xf32>
    %cst_490 = arith.constant 2.14450693 : f32
    %2127 = vector.broadcast %cst_490 : f32 to vector<8x128xf32>
    %2128 = arith.mulf %2102, %2127 : vector<8x128xf32>
    %cst_491 = arith.constant 0.000000e+00 : f32
    %2129 = vector.broadcast %cst_491 : f32 to vector<8x128xf32>
    %2130 = arith.cmpf ogt, %2102, %2129 : vector<8x128xf32>
    %2131 = arith.cmpf ole, %2109, %2128 : vector<8x128xf32>
    %2132 = arith.andi %2130, %2131 : vector<8x128xi1>
    %cst_492 = arith.constant 0.000000e+00 : f32
    %2133 = vector.broadcast %cst_492 : f32 to vector<8x128xf32>
    %2134 = arith.subf %2133, %2128 : vector<8x128xf32>
    %2135 = arith.cmpf ogt, %2109, %2134 : vector<8x128xf32>
    %2136 = arith.andi %2132, %2135 : vector<8x128xi1>
    %cst_493 = arith.constant 0.00999999977 : f32
    %2137 = vector.broadcast %cst_493 : f32 to vector<8x128xf32>
    %2138 = arith.cmpf ogt, %2121, %2137 : vector<8x128xf32>
    %2139 = arith.andi %2136, %2138 : vector<8x128xi1>
    %cst_494 = arith.constant 1.000000e+02 : f32
    %2140 = vector.broadcast %cst_494 : f32 to vector<8x128xf32>
    %2141 = arith.cmpf ole, %2121, %2140 : vector<8x128xf32>
    %2142 = arith.andi %2139, %2141 : vector<8x128xi1>
    %2143 = arith.addf %2121, %1331 : vector<8x128xf32>
    %cst_495 = arith.constant 2.000000e+00 : f32
    %2144 = vector.broadcast %cst_495 : f32 to vector<8x128xf32>
    %2145 = arith.mulf %2144, %1328 : vector<8x128xf32>
    %2146 = arith.mulf %1329, %2102 : vector<8x128xf32>
    %2147 = arith.mulf %1330, %2109 : vector<8x128xf32>
    %2148 = arith.addf %2146, %2147 : vector<8x128xf32>
    %2149 = arith.mulf %2126, %2148 : vector<8x128xf32>
    %2150 = arith.mulf %2145, %2149 : vector<8x128xf32>
    %2151 = arith.subf %2143, %2150 : vector<8x128xf32>
    %2152 = arith.addf %2121, %1350 : vector<8x128xf32>
    %cst_496 = arith.constant 2.000000e+00 : f32
    %2153 = vector.broadcast %cst_496 : f32 to vector<8x128xf32>
    %2154 = arith.mulf %2153, %1347 : vector<8x128xf32>
    %2155 = arith.mulf %1348, %2102 : vector<8x128xf32>
    %2156 = arith.mulf %1349, %2109 : vector<8x128xf32>
    %2157 = arith.addf %2155, %2156 : vector<8x128xf32>
    %2158 = arith.mulf %2126, %2157 : vector<8x128xf32>
    %2159 = arith.mulf %2154, %2158 : vector<8x128xf32>
    %2160 = arith.subf %2152, %2159 : vector<8x128xf32>
    %2161 = arith.minimumf %2093, %2151 : vector<8x128xf32>
    %2162 = arith.minimumf %2094, %2160 : vector<8x128xf32>
    %2163 = arith.andi %2095, %2142 : vector<8x128xi1>
    %cst_497 = arith.constant 0.994521915 : f32
    %2164 = vector.broadcast %cst_497 : f32 to vector<8x128xf32>
    %2165 = arith.mulf %2164, %1296 : vector<8x128xf32>
    %cst_498 = arith.constant 0.104528464 : f32
    %2166 = vector.broadcast %cst_498 : f32 to vector<8x128xf32>
    %2167 = arith.mulf %2166, %1298 : vector<8x128xf32>
    %2168 = arith.addf %2165, %2167 : vector<8x128xf32>
    %2169 = vector.broadcast %1289 : f32 to vector<8x128xf32>
    %2170 = arith.addf %2168, %2169 : vector<8x128xf32>
    %cst_499 = arith.constant 0.994521915 : f32
    %2171 = vector.broadcast %cst_499 : f32 to vector<8x128xf32>
    %2172 = arith.mulf %2171, %1303 : vector<8x128xf32>
    %cst_500 = arith.constant 0.104528464 : f32
    %2173 = vector.broadcast %cst_500 : f32 to vector<8x128xf32>
    %2174 = arith.mulf %2173, %1305 : vector<8x128xf32>
    %2175 = arith.addf %2172, %2174 : vector<8x128xf32>
    %2176 = vector.broadcast %1290 : f32 to vector<8x128xf32>
    %2177 = arith.addf %2175, %2176 : vector<8x128xf32>
    %cst_501 = arith.constant 0.994521915 : f32
    %2178 = vector.broadcast %cst_501 : f32 to vector<8x128xf32>
    %2179 = arith.mulf %2178, %1310 : vector<8x128xf32>
    %cst_502 = arith.constant 0.104528464 : f32
    %2180 = vector.broadcast %cst_502 : f32 to vector<8x128xf32>
    %2181 = arith.mulf %2180, %1312 : vector<8x128xf32>
    %2182 = arith.addf %2179, %2181 : vector<8x128xf32>
    %2183 = vector.broadcast %1291 : f32 to vector<8x128xf32>
    %2184 = arith.addf %2182, %2183 : vector<8x128xf32>
    %2185 = arith.mulf %2170, %2170 : vector<8x128xf32>
    %2186 = arith.mulf %2177, %2177 : vector<8x128xf32>
    %2187 = arith.addf %2185, %2186 : vector<8x128xf32>
    %2188 = arith.mulf %2184, %2184 : vector<8x128xf32>
    %2189 = arith.addf %2187, %2188 : vector<8x128xf32>
    %cst_503 = arith.constant 9.99999968E-21 : f32
    %2190 = vector.broadcast %cst_503 : f32 to vector<8x128xf32>
    %2191 = arith.addf %2187, %2190 : vector<8x128xf32>
    %2192 = tpu.reciprocal %2191 {approx = true} : vector<8x128xf32> -> vector<8x128xf32>
    %2193 = arith.mulf %2189, %2192 : vector<8x128xf32>
    %2194 = math.sqrt %2193 : vector<8x128xf32>
    %cst_504 = arith.constant 2.14450693 : f32
    %2195 = vector.broadcast %cst_504 : f32 to vector<8x128xf32>
    %2196 = arith.mulf %2170, %2195 : vector<8x128xf32>
    %cst_505 = arith.constant 0.000000e+00 : f32
    %2197 = vector.broadcast %cst_505 : f32 to vector<8x128xf32>
    %2198 = arith.cmpf ogt, %2170, %2197 : vector<8x128xf32>
    %2199 = arith.cmpf ole, %2177, %2196 : vector<8x128xf32>
    %2200 = arith.andi %2198, %2199 : vector<8x128xi1>
    %cst_506 = arith.constant 0.000000e+00 : f32
    %2201 = vector.broadcast %cst_506 : f32 to vector<8x128xf32>
    %2202 = arith.subf %2201, %2196 : vector<8x128xf32>
    %2203 = arith.cmpf ogt, %2177, %2202 : vector<8x128xf32>
    %2204 = arith.andi %2200, %2203 : vector<8x128xi1>
    %cst_507 = arith.constant 0.00999999977 : f32
    %2205 = vector.broadcast %cst_507 : f32 to vector<8x128xf32>
    %2206 = arith.cmpf ogt, %2189, %2205 : vector<8x128xf32>
    %2207 = arith.andi %2204, %2206 : vector<8x128xi1>
    %cst_508 = arith.constant 1.000000e+02 : f32
    %2208 = vector.broadcast %cst_508 : f32 to vector<8x128xf32>
    %2209 = arith.cmpf ole, %2189, %2208 : vector<8x128xf32>
    %2210 = arith.andi %2207, %2209 : vector<8x128xi1>
    %2211 = arith.addf %2189, %1331 : vector<8x128xf32>
    %cst_509 = arith.constant 2.000000e+00 : f32
    %2212 = vector.broadcast %cst_509 : f32 to vector<8x128xf32>
    %2213 = arith.mulf %2212, %1328 : vector<8x128xf32>
    %2214 = arith.mulf %1329, %2170 : vector<8x128xf32>
    %2215 = arith.mulf %1330, %2177 : vector<8x128xf32>
    %2216 = arith.addf %2214, %2215 : vector<8x128xf32>
    %2217 = arith.mulf %2194, %2216 : vector<8x128xf32>
    %2218 = arith.mulf %2213, %2217 : vector<8x128xf32>
    %2219 = arith.subf %2211, %2218 : vector<8x128xf32>
    %2220 = arith.addf %2189, %1350 : vector<8x128xf32>
    %cst_510 = arith.constant 2.000000e+00 : f32
    %2221 = vector.broadcast %cst_510 : f32 to vector<8x128xf32>
    %2222 = arith.mulf %2221, %1347 : vector<8x128xf32>
    %2223 = arith.mulf %1348, %2170 : vector<8x128xf32>
    %2224 = arith.mulf %1349, %2177 : vector<8x128xf32>
    %2225 = arith.addf %2223, %2224 : vector<8x128xf32>
    %2226 = arith.mulf %2194, %2225 : vector<8x128xf32>
    %2227 = arith.mulf %2222, %2226 : vector<8x128xf32>
    %2228 = arith.subf %2220, %2227 : vector<8x128xf32>
    %2229 = arith.minimumf %2161, %2219 : vector<8x128xf32>
    %2230 = arith.minimumf %2162, %2228 : vector<8x128xf32>
    %2231 = arith.andi %2163, %2210 : vector<8x128xi1>
    %cst_511 = arith.constant 0.991820335 : f32
    %2232 = vector.broadcast %cst_511 : f32 to vector<8x128xf32>
    %2233 = arith.mulf %2232, %1296 : vector<8x128xf32>
    %cst_512 = arith.constant 0.127641648 : f32
    %2234 = vector.broadcast %cst_512 : f32 to vector<8x128xf32>
    %2235 = arith.mulf %2234, %1298 : vector<8x128xf32>
    %2236 = arith.addf %2233, %2235 : vector<8x128xf32>
    %2237 = vector.broadcast %1289 : f32 to vector<8x128xf32>
    %2238 = arith.addf %2236, %2237 : vector<8x128xf32>
    %cst_513 = arith.constant 0.991820335 : f32
    %2239 = vector.broadcast %cst_513 : f32 to vector<8x128xf32>
    %2240 = arith.mulf %2239, %1303 : vector<8x128xf32>
    %cst_514 = arith.constant 0.127641648 : f32
    %2241 = vector.broadcast %cst_514 : f32 to vector<8x128xf32>
    %2242 = arith.mulf %2241, %1305 : vector<8x128xf32>
    %2243 = arith.addf %2240, %2242 : vector<8x128xf32>
    %2244 = vector.broadcast %1290 : f32 to vector<8x128xf32>
    %2245 = arith.addf %2243, %2244 : vector<8x128xf32>
    %cst_515 = arith.constant 0.991820335 : f32
    %2246 = vector.broadcast %cst_515 : f32 to vector<8x128xf32>
    %2247 = arith.mulf %2246, %1310 : vector<8x128xf32>
    %cst_516 = arith.constant 0.127641648 : f32
    %2248 = vector.broadcast %cst_516 : f32 to vector<8x128xf32>
    %2249 = arith.mulf %2248, %1312 : vector<8x128xf32>
    %2250 = arith.addf %2247, %2249 : vector<8x128xf32>
    %2251 = vector.broadcast %1291 : f32 to vector<8x128xf32>
    %2252 = arith.addf %2250, %2251 : vector<8x128xf32>
    %2253 = arith.mulf %2238, %2238 : vector<8x128xf32>
    %2254 = arith.mulf %2245, %2245 : vector<8x128xf32>
    %2255 = arith.addf %2253, %2254 : vector<8x128xf32>
    %2256 = arith.mulf %2252, %2252 : vector<8x128xf32>
    %2257 = arith.addf %2255, %2256 : vector<8x128xf32>
    %cst_517 = arith.constant 9.99999968E-21 : f32
    %2258 = vector.broadcast %cst_517 : f32 to vector<8x128xf32>
    %2259 = arith.addf %2255, %2258 : vector<8x128xf32>
    %2260 = tpu.reciprocal %2259 {approx = true} : vector<8x128xf32> -> vector<8x128xf32>
    %2261 = arith.mulf %2257, %2260 : vector<8x128xf32>
    %2262 = math.sqrt %2261 : vector<8x128xf32>
    %cst_518 = arith.constant 2.14450693 : f32
    %2263 = vector.broadcast %cst_518 : f32 to vector<8x128xf32>
    %2264 = arith.mulf %2238, %2263 : vector<8x128xf32>
    %cst_519 = arith.constant 0.000000e+00 : f32
    %2265 = vector.broadcast %cst_519 : f32 to vector<8x128xf32>
    %2266 = arith.cmpf ogt, %2238, %2265 : vector<8x128xf32>
    %2267 = arith.cmpf ole, %2245, %2264 : vector<8x128xf32>
    %2268 = arith.andi %2266, %2267 : vector<8x128xi1>
    %cst_520 = arith.constant 0.000000e+00 : f32
    %2269 = vector.broadcast %cst_520 : f32 to vector<8x128xf32>
    %2270 = arith.subf %2269, %2264 : vector<8x128xf32>
    %2271 = arith.cmpf ogt, %2245, %2270 : vector<8x128xf32>
    %2272 = arith.andi %2268, %2271 : vector<8x128xi1>
    %cst_521 = arith.constant 0.00999999977 : f32
    %2273 = vector.broadcast %cst_521 : f32 to vector<8x128xf32>
    %2274 = arith.cmpf ogt, %2257, %2273 : vector<8x128xf32>
    %2275 = arith.andi %2272, %2274 : vector<8x128xi1>
    %cst_522 = arith.constant 1.000000e+02 : f32
    %2276 = vector.broadcast %cst_522 : f32 to vector<8x128xf32>
    %2277 = arith.cmpf ole, %2257, %2276 : vector<8x128xf32>
    %2278 = arith.andi %2275, %2277 : vector<8x128xi1>
    %2279 = arith.addf %2257, %1331 : vector<8x128xf32>
    %cst_523 = arith.constant 2.000000e+00 : f32
    %2280 = vector.broadcast %cst_523 : f32 to vector<8x128xf32>
    %2281 = arith.mulf %2280, %1328 : vector<8x128xf32>
    %2282 = arith.mulf %1329, %2238 : vector<8x128xf32>
    %2283 = arith.mulf %1330, %2245 : vector<8x128xf32>
    %2284 = arith.addf %2282, %2283 : vector<8x128xf32>
    %2285 = arith.mulf %2262, %2284 : vector<8x128xf32>
    %2286 = arith.mulf %2281, %2285 : vector<8x128xf32>
    %2287 = arith.subf %2279, %2286 : vector<8x128xf32>
    %2288 = arith.addf %2257, %1350 : vector<8x128xf32>
    %cst_524 = arith.constant 2.000000e+00 : f32
    %2289 = vector.broadcast %cst_524 : f32 to vector<8x128xf32>
    %2290 = arith.mulf %2289, %1347 : vector<8x128xf32>
    %2291 = arith.mulf %1348, %2238 : vector<8x128xf32>
    %2292 = arith.mulf %1349, %2245 : vector<8x128xf32>
    %2293 = arith.addf %2291, %2292 : vector<8x128xf32>
    %2294 = arith.mulf %2262, %2293 : vector<8x128xf32>
    %2295 = arith.mulf %2290, %2294 : vector<8x128xf32>
    %2296 = arith.subf %2288, %2295 : vector<8x128xf32>
    %2297 = arith.minimumf %2229, %2287 : vector<8x128xf32>
    %2298 = arith.minimumf %2230, %2296 : vector<8x128xf32>
    %2299 = arith.andi %2231, %2278 : vector<8x128xi1>
    %cst_525 = arith.constant 0.988581717 : f32
    %2300 = vector.broadcast %cst_525 : f32 to vector<8x128xf32>
    %2301 = arith.mulf %2300, %1296 : vector<8x128xf32>
    %cst_526 = arith.constant 0.150685713 : f32
    %2302 = vector.broadcast %cst_526 : f32 to vector<8x128xf32>
    %2303 = arith.mulf %2302, %1298 : vector<8x128xf32>
    %2304 = arith.addf %2301, %2303 : vector<8x128xf32>
    %2305 = vector.broadcast %1289 : f32 to vector<8x128xf32>
    %2306 = arith.addf %2304, %2305 : vector<8x128xf32>
    %cst_527 = arith.constant 0.988581717 : f32
    %2307 = vector.broadcast %cst_527 : f32 to vector<8x128xf32>
    %2308 = arith.mulf %2307, %1303 : vector<8x128xf32>
    %cst_528 = arith.constant 0.150685713 : f32
    %2309 = vector.broadcast %cst_528 : f32 to vector<8x128xf32>
    %2310 = arith.mulf %2309, %1305 : vector<8x128xf32>
    %2311 = arith.addf %2308, %2310 : vector<8x128xf32>
    %2312 = vector.broadcast %1290 : f32 to vector<8x128xf32>
    %2313 = arith.addf %2311, %2312 : vector<8x128xf32>
    %cst_529 = arith.constant 0.988581717 : f32
    %2314 = vector.broadcast %cst_529 : f32 to vector<8x128xf32>
    %2315 = arith.mulf %2314, %1310 : vector<8x128xf32>
    %cst_530 = arith.constant 0.150685713 : f32
    %2316 = vector.broadcast %cst_530 : f32 to vector<8x128xf32>
    %2317 = arith.mulf %2316, %1312 : vector<8x128xf32>
    %2318 = arith.addf %2315, %2317 : vector<8x128xf32>
    %2319 = vector.broadcast %1291 : f32 to vector<8x128xf32>
    %2320 = arith.addf %2318, %2319 : vector<8x128xf32>
    %2321 = arith.mulf %2306, %2306 : vector<8x128xf32>
    %2322 = arith.mulf %2313, %2313 : vector<8x128xf32>
    %2323 = arith.addf %2321, %2322 : vector<8x128xf32>
    %2324 = arith.mulf %2320, %2320 : vector<8x128xf32>
    %2325 = arith.addf %2323, %2324 : vector<8x128xf32>
    %cst_531 = arith.constant 9.99999968E-21 : f32
    %2326 = vector.broadcast %cst_531 : f32 to vector<8x128xf32>
    %2327 = arith.addf %2323, %2326 : vector<8x128xf32>
    %2328 = tpu.reciprocal %2327 {approx = true} : vector<8x128xf32> -> vector<8x128xf32>
    %2329 = arith.mulf %2325, %2328 : vector<8x128xf32>
    %2330 = math.sqrt %2329 : vector<8x128xf32>
    %cst_532 = arith.constant 2.14450693 : f32
    %2331 = vector.broadcast %cst_532 : f32 to vector<8x128xf32>
    %2332 = arith.mulf %2306, %2331 : vector<8x128xf32>
    %cst_533 = arith.constant 0.000000e+00 : f32
    %2333 = vector.broadcast %cst_533 : f32 to vector<8x128xf32>
    %2334 = arith.cmpf ogt, %2306, %2333 : vector<8x128xf32>
    %2335 = arith.cmpf ole, %2313, %2332 : vector<8x128xf32>
    %2336 = arith.andi %2334, %2335 : vector<8x128xi1>
    %cst_534 = arith.constant 0.000000e+00 : f32
    %2337 = vector.broadcast %cst_534 : f32 to vector<8x128xf32>
    %2338 = arith.subf %2337, %2332 : vector<8x128xf32>
    %2339 = arith.cmpf ogt, %2313, %2338 : vector<8x128xf32>
    %2340 = arith.andi %2336, %2339 : vector<8x128xi1>
    %cst_535 = arith.constant 0.00999999977 : f32
    %2341 = vector.broadcast %cst_535 : f32 to vector<8x128xf32>
    %2342 = arith.cmpf ogt, %2325, %2341 : vector<8x128xf32>
    %2343 = arith.andi %2340, %2342 : vector<8x128xi1>
    %cst_536 = arith.constant 1.000000e+02 : f32
    %2344 = vector.broadcast %cst_536 : f32 to vector<8x128xf32>
    %2345 = arith.cmpf ole, %2325, %2344 : vector<8x128xf32>
    %2346 = arith.andi %2343, %2345 : vector<8x128xi1>
    %2347 = arith.addf %2325, %1331 : vector<8x128xf32>
    %cst_537 = arith.constant 2.000000e+00 : f32
    %2348 = vector.broadcast %cst_537 : f32 to vector<8x128xf32>
    %2349 = arith.mulf %2348, %1328 : vector<8x128xf32>
    %2350 = arith.mulf %1329, %2306 : vector<8x128xf32>
    %2351 = arith.mulf %1330, %2313 : vector<8x128xf32>
    %2352 = arith.addf %2350, %2351 : vector<8x128xf32>
    %2353 = arith.mulf %2330, %2352 : vector<8x128xf32>
    %2354 = arith.mulf %2349, %2353 : vector<8x128xf32>
    %2355 = arith.subf %2347, %2354 : vector<8x128xf32>
    %2356 = arith.addf %2325, %1350 : vector<8x128xf32>
    %cst_538 = arith.constant 2.000000e+00 : f32
    %2357 = vector.broadcast %cst_538 : f32 to vector<8x128xf32>
    %2358 = arith.mulf %2357, %1347 : vector<8x128xf32>
    %2359 = arith.mulf %1348, %2306 : vector<8x128xf32>
    %2360 = arith.mulf %1349, %2313 : vector<8x128xf32>
    %2361 = arith.addf %2359, %2360 : vector<8x128xf32>
    %2362 = arith.mulf %2330, %2361 : vector<8x128xf32>
    %2363 = arith.mulf %2358, %2362 : vector<8x128xf32>
    %2364 = arith.subf %2356, %2363 : vector<8x128xf32>
    %2365 = arith.minimumf %2297, %2355 : vector<8x128xf32>
    %2366 = arith.minimumf %2298, %2364 : vector<8x128xf32>
    %2367 = arith.andi %2299, %2346 : vector<8x128xi1>
    %cst_539 = arith.constant 0.984807729 : f32
    %2368 = vector.broadcast %cst_539 : f32 to vector<8x128xf32>
    %2369 = arith.mulf %2368, %1296 : vector<8x128xf32>
    %cst_540 = arith.constant 0.173648179 : f32
    %2370 = vector.broadcast %cst_540 : f32 to vector<8x128xf32>
    %2371 = arith.mulf %2370, %1298 : vector<8x128xf32>
    %2372 = arith.addf %2369, %2371 : vector<8x128xf32>
    %2373 = vector.broadcast %1289 : f32 to vector<8x128xf32>
    %2374 = arith.addf %2372, %2373 : vector<8x128xf32>
    %cst_541 = arith.constant 0.984807729 : f32
    %2375 = vector.broadcast %cst_541 : f32 to vector<8x128xf32>
    %2376 = arith.mulf %2375, %1303 : vector<8x128xf32>
    %cst_542 = arith.constant 0.173648179 : f32
    %2377 = vector.broadcast %cst_542 : f32 to vector<8x128xf32>
    %2378 = arith.mulf %2377, %1305 : vector<8x128xf32>
    %2379 = arith.addf %2376, %2378 : vector<8x128xf32>
    %2380 = vector.broadcast %1290 : f32 to vector<8x128xf32>
    %2381 = arith.addf %2379, %2380 : vector<8x128xf32>
    %cst_543 = arith.constant 0.984807729 : f32
    %2382 = vector.broadcast %cst_543 : f32 to vector<8x128xf32>
    %2383 = arith.mulf %2382, %1310 : vector<8x128xf32>
    %cst_544 = arith.constant 0.173648179 : f32
    %2384 = vector.broadcast %cst_544 : f32 to vector<8x128xf32>
    %2385 = arith.mulf %2384, %1312 : vector<8x128xf32>
    %2386 = arith.addf %2383, %2385 : vector<8x128xf32>
    %2387 = vector.broadcast %1291 : f32 to vector<8x128xf32>
    %2388 = arith.addf %2386, %2387 : vector<8x128xf32>
    %2389 = arith.mulf %2374, %2374 : vector<8x128xf32>
    %2390 = arith.mulf %2381, %2381 : vector<8x128xf32>
    %2391 = arith.addf %2389, %2390 : vector<8x128xf32>
    %2392 = arith.mulf %2388, %2388 : vector<8x128xf32>
    %2393 = arith.addf %2391, %2392 : vector<8x128xf32>
    %cst_545 = arith.constant 9.99999968E-21 : f32
    %2394 = vector.broadcast %cst_545 : f32 to vector<8x128xf32>
    %2395 = arith.addf %2391, %2394 : vector<8x128xf32>
    %2396 = tpu.reciprocal %2395 {approx = true} : vector<8x128xf32> -> vector<8x128xf32>
    %2397 = arith.mulf %2393, %2396 : vector<8x128xf32>
    %2398 = math.sqrt %2397 : vector<8x128xf32>
    %cst_546 = arith.constant 2.14450693 : f32
    %2399 = vector.broadcast %cst_546 : f32 to vector<8x128xf32>
    %2400 = arith.mulf %2374, %2399 : vector<8x128xf32>
    %cst_547 = arith.constant 0.000000e+00 : f32
    %2401 = vector.broadcast %cst_547 : f32 to vector<8x128xf32>
    %2402 = arith.cmpf ogt, %2374, %2401 : vector<8x128xf32>
    %2403 = arith.cmpf ole, %2381, %2400 : vector<8x128xf32>
    %2404 = arith.andi %2402, %2403 : vector<8x128xi1>
    %cst_548 = arith.constant 0.000000e+00 : f32
    %2405 = vector.broadcast %cst_548 : f32 to vector<8x128xf32>
    %2406 = arith.subf %2405, %2400 : vector<8x128xf32>
    %2407 = arith.cmpf ogt, %2381, %2406 : vector<8x128xf32>
    %2408 = arith.andi %2404, %2407 : vector<8x128xi1>
    %cst_549 = arith.constant 0.00999999977 : f32
    %2409 = vector.broadcast %cst_549 : f32 to vector<8x128xf32>
    %2410 = arith.cmpf ogt, %2393, %2409 : vector<8x128xf32>
    %2411 = arith.andi %2408, %2410 : vector<8x128xi1>
    %cst_550 = arith.constant 1.000000e+02 : f32
    %2412 = vector.broadcast %cst_550 : f32 to vector<8x128xf32>
    %2413 = arith.cmpf ole, %2393, %2412 : vector<8x128xf32>
    %2414 = arith.andi %2411, %2413 : vector<8x128xi1>
    %2415 = arith.addf %2393, %1331 : vector<8x128xf32>
    %cst_551 = arith.constant 2.000000e+00 : f32
    %2416 = vector.broadcast %cst_551 : f32 to vector<8x128xf32>
    %2417 = arith.mulf %2416, %1328 : vector<8x128xf32>
    %2418 = arith.mulf %1329, %2374 : vector<8x128xf32>
    %2419 = arith.mulf %1330, %2381 : vector<8x128xf32>
    %2420 = arith.addf %2418, %2419 : vector<8x128xf32>
    %2421 = arith.mulf %2398, %2420 : vector<8x128xf32>
    %2422 = arith.mulf %2417, %2421 : vector<8x128xf32>
    %2423 = arith.subf %2415, %2422 : vector<8x128xf32>
    %2424 = arith.addf %2393, %1350 : vector<8x128xf32>
    %cst_552 = arith.constant 2.000000e+00 : f32
    %2425 = vector.broadcast %cst_552 : f32 to vector<8x128xf32>
    %2426 = arith.mulf %2425, %1347 : vector<8x128xf32>
    %2427 = arith.mulf %1348, %2374 : vector<8x128xf32>
    %2428 = arith.mulf %1349, %2381 : vector<8x128xf32>
    %2429 = arith.addf %2427, %2428 : vector<8x128xf32>
    %2430 = arith.mulf %2398, %2429 : vector<8x128xf32>
    %2431 = arith.mulf %2426, %2430 : vector<8x128xf32>
    %2432 = arith.subf %2424, %2431 : vector<8x128xf32>
    %2433 = arith.minimumf %2365, %2423 : vector<8x128xf32>
    %2434 = arith.minimumf %2366, %2432 : vector<8x128xf32>
    %2435 = arith.andi %2367, %2414 : vector<8x128xi1>
    %cst_553 = arith.constant 0.000000e+00 : f32
    %2436 = vector.broadcast %cst_553 : f32 to vector<8x128xf32>
    %2437 = arith.select %2435, %17, %2436 : vector<8x128xi1>, vector<8x128xf32>
    %c1_554 = arith.constant 1 : index
    %c0_555 = arith.constant 0 : index
    %c0_556 = arith.constant 0 : index
    %2438 = vector.load %arg9[%c1_554, %c0_555, %c0_556] : memref<2x8x128xf32, #tpu.memory_space<vmem>>, vector<1x8x128xf32>
    %2439 = vector.shape_cast %2438 : vector<1x8x128xf32> to vector<8x128xf32>
    %c1_557 = arith.constant 1 : index
    %c0_558 = arith.constant 0 : index
    %c0_559 = arith.constant 0 : index
    %2440 = vector.load %arg10[%c1_557, %c0_558, %c0_559] : memref<2x8x128xf32, #tpu.memory_space<vmem>>, vector<1x8x128xf32>
    %2441 = vector.shape_cast %2440 : vector<1x8x128xf32> to vector<8x128xf32>
    %cst_560 = arith.constant 6.400000e+01 : f32
    %2442 = vector.broadcast %cst_560 : f32 to vector<8x128xf32>
    %2443 = arith.subf %2442, %2439 : vector<8x128xf32>
    %cst_561 = arith.constant 3.545200e-02 : f32
    %2444 = vector.broadcast %cst_561 : f32 to vector<8x128xf32>
    %2445 = arith.mulf %2443, %2444 : vector<8x128xf32>
    %cst_562 = arith.constant 1.13446403 : f32
    %2446 = vector.broadcast %cst_562 : f32 to vector<8x128xf32>
    %2447 = arith.subf %2445, %2446 : vector<8x128xf32>
    %cst_563 = arith.constant 6.400000e+01 : f32
    %2448 = vector.broadcast %cst_563 : f32 to vector<8x128xf32>
    %2449 = arith.subf %2448, %2441 : vector<8x128xf32>
    %cst_564 = arith.constant 0.154687494 : f32
    %2450 = vector.broadcast %cst_564 : f32 to vector<8x128xf32>
    %2451 = arith.mulf %2450, %2449 : vector<8x128xf32>
    %cst_565 = arith.constant 1.000000e-01 : f32
    %2452 = vector.broadcast %cst_565 : f32 to vector<8x128xf32>
    %2453 = arith.addf %2451, %2452 : vector<8x128xf32>
    %2454 = arith.mulf %1273, %1273 : vector<8x128xf32>
    %2455 = arith.mulf %2453, %2453 : vector<8x128xf32>
    %2456 = arith.addf %2454, %2455 : vector<8x128xf32>
    %cst_566 = arith.constant 2.000000e+00 : f32
    %2457 = vector.broadcast %cst_566 : f32 to vector<8x128xf32>
    %2458 = arith.mulf %2457, %1273 : vector<8x128xf32>
    %2459 = arith.mulf %2458, %2453 : vector<8x128xf32>
    %2460 = arith.subf %2447, %1267 : vector<8x128xf32>
    %cst_567 = arith.constant 0.0174532924 : f32
    %2461 = vector.broadcast %cst_567 : f32 to vector<8x128xf32>
    %2462 = arith.mulf %2461, %2460 : vector<8x128xf32>
    %2463 = math.cos %2462 : vector<8x128xf32>
    %2464 = arith.mulf %2459, %2463 : vector<8x128xf32>
    %2465 = arith.subf %2456, %2464 : vector<8x128xf32>
    %c1_568 = arith.constant 1 : index
    %c0_569 = arith.constant 0 : index
    %c0_570 = arith.constant 0 : index
    %2466 = vector.load %arg11[%c1_568, %c0_569, %c0_570] : memref<2x8x128xf32, #tpu.memory_space<vmem>>, vector<1x8x128xf32>
    %2467 = vector.shape_cast %2466 : vector<1x8x128xf32> to vector<8x128xf32>
    %c1_571 = arith.constant 1 : index
    %c0_572 = arith.constant 0 : index
    %c0_573 = arith.constant 0 : index
    %2468 = vector.load %arg12[%c1_571, %c0_572, %c0_573] : memref<2x8x128xf32, #tpu.memory_space<vmem>>, vector<1x8x128xf32>
    %2469 = vector.shape_cast %2468 : vector<1x8x128xf32> to vector<8x128xf32>
    %cst_574 = arith.constant 6.400000e+01 : f32
    %2470 = vector.broadcast %cst_574 : f32 to vector<8x128xf32>
    %2471 = arith.subf %2470, %2467 : vector<8x128xf32>
    %cst_575 = arith.constant 3.545200e-02 : f32
    %2472 = vector.broadcast %cst_575 : f32 to vector<8x128xf32>
    %2473 = arith.mulf %2471, %2472 : vector<8x128xf32>
    %cst_576 = arith.constant 1.13446403 : f32
    %2474 = vector.broadcast %cst_576 : f32 to vector<8x128xf32>
    %2475 = arith.subf %2473, %2474 : vector<8x128xf32>
    %cst_577 = arith.constant 6.400000e+01 : f32
    %2476 = vector.broadcast %cst_577 : f32 to vector<8x128xf32>
    %2477 = arith.subf %2476, %2469 : vector<8x128xf32>
    %cst_578 = arith.constant 0.154687494 : f32
    %2478 = vector.broadcast %cst_578 : f32 to vector<8x128xf32>
    %2479 = arith.mulf %2478, %2477 : vector<8x128xf32>
    %cst_579 = arith.constant 1.000000e-01 : f32
    %2480 = vector.broadcast %cst_579 : f32 to vector<8x128xf32>
    %2481 = arith.addf %2479, %2480 : vector<8x128xf32>
    %2482 = arith.mulf %1273, %1273 : vector<8x128xf32>
    %2483 = arith.mulf %2481, %2481 : vector<8x128xf32>
    %2484 = arith.addf %2482, %2483 : vector<8x128xf32>
    %cst_580 = arith.constant 2.000000e+00 : f32
    %2485 = vector.broadcast %cst_580 : f32 to vector<8x128xf32>
    %2486 = arith.mulf %2485, %1273 : vector<8x128xf32>
    %2487 = arith.mulf %2486, %2481 : vector<8x128xf32>
    %2488 = arith.subf %2475, %1267 : vector<8x128xf32>
    %cst_581 = arith.constant 0.0174532924 : f32
    %2489 = vector.broadcast %cst_581 : f32 to vector<8x128xf32>
    %2490 = arith.mulf %2489, %2488 : vector<8x128xf32>
    %2491 = math.cos %2490 : vector<8x128xf32>
    %2492 = arith.mulf %2487, %2491 : vector<8x128xf32>
    %2493 = arith.subf %2484, %2492 : vector<8x128xf32>
    %2494 = arith.mulf %2433, %2437 : vector<8x128xf32>
    %2495 = arith.mulf %2434, %2437 : vector<8x128xf32>
    %2496 = arith.mulf %2465, %17 : vector<8x128xf32>
    %2497 = arith.mulf %2493, %17 : vector<8x128xf32>
    %2498 = arith.addf %1254, %2494 : vector<8x128xf32>
    %2499 = arith.addf %1255, %2495 : vector<8x128xf32>
    %2500 = arith.addf %1197, %2437 : vector<8x128xf32>
    %2501 = arith.addf %1256, %2496 : vector<8x128xf32>
    %2502 = arith.addf %1257, %2497 : vector<8x128xf32>
    %c0_582 = arith.constant 0 : index
    %c0_583 = arith.constant 0 : index
    %c0_584 = arith.constant 0 : index
    %2503 = vector.load %arg13[%c0_582, %c0_583, %c0_584] : memref<5x8x128xf32, #tpu.memory_space<vmem>>, vector<1x8x128xf32>
    %2504 = vector.shape_cast %2503 : vector<1x8x128xf32> to vector<8x128xf32>
    %2505 = arith.addf %2504, %2498 : vector<8x128xf32>
    %c0_585 = arith.constant 0 : index
    %c0_586 = arith.constant 0 : index
    %c0_587 = arith.constant 0 : index
    %2506 = vector.load %arg13[%c0_585, %c0_586, %c0_587] : memref<5x8x128xf32, #tpu.memory_space<vmem>>, vector<1x8x128xf32>
    %2507 = vector.shape_cast %2506 : vector<1x8x128xf32> to vector<8x128xf32>
    %2508 = vector.shape_cast %2505 : vector<8x128xf32> to vector<1x8x128xf32>
    tpu.vector_store %arg13[%c0_585, %c0_586, %c0_587], %2508 {strides = array<i32>} : memref<5x8x128xf32, #tpu.memory_space<vmem>>, vector<1x8x128xf32>,
    %c1_588 = arith.constant 1 : index
    %c0_589 = arith.constant 0 : index
    %c0_590 = arith.constant 0 : index
    %2509 = vector.load %arg13[%c1_588, %c0_589, %c0_590] : memref<5x8x128xf32, #tpu.memory_space<vmem>>, vector<1x8x128xf32>
    %2510 = vector.shape_cast %2509 : vector<1x8x128xf32> to vector<8x128xf32>
    %2511 = arith.addf %2510, %2499 : vector<8x128xf32>
    %c1_591 = arith.constant 1 : index
    %c0_592 = arith.constant 0 : index
    %c0_593 = arith.constant 0 : index
    %2512 = vector.load %arg13[%c1_591, %c0_592, %c0_593] : memref<5x8x128xf32, #tpu.memory_space<vmem>>, vector<1x8x128xf32>
    %2513 = vector.shape_cast %2512 : vector<1x8x128xf32> to vector<8x128xf32>
    %2514 = vector.shape_cast %2511 : vector<8x128xf32> to vector<1x8x128xf32>
    tpu.vector_store %arg13[%c1_591, %c0_592, %c0_593], %2514 {strides = array<i32>} : memref<5x8x128xf32, #tpu.memory_space<vmem>>, vector<1x8x128xf32>,
    %c2_594 = arith.constant 2 : index
    %c0_595 = arith.constant 0 : index
    %c0_596 = arith.constant 0 : index
    %2515 = vector.load %arg13[%c2_594, %c0_595, %c0_596] : memref<5x8x128xf32, #tpu.memory_space<vmem>>, vector<1x8x128xf32>
    %2516 = vector.shape_cast %2515 : vector<1x8x128xf32> to vector<8x128xf32>
    %2517 = arith.addf %2516, %2500 : vector<8x128xf32>
    %c2_597 = arith.constant 2 : index
    %c0_598 = arith.constant 0 : index
    %c0_599 = arith.constant 0 : index
    %2518 = vector.load %arg13[%c2_597, %c0_598, %c0_599] : memref<5x8x128xf32, #tpu.memory_space<vmem>>, vector<1x8x128xf32>
    %2519 = vector.shape_cast %2518 : vector<1x8x128xf32> to vector<8x128xf32>
    %2520 = vector.shape_cast %2517 : vector<8x128xf32> to vector<1x8x128xf32>
    tpu.vector_store %arg13[%c2_597, %c0_598, %c0_599], %2520 {strides = array<i32>} : memref<5x8x128xf32, #tpu.memory_space<vmem>>, vector<1x8x128xf32>,
    %c3_600 = arith.constant 3 : index
    %c0_601 = arith.constant 0 : index
    %c0_602 = arith.constant 0 : index
    %2521 = vector.load %arg13[%c3_600, %c0_601, %c0_602] : memref<5x8x128xf32, #tpu.memory_space<vmem>>, vector<1x8x128xf32>
    %2522 = vector.shape_cast %2521 : vector<1x8x128xf32> to vector<8x128xf32>
    %2523 = arith.addf %2522, %2501 : vector<8x128xf32>
    %c3_603 = arith.constant 3 : index
    %c0_604 = arith.constant 0 : index
    %c0_605 = arith.constant 0 : index
    %2524 = vector.load %arg13[%c3_603, %c0_604, %c0_605] : memref<5x8x128xf32, #tpu.memory_space<vmem>>, vector<1x8x128xf32>
    %2525 = vector.shape_cast %2524 : vector<1x8x128xf32> to vector<8x128xf32>
    %2526 = vector.shape_cast %2523 : vector<8x128xf32> to vector<1x8x128xf32>
    tpu.vector_store %arg13[%c3_603, %c0_604, %c0_605], %2526 {strides = array<i32>} : memref<5x8x128xf32, #tpu.memory_space<vmem>>, vector<1x8x128xf32>,
    %c4_606 = arith.constant 4 : index
    %c0_607 = arith.constant 0 : index
    %c0_608 = arith.constant 0 : index
    %2527 = vector.load %arg13[%c4_606, %c0_607, %c0_608] : memref<5x8x128xf32, #tpu.memory_space<vmem>>, vector<1x8x128xf32>
    %2528 = vector.shape_cast %2527 : vector<1x8x128xf32> to vector<8x128xf32>
    %2529 = arith.addf %2528, %2502 : vector<8x128xf32>
    %c4_609 = arith.constant 4 : index
    %c0_610 = arith.constant 0 : index
    %c0_611 = arith.constant 0 : index
    %2530 = vector.load %arg13[%c4_609, %c0_610, %c0_611] : memref<5x8x128xf32, #tpu.memory_space<vmem>>, vector<1x8x128xf32>
    %2531 = vector.shape_cast %2530 : vector<1x8x128xf32> to vector<8x128xf32>
    %2532 = vector.shape_cast %2529 : vector<8x128xf32> to vector<1x8x128xf32>
    tpu.vector_store %arg13[%c4_609, %c0_610, %c0_611], %2532 {strides = array<i32>} : memref<5x8x128xf32, #tpu.memory_space<vmem>>, vector<1x8x128xf32>,
    return
  }
  func.func @transform_0(%arg0: i32, %arg1: i32) -> i32 {
    %c0_i32 = arith.constant 0 : i32
    %c0_i32_0 = arith.constant 0 : i32
    return %c0_i32 : i32
  }
  func.func @transform_1(%arg0: i32, %arg1: i32) -> (i32, i32, i32) {
    %c1_i32 = arith.constant 1 : i32
    %0 = arith.muli %arg0, %c1_i32 : i32
    %1 = arith.addi %0, %arg1 : i32
    %c0_i32 = arith.constant 0 : i32
    %c0_i32_0 = arith.constant 0 : i32
    %c0_i32_1 = arith.constant 0 : i32
    return %c0_i32, %1, %c0_i32_0 : i32, i32, i32
  }
  func.func @transform_2(%arg0: i32, %arg1: i32) -> (i32, i32, i32) {
    %c1_i32 = arith.constant 1 : i32
    %0 = arith.muli %arg0, %c1_i32 : i32
    %1 = arith.addi %0, %arg1 : i32
    %c0_i32 = arith.constant 0 : i32
    %c0_i32_0 = arith.constant 0 : i32
    %c0_i32_1 = arith.constant 0 : i32
    return %c0_i32, %1, %c0_i32_0 : i32, i32, i32
  }
  func.func @transform_3(%arg0: i32, %arg1: i32) -> (i32, i32, i32) {
    %c1_i32 = arith.constant 1 : i32
    %0 = arith.muli %arg0, %c1_i32 : i32
    %1 = arith.addi %0, %arg1 : i32
    %c0_i32 = arith.constant 0 : i32
    %c0_i32_0 = arith.constant 0 : i32
    %c0_i32_1 = arith.constant 0 : i32
    return %c0_i32, %1, %c0_i32_0 : i32, i32, i32
  }
  func.func @transform_4(%arg0: i32, %arg1: i32) -> (i32, i32, i32) {
    %c1_i32 = arith.constant 1 : i32
    %0 = arith.muli %arg0, %c1_i32 : i32
    %1 = arith.addi %0, %arg1 : i32
    %c0_i32 = arith.constant 0 : i32
    %c0_i32_0 = arith.constant 0 : i32
    %c0_i32_1 = arith.constant 0 : i32
    return %c0_i32, %1, %c0_i32_0 : i32, i32, i32
  }
  func.func @transform_5(%arg0: i32, %arg1: i32) -> (i32, i32, i32) {
    %c1_i32 = arith.constant 1 : i32
    %0 = arith.muli %arg0, %c1_i32 : i32
    %1 = arith.addi %0, %arg1 : i32
    %c0_i32 = arith.constant 0 : i32
    %c0_i32_0 = arith.constant 0 : i32
    %c0_i32_1 = arith.constant 0 : i32
    return %c0_i32, %1, %c0_i32_0 : i32, i32, i32
  }
  func.func @transform_6(%arg0: i32, %arg1: i32) -> (i32, i32, i32) {
    %c1_i32 = arith.constant 1 : i32
    %0 = arith.muli %arg0, %c1_i32 : i32
    %1 = arith.addi %0, %arg1 : i32
    %c0_i32 = arith.constant 0 : i32
    %c0_i32_0 = arith.constant 0 : i32
    %c0_i32_1 = arith.constant 0 : i32
    return %c0_i32, %1, %c0_i32_0 : i32, i32, i32
  }
  func.func @transform_7(%arg0: i32, %arg1: i32) -> (i32, i32, i32) {
    %c1_i32 = arith.constant 1 : i32
    %0 = arith.muli %arg0, %c1_i32 : i32
    %1 = arith.addi %0, %arg1 : i32
    %c0_i32 = arith.constant 0 : i32
    %c0_i32_0 = arith.constant 0 : i32
    %c0_i32_1 = arith.constant 0 : i32
    return %c0_i32, %1, %c0_i32_0 : i32, i32, i32
  }
  func.func @transform_8(%arg0: i32, %arg1: i32) -> (i32, i32, i32) {
    %c1_i32 = arith.constant 1 : i32
    %0 = arith.muli %arg0, %c1_i32 : i32
    %1 = arith.addi %0, %arg1 : i32
    %c0_i32 = arith.constant 0 : i32
    %c0_i32_0 = arith.constant 0 : i32
    %c0_i32_1 = arith.constant 0 : i32
    return %c0_i32, %1, %c0_i32_0 : i32, i32, i32
  }
  func.func @transform_9(%arg0: i32, %arg1: i32) -> (i32, i32, i32) {
    %c1_i32 = arith.constant 1 : i32
    %0 = arith.muli %arg0, %c1_i32 : i32
    %1 = arith.addi %0, %arg1 : i32
    %c0_i32 = arith.constant 0 : i32
    %c0_i32_0 = arith.constant 0 : i32
    %c0_i32_1 = arith.constant 0 : i32
    return %c0_i32, %1, %c0_i32_0 : i32, i32, i32
  }
  func.func @transform_10(%arg0: i32, %arg1: i32) -> (i32, i32, i32) {
    %c1_i32 = arith.constant 1 : i32
    %0 = arith.muli %arg0, %c1_i32 : i32
    %1 = arith.addi %0, %arg1 : i32
    %c0_i32 = arith.constant 0 : i32
    %c0_i32_0 = arith.constant 0 : i32
    %c0_i32_1 = arith.constant 0 : i32
    return %c0_i32, %1, %c0_i32_0 : i32, i32, i32
  }
  func.func @transform_11(%arg0: i32, %arg1: i32) -> (i32, i32, i32) {
    %c0_i32 = arith.constant 0 : i32
    %c0_i32_0 = arith.constant 0 : i32
    %c0_i32_1 = arith.constant 0 : i32
    return %arg0, %c0_i32, %c0_i32_0 : i32, i32, i32
  }
}

</mosaic_0001>

<llo_original>
// kernel: tpu_custom_call.1
$region0: #{tpu_custom_call.1}
  #allocation0 [shape = 'u32[]', space=smem, size = 0x4, offset = 0x4, fixed_abs, tag = 'smem constant byte address 0x4 - core index']
  #allocation1 [shape = 'u32[72,128]{1,0:T(1,128)}', space=vmem, size = 0x9000, scoped, tag = 'internal scratch']
  %s0 = inlined_call_operand.hbm [shape: f32[24], index: 0, kind: input, shape index: {}]
  %s1 = inlined_call_operand.hbm [shape: f32[2,16,128], index: 1, kind: input, shape index: {}]
  %s2 = inlined_call_operand.hbm [shape: f32[2,16,128], index: 2, kind: input, shape index: {}]
  %s3 = inlined_call_operand.hbm [shape: f32[2,16,128], index: 3, kind: input, shape index: {}]
  %s4 = inlined_call_operand.hbm [shape: f32[2,16,128], index: 4, kind: input, shape index: {}]
  %s5 = inlined_call_operand.hbm [shape: f32[2,16,128], index: 5, kind: input, shape index: {}]
  %s6 = inlined_call_operand.hbm [shape: f32[2,16,128], index: 6, kind: input, shape index: {}]
  %s7 = inlined_call_operand.hbm [shape: f32[2,16,128], index: 7, kind: input, shape index: {}]
  %s8 = inlined_call_operand.hbm [shape: f32[2,16,128], index: 8, kind: input, shape index: {}]
  %s9 = inlined_call_operand.hbm [shape: f32[2,16,128], index: 9, kind: input, shape index: {}]
  %s10 = inlined_call_operand.hbm [shape: f32[2,16,128], index: 10, kind: input, shape index: {}]
  %s11 = inlined_call_operand.hbm [shape: f32[10,8,128], index: 11, kind: output, shape index: {}]
  %s12 = sld [smem:[#allocation0]]
  $region125: #{tpu_custom_call.1} parent=0
    _
  %s14 = ssub.s32 1, %s12
  %s15 = scalar_select 0, %s14, %s12
  $region1: #{tpu_custom_call.1} parent=0
    #allocation2 [shape = 'u8[512]{0}', space=smem, size = 0x200, scoped, tag = 'input window, operand 0, single buffered']
    #allocation3 [shape = 's32[2]{0}', space=sflag, size = 0x8, scoped, tag = 'scoped memory for tpu_custom_call.1']
    #allocation4 [shape = 's32[2]{0}', space=sflag, size = 0x8, scoped, tag = 'scoped memory for tpu_custom_call.1']
    #allocation5 [shape = 's32[2]{0}', space=sflag, size = 0x8, scoped, tag = 'scoped memory for tpu_custom_call.1']
    #allocation6 [shape = 'u8[16384]{0}', space=vmem, size = 0x4000, scoped, tag = 'input window, operand 1']
    #allocation7 [shape = 'u8[16384]{0}', space=vmem, size = 0x4000, scoped, tag = 'input window, operand 2']
    #allocation8 [shape = 's32[2]{0}', space=sflag, size = 0x8, scoped, tag = 'scoped memory for tpu_custom_call.1']
    #allocation9 [shape = 'u8[16384]{0}', space=vmem, size = 0x4000, scoped, tag = 'input window, operand 3']
    #allocation10 [shape = 'u8[16384]{0}', space=vmem, size = 0x4000, scoped, tag = 'input window, operand 4']
    #allocation11 [shape = 's32[2]{0}', space=sflag, size = 0x8, scoped, tag = 'scoped memory for tpu_custom_call.1']
    #allocation12 [shape = 'u8[16384]{0}', space=vmem, size = 0x4000, scoped, tag = 'input window, operand 5']
    #allocation13 [shape = 'u8[16384]{0}', space=vmem, size = 0x4000, scoped, tag = 'input window, operand 6']
    #allocation14 [shape = 's32[2]{0}', space=sflag, size = 0x8, scoped, tag = 'scoped memory for tpu_custom_call.1']
    #allocation15 [shape = 'u8[16384]{0}', space=vmem, size = 0x4000, scoped, tag = 'input window, operand 7']
    #allocation16 [shape = 'u8[16384]{0}', space=vmem, size = 0x4000, scoped, tag = 'input window, operand 8']
    #allocation17 [shape = 's32[2]{0}', space=sflag, size = 0x8, scoped, tag = 'scoped memory for tpu_custom_call.1']
    #allocation18 [shape = 'u8[16384]{0}', space=vmem, size = 0x4000, scoped, tag = 'input window, operand 9']
    #allocation19 [shape = 'u8[16384]{0}', space=vmem, size = 0x4000, scoped, tag = 'input window, operand 10']
    #allocation20 [shape = 's32[2]{0}', space=sflag, size = 0x8, scoped, tag = 'scoped memory for tpu_custom_call.1']
    #allocation21 [shape = 'u8[40960]{0}', space=vmem, size = 0xa000, scoped, tag = 'output window, operand 0']
    %16 = vsyncpa [#allocation5], 0
    %17 = vsyncpa [#allocation3], 0
    %s18 = scalar_lea.sflag [#allocation3], 1
    %19 = vsyncpa %s18, 0
    %20 = vsyncpa [#allocation8], 0
    %s21 = scalar_lea.sflag [#allocation8], 1
    %22 = vsyncpa %s21, 0
    %23 = vsyncpa [#allocation11], 0
    %s24 = scalar_lea.sflag [#allocation11], 1
    %25 = vsyncpa %s24, 0
    %26 = vsyncpa [#allocation14], 0
    %s27 = scalar_lea.sflag [#allocation14], 1
    %28 = vsyncpa %s27, 0
    %29 = vsyncpa [#allocation17], 0
    %s30 = scalar_lea.sflag [#allocation17], 1
    %31 = vsyncpa %s30, 0
    %32 = vsyncpa [#allocation20], 0
    %s33 = scalar_lea.sflag [#allocation20], 1
    %34 = vsyncpa %s33, 0
    %35 = vsyncpa [#allocation4], 0
    %s36 = scalar_lea.sflag [#allocation4], 1
    %37 = vsyncpa %s36, 0
    loop: start=0, step=1, limit=4
    $region2: #{tpu_custom_call.1} parent=1 // loop_pre_header
      _
    $region3: #{tpu_custom_call.1} parent=1 // loop_header
      %s39 = sphi 0, %s43
      %p40 = scmp.ge.s32.totalorder %s39, 4
      %s46 = sphi 0, %s58
      %s47 = sphi 0, %s54
      %s48 = sphi 0, %s46
      %s49 = sphi 0, %s47
      %s50 = sphi 0, %s48
      %s51 = sphi 0, %s49
      %s59 = sphi 0, %s59
      %s61 = sphi 0, %s59
      %s62 = sphi 0, %s61
      %s76 = sphi 0, %s62
      %s84 = sphi 0, %s86
      %s87 = sphi 0, %s84
      %s88 = sphi 0, %s87
      %s104 = sphi 0, %s88
      %s112 = sphi 0, %s114
      %s115 = sphi 0, %s112
      %s116 = sphi 0, %s115
      %s132 = sphi 0, %s116
      %s140 = sphi 0, %s142
      %s143 = sphi 0, %s140
      %s144 = sphi 0, %s143
      %s160 = sphi 0, %s144
      %s168 = sphi 0, %s170
      %s171 = sphi 0, %s168
      %s172 = sphi 0, %s171
      %s188 = sphi 0, %s172
      %s196 = sphi 0, %s198
      %s199 = sphi 0, %s196
      %s200 = sphi 0, %s199
      %s216 = sphi 0, %s200
      %s224 = sphi 0, %s226
      %s227 = sphi 0, %s224
      %s228 = sphi 0, %s227
      %s244 = sphi 0, %s228
      %s252 = sphi 0, %s254
      %s255 = sphi 0, %s252
      %s256 = sphi 0, %s255
      %s272 = sphi 0, %s256
      %s280 = sphi 0, %s282
      %s283 = sphi 0, %s280
      %s284 = sphi 0, %s283
      %s300 = sphi 0, %s284
      %s308 = sphi 0, %s310
      %s311 = sphi 0, %s308
      %s312 = sphi 0, %s311
      %s328 = sphi 0, %s312
      %s336 = sphi 0, %s338
      %s339 = sphi 0, %s336
      %s340 = sphi 0, %s339
      %s356 = sphi 0, %s340
      %s362 = sphi 0, %s364
      %s365 = sphi 0, %s362
      %s366 = sphi 0, %s365
      %s382 = sphi 0, %s366
    $region4: #{tpu_custom_call.1} parent=1 // loop_header_branch
      %42 = sbr.rel (%p40) target = $region8
    $region5: #{tpu_custom_call.1} parent=1 // loop_body
      %s44 = ssub.s32 %s39, 1
      %s45 = ssub.s32 %s39, 2
      %s52 = sadd.s32 1, %s47
      %p53 = scmp.ge.s32.totalorder %s52, 1
      %s54 = scalar_select %p53, 0, %s52
      %s55 = sadd.s32 1, %s46
      %s56 = scalar_select %p53, %s55, %s46
      %p57 = scmp.ge.s32.totalorder %s56, 2
      %s58 = scalar_select %p57, 0, %s56
      %s60 = sadd.s32 %s59, 1
      %p63 = scmp.eq.s32.totalorder %s39, 1
      %p64 = scmp.ne.s32.totalorder %s59, %s61
      %p65 = scmp.eq.s32.totalorder %s39, 0
      %p66 = por %p64, %p65
      %p67 = scmp.ne.s32.totalorder %s59, %s61
      %p68 = scmp.eq.s32.totalorder %s44, 1
      %p69 = por %p67, %p68
      %p70 = scmp.ne.s32.totalorder %s61, %s62
      %p71 = scmp.eq.s32.totalorder %s44, 0
      %p72 = por %p70, %p71
      %p73 = scmp.ne.s32.totalorder %s61, %s62
      %p74 = scmp.eq.s32.totalorder %s45, 1
      %p75 = por %p73, %p74
      %p77 = scmp.ne.s32.totalorder %s62, %s76
      %p78 = scmp.eq.s32.totalorder %s45, 0
      %p79 = por %p77, %p78
      %s80 = sadd.s32 %s46, %s47
      %s81 = sadd.s32 %s58, %s54
      %s82 = ssub.s32 %s80, %s81
      %p83 = scmp.eq.s32.totalorder %s82, 0
      %s85 = sadd.s32 %s84, 1
      %s86 = scalar_select %p83, %s84, %s85
      %p89 = pneg %p83
      %p90 = scmp.eq.s32.totalorder %s39, 1
      %p91 = por %p89, %p90
      %p92 = scmp.ne.s32.totalorder %s84, %s87
      %p93 = scmp.eq.s32.totalorder %s39, 0
      %p94 = por %p92, %p93
      %p95 = scmp.ne.s32.totalorder %s84, %s87
      %p96 = scmp.eq.s32.totalorder %s44, 1
      %p97 = por %p95, %p96
      %p98 = scmp.ne.s32.totalorder %s87, %s88
      %p99 = scmp.eq.s32.totalorder %s44, 0
      %p100 = por %p98, %p99
      %p101 = scmp.ne.s32.totalorder %s87, %s88
      %p102 = scmp.eq.s32.totalorder %s45, 1
      %p103 = por %p101, %p102
      %p105 = scmp.ne.s32.totalorder %s88, %s104
      %p106 = scmp.eq.s32.totalorder %s45, 0
      %p107 = por %p105, %p106
      %s108 = sadd.s32 %s46, %s47
      %s109 = sadd.s32 %s58, %s54
      %s110 = ssub.s32 %s108, %s109
      %p111 = scmp.eq.s32.totalorder %s110, 0
      %s113 = sadd.s32 %s112, 1
      %s114 = scalar_select %p111, %s112, %s113
      %p117 = pneg %p111
      %p118 = scmp.eq.s32.totalorder %s39, 1
      %p119 = por %p117, %p118
      %p120 = scmp.ne.s32.totalorder %s112, %s115
      %p121 = scmp.eq.s32.totalorder %s39, 0
      %p122 = por %p120, %p121
      %p123 = scmp.ne.s32.totalorder %s112, %s115
      %p124 = scmp.eq.s32.totalorder %s44, 1
      %p125 = por %p123, %p124
      %p126 = scmp.ne.s32.totalorder %s115, %s116
      %p127 = scmp.eq.s32.totalorder %s44, 0
      %p128 = por %p126, %p127
      %p129 = scmp.ne.s32.totalorder %s115, %s116
      %p130 = scmp.eq.s32.totalorder %s45, 1
      %p131 = por %p129, %p130
      %p133 = scmp.ne.s32.totalorder %s116, %s132
      %p134 = scmp.eq.s32.totalorder %s45, 0
      %p135 = por %p133, %p134
      %s136 = sadd.s32 %s46, %s47
      %s137 = sadd.s32 %s58, %s54
      %s138 = ssub.s32 %s136, %s137
      %p139 = scmp.eq.s32.totalorder %s138, 0
      %s141 = sadd.s32 %s140, 1
      %s142 = scalar_select %p139, %s140, %s141
      %p145 = pneg %p139
      %p146 = scmp.eq.s32.totalorder %s39, 1
      %p147 = por %p145, %p146
      %p148 = scmp.ne.s32.totalorder %s140, %s143
      %p149 = scmp.eq.s32.totalorder %s39, 0
      %p150 = por %p148, %p149
      %p151 = scmp.ne.s32.totalorder %s140, %s143
      %p152 = scmp.eq.s32.totalorder %s44, 1
      %p153 = por %p151, %p152
      %p154 = scmp.ne.s32.totalorder %s143, %s144
      %p155 = scmp.eq.s32.totalorder %s44, 0
      %p156 = por %p154, %p155
      %p157 = scmp.ne.s32.totalorder %s143, %s144
      %p158 = scmp.eq.s32.totalorder %s45, 1
      %p159 = por %p157, %p158
      %p161 = scmp.ne.s32.totalorder %s144, %s160
      %p162 = scmp.eq.s32.totalorder %s45, 0
      %p163 = por %p161, %p162
      %s164 = sadd.s32 %s46, %s47
      %s165 = sadd.s32 %s58, %s54
      %s166 = ssub.s32 %s164, %s165
      %p167 = scmp.eq.s32.totalorder %s166, 0
      %s169 = sadd.s32 %s168, 1
      %s170 = scalar_select %p167, %s168, %s169
      %p173 = pneg %p167
      %p174 = scmp.eq.s32.totalorder %s39, 1
      %p175 = por %p173, %p174
      %p176 = scmp.ne.s32.totalorder %s168, %s171
      %p177 = scmp.eq.s32.totalorder %s39, 0
      %p178 = por %p176, %p177
      %p179 = scmp.ne.s32.totalorder %s168, %s171
      %p180 = scmp.eq.s32.totalorder %s44, 1
      %p181 = por %p179, %p180
      %p182 = scmp.ne.s32.totalorder %s171, %s172
      %p183 = scmp.eq.s32.totalorder %s44, 0
      %p184 = por %p182, %p183
      %p185 = scmp.ne.s32.totalorder %s171, %s172
      %p186 = scmp.eq.s32.totalorder %s45, 1
      %p187 = por %p185, %p186
      %p189 = scmp.ne.s32.totalorder %s172, %s188
      %p190 = scmp.eq.s32.totalorder %s45, 0
      %p191 = por %p189, %p190
      %s192 = sadd.s32 %s46, %s47
      %s193 = sadd.s32 %s58, %s54
      %s194 = ssub.s32 %s192, %s193
      %p195 = scmp.eq.s32.totalorder %s194, 0
      %s197 = sadd.s32 %s196, 1
      %s198 = scalar_select %p195, %s196, %s197
      %p201 = pneg %p195
      %p202 = scmp.eq.s32.totalorder %s39, 1
      %p203 = por %p201, %p202
      %p204 = scmp.ne.s32.totalorder %s196, %s199
      %p205 = scmp.eq.s32.totalorder %s39, 0
      %p206 = por %p204, %p205
      %p207 = scmp.ne.s32.totalorder %s196, %s199
      %p208 = scmp.eq.s32.totalorder %s44, 1
      %p209 = por %p207, %p208
      %p210 = scmp.ne.s32.totalorder %s199, %s200
      %p211 = scmp.eq.s32.totalorder %s44, 0
      %p212 = por %p210, %p211
      %p213 = scmp.ne.s32.totalorder %s199, %s200
      %p214 = scmp.eq.s32.totalorder %s45, 1
      %p215 = por %p213, %p214
      %p217 = scmp.ne.s32.totalorder %s200, %s216
      %p218 = scmp.eq.s32.totalorder %s45, 0
      %p219 = por %p217, %p218
      %s220 = sadd.s32 %s46, %s47
      %s221 = sadd.s32 %s58, %s54
      %s222 = ssub.s32 %s220, %s221
      %p223 = scmp.eq.s32.totalorder %s222, 0
      %s225 = sadd.s32 %s224, 1
      %s226 = scalar_select %p223, %s224, %s225
      %p229 = pneg %p223
      %p230 = scmp.eq.s32.totalorder %s39, 1
      %p231 = por %p229, %p230
      %p232 = scmp.ne.s32.totalorder %s224, %s227
      %p233 = scmp.eq.s32.totalorder %s39, 0
      %p234 = por %p232, %p233
      %p235 = scmp.ne.s32.totalorder %s224, %s227
      %p236 = scmp.eq.s32.totalorder %s44, 1
      %p237 = por %p235, %p236
      %p238 = scmp.ne.s32.totalorder %s227, %s228
      %p239 = scmp.eq.s32.totalorder %s44, 0
      %p240 = por %p238, %p239
      %p241 = scmp.ne.s32.totalorder %s227, %s228
      %p242 = scmp.eq.s32.totalorder %s45, 1
      %p243 = por %p241, %p242
      %p245 = scmp.ne.s32.totalorder %s228, %s244
      %p246 = scmp.eq.s32.totalorder %s45, 0
      %p247 = por %p245, %p246
      %s248 = sadd.s32 %s46, %s47
      %s249 = sadd.s32 %s58, %s54
      %s250 = ssub.s32 %s248, %s249
      %p251 = scmp.eq.s32.totalorder %s250, 0
      %s253 = sadd.s32 %s252, 1
      %s254 = scalar_select %p251, %s252, %s253
      %p257 = pneg %p251
      %p258 = scmp.eq.s32.totalorder %s39, 1
      %p259 = por %p257, %p258
      %p260 = scmp.ne.s32.totalorder %s252, %s255
      %p261 = scmp.eq.s32.totalorder %s39, 0
      %p262 = por %p260, %p261
      %p263 = scmp.ne.s32.totalorder %s252, %s255
      %p264 = scmp.eq.s32.totalorder %s44, 1
      %p265 = por %p263, %p264
      %p266 = scmp.ne.s32.totalorder %s255, %s256
      %p267 = scmp.eq.s32.totalorder %s44, 0
      %p268 = por %p266, %p267
      %p269 = scmp.ne.s32.totalorder %s255, %s256
      %p270 = scmp.eq.s32.totalorder %s45, 1
      %p271 = por %p269, %p270
      %p273 = scmp.ne.s32.totalorder %s256, %s272
      %p274 = scmp.eq.s32.totalorder %s45, 0
      %p275 = por %p273, %p274
      %s276 = sadd.s32 %s46, %s47
      %s277 = sadd.s32 %s58, %s54
      %s278 = ssub.s32 %s276, %s277
      %p279 = scmp.eq.s32.totalorder %s278, 0
      %s281 = sadd.s32 %s280, 1
      %s282 = scalar_select %p279, %s280, %s281
      %p285 = pneg %p279
      %p286 = scmp.eq.s32.totalorder %s39, 1
      %p287 = por %p285, %p286
      %p288 = scmp.ne.s32.totalorder %s280, %s283
      %p289 = scmp.eq.s32.totalorder %s39, 0
      %p290 = por %p288, %p289
      %p291 = scmp.ne.s32.totalorder %s280, %s283
      %p292 = scmp.eq.s32.totalorder %s44, 1
      %p293 = por %p291, %p292
      %p294 = scmp.ne.s32.totalorder %s283, %s284
      %p295 = scmp.eq.s32.totalorder %s44, 0
      %p296 = por %p294, %p295
      %p297 = scmp.ne.s32.totalorder %s283, %s284
      %p298 = scmp.eq.s32.totalorder %s45, 1
      %p299 = por %p297, %p298
      %p301 = scmp.ne.s32.totalorder %s284, %s300
      %p302 = scmp.eq.s32.totalorder %s45, 0
      %p303 = por %p301, %p302
      %s304 = sadd.s32 %s46, %s47
      %s305 = sadd.s32 %s58, %s54
      %s306 = ssub.s32 %s304, %s305
      %p307 = scmp.eq.s32.totalorder %s306, 0
      %s309 = sadd.s32 %s308, 1
      %s310 = scalar_select %p307, %s308, %s309
      %p313 = pneg %p307
      %p314 = scmp.eq.s32.totalorder %s39, 1
      %p315 = por %p313, %p314
      %p316 = scmp.ne.s32.totalorder %s308, %s311
      %p317 = scmp.eq.s32.totalorder %s39, 0
      %p318 = por %p316, %p317
      %p319 = scmp.ne.s32.totalorder %s308, %s311
      %p320 = scmp.eq.s32.totalorder %s44, 1
      %p321 = por %p319, %p320
      %p322 = scmp.ne.s32.totalorder %s311, %s312
      %p323 = scmp.eq.s32.totalorder %s44, 0
      %p324 = por %p322, %p323
      %p325 = scmp.ne.s32.totalorder %s311, %s312
      %p326 = scmp.eq.s32.totalorder %s45, 1
      %p327 = por %p325, %p326
      %p329 = scmp.ne.s32.totalorder %s312, %s328
      %p330 = scmp.eq.s32.totalorder %s45, 0
      %p331 = por %p329, %p330
      %s332 = sadd.s32 %s46, %s47
      %s333 = sadd.s32 %s58, %s54
      %s334 = ssub.s32 %s332, %s333
      %p335 = scmp.eq.s32.totalorder %s334, 0
      %s337 = sadd.s32 %s336, 1
      %s338 = scalar_select %p335, %s336, %s337
      %p341 = pneg %p335
      %p342 = scmp.eq.s32.totalorder %s39, 1
      %p343 = por %p341, %p342
      %p344 = scmp.ne.s32.totalorder %s336, %s339
      %p345 = scmp.eq.s32.totalorder %s39, 0
      %p346 = por %p344, %p345
      %p347 = scmp.ne.s32.totalorder %s336, %s339
      %p348 = scmp.eq.s32.totalorder %s44, 1
      %p349 = por %p347, %p348
      %p350 = scmp.ne.s32.totalorder %s339, %s340
      %p351 = scmp.eq.s32.totalorder %s44, 0
      %p352 = por %p350, %p351
      %p353 = scmp.ne.s32.totalorder %s339, %s340
      %p354 = scmp.eq.s32.totalorder %s45, 1
      %p355 = por %p353, %p354
      %p357 = scmp.ne.s32.totalorder %s340, %s356
      %p358 = scmp.eq.s32.totalorder %s45, 0
      %p359 = por %p357, %p358
      %s360 = ssub.s32 %s46, %s58
      %p361 = scmp.eq.s32.totalorder %s360, 0
      %s363 = sadd.s32 %s362, 1
      %s364 = scalar_select %p361, %s362, %s363
      %p367 = pneg %p361
      %p368 = scmp.eq.s32.totalorder %s39, 1
      %p369 = por %p367, %p368
      %p370 = scmp.ne.s32.totalorder %s362, %s365
      %p371 = scmp.eq.s32.totalorder %s39, 0
      %p372 = por %p370, %p371
      %p373 = scmp.ne.s32.totalorder %s362, %s365
      %p374 = scmp.eq.s32.totalorder %s44, 1
      %p375 = por %p373, %p374
      %p376 = scmp.ne.s32.totalorder %s365, %s366
      %p377 = scmp.eq.s32.totalorder %s44, 0
      %p378 = por %p376, %p377
      %p379 = scmp.ne.s32.totalorder %s365, %s366
      %p380 = scmp.eq.s32.totalorder %s45, 1
      %p381 = por %p379, %p380
      %p383 = scmp.ne.s32.totalorder %s366, %s382
      %p384 = scmp.eq.s32.totalorder %s45, 0
      %p385 = por %p383, %p384
      %p386 = scmp.le.s32.totalorder 1, %s39
      %p387 = scmp.lt.s32.totalorder %s39, 3
      %p388 = pnand %p386, %p387
      %p389 = pneg %p388
      // Predicated region
      $region9: #{tpu_custom_call.1} parent=5 // pred_check
        _
      $region10: #{tpu_custom_call.1} parent=5 // pred_check_branch
        %391 = sbr.rel (%p388) target = $region12
      $region11: #{tpu_custom_call.1} parent=5 // pred_region
        %s392 = ssub.s32 %s39, 1
        // Predicated region
        $region13: #{tpu_custom_call.1} parent=11 // pred_check
          %p393 = pneg %p72
        $region14: #{tpu_custom_call.1} parent=11 // pred_check_branch
          %395 = sbr.rel (%p393) target = $region16
        $region15: #{tpu_custom_call.1} parent=11 // pred_region
          %397 = vsyncadd [#allocation5], 0
          %s399 = sshll.u32 %s0, 4
          %s400 = int_to_ptr.hbm [resolvable:$true] %s399
          %402 = dma.hbm_to_smem %s400, 16, [#allocation2], [#allocation5]
        $region16: #{tpu_custom_call.1} parent=11 // pred_fallthru
          _
      $region12: #{tpu_custom_call.1} parent=5 // pred_fallthru
        _
      %p403 = scmp.lt.s32.totalorder %s39, 2
      // Predicated region
      $region17: #{tpu_custom_call.1} parent=5 // pred_check
        %p404 = pneg %p403
      $region18: #{tpu_custom_call.1} parent=5 // pred_check_branch
        %406 = sbr.rel (%p404) target = $region20
      $region19: #{tpu_custom_call.1} parent=5 // pred_region
        // Predicated region
        $region21: #{tpu_custom_call.1} parent=19 // pred_check
          %p407 = pneg %p94
        $region22: #{tpu_custom_call.1} parent=19 // pred_check_branch
          %409 = sbr.rel (%p407) target = $region24
        $region23: #{tpu_custom_call.1} parent=19 // pred_region
          %s410 = sand.u32 %s84, 1
          %s411 = scalar_lea.sflag [#allocation3], %s410
          %s412 = sand.u32 %s84, 1
          %s413 = smul.addr %s412, 16
          %s414 = scalar_lea.vmem [#allocation6], %s413
          %s415 = sadd.s32 %s46, %s47
          %417 = vsyncadd %s411, 0
          %s418 = smul.addr %s415, 8
          %s419 = scalar_lea.hbm %s1, %s418
          %s420 = sshll.u32 %s419, 4
          %s421 = int_to_ptr.hbm [resolvable:$true] %s420
          %s422 = sshll.u32 %s414, 4
          %s423 = int_to_ptr.vmem [resolvable:$true] %s422
          %428 = dma.hbm_to_vmem [thread:$0]  %s421, 256, %s423, %s411, 256, 128, 8
        $region24: #{tpu_custom_call.1} parent=19 // pred_fallthru
          _
        // Predicated region
        $region25: #{tpu_custom_call.1} parent=19 // pred_check
          %p429 = pneg %p122
        $region26: #{tpu_custom_call.1} parent=19 // pred_check_branch
          %431 = sbr.rel (%p429) target = $region28
        $region27: #{tpu_custom_call.1} parent=19 // pred_region
          %s432 = sand.u32 %s39, 1
          %s433 = scalar_lea.sflag [#allocation8], %s432
          %s434 = sand.u32 %s112, 1
          %s435 = smul.addr %s434, 16
          %s436 = scalar_lea.vmem [#allocation7], %s435
          %s437 = sadd.s32 %s46, %s47
          %439 = vsyncadd %s433, 0
          %s440 = smul.addr %s437, 8
          %s441 = scalar_lea.hbm %s2, %s440
          %s442 = sshll.u32 %s441, 4
          %s443 = int_to_ptr.hbm [resolvable:$true] %s442
          %s444 = sshll.u32 %s436, 4
          %s445 = int_to_ptr.vmem [resolvable:$true] %s444
          %450 = dma.hbm_to_vmem [thread:$0]  %s443, 256, %s445, %s433, 256, 128, 8
        $region28: #{tpu_custom_call.1} parent=19 // pred_fallthru
          _
        // Predicated region
        $region29: #{tpu_custom_call.1} parent=19 // pred_check
          %p451 = pneg %p150
        $region30: #{tpu_custom_call.1} parent=19 // pred_check_branch
          %453 = sbr.rel (%p451) target = $region32
        $region31: #{tpu_custom_call.1} parent=19 // pred_region
          %s454 = sand.u32 %s39, 1
          %s455 = scalar_lea.sflag [#allocation8], %s454
          %s456 = sand.u32 %s140, 1
          %s457 = smul.addr %s456, 16
          %s458 = scalar_lea.vmem [#allocation9], %s457
          %s459 = sadd.s32 %s46, %s47
          %461 = vsyncadd %s455, 0
          %s462 = smul.addr %s459, 8
          %s463 = scalar_lea.hbm %s3, %s462
          %s464 = sshll.u32 %s463, 4
          %s465 = int_to_ptr.hbm [resolvable:$true] %s464
          %s466 = sshll.u32 %s458, 4
          %s467 = int_to_ptr.vmem [resolvable:$true] %s466
          %472 = dma.hbm_to_vmem [thread:$0]  %s465, 256, %s467, %s455, 256, 128, 8
        $region32: #{tpu_custom_call.1} parent=19 // pred_fallthru
          _
        // Predicated region
        $region33: #{tpu_custom_call.1} parent=19 // pred_check
          %p473 = pneg %p178
        $region34: #{tpu_custom_call.1} parent=19 // pred_check_branch
          %475 = sbr.rel (%p473) target = $region36
        $region35: #{tpu_custom_call.1} parent=19 // pred_region
          %s476 = sand.u32 %s39, 1
          %s477 = scalar_lea.sflag [#allocation11], %s476
          %s478 = sand.u32 %s168, 1
          %s479 = smul.addr %s478, 16
          %s480 = scalar_lea.vmem [#allocation10], %s479
          %s481 = sadd.s32 %s46, %s47
          %483 = vsyncadd %s477, 0
          %s484 = smul.addr %s481, 8
          %s485 = scalar_lea.hbm %s4, %s484
          %s486 = sshll.u32 %s485, 4
          %s487 = int_to_ptr.hbm [resolvable:$true] %s486
          %s488 = sshll.u32 %s480, 4
          %s489 = int_to_ptr.vmem [resolvable:$true] %s488
          %494 = dma.hbm_to_vmem [thread:$0]  %s487, 256, %s489, %s477, 256, 128, 8
        $region36: #{tpu_custom_call.1} parent=19 // pred_fallthru
          _
        // Predicated region
        $region37: #{tpu_custom_call.1} parent=19 // pred_check
          %p495 = pneg %p206
        $region38: #{tpu_custom_call.1} parent=19 // pred_check_branch
          %497 = sbr.rel (%p495) target = $region40
        $region39: #{tpu_custom_call.1} parent=19 // pred_region
          %s498 = sand.u32 %s39, 1
          %s499 = scalar_lea.sflag [#allocation11], %s498
          %s500 = sand.u32 %s196, 1
          %s501 = smul.addr %s500, 16
          %s502 = scalar_lea.vmem [#allocation12], %s501
          %s503 = sadd.s32 %s46, %s47
          %505 = vsyncadd %s499, 0
          %s506 = smul.addr %s503, 8
          %s507 = scalar_lea.hbm %s5, %s506
          %s508 = sshll.u32 %s507, 4
          %s509 = int_to_ptr.hbm [resolvable:$true] %s508
          %s510 = sshll.u32 %s502, 4
          %s511 = int_to_ptr.vmem [resolvable:$true] %s510
          %516 = dma.hbm_to_vmem [thread:$0]  %s509, 256, %s511, %s499, 256, 128, 8
        $region40: #{tpu_custom_call.1} parent=19 // pred_fallthru
          _
        // Predicated region
        $region41: #{tpu_custom_call.1} parent=19 // pred_check
          %p517 = pneg %p234
        $region42: #{tpu_custom_call.1} parent=19 // pred_check_branch
          %519 = sbr.rel (%p517) target = $region44
        $region43: #{tpu_custom_call.1} parent=19 // pred_region
          %s520 = sand.u32 %s39, 1
          %s521 = scalar_lea.sflag [#allocation14], %s520
          %s522 = sand.u32 %s224, 1
          %s523 = smul.addr %s522, 16
          %s524 = scalar_lea.vmem [#allocation13], %s523
          %s525 = sadd.s32 %s46, %s47
          %527 = vsyncadd %s521, 0
          %s528 = smul.addr %s525, 8
          %s529 = scalar_lea.hbm %s6, %s528
          %s530 = sshll.u32 %s529, 4
          %s531 = int_to_ptr.hbm [resolvable:$true] %s530
          %s532 = sshll.u32 %s524, 4
          %s533 = int_to_ptr.vmem [resolvable:$true] %s532
          %538 = dma.hbm_to_vmem [thread:$0]  %s531, 256, %s533, %s521, 256, 128, 8
        $region44: #{tpu_custom_call.1} parent=19 // pred_fallthru
          _
        // Predicated region
        $region45: #{tpu_custom_call.1} parent=19 // pred_check
          %p539 = pneg %p262
        $region46: #{tpu_custom_call.1} parent=19 // pred_check_branch
          %541 = sbr.rel (%p539) target = $region48
        $region47: #{tpu_custom_call.1} parent=19 // pred_region
          %s542 = sand.u32 %s39, 1
          %s543 = scalar_lea.sflag [#allocation14], %s542
          %s544 = sand.u32 %s252, 1
          %s545 = smul.addr %s544, 16
          %s546 = scalar_lea.vmem [#allocation15], %s545
          %s547 = sadd.s32 %s46, %s47
          %549 = vsyncadd %s543, 0
          %s550 = smul.addr %s547, 8
          %s551 = scalar_lea.hbm %s7, %s550
          %s552 = sshll.u32 %s551, 4
          %s553 = int_to_ptr.hbm [resolvable:$true] %s552
          %s554 = sshll.u32 %s546, 4
          %s555 = int_to_ptr.vmem [resolvable:$true] %s554
          %560 = dma.hbm_to_vmem [thread:$0]  %s553, 256, %s555, %s543, 256, 128, 8
        $region48: #{tpu_custom_call.1} parent=19 // pred_fallthru
          _
        // Predicated region
        $region49: #{tpu_custom_call.1} parent=19 // pred_check
          %p561 = pneg %p290
        $region50: #{tpu_custom_call.1} parent=19 // pred_check_branch
          %563 = sbr.rel (%p561) target = $region52
        $region51: #{tpu_custom_call.1} parent=19 // pred_region
          %s564 = sand.u32 %s39, 1
          %s565 = scalar_lea.sflag [#allocation17], %s564
          %s566 = sand.u32 %s280, 1
          %s567 = smul.addr %s566, 16
          %s568 = scalar_lea.vmem [#allocation16], %s567
          %s569 = sadd.s32 %s46, %s47
          %571 = vsyncadd %s565, 0
          %s572 = smul.addr %s569, 8
          %s573 = scalar_lea.hbm %s8, %s572
          %s574 = sshll.u32 %s573, 4
          %s575 = int_to_ptr.hbm [resolvable:$true] %s574
          %s576 = sshll.u32 %s568, 4
          %s577 = int_to_ptr.vmem [resolvable:$true] %s576
          %582 = dma.hbm_to_vmem [thread:$0]  %s575, 256, %s577, %s565, 256, 128, 8
        $region52: #{tpu_custom_call.1} parent=19 // pred_fallthru
          _
        // Predicated region
        $region53: #{tpu_custom_call.1} parent=19 // pred_check
          %p583 = pneg %p318
        $region54: #{tpu_custom_call.1} parent=19 // pred_check_branch
          %585 = sbr.rel (%p583) target = $region56
        $region55: #{tpu_custom_call.1} parent=19 // pred_region
          %s586 = sand.u32 %s39, 1
          %s587 = scalar_lea.sflag [#allocation17], %s586
          %s588 = sand.u32 %s308, 1
          %s589 = smul.addr %s588, 16
          %s590 = scalar_lea.vmem [#allocation18], %s589
          %s591 = sadd.s32 %s46, %s47
          %593 = vsyncadd %s587, 0
          %s594 = smul.addr %s591, 8
          %s595 = scalar_lea.hbm %s9, %s594
          %s596 = sshll.u32 %s595, 4
          %s597 = int_to_ptr.hbm [resolvable:$true] %s596
          %s598 = sshll.u32 %s590, 4
          %s599 = int_to_ptr.vmem [resolvable:$true] %s598
          %604 = dma.hbm_to_vmem [thread:$0]  %s597, 256, %s599, %s587, 256, 128, 8
        $region56: #{tpu_custom_call.1} parent=19 // pred_fallthru
          _
        // Predicated region
        $region57: #{tpu_custom_call.1} parent=19 // pred_check
          %p605 = pneg %p346
        $region58: #{tpu_custom_call.1} parent=19 // pred_check_branch
          %607 = sbr.rel (%p605) target = $region60
        $region59: #{tpu_custom_call.1} parent=19 // pred_region
          %s608 = sand.u32 %s336, 1
          %s609 = scalar_lea.sflag [#allocation20], %s608
          %s610 = sand.u32 %s336, 1
          %s611 = smul.addr %s610, 16
          %s612 = scalar_lea.vmem [#allocation19], %s611
          %s613 = sadd.s32 %s46, %s47
          %615 = vsyncadd %s609, 0
          %s616 = smul.addr %s613, 8
          %s617 = scalar_lea.hbm %s10, %s616
          %s618 = sshll.u32 %s617, 4
          %s619 = int_to_ptr.hbm [resolvable:$true] %s618
          %s620 = sshll.u32 %s612, 4
          %s621 = int_to_ptr.vmem [resolvable:$true] %s620
          %626 = dma.hbm_to_vmem [thread:$0]  %s619, 256, %s621, %s609, 256, 128, 8
        $region60: #{tpu_custom_call.1} parent=19 // pred_fallthru
          _
      $region20: #{tpu_custom_call.1} parent=5 // pred_fallthru
        _
      %p627 = scmp.le.s32.totalorder 1, %s39
      %p628 = scmp.lt.s32.totalorder %s39, 3
      %p629 = pnand %p627, %p628
      %p630 = pneg %p629
      // Predicated region
      $region61: #{tpu_custom_call.1} parent=5 // pred_check
        _
      $region62: #{tpu_custom_call.1} parent=5 // pred_check_branch
        %632 = sbr.rel (%p629) target = $region64
      $region63: #{tpu_custom_call.1} parent=5 // pred_region
        %s633 = ssub.s32 %s39, 1
        // Predicated region
        $region65: #{tpu_custom_call.1} parent=63 // pred_check
          %p634 = pneg %p72
        $region66: #{tpu_custom_call.1} parent=63 // pred_check_branch
          %636 = sbr.rel (%p634) target = $region68
        $region67: #{tpu_custom_call.1} parent=63 // pred_region
          %638 = dma.done [#allocation5], 16
        $region68: #{tpu_custom_call.1} parent=63 // pred_fallthru
          _
        %s639 = sand.u32 %s87, 1
        %s640 = scalar_lea.sflag [#allocation3], %s639
        %s641 = sand.u32 %s87, 1
        %s642 = smul.addr %s641, 16
        %s643 = scalar_lea.vmem [#allocation6], %s642
        // Predicated region
        $region69: #{tpu_custom_call.1} parent=63 // pred_check
          %p644 = pneg %p100
        $region70: #{tpu_custom_call.1} parent=63 // pred_check_branch
          %646 = sbr.rel (%p644) target = $region72
        $region71: #{tpu_custom_call.1} parent=63 // pred_region
          %648 = dma.done %s640, 256
        $region72: #{tpu_custom_call.1} parent=63 // pred_fallthru
          _
        %s649 = sand.u32 %s44, 1
        %s650 = scalar_lea.sflag [#allocation8], %s649
        %s651 = sand.u32 %s115, 1
        %s652 = smul.addr %s651, 16
        %s653 = scalar_lea.vmem [#allocation7], %s652
        // Predicated region
        $region73: #{tpu_custom_call.1} parent=63 // pred_check
          %p654 = pneg %p128
        $region74: #{tpu_custom_call.1} parent=63 // pred_check_branch
          %656 = sbr.rel (%p654) target = $region76
        $region75: #{tpu_custom_call.1} parent=63 // pred_region
          %658 = dma.done %s650, 256
        $region76: #{tpu_custom_call.1} parent=63 // pred_fallthru
          _
        %s659 = sand.u32 %s44, 1
        %s660 = scalar_lea.sflag [#allocation8], %s659
        %s661 = sand.u32 %s143, 1
        %s662 = smul.addr %s661, 16
        %s663 = scalar_lea.vmem [#allocation9], %s662
        // Predicated region
        $region77: #{tpu_custom_call.1} parent=63 // pred_check
          %p664 = pneg %p156
        $region78: #{tpu_custom_call.1} parent=63 // pred_check_branch
          %666 = sbr.rel (%p664) target = $region80
        $region79: #{tpu_custom_call.1} parent=63 // pred_region
          %668 = dma.done %s660, 256
        $region80: #{tpu_custom_call.1} parent=63 // pred_fallthru
          _
        %s669 = sand.u32 %s44, 1
        %s670 = scalar_lea.sflag [#allocation11], %s669
        %s671 = sand.u32 %s171, 1
        %s672 = smul.addr %s671, 16
        %s673 = scalar_lea.vmem [#allocation10], %s672
        // Predicated region
        $region81: #{tpu_custom_call.1} parent=63 // pred_check
          %p674 = pneg %p184
        $region82: #{tpu_custom_call.1} parent=63 // pred_check_branch
          %676 = sbr.rel (%p674) target = $region84
        $region83: #{tpu_custom_call.1} parent=63 // pred_region
          %678 = dma.done %s670, 256
        $region84: #{tpu_custom_call.1} parent=63 // pred_fallthru
          _
        %s679 = sand.u32 %s44, 1
        %s680 = scalar_lea.sflag [#allocation11], %s679
        %s681 = sand.u32 %s199, 1
        %s682 = smul.addr %s681, 16
        %s683 = scalar_lea.vmem [#allocation12], %s682
        // Predicated region
        $region85: #{tpu_custom_call.1} parent=63 // pred_check
          %p684 = pneg %p212
        $region86: #{tpu_custom_call.1} parent=63 // pred_check_branch
          %686 = sbr.rel (%p684) target = $region88
        $region87: #{tpu_custom_call.1} parent=63 // pred_region
          %688 = dma.done %s680, 256
        $region88: #{tpu_custom_call.1} parent=63 // pred_fallthru
          _
        %s689 = sand.u32 %s44, 1
        %s690 = scalar_lea.sflag [#allocation14], %s689
        %s691 = sand.u32 %s227, 1
        %s692 = smul.addr %s691, 16
        %s693 = scalar_lea.vmem [#allocation13], %s692
        // Predicated region
        $region89: #{tpu_custom_call.1} parent=63 // pred_check
          %p694 = pneg %p240
        $region90: #{tpu_custom_call.1} parent=63 // pred_check_branch
          %696 = sbr.rel (%p694) target = $region92
        $region91: #{tpu_custom_call.1} parent=63 // pred_region
          %698 = dma.done %s690, 256
        $region92: #{tpu_custom_call.1} parent=63 // pred_fallthru
          _
        %s699 = sand.u32 %s44, 1
        %s700 = scalar_lea.sflag [#allocation14], %s699
        %s701 = sand.u32 %s255, 1
        %s702 = smul.addr %s701, 16
        %s703 = scalar_lea.vmem [#allocation15], %s702
        // Predicated region
        $region93: #{tpu_custom_call.1} parent=63 // pred_check
          %p704 = pneg %p268
        $region94: #{tpu_custom_call.1} parent=63 // pred_check_branch
          %706 = sbr.rel (%p704) target = $region96
        $region95: #{tpu_custom_call.1} parent=63 // pred_region
          %708 = dma.done %s700, 256
        $region96: #{tpu_custom_call.1} parent=63 // pred_fallthru
          _
        %s709 = sand.u32 %s44, 1
        %s710 = scalar_lea.sflag [#allocation17], %s709
        %s711 = sand.u32 %s283, 1
        %s712 = smul.addr %s711, 16
        %s713 = scalar_lea.vmem [#allocation16], %s712
        // Predicated region
        $region97: #{tpu_custom_call.1} parent=63 // pred_check
          %p714 = pneg %p296
        $region98: #{tpu_custom_call.1} parent=63 // pred_check_branch
          %716 = sbr.rel (%p714) target = $region100
        $region99: #{tpu_custom_call.1} parent=63 // pred_region
          %718 = dma.done %s710, 256
        $region100: #{tpu_custom_call.1} parent=63 // pred_fallthru
          _
        %s719 = sand.u32 %s44, 1
        %s720 = scalar_lea.sflag [#allocation17], %s719
        %s721 = sand.u32 %s311, 1
        %s722 = smul.addr %s721, 16
        %s723 = scalar_lea.vmem [#allocation18], %s722
        // Predicated region
        $region101: #{tpu_custom_call.1} parent=63 // pred_check
          %p724 = pneg %p324
        $region102: #{tpu_custom_call.1} parent=63 // pred_check_branch
          %726 = sbr.rel (%p724) target = $region104
        $region103: #{tpu_custom_call.1} parent=63 // pred_region
          %728 = dma.done %s720, 256
        $region104: #{tpu_custom_call.1} parent=63 // pred_fallthru
          _
        %s729 = sand.u32 %s339, 1
        %s730 = scalar_lea.sflag [#allocation20], %s729
        %s731 = sand.u32 %s339, 1
        %s732 = smul.addr %s731, 16
        %s733 = scalar_lea.vmem [#allocation19], %s732
        // Predicated region
        $region105: #{tpu_custom_call.1} parent=63 // pred_check
          %p734 = pneg %p352
        $region106: #{tpu_custom_call.1} parent=63 // pred_check_branch
          %736 = sbr.rel (%p734) target = $region108
        $region107: #{tpu_custom_call.1} parent=63 // pred_region
          %738 = dma.done %s730, 256
        $region108: #{tpu_custom_call.1} parent=63 // pred_fallthru
          _
        %739 = sfence
        %p740 = pneg %p72
        %p741 = pneg %p69
        %s742 = sand.u32 %s87, 1
        %s743 = scalar_lea.sflag [#allocation3], %s742
        %s744 = sand.u32 %s87, 1
        %s745 = smul.addr %s744, 16
        %s746 = scalar_lea.vmem [#allocation6], %s745
        %p747 = pneg %p100
        %p748 = pneg %p97
        %s749 = sand.u32 %s44, 1
        %s750 = scalar_lea.sflag [#allocation8], %s749
        %s751 = sand.u32 %s115, 1
        %s752 = smul.addr %s751, 16
        %s753 = scalar_lea.vmem [#allocation7], %s752
        %p754 = pneg %p128
        %p755 = pneg %p125
        %s756 = sand.u32 %s44, 1
        %s757 = scalar_lea.sflag [#allocation8], %s756
        %s758 = sand.u32 %s143, 1
        %s759 = smul.addr %s758, 16
        %s760 = scalar_lea.vmem [#allocation9], %s759
        %p761 = pneg %p156
        %p762 = pneg %p153
        %s763 = sand.u32 %s44, 1
        %s764 = scalar_lea.sflag [#allocation11], %s763
        %s765 = sand.u32 %s171, 1
        %s766 = smul.addr %s765, 16
        %s767 = scalar_lea.vmem [#allocation10], %s766
        %p768 = pneg %p184
        %p769 = pneg %p181
        %s770 = sand.u32 %s44, 1
        %s771 = scalar_lea.sflag [#allocation11], %s770
        %s772 = sand.u32 %s199, 1
        %s773 = smul.addr %s772, 16
        %s774 = scalar_lea.vmem [#allocation12], %s773
        %p775 = pneg %p212
        %p776 = pneg %p209
        %s777 = sand.u32 %s44, 1
        %s778 = scalar_lea.sflag [#allocation14], %s777
        %s779 = sand.u32 %s227, 1
        %s780 = smul.addr %s779, 16
        %s781 = scalar_lea.vmem [#allocation13], %s780
        %p782 = pneg %p240
        %p783 = pneg %p237
        %s784 = sand.u32 %s44, 1
        %s785 = scalar_lea.sflag [#allocation14], %s784
        %s786 = sand.u32 %s255, 1
        %s787 = smul.addr %s786, 16
        %s788 = scalar_lea.vmem [#allocation15], %s787
        %p789 = pneg %p268
        %p790 = pneg %p265
        %s791 = sand.u32 %s44, 1
        %s792 = scalar_lea.sflag [#allocation17], %s791
        %s793 = sand.u32 %s283, 1
        %s794 = smul.addr %s793, 16
        %s795 = scalar_lea.vmem [#allocation16], %s794
        %p796 = pneg %p296
        %p797 = pneg %p293
        %s798 = sand.u32 %s44, 1
        %s799 = scalar_lea.sflag [#allocation17], %s798
        %s800 = sand.u32 %s311, 1
        %s801 = smul.addr %s800, 16
        %s802 = scalar_lea.vmem [#allocation18], %s801
        %p803 = pneg %p324
        %p804 = pneg %p321
        %s805 = sand.u32 %s339, 1
        %s806 = scalar_lea.sflag [#allocation20], %s805
        %s807 = sand.u32 %s339, 1
        %s808 = smul.addr %s807, 16
        %s809 = scalar_lea.vmem [#allocation19], %s808
        %p810 = pneg %p352
        %p811 = pneg %p349
        %p812 = pneg %p378
        %p813 = pneg %p375
        %s814 = sand.u32 %s365, 1
        %s815 = scalar_lea.sflag [#allocation4], %s814
        %s816 = sand.u32 %s365, 1
        %s817 = smul.addr %s816, 40
        %s818 = scalar_lea.vmem [#allocation21], %s817
        %s819 = sadd.s32 %s48, %s49
        %s820 = sadd.s32 %s48, %s49
        %s821 = sadd.s32 %s48, %s49
        %s822 = sadd.s32 %s48, %s49
        %s823 = sadd.s32 %s48, %s49
        %s824 = sadd.s32 %s48, %s49
        %s825 = sadd.s32 %s48, %s49
        %s826 = sadd.s32 %s48, %s49
        %s827 = sadd.s32 %s48, %s49
        %s828 = sadd.s32 %s48, %s49
        %s829 = smul.u32 5, %s48
        %p830 = scmp.eq.s32.totalorder %s49, 0
        // Predicated region
        $region109: #{tpu_custom_call.1} parent=63 // pred_check
          %p831 = pneg %p830
        $region110: #{tpu_custom_call.1} parent=63 // pred_check_branch
          %833 = sbr.rel (%p831) target = $region112
        $region111: #{tpu_custom_call.1} parent=63 // pred_region
          %834 = vst [vmem:[%s818] sm:$0xff] 0.0
          %835 = vst [vmem:[%s818 + $0x8] sm:$0xff] 0.0
          %836 = vst [vmem:[%s818 + $0x10] sm:$0xff] 0.0
          %837 = vst [vmem:[%s818 + $0x18] sm:$0xff] 0.0
          %838 = vst [vmem:[%s818 + $0x20] sm:$0xff] 0.0
        $region112: #{tpu_custom_call.1} parent=63 // pred_fallthru
          _
        %s839 = sadd.s32 %s48, %s49
        %s840 = smul.u32 %s839, 1024
        %v841 = vlaneseq
        %v842 = vshrl.u32 %v841, 7
        %v843 = vlaneseq
        %v844 = vand.u32 %v843, 127
        %v845 = vmul.u32 %v842, 128
        %v846 = vstv %s840
        %v847 = vadd.s32 %v846, %v845
        %v848 = vadd.s32 %v847, %v844
        %vm849 = vcmp.lt.s32.totalorder %v848, 1792
        %v850 = vsel %vm849, 1.0, 0.0
        %v851 = vld [vmem:[%s643] sm:$0xff]
        %v852 = vld [vmem:[%s653] sm:$0xff]
        %v853 = vsub.f32 64.0, %v851
        %v854 = vmul.f32 %v853, 0.035452
        %v855 = vsub.f32 %v854, 1.134464
        %v856 = vsub.f32 64.0, %v852
        %v857 = vmul.f32 %v856, 0.1546875
        %v858 = vadd.f32 %v857, 0.1
        %v859 = vand.u32 2147483647, %v855
        %vm860 = vcmp.le.f32.partialorder %v859, 0.7853982
        %vm861 = vcmp.lt.s32.totalorder %v855, 0
        %v862 = vand.u32 %v855, 2139095040
        %v863 = vshrl.u32 %v862, 23
        %v864 = vsub.s32 %v863, 127
        %v865 = vand.u32 2147483647, %v855
        %v866 = vand.u32 %v865, 8388607
        %v867 = vor.u32 %v866, 8388608
        %v868 = vsub.s32 0, %v867
        %v869 = vadd.s32 %v864, 1
        %vm870 = vcmp.gt.s32.totalorder %v869, 0
        %v871 = vsel %vm870, %v869, 0
        %v872 = vshrl.u32 %v871, 5
        %v873 = vand.u32 %v871, 31
        %v874 = vsub.s32 32, %v873
        %v875 = vshrl.u32 683565275, %v874
        %v876 = vshll.u32 683565275, %v873
        %v877 = vshrl.u32 2475754826, %v874
        %v878 = vor.u32 %v876, %v877
        %v879 = vshll.u32 2475754826, %v873
        %v880 = vshrl.u32 2131351028, %v874
        %v881 = vor.u32 %v879, %v880
        %v882 = vshll.u32 2131351028, %v873
        %v883 = vshrl.u32 2102212464, %v874
        %v884 = vor.u32 %v882, %v883
        %v885 = vshll.u32 2102212464, %v873
        %v886 = vshrl.u32 920167782, %v874
        %v887 = vor.u32 %v885, %v886
        %v888 = vshll.u32 920167782, %v873
        %v889 = vshrl.u32 1326507024, %v874
        %v890 = vor.u32 %v888, %v889
        %vm891 = vcmp.lt.s32.totalorder %v872, 1
        %vm892 = vcmp.lt.s32.totalorder %v872, 2
        %vm893 = vcmp.lt.s32.totalorder %v872, 3
        %vm894 = vcmp.lt.s32.totalorder %v872, 4
        %v895 = vsel %vm891, %v875, %v878
        %v896 = vsel %vm894, %v884, 2102212464
        %v897 = vsel %vm893, %v881, %v896
        %v898 = vsel %vm892, %v895, %v897
        %v899 = vsel %vm891, %v878, %v881
        %v900 = vsel %vm894, %v887, 920167782
        %v901 = vsel %vm893, %v884, %v900
        %v902 = vsel %vm892, %v899, %v901
        %v903 = vsel %vm891, %v881, %v884
        %v904 = vsel %vm894, %v890, 1326507024
        %v905 = vsel %vm893, %v887, %v904
        %v906 = vsel %vm892, %v903, %v905
        %v907 = vshll.u32 %v867, 8
        %v908 = vand.u32 %v907, 65535
        %v909 = vshrl.u32 %v907, 16
        %v910 = vand.u32 %v906, 65535
        %v911 = vshrl.u32 %v906, 16
        %v912 = vmul.u32 %v908, %v910
        %v913 = vmul.u32 %v908, %v911
        %v914 = vmul.u32 %v909, %v910
        %v915 = vmul.u32 %v909, %v911
        %v916 = vshll.u32 %v913, 16
        %v917 = vshrl.u32 %v913, 16
        %v918 = vshll.u32 %v914, 16
        %v919 = vshrl.u32 %v914, 16
        %vm920 = vc.u32 %v912, %v916
        %v921 = vsel %vm920, 1, 0
        %v922 = vadd.s32 %v912, %v916
        %v923 = vadd.s32 %v915, %v921
        %vm924 = vc.u32 %v922, %v918
        %v925 = vsel %vm924, 1, 0
        %v926 = vadd.s32 %v922, %v918
        %v927 = vadd.s32 %v923, %v925
        %v928 = vadd.s32 %v927, %v917
        %v929 = vadd.s32 %v928, %v919
        %v930 = vand.u32 %v907, 65535
        %v931 = vshrl.u32 %v907, 16
        %v932 = vand.u32 %v902, 65535
        %v933 = vshrl.u32 %v902, 16
        %v934 = vmul.u32 %v930, %v932
        %v935 = vmul.u32 %v930, %v933
        %v936 = vmul.u32 %v931, %v932
        %v937 = vmul.u32 %v931, %v933
        %v938 = vshll.u32 %v935, 16
        %v939 = vshrl.u32 %v935, 16
        %v940 = vshll.u32 %v936, 16
        %v941 = vshrl.u32 %v936, 16
        %vm942 = vc.u32 %v934, %v938
        %v943 = vsel %vm942, 1, 0
        %v944 = vadd.s32 %v934, %v938
        %v945 = vadd.s32 %v937, %v943
        %vm946 = vc.u32 %v944, %v940
        %v947 = vsel %vm946, 1, 0
        %v948 = vadd.s32 %v944, %v940
        %v949 = vadd.s32 %v945, %v947
        %v950 = vadd.s32 %v949, %v939
        %v951 = vadd.s32 %v950, %v941
        %v952 = vmul.u32 %v907, %v898
        %v953 = vadd.s32 %v929, %v948
        %vm954 = vc.u32 %v929, %v948
        %v955 = vadd.s32 %v951, 1
        %v956 = vsel %vm954, %v955, %v951
        %v957 = vadd.s32 %v952, %v956
        %v958 = vadd.s32 %v957, 536870912
        %v959 = vshrl.u32 %v958, 30
        %v960 = vshll.u32 %v959, 30
        %v961 = vsub.s32 %v957, %v960
        %vm962 = vcmp.lt.s32.totalorder %v961, 0
        %v963 = vsub.s32 0, %v961
        %v964 = vsel %vm962, %v963, %v961
        %v965 = vclz %v964
        %v966 = vsub.s32 %v965, 2
        %vm967 = vcmp.gt.s32.totalorder 0, %v966
        %v968 = vsel %vm967, 0, %v966
        %v969 = vsub.s32 32, %v968
        %v970 = vshll.u32 %v961, %v968
        %v971 = vshrl.u32 %v953, %v969
        %v972 = vor.u32 %v970, %v971
        %v973 = vsub.s32 4294967266, %v968
        %v974 = vadd.s32 %v973, 127
        %v975 = vshll.u32 %v974, 23
        %v976 = vor.u32 4788187, %v975
        %v977 = vand.u32 2147483647, %v976
        %v979 = vcvt.s32.f32 %v972
        %v980 = vmul.f32 %v979, %v977
        %v981 = vxor.u32 %v980, 2147483648
        %v982 = vsel %vm861, %v981, %v980
        %v983 = vsub.s32 4, %v959
        %v984 = vsel %vm861, %v983, %v959
        %v985 = vsel %vm860, %v855, %v982
        %v986 = vsel %vm860, 0, %v984
        %v987 = vmul.f32 %v985, %v985
        %v988 = vmul.f32 %v987, -0.001358992
        %v989 = vadd.f32 %v988, 0.041655596
        %v990 = vmul.f32 %v987, %v989
        %v991 = vadd.f32 %v990, -0.4999988
        %v992 = vmul.f32 %v987, %v991
        %v993 = vadd.f32 1.0, %v992
        %v994 = vmul.f32 %v985, %v985
        %v995 = vmul.f32 %v994, -0.00019511016
        %v996 = vadd.f32 %v995, 0.008332121
        %v997 = vmul.f32 %v994, %v996
        %v998 = vadd.f32 %v997, -0.16666654
        %v999 = vmul.f32 %v994, %v998
        %v1000 = vadd.f32 %v999, 1.0
        %v1001 = vmul.f32 %v1000, %v985
        %vm1002 = vweird.f32 %v855
        %v1003 = vand.u32 %v986, 3
        %vm1004 = vcmp.lt.s32.totalorder %v1003, 2
        %vm1005 = vcmp.eq.s32.totalorder %v1003, 0
        %v1006 = vxor.u32 %v1001, 2147483648
        %v1007 = vsel %vm1005, %v993, %v1006
        %vm1008 = vcmp.eq.s32.totalorder %v1003, 2
        %v1009 = vxor.u32 %v993, 2147483648
        %v1010 = vsel %vm1008, %v1009, %v1001
        %v1011 = vsel %vm1004, %v1007, %v1010
        %v1012 = vsel %vm1002, nan, %v1011
        %v1013 = vand.u32 2147483647, %v855
        %vm1014 = vcmp.le.f32.partialorder %v1013, 0.7853982
        %vm1015 = vcmp.lt.s32.totalorder %v855, 0
        %v1016 = vand.u32 %v855, 2139095040
        %v1017 = vshrl.u32 %v1016, 23
        %v1018 = vsub.s32 %v1017, 127
        %v1019 = vand.u32 2147483647, %v855
        %v1020 = vand.u32 %v1019, 8388607
        %v1021 = vor.u32 %v1020, 8388608
        %v1022 = vsub.s32 0, %v1021
        %v1023 = vadd.s32 %v1018, 1
        %vm1024 = vcmp.gt.s32.totalorder %v1023, 0
        %v1025 = vsel %vm1024, %v1023, 0
        %v1026 = vshrl.u32 %v1025, 5
        %v1027 = vand.u32 %v1025, 31
        %v1028 = vsub.s32 32, %v1027
        %v1029 = vshrl.u32 683565275, %v1028
        %v1030 = vshll.u32 683565275, %v1027
        %v1031 = vshrl.u32 2475754826, %v1028
        %v1032 = vor.u32 %v1030, %v1031
        %v1033 = vshll.u32 2475754826, %v1027
        %v1034 = vshrl.u32 2131351028, %v1028
        %v1035 = vor.u32 %v1033, %v1034
        %v1036 = vshll.u32 2131351028, %v1027
        %v1037 = vshrl.u32 2102212464, %v1028
        %v1038 = vor.u32 %v1036, %v1037
        %v1039 = vshll.u32 2102212464, %v1027
        %v1040 = vshrl.u32 920167782, %v1028
        %v1041 = vor.u32 %v1039, %v1040
        %v1042 = vshll.u32 920167782, %v1027
        %v1043 = vshrl.u32 1326507024, %v1028
        %v1044 = vor.u32 %v1042, %v1043
        %vm1045 = vcmp.lt.s32.totalorder %v1026, 1
        %vm1046 = vcmp.lt.s32.totalorder %v1026, 2
        %vm1047 = vcmp.lt.s32.totalorder %v1026, 3
        %vm1048 = vcmp.lt.s32.totalorder %v1026, 4
        %v1049 = vsel %vm1045, %v1029, %v1032
        %v1050 = vsel %vm1048, %v1038, 2102212464
        %v1051 = vsel %vm1047, %v1035, %v1050
        %v1052 = vsel %vm1046, %v1049, %v1051
        %v1053 = vsel %vm1045, %v1032, %v1035
        %v1054 = vsel %vm1048, %v1041, 920167782
        %v1055 = vsel %vm1047, %v1038, %v1054
        %v1056 = vsel %vm1046, %v1053, %v1055
        %v1057 = vsel %vm1045, %v1035, %v1038
        %v1058 = vsel %vm1048, %v1044, 1326507024
        %v1059 = vsel %vm1047, %v1041, %v1058
        %v1060 = vsel %vm1046, %v1057, %v1059
        %v1061 = vshll.u32 %v1021, 8
        %v1062 = vand.u32 %v1061, 65535
        %v1063 = vshrl.u32 %v1061, 16
        %v1064 = vand.u32 %v1060, 65535
        %v1065 = vshrl.u32 %v1060, 16
        %v1066 = vmul.u32 %v1062, %v1064
        %v1067 = vmul.u32 %v1062, %v1065
        %v1068 = vmul.u32 %v1063, %v1064
        %v1069 = vmul.u32 %v1063, %v1065
        %v1070 = vshll.u32 %v1067, 16
        %v1071 = vshrl.u32 %v1067, 16
        %v1072 = vshll.u32 %v1068, 16
        %v1073 = vshrl.u32 %v1068, 16
        %vm1074 = vc.u32 %v1066, %v1070
        %v1075 = vsel %vm1074, 1, 0
        %v1076 = vadd.s32 %v1066, %v1070
        %v1077 = vadd.s32 %v1069, %v1075
        %vm1078 = vc.u32 %v1076, %v1072
        %v1079 = vsel %vm1078, 1, 0
        %v1080 = vadd.s32 %v1076, %v1072
        %v1081 = vadd.s32 %v1077, %v1079
        %v1082 = vadd.s32 %v1081, %v1071
        %v1083 = vadd.s32 %v1082, %v1073
        %v1084 = vand.u32 %v1061, 65535
        %v1085 = vshrl.u32 %v1061, 16
        %v1086 = vand.u32 %v1056, 65535
        %v1087 = vshrl.u32 %v1056, 16
        %v1088 = vmul.u32 %v1084, %v1086
        %v1089 = vmul.u32 %v1084, %v1087
        %v1090 = vmul.u32 %v1085, %v1086
        %v1091 = vmul.u32 %v1085, %v1087
        %v1092 = vshll.u32 %v1089, 16
        %v1093 = vshrl.u32 %v1089, 16
        %v1094 = vshll.u32 %v1090, 16
        %v1095 = vshrl.u32 %v1090, 16
        %vm1096 = vc.u32 %v1088, %v1092
        %v1097 = vsel %vm1096, 1, 0
        %v1098 = vadd.s32 %v1088, %v1092
        %v1099 = vadd.s32 %v1091, %v1097
        %vm1100 = vc.u32 %v1098, %v1094
        %v1101 = vsel %vm1100, 1, 0
        %v1102 = vadd.s32 %v1098, %v1094
        %v1103 = vadd.s32 %v1099, %v1101
        %v1104 = vadd.s32 %v1103, %v1093
        %v1105 = vadd.s32 %v1104, %v1095
        %v1106 = vmul.u32 %v1061, %v1052
        %v1107 = vadd.s32 %v1083, %v1102
        %vm1108 = vc.u32 %v1083, %v1102
        %v1109 = vadd.s32 %v1105, 1
        %v1110 = vsel %vm1108, %v1109, %v1105
        %v1111 = vadd.s32 %v1106, %v1110
        %v1112 = vadd.s32 %v1111, 536870912
        %v1113 = vshrl.u32 %v1112, 30
        %v1114 = vshll.u32 %v1113, 30
        %v1115 = vsub.s32 %v1111, %v1114
        %vm1116 = vcmp.lt.s32.totalorder %v1115, 0
        %v1117 = vsub.s32 0, %v1115
        %v1118 = vsel %vm1116, %v1117, %v1115
        %v1119 = vclz %v1118
        %v1120 = vsub.s32 %v1119, 2
        %vm1121 = vcmp.gt.s32.totalorder 0, %v1120
        %v1122 = vsel %vm1121, 0, %v1120
        %v1123 = vsub.s32 32, %v1122
        %v1124 = vshll.u32 %v1115, %v1122
        %v1125 = vshrl.u32 %v1107, %v1123
        %v1126 = vor.u32 %v1124, %v1125
        %v1127 = vsub.s32 4294967266, %v1122
        %v1128 = vadd.s32 %v1127, 127
        %v1129 = vshll.u32 %v1128, 23
        %v1130 = vor.u32 4788187, %v1129
        %v1131 = vand.u32 2147483647, %v1130
        %v1133 = vcvt.s32.f32 %v1126
        %v1134 = vmul.f32 %v1133, %v1131
        %v1135 = vxor.u32 %v1134, 2147483648
        %v1136 = vsel %vm1015, %v1135, %v1134
        %v1137 = vsub.s32 4, %v1113
        %v1138 = vsel %vm1015, %v1137, %v1113
        %v1139 = vsel %vm1014, %v855, %v1136
        %v1140 = vsel %vm1014, 0, %v1138
        %v1141 = vmul.f32 %v1139, %v1139
        %v1142 = vmul.f32 %v1141, -0.001358992
        %v1143 = vadd.f32 %v1142, 0.041655596
        %v1144 = vmul.f32 %v1141, %v1143
        %v1145 = vadd.f32 %v1144, -0.4999988
        %v1146 = vmul.f32 %v1141, %v1145
        %v1147 = vadd.f32 1.0, %v1146
        %v1148 = vmul.f32 %v1139, %v1139
        %v1149 = vmul.f32 %v1148, -0.00019511016
        %v1150 = vadd.f32 %v1149, 0.008332121
        %v1151 = vmul.f32 %v1148, %v1150
        %v1152 = vadd.f32 %v1151, -0.16666654
        %v1153 = vmul.f32 %v1148, %v1152
        %v1154 = vadd.f32 %v1153, 1.0
        %v1155 = vmul.f32 %v1154, %v1139
        %vm1156 = vweird.f32 %v855
        %v1157 = vadd.s32 %v1140, 3
        %v1158 = vand.u32 %v1157, 3
        %vm1159 = vcmp.lt.s32.totalorder %v1158, 2
        %vm1160 = vcmp.eq.s32.totalorder %v1158, 0
        %v1161 = vxor.u32 %v1155, 2147483648
        %v1162 = vsel %vm1160, %v1147, %v1161
        %vm1163 = vcmp.eq.s32.totalorder %v1158, 2
        %v1164 = vxor.u32 %v1147, 2147483648
        %v1165 = vsel %vm1163, %v1164, %v1155
        %v1166 = vsel %vm1159, %v1162, %v1165
        %v1167 = vsel %vm1156, nan, %v1166
        %v1168 = vmul.f32 %v858, %v1012
        %v1169 = vmul.f32 %v858, %v1167
        %v1170 = vsub.f32 0.0, %v858
        %s1171 = sld [smem:[#allocation2]]
        %s1172 = sld [smem:[#allocation2 + $0x1]]
        %s1173 = sld [smem:[#allocation2 + $0x2]]
        %s1174 = sld [smem:[#allocation2 + $0x3]]
        %s1175 = sld [smem:[#allocation2 + $0x4]]
        %s1176 = sld [smem:[#allocation2 + $0x5]]
        %s1177 = sld [smem:[#allocation2 + $0x6]]
        %s1178 = sld [smem:[#allocation2 + $0x7]]
        %s1179 = sld [smem:[#allocation2 + $0x8]]
        %s1180 = sld [smem:[#allocation2 + $0x9]]
        %s1181 = sld [smem:[#allocation2 + $0xa]]
        %s1182 = sld [smem:[#allocation2 + $0xb]]
        %v1183 = vstv %s1171
        %v1184 = vmul.f32 %v1183, %v1168
        %v1185 = vstv %s1172
        %v1186 = vmul.f32 %v1185, %v1169
        %v1187 = vadd.f32 %v1184, %v1186
        %v1188 = vstv %s1173
        %v1189 = vmul.f32 %v1188, %v1170
        %v1190 = vstv %s1174
        %v1191 = vmul.f32 %v1190, %v1168
        %v1192 = vstv %s1175
        %v1193 = vmul.f32 %v1192, %v1169
        %v1194 = vadd.f32 %v1191, %v1193
        %v1195 = vstv %s1176
        %v1196 = vmul.f32 %v1195, %v1170
        %v1197 = vstv %s1177
        %v1198 = vmul.f32 %v1197, %v1168
        %v1199 = vstv %s1178
        %v1200 = vmul.f32 %v1199, %v1169
        %v1201 = vadd.f32 %v1198, %v1200
        %v1202 = vstv %s1179
        %v1203 = vmul.f32 %v1202, %v1170
        %v1204 = vld [vmem:[%s663] sm:$0xff]
        %v1205 = vld [vmem:[%s673] sm:$0xff]
        %v1206 = vsub.f32 64.0, %v1204
        %v1207 = vmul.f32 %v1206, 0.035452
        %v1208 = vsub.f32 %v1207, 1.134464
        %v1209 = vsub.f32 64.0, %v1205
        %v1210 = vmul.f32 %v1209, 0.1546875
        %v1211 = vadd.f32 %v1210, 0.1
        %v1212 = vand.u32 2147483647, %v1208
        %vm1213 = vcmp.le.f32.partialorder %v1212, 0.7853982
        %vm1214 = vcmp.lt.s32.totalorder %v1208, 0
        %v1215 = vand.u32 %v1208, 2139095040
        %v1216 = vshrl.u32 %v1215, 23
        %v1217 = vsub.s32 %v1216, 127
        %v1218 = vand.u32 2147483647, %v1208
        %v1219 = vand.u32 %v1218, 8388607
        %v1220 = vor.u32 %v1219, 8388608
        %v1221 = vsub.s32 0, %v1220
        %v1222 = vadd.s32 %v1217, 1
        %vm1223 = vcmp.gt.s32.totalorder %v1222, 0
        %v1224 = vsel %vm1223, %v1222, 0
        %v1225 = vshrl.u32 %v1224, 5
        %v1226 = vand.u32 %v1224, 31
        %v1227 = vsub.s32 32, %v1226
        %v1228 = vshrl.u32 683565275, %v1227
        %v1229 = vshll.u32 683565275, %v1226
        %v1230 = vshrl.u32 2475754826, %v1227
        %v1231 = vor.u32 %v1229, %v1230
        %v1232 = vshll.u32 2475754826, %v1226
        %v1233 = vshrl.u32 2131351028, %v1227
        %v1234 = vor.u32 %v1232, %v1233
        %v1235 = vshll.u32 2131351028, %v1226
        %v1236 = vshrl.u32 2102212464, %v1227
        %v1237 = vor.u32 %v1235, %v1236
        %v1238 = vshll.u32 2102212464, %v1226
        %v1239 = vshrl.u32 920167782, %v1227
        %v1240 = vor.u32 %v1238, %v1239
        %v1241 = vshll.u32 920167782, %v1226
        %v1242 = vshrl.u32 1326507024, %v1227
        %v1243 = vor.u32 %v1241, %v1242
        %vm1244 = vcmp.lt.s32.totalorder %v1225, 1
        %vm1245 = vcmp.lt.s32.totalorder %v1225, 2
        %vm1246 = vcmp.lt.s32.totalorder %v1225, 3
        %vm1247 = vcmp.lt.s32.totalorder %v1225, 4
        %v1248 = vsel %vm1244, %v1228, %v1231
        %v1249 = vsel %vm1247, %v1237, 2102212464
        %v1250 = vsel %vm1246, %v1234, %v1249
        %v1251 = vsel %vm1245, %v1248, %v1250
        %v1252 = vsel %vm1244, %v1231, %v1234
        %v1253 = vsel %vm1247, %v1240, 920167782
        %v1254 = vsel %vm1246, %v1237, %v1253
        %v1255 = vsel %vm1245, %v1252, %v1254
        %v1256 = vsel %vm1244, %v1234, %v1237
        %v1257 = vsel %vm1247, %v1243, 1326507024
        %v1258 = vsel %vm1246, %v1240, %v1257
        %v1259 = vsel %vm1245, %v1256, %v1258
        %v1260 = vshll.u32 %v1220, 8
        %v1261 = vand.u32 %v1260, 65535
        %v1262 = vshrl.u32 %v1260, 16
        %v1263 = vand.u32 %v1259, 65535
        %v1264 = vshrl.u32 %v1259, 16
        %v1265 = vmul.u32 %v1261, %v1263
        %v1266 = vmul.u32 %v1261, %v1264
        %v1267 = vmul.u32 %v1262, %v1263
        %v1268 = vmul.u32 %v1262, %v1264
        %v1269 = vshll.u32 %v1266, 16
        %v1270 = vshrl.u32 %v1266, 16
        %v1271 = vshll.u32 %v1267, 16
        %v1272 = vshrl.u32 %v1267, 16
        %vm1273 = vc.u32 %v1265, %v1269
        %v1274 = vsel %vm1273, 1, 0
        %v1275 = vadd.s32 %v1265, %v1269
        %v1276 = vadd.s32 %v1268, %v1274
        %vm1277 = vc.u32 %v1275, %v1271
        %v1278 = vsel %vm1277, 1, 0
        %v1279 = vadd.s32 %v1275, %v1271
        %v1280 = vadd.s32 %v1276, %v1278
        %v1281 = vadd.s32 %v1280, %v1270
        %v1282 = vadd.s32 %v1281, %v1272
        %v1283 = vand.u32 %v1260, 65535
        %v1284 = vshrl.u32 %v1260, 16
        %v1285 = vand.u32 %v1255, 65535
        %v1286 = vshrl.u32 %v1255, 16
        %v1287 = vmul.u32 %v1283, %v1285
        %v1288 = vmul.u32 %v1283, %v1286
        %v1289 = vmul.u32 %v1284, %v1285
        %v1290 = vmul.u32 %v1284, %v1286
        %v1291 = vshll.u32 %v1288, 16
        %v1292 = vshrl.u32 %v1288, 16
        %v1293 = vshll.u32 %v1289, 16
        %v1294 = vshrl.u32 %v1289, 16
        %vm1295 = vc.u32 %v1287, %v1291
        %v1296 = vsel %vm1295, 1, 0
        %v1297 = vadd.s32 %v1287, %v1291
        %v1298 = vadd.s32 %v1290, %v1296
        %vm1299 = vc.u32 %v1297, %v1293
        %v1300 = vsel %vm1299, 1, 0
        %v1301 = vadd.s32 %v1297, %v1293
        %v1302 = vadd.s32 %v1298, %v1300
        %v1303 = vadd.s32 %v1302, %v1292
        %v1304 = vadd.s32 %v1303, %v1294
        %v1305 = vmul.u32 %v1260, %v1251
        %v1306 = vadd.s32 %v1282, %v1301
        %vm1307 = vc.u32 %v1282, %v1301
        %v1308 = vadd.s32 %v1304, 1
        %v1309 = vsel %vm1307, %v1308, %v1304
        %v1310 = vadd.s32 %v1305, %v1309
        %v1311 = vadd.s32 %v1310, 536870912
        %v1312 = vshrl.u32 %v1311, 30
        %v1313 = vshll.u32 %v1312, 30
        %v1314 = vsub.s32 %v1310, %v1313
        %vm1315 = vcmp.lt.s32.totalorder %v1314, 0
        %v1316 = vsub.s32 0, %v1314
        %v1317 = vsel %vm1315, %v1316, %v1314
        %v1318 = vclz %v1317
        %v1319 = vsub.s32 %v1318, 2
        %vm1320 = vcmp.gt.s32.totalorder 0, %v1319
        %v1321 = vsel %vm1320, 0, %v1319
        %v1322 = vsub.s32 32, %v1321
        %v1323 = vshll.u32 %v1314, %v1321
        %v1324 = vshrl.u32 %v1306, %v1322
        %v1325 = vor.u32 %v1323, %v1324
        %v1326 = vsub.s32 4294967266, %v1321
        %v1327 = vadd.s32 %v1326, 127
        %v1328 = vshll.u32 %v1327, 23
        %v1329 = vor.u32 4788187, %v1328
        %v1330 = vand.u32 2147483647, %v1329
        %v1332 = vcvt.s32.f32 %v1325
        %v1333 = vmul.f32 %v1332, %v1330
        %v1334 = vxor.u32 %v1333, 2147483648
        %v1335 = vsel %vm1214, %v1334, %v1333
        %v1336 = vsub.s32 4, %v1312
        %v1337 = vsel %vm1214, %v1336, %v1312
        %v1338 = vsel %vm1213, %v1208, %v1335
        %v1339 = vsel %vm1213, 0, %v1337
        %v1340 = vmul.f32 %v1338, %v1338
        %v1341 = vmul.f32 %v1340, -0.001358992
        %v1342 = vadd.f32 %v1341, 0.041655596
        %v1343 = vmul.f32 %v1340, %v1342
        %v1344 = vadd.f32 %v1343, -0.4999988
        %v1345 = vmul.f32 %v1340, %v1344
        %v1346 = vadd.f32 1.0, %v1345
        %v1347 = vmul.f32 %v1338, %v1338
        %v1348 = vmul.f32 %v1347, -0.00019511016
        %v1349 = vadd.f32 %v1348, 0.008332121
        %v1350 = vmul.f32 %v1347, %v1349
        %v1351 = vadd.f32 %v1350, -0.16666654
        %v1352 = vmul.f32 %v1347, %v1351
        %v1353 = vadd.f32 %v1352, 1.0
        %v1354 = vmul.f32 %v1353, %v1338
        %vm1355 = vweird.f32 %v1208
        %v1356 = vand.u32 %v1339, 3
        %vm1357 = vcmp.lt.s32.totalorder %v1356, 2
        %vm1358 = vcmp.eq.s32.totalorder %v1356, 0
        %v1359 = vxor.u32 %v1354, 2147483648
        %v1360 = vsel %vm1358, %v1346, %v1359
        %vm1361 = vcmp.eq.s32.totalorder %v1356, 2
        %v1362 = vxor.u32 %v1346, 2147483648
        %v1363 = vsel %vm1361, %v1362, %v1354
        %v1364 = vsel %vm1357, %v1360, %v1363
        %v1365 = vsel %vm1355, nan, %v1364
        %v1366 = vand.u32 2147483647, %v1208
        %vm1367 = vcmp.le.f32.partialorder %v1366, 0.7853982
        %vm1368 = vcmp.lt.s32.totalorder %v1208, 0
        %v1369 = vand.u32 %v1208, 2139095040
        %v1370 = vshrl.u32 %v1369, 23
        %v1371 = vsub.s32 %v1370, 127
        %v1372 = vand.u32 2147483647, %v1208
        %v1373 = vand.u32 %v1372, 8388607
        %v1374 = vor.u32 %v1373, 8388608
        %v1375 = vsub.s32 0, %v1374
        %v1376 = vadd.s32 %v1371, 1
        %vm1377 = vcmp.gt.s32.totalorder %v1376, 0
        %v1378 = vsel %vm1377, %v1376, 0
        %v1379 = vshrl.u32 %v1378, 5
        %v1380 = vand.u32 %v1378, 31
        %v1381 = vsub.s32 32, %v1380
        %v1382 = vshrl.u32 683565275, %v1381
        %v1383 = vshll.u32 683565275, %v1380
        %v1384 = vshrl.u32 2475754826, %v1381
        %v1385 = vor.u32 %v1383, %v1384
        %v1386 = vshll.u32 2475754826, %v1380
        %v1387 = vshrl.u32 2131351028, %v1381
        %v1388 = vor.u32 %v1386, %v1387
        %v1389 = vshll.u32 2131351028, %v1380
        %v1390 = vshrl.u32 2102212464, %v1381
        %v1391 = vor.u32 %v1389, %v1390
        %v1392 = vshll.u32 2102212464, %v1380
        %v1393 = vshrl.u32 920167782, %v1381
        %v1394 = vor.u32 %v1392, %v1393
        %v1395 = vshll.u32 920167782, %v1380
        %v1396 = vshrl.u32 1326507024, %v1381
        %v1397 = vor.u32 %v1395, %v1396
        %vm1398 = vcmp.lt.s32.totalorder %v1379, 1
        %vm1399 = vcmp.lt.s32.totalorder %v1379, 2
        %vm1400 = vcmp.lt.s32.totalorder %v1379, 3
        %vm1401 = vcmp.lt.s32.totalorder %v1379, 4
        %v1402 = vsel %vm1398, %v1382, %v1385
        %v1403 = vsel %vm1401, %v1391, 2102212464
        %v1404 = vsel %vm1400, %v1388, %v1403
        %v1405 = vsel %vm1399, %v1402, %v1404
        %v1406 = vsel %vm1398, %v1385, %v1388
        %v1407 = vsel %vm1401, %v1394, 920167782
        %v1408 = vsel %vm1400, %v1391, %v1407
        %v1409 = vsel %vm1399, %v1406, %v1408
        %v1410 = vsel %vm1398, %v1388, %v1391
        %v1411 = vsel %vm1401, %v1397, 1326507024
        %v1412 = vsel %vm1400, %v1394, %v1411
        %v1413 = vsel %vm1399, %v1410, %v1412
        %v1414 = vshll.u32 %v1374, 8
        %v1415 = vand.u32 %v1414, 65535
        %v1416 = vshrl.u32 %v1414, 16
        %v1417 = vand.u32 %v1413, 65535
        %v1418 = vshrl.u32 %v1413, 16
        %v1419 = vmul.u32 %v1415, %v1417
        %v1420 = vmul.u32 %v1415, %v1418
        %v1421 = vmul.u32 %v1416, %v1417
        %v1422 = vmul.u32 %v1416, %v1418
        %v1423 = vshll.u32 %v1420, 16
        %v1424 = vshrl.u32 %v1420, 16
        %v1425 = vshll.u32 %v1421, 16
        %v1426 = vshrl.u32 %v1421, 16
        %vm1427 = vc.u32 %v1419, %v1423
        %v1428 = vsel %vm1427, 1, 0
        %v1429 = vadd.s32 %v1419, %v1423
        %v1430 = vadd.s32 %v1422, %v1428
        %vm1431 = vc.u32 %v1429, %v1425
        %v1432 = vsel %vm1431, 1, 0
        %v1433 = vadd.s32 %v1429, %v1425
        %v1434 = vadd.s32 %v1430, %v1432
        %v1435 = vadd.s32 %v1434, %v1424
        %v1436 = vadd.s32 %v1435, %v1426
        %v1437 = vand.u32 %v1414, 65535
        %v1438 = vshrl.u32 %v1414, 16
        %v1439 = vand.u32 %v1409, 65535
        %v1440 = vshrl.u32 %v1409, 16
        %v1441 = vmul.u32 %v1437, %v1439
        %v1442 = vmul.u32 %v1437, %v1440
        %v1443 = vmul.u32 %v1438, %v1439
        %v1444 = vmul.u32 %v1438, %v1440
        %v1445 = vshll.u32 %v1442, 16
        %v1446 = vshrl.u32 %v1442, 16
        %v1447 = vshll.u32 %v1443, 16
        %v1448 = vshrl.u32 %v1443, 16
        %vm1449 = vc.u32 %v1441, %v1445
        %v1450 = vsel %vm1449, 1, 0
        %v1451 = vadd.s32 %v1441, %v1445
        %v1452 = vadd.s32 %v1444, %v1450
        %vm1453 = vc.u32 %v1451, %v1447
        %v1454 = vsel %vm1453, 1, 0
        %v1455 = vadd.s32 %v1451, %v1447
        %v1456 = vadd.s32 %v1452, %v1454
        %v1457 = vadd.s32 %v1456, %v1446
        %v1458 = vadd.s32 %v1457, %v1448
        %v1459 = vmul.u32 %v1414, %v1405
        %v1460 = vadd.s32 %v1436, %v1455
        %vm1461 = vc.u32 %v1436, %v1455
        %v1462 = vadd.s32 %v1458, 1
        %v1463 = vsel %vm1461, %v1462, %v1458
        %v1464 = vadd.s32 %v1459, %v1463
        %v1465 = vadd.s32 %v1464, 536870912
        %v1466 = vshrl.u32 %v1465, 30
        %v1467 = vshll.u32 %v1466, 30
        %v1468 = vsub.s32 %v1464, %v1467
        %vm1469 = vcmp.lt.s32.totalorder %v1468, 0
        %v1470 = vsub.s32 0, %v1468
        %v1471 = vsel %vm1469, %v1470, %v1468
        %v1472 = vclz %v1471
        %v1473 = vsub.s32 %v1472, 2
        %vm1474 = vcmp.gt.s32.totalorder 0, %v1473
        %v1475 = vsel %vm1474, 0, %v1473
        %v1476 = vsub.s32 32, %v1475
        %v1477 = vshll.u32 %v1468, %v1475
        %v1478 = vshrl.u32 %v1460, %v1476
        %v1479 = vor.u32 %v1477, %v1478
        %v1480 = vsub.s32 4294967266, %v1475
        %v1481 = vadd.s32 %v1480, 127
        %v1482 = vshll.u32 %v1481, 23
        %v1483 = vor.u32 4788187, %v1482
        %v1484 = vand.u32 2147483647, %v1483
        %v1486 = vcvt.s32.f32 %v1479
        %v1487 = vmul.f32 %v1486, %v1484
        %v1488 = vxor.u32 %v1487, 2147483648
        %v1489 = vsel %vm1368, %v1488, %v1487
        %v1490 = vsub.s32 4, %v1466
        %v1491 = vsel %vm1368, %v1490, %v1466
        %v1492 = vsel %vm1367, %v1208, %v1489
        %v1493 = vsel %vm1367, 0, %v1491
        %v1494 = vmul.f32 %v1492, %v1492
        %v1495 = vmul.f32 %v1494, -0.001358992
        %v1496 = vadd.f32 %v1495, 0.041655596
        %v1497 = vmul.f32 %v1494, %v1496
        %v1498 = vadd.f32 %v1497, -0.4999988
        %v1499 = vmul.f32 %v1494, %v1498
        %v1500 = vadd.f32 1.0, %v1499
        %v1501 = vmul.f32 %v1492, %v1492
        %v1502 = vmul.f32 %v1501, -0.00019511016
        %v1503 = vadd.f32 %v1502, 0.008332121
        %v1504 = vmul.f32 %v1501, %v1503
        %v1505 = vadd.f32 %v1504, -0.16666654
        %v1506 = vmul.f32 %v1501, %v1505
        %v1507 = vadd.f32 %v1506, 1.0
        %v1508 = vmul.f32 %v1507, %v1492
        %vm1509 = vweird.f32 %v1208
        %v1510 = vadd.s32 %v1493, 3
        %v1511 = vand.u32 %v1510, 3
        %vm1512 = vcmp.lt.s32.totalorder %v1511, 2
        %vm1513 = vcmp.eq.s32.totalorder %v1511, 0
        %v1514 = vxor.u32 %v1508, 2147483648
        %v1515 = vsel %vm1513, %v1500, %v1514
        %vm1516 = vcmp.eq.s32.totalorder %v1511, 2
        %v1517 = vxor.u32 %v1500, 2147483648
        %v1518 = vsel %vm1516, %v1517, %v1508
        %v1519 = vsel %vm1512, %v1515, %v1518
        %v1520 = vsel %vm1509, nan, %v1519
        %v1521 = vmul.f32 %v1211, %v1211
        %v1522 = vld [vmem:[%s683] sm:$0xff]
        %v1523 = vld [vmem:[%s693] sm:$0xff]
        %v1524 = vsub.f32 64.0, %v1522
        %v1525 = vmul.f32 %v1524, 0.035452
        %v1526 = vsub.f32 %v1525, 1.134464
        %v1527 = vsub.f32 64.0, %v1523
        %v1528 = vmul.f32 %v1527, 0.1546875
        %v1529 = vadd.f32 %v1528, 0.1
        %v1530 = vand.u32 2147483647, %v1526
        %vm1531 = vcmp.le.f32.partialorder %v1530, 0.7853982
        %vm1532 = vcmp.lt.s32.totalorder %v1526, 0
        %v1533 = vand.u32 %v1526, 2139095040
        %v1534 = vshrl.u32 %v1533, 23
        %v1535 = vsub.s32 %v1534, 127
        %v1536 = vand.u32 2147483647, %v1526
        %v1537 = vand.u32 %v1536, 8388607
        %v1538 = vor.u32 %v1537, 8388608
        %v1539 = vsub.s32 0, %v1538
        %v1540 = vadd.s32 %v1535, 1
        %vm1541 = vcmp.gt.s32.totalorder %v1540, 0
        %v1542 = vsel %vm1541, %v1540, 0
        %v1543 = vshrl.u32 %v1542, 5
        %v1544 = vand.u32 %v1542, 31
        %v1545 = vsub.s32 32, %v1544
        %v1546 = vshrl.u32 683565275, %v1545
        %v1547 = vshll.u32 683565275, %v1544
        %v1548 = vshrl.u32 2475754826, %v1545
        %v1549 = vor.u32 %v1547, %v1548
        %v1550 = vshll.u32 2475754826, %v1544
        %v1551 = vshrl.u32 2131351028, %v1545
        %v1552 = vor.u32 %v1550, %v1551
        %v1553 = vshll.u32 2131351028, %v1544
        %v1554 = vshrl.u32 2102212464, %v1545
        %v1555 = vor.u32 %v1553, %v1554
        %v1556 = vshll.u32 2102212464, %v1544
        %v1557 = vshrl.u32 920167782, %v1545
        %v1558 = vor.u32 %v1556, %v1557
        %v1559 = vshll.u32 920167782, %v1544
        %v1560 = vshrl.u32 1326507024, %v1545
        %v1561 = vor.u32 %v1559, %v1560
        %vm1562 = vcmp.lt.s32.totalorder %v1543, 1
        %vm1563 = vcmp.lt.s32.totalorder %v1543, 2
        %vm1564 = vcmp.lt.s32.totalorder %v1543, 3
        %vm1565 = vcmp.lt.s32.totalorder %v1543, 4
        %v1566 = vsel %vm1562, %v1546, %v1549
        %v1567 = vsel %vm1565, %v1555, 2102212464
        %v1568 = vsel %vm1564, %v1552, %v1567
        %v1569 = vsel %vm1563, %v1566, %v1568
        %v1570 = vsel %vm1562, %v1549, %v1552
        %v1571 = vsel %vm1565, %v1558, 920167782
        %v1572 = vsel %vm1564, %v1555, %v1571
        %v1573 = vsel %vm1563, %v1570, %v1572
        %v1574 = vsel %vm1562, %v1552, %v1555
        %v1575 = vsel %vm1565, %v1561, 1326507024
        %v1576 = vsel %vm1564, %v1558, %v1575
        %v1577 = vsel %vm1563, %v1574, %v1576
        %v1578 = vshll.u32 %v1538, 8
        %v1579 = vand.u32 %v1578, 65535
        %v1580 = vshrl.u32 %v1578, 16
        %v1581 = vand.u32 %v1577, 65535
        %v1582 = vshrl.u32 %v1577, 16
        %v1583 = vmul.u32 %v1579, %v1581
        %v1584 = vmul.u32 %v1579, %v1582
        %v1585 = vmul.u32 %v1580, %v1581
        %v1586 = vmul.u32 %v1580, %v1582
        %v1587 = vshll.u32 %v1584, 16
        %v1588 = vshrl.u32 %v1584, 16
        %v1589 = vshll.u32 %v1585, 16
        %v1590 = vshrl.u32 %v1585, 16
        %vm1591 = vc.u32 %v1583, %v1587
        %v1592 = vsel %vm1591, 1, 0
        %v1593 = vadd.s32 %v1583, %v1587
        %v1594 = vadd.s32 %v1586, %v1592
        %vm1595 = vc.u32 %v1593, %v1589
        %v1596 = vsel %vm1595, 1, 0
        %v1597 = vadd.s32 %v1593, %v1589
        %v1598 = vadd.s32 %v1594, %v1596
        %v1599 = vadd.s32 %v1598, %v1588
        %v1600 = vadd.s32 %v1599, %v1590
        %v1601 = vand.u32 %v1578, 65535
        %v1602 = vshrl.u32 %v1578, 16
        %v1603 = vand.u32 %v1573, 65535
        %v1604 = vshrl.u32 %v1573, 16
        %v1605 = vmul.u32 %v1601, %v1603
        %v1606 = vmul.u32 %v1601, %v1604
        %v1607 = vmul.u32 %v1602, %v1603
        %v1608 = vmul.u32 %v1602, %v1604
        %v1609 = vshll.u32 %v1606, 16
        %v1610 = vshrl.u32 %v1606, 16
        %v1611 = vshll.u32 %v1607, 16
        %v1612 = vshrl.u32 %v1607, 16
        %vm1613 = vc.u32 %v1605, %v1609
        %v1614 = vsel %vm1613, 1, 0
        %v1615 = vadd.s32 %v1605, %v1609
        %v1616 = vadd.s32 %v1608, %v1614
        %vm1617 = vc.u32 %v1615, %v1611
        %v1618 = vsel %vm1617, 1, 0
        %v1619 = vadd.s32 %v1615, %v1611
        %v1620 = vadd.s32 %v1616, %v1618
        %v1621 = vadd.s32 %v1620, %v1610
        %v1622 = vadd.s32 %v1621, %v1612
        %v1623 = vmul.u32 %v1578, %v1569
        %v1624 = vadd.s32 %v1600, %v1619
        %vm1625 = vc.u32 %v1600, %v1619
        %v1626 = vadd.s32 %v1622, 1
        %v1627 = vsel %vm1625, %v1626, %v1622
        %v1628 = vadd.s32 %v1623, %v1627
        %v1629 = vadd.s32 %v1628, 536870912
        %v1630 = vshrl.u32 %v1629, 30
        %v1631 = vshll.u32 %v1630, 30
        %v1632 = vsub.s32 %v1628, %v1631
        %vm1633 = vcmp.lt.s32.totalorder %v1632, 0
        %v1634 = vsub.s32 0, %v1632
        %v1635 = vsel %vm1633, %v1634, %v1632
        %v1636 = vclz %v1635
        %v1637 = vsub.s32 %v1636, 2
        %vm1638 = vcmp.gt.s32.totalorder 0, %v1637
        %v1639 = vsel %vm1638, 0, %v1637
        %v1640 = vsub.s32 32, %v1639
        %v1641 = vshll.u32 %v1632, %v1639
        %v1642 = vshrl.u32 %v1624, %v1640
        %v1643 = vor.u32 %v1641, %v1642
        %v1644 = vsub.s32 4294967266, %v1639
        %v1645 = vadd.s32 %v1644, 127
        %v1646 = vshll.u32 %v1645, 23
        %v1647 = vor.u32 4788187, %v1646
        %v1648 = vand.u32 2147483647, %v1647
        %v1650 = vcvt.s32.f32 %v1643
        %v1651 = vmul.f32 %v1650, %v1648
        %v1652 = vxor.u32 %v1651, 2147483648
        %v1653 = vsel %vm1532, %v1652, %v1651
        %v1654 = vsub.s32 4, %v1630
        %v1655 = vsel %vm1532, %v1654, %v1630
        %v1656 = vsel %vm1531, %v1526, %v1653
        %v1657 = vsel %vm1531, 0, %v1655
        %v1658 = vmul.f32 %v1656, %v1656
        %v1659 = vmul.f32 %v1658, -0.001358992
        %v1660 = vadd.f32 %v1659, 0.041655596
        %v1661 = vmul.f32 %v1658, %v1660
        %v1662 = vadd.f32 %v1661, -0.4999988
        %v1663 = vmul.f32 %v1658, %v1662
        %v1664 = vadd.f32 1.0, %v1663
        %v1665 = vmul.f32 %v1656, %v1656
        %v1666 = vmul.f32 %v1665, -0.00019511016
        %v1667 = vadd.f32 %v1666, 0.008332121
        %v1668 = vmul.f32 %v1665, %v1667
        %v1669 = vadd.f32 %v1668, -0.16666654
        %v1670 = vmul.f32 %v1665, %v1669
        %v1671 = vadd.f32 %v1670, 1.0
        %v1672 = vmul.f32 %v1671, %v1656
        %vm1673 = vweird.f32 %v1526
        %v1674 = vand.u32 %v1657, 3
        %vm1675 = vcmp.lt.s32.totalorder %v1674, 2
        %vm1676 = vcmp.eq.s32.totalorder %v1674, 0
        %v1677 = vxor.u32 %v1672, 2147483648
        %v1678 = vsel %vm1676, %v1664, %v1677
        %vm1679 = vcmp.eq.s32.totalorder %v1674, 2
        %v1680 = vxor.u32 %v1664, 2147483648
        %v1681 = vsel %vm1679, %v1680, %v1672
        %v1682 = vsel %vm1675, %v1678, %v1681
        %v1683 = vsel %vm1673, nan, %v1682
        %v1684 = vand.u32 2147483647, %v1526
        %vm1685 = vcmp.le.f32.partialorder %v1684, 0.7853982
        %vm1686 = vcmp.lt.s32.totalorder %v1526, 0
        %v1687 = vand.u32 %v1526, 2139095040
        %v1688 = vshrl.u32 %v1687, 23
        %v1689 = vsub.s32 %v1688, 127
        %v1690 = vand.u32 2147483647, %v1526
        %v1691 = vand.u32 %v1690, 8388607
        %v1692 = vor.u32 %v1691, 8388608
        %v1693 = vsub.s32 0, %v1692
        %v1694 = vadd.s32 %v1689, 1
        %vm1695 = vcmp.gt.s32.totalorder %v1694, 0
        %v1696 = vsel %vm1695, %v1694, 0
        %v1697 = vshrl.u32 %v1696, 5
        %v1698 = vand.u32 %v1696, 31
        %v1699 = vsub.s32 32, %v1698
        %v1700 = vshrl.u32 683565275, %v1699
        %v1701 = vshll.u32 683565275, %v1698
        %v1702 = vshrl.u32 2475754826, %v1699
        %v1703 = vor.u32 %v1701, %v1702
        %v1704 = vshll.u32 2475754826, %v1698
        %v1705 = vshrl.u32 2131351028, %v1699
        %v1706 = vor.u32 %v1704, %v1705
        %v1707 = vshll.u32 2131351028, %v1698
        %v1708 = vshrl.u32 2102212464, %v1699
        %v1709 = vor.u32 %v1707, %v1708
        %v1710 = vshll.u32 2102212464, %v1698
        %v1711 = vshrl.u32 920167782, %v1699
        %v1712 = vor.u32 %v1710, %v1711
        %v1713 = vshll.u32 920167782, %v1698
        %v1714 = vshrl.u32 1326507024, %v1699
        %v1715 = vor.u32 %v1713, %v1714
        %vm1716 = vcmp.lt.s32.totalorder %v1697, 1
        %vm1717 = vcmp.lt.s32.totalorder %v1697, 2
        %vm1718 = vcmp.lt.s32.totalorder %v1697, 3
        %vm1719 = vcmp.lt.s32.totalorder %v1697, 4
        %v1720 = vsel %vm1716, %v1700, %v1703
        %v1721 = vsel %vm1719, %v1709, 2102212464
        %v1722 = vsel %vm1718, %v1706, %v1721
        %v1723 = vsel %vm1717, %v1720, %v1722
        %v1724 = vsel %vm1716, %v1703, %v1706
        %v1725 = vsel %vm1719, %v1712, 920167782
        %v1726 = vsel %vm1718, %v1709, %v1725
        %v1727 = vsel %vm1717, %v1724, %v1726
        %v1728 = vsel %vm1716, %v1706, %v1709
        %v1729 = vsel %vm1719, %v1715, 1326507024
        %v1730 = vsel %vm1718, %v1712, %v1729
        %v1731 = vsel %vm1717, %v1728, %v1730
        %v1732 = vshll.u32 %v1692, 8
        %v1733 = vand.u32 %v1732, 65535
        %v1734 = vshrl.u32 %v1732, 16
        %v1735 = vand.u32 %v1731, 65535
        %v1736 = vshrl.u32 %v1731, 16
        %v1737 = vmul.u32 %v1733, %v1735
        %v1738 = vmul.u32 %v1733, %v1736
        %v1739 = vmul.u32 %v1734, %v1735
        %v1740 = vmul.u32 %v1734, %v1736
        %v1741 = vshll.u32 %v1738, 16
        %v1742 = vshrl.u32 %v1738, 16
        %v1743 = vshll.u32 %v1739, 16
        %v1744 = vshrl.u32 %v1739, 16
        %vm1745 = vc.u32 %v1737, %v1741
        %v1746 = vsel %vm1745, 1, 0
        %v1747 = vadd.s32 %v1737, %v1741
        %v1748 = vadd.s32 %v1740, %v1746
        %vm1749 = vc.u32 %v1747, %v1743
        %v1750 = vsel %vm1749, 1, 0
        %v1751 = vadd.s32 %v1747, %v1743
        %v1752 = vadd.s32 %v1748, %v1750
        %v1753 = vadd.s32 %v1752, %v1742
        %v1754 = vadd.s32 %v1753, %v1744
        %v1755 = vand.u32 %v1732, 65535
        %v1756 = vshrl.u32 %v1732, 16
        %v1757 = vand.u32 %v1727, 65535
        %v1758 = vshrl.u32 %v1727, 16
        %v1759 = vmul.u32 %v1755, %v1757
        %v1760 = vmul.u32 %v1755, %v1758
        %v1761 = vmul.u32 %v1756, %v1757
        %v1762 = vmul.u32 %v1756, %v1758
        %v1763 = vshll.u32 %v1760, 16
        %v1764 = vshrl.u32 %v1760, 16
        %v1765 = vshll.u32 %v1761, 16
        %v1766 = vshrl.u32 %v1761, 16
        %vm1767 = vc.u32 %v1759, %v1763
        %v1768 = vsel %vm1767, 1, 0
        %v1769 = vadd.s32 %v1759, %v1763
        %v1770 = vadd.s32 %v1762, %v1768
        %vm1771 = vc.u32 %v1769, %v1765
        %v1772 = vsel %vm1771, 1, 0
        %v1773 = vadd.s32 %v1769, %v1765
        %v1774 = vadd.s32 %v1770, %v1772
        %v1775 = vadd.s32 %v1774, %v1764
        %v1776 = vadd.s32 %v1775, %v1766
        %v1777 = vmul.u32 %v1732, %v1723
        %v1778 = vadd.s32 %v1754, %v1773
        %vm1779 = vc.u32 %v1754, %v1773
        %v1780 = vadd.s32 %v1776, 1
        %v1781 = vsel %vm1779, %v1780, %v1776
        %v1782 = vadd.s32 %v1777, %v1781
        %v1783 = vadd.s32 %v1782, 536870912
        %v1784 = vshrl.u32 %v1783, 30
        %v1785 = vshll.u32 %v1784, 30
        %v1786 = vsub.s32 %v1782, %v1785
        %vm1787 = vcmp.lt.s32.totalorder %v1786, 0
        %v1788 = vsub.s32 0, %v1786
        %v1789 = vsel %vm1787, %v1788, %v1786
        %v1790 = vclz %v1789
        %v1791 = vsub.s32 %v1790, 2
        %vm1792 = vcmp.gt.s32.totalorder 0, %v1791
        %v1793 = vsel %vm1792, 0, %v1791
        %v1794 = vsub.s32 32, %v1793
        %v1795 = vshll.u32 %v1786, %v1793
        %v1796 = vshrl.u32 %v1778, %v1794
        %v1797 = vor.u32 %v1795, %v1796
        %v1798 = vsub.s32 4294967266, %v1793
        %v1799 = vadd.s32 %v1798, 127
        %v1800 = vshll.u32 %v1799, 23
        %v1801 = vor.u32 4788187, %v1800
        %v1802 = vand.u32 2147483647, %v1801
        %v1804 = vcvt.s32.f32 %v1797
        %v1805 = vmul.f32 %v1804, %v1802
        %v1806 = vxor.u32 %v1805, 2147483648
        %v1807 = vsel %vm1686, %v1806, %v1805
        %v1808 = vsub.s32 4, %v1784
        %v1809 = vsel %vm1686, %v1808, %v1784
        %v1810 = vsel %vm1685, %v1526, %v1807
        %v1811 = vsel %vm1685, 0, %v1809
        %v1812 = vmul.f32 %v1810, %v1810
        %v1813 = vmul.f32 %v1812, -0.001358992
        %v1814 = vadd.f32 %v1813, 0.041655596
        %v1815 = vmul.f32 %v1812, %v1814
        %v1816 = vadd.f32 %v1815, -0.4999988
        %v1817 = vmul.f32 %v1812, %v1816
        %v1818 = vadd.f32 1.0, %v1817
        %v1819 = vmul.f32 %v1810, %v1810
        %v1820 = vmul.f32 %v1819, -0.00019511016
        %v1821 = vadd.f32 %v1820, 0.008332121
        %v1822 = vmul.f32 %v1819, %v1821
        %v1823 = vadd.f32 %v1822, -0.16666654
        %v1824 = vmul.f32 %v1819, %v1823
        %v1825 = vadd.f32 %v1824, 1.0
        %v1826 = vmul.f32 %v1825, %v1810
        %vm1827 = vweird.f32 %v1526
        %v1828 = vadd.s32 %v1811, 3
        %v1829 = vand.u32 %v1828, 3
        %vm1830 = vcmp.lt.s32.totalorder %v1829, 2
        %vm1831 = vcmp.eq.s32.totalorder %v1829, 0
        %v1832 = vxor.u32 %v1826, 2147483648
        %v1833 = vsel %vm1831, %v1818, %v1832
        %vm1834 = vcmp.eq.s32.totalorder %v1829, 2
        %v1835 = vxor.u32 %v1818, 2147483648
        %v1836 = vsel %vm1834, %v1835, %v1826
        %v1837 = vsel %vm1830, %v1833, %v1836
        %v1838 = vsel %vm1827, nan, %v1837
        %v1839 = vmul.f32 %v1529, %v1529
        %v1840 = vmul.f32 %v1187, 0.9848077
        %v1841 = vmul.f32 %v1189, -0.17364818
        %v1842 = vadd.f32 %v1840, %v1841
        %v1843 = vstv %s1180
        %v1844 = vadd.f32 %v1842, %v1843
        %v1845 = vmul.f32 %v1194, 0.9848077
        %v1846 = vmul.f32 %v1196, -0.17364818
        %v1847 = vadd.f32 %v1845, %v1846
        %v1848 = vstv %s1181
        %v1849 = vadd.f32 %v1847, %v1848
        %v1850 = vmul.f32 %v1201, 0.9848077
        %v1851 = vmul.f32 %v1203, -0.17364818
        %v1852 = vadd.f32 %v1850, %v1851
        %v1853 = vstv %s1182
        %v1854 = vadd.f32 %v1852, %v1853
        %v1855 = vmul.f32 %v1844, %v1844
        %v1856 = vmul.f32 %v1849, %v1849
        %v1857 = vadd.f32 %v1855, %v1856
        %v1858 = vmul.f32 %v1854, %v1854
        %v1859 = vadd.f32 %v1857, %v1858
        %v1860 = vadd.f32 %v1857, 1e-20
        %v1861 = vrcp.pop %v1860
        %v1862 = vmul.f32 %v1859, %v1861
        %v1863 = vrsqrt.pop %v1862
        %v1864 = vmul.f32 %v1863, %v1862
        %v1865 = vmul.f32 %v1864, %v1863
        %v1866 = vmul.f32 0.5, %v1865
        %v1867 = vsub.f32 1.5, %v1866
        %v1868 = vmul.f32 %v1863, %v1867
        %v1869 = vmul.f32 %v1862, %v1868
        %vm1870 = vcmp.eq.f32.partialorder %v1862, inf
        %v1871 = vsel %vm1870, %v1862, %v1869
        %vm1872 = vcmp.eq.f32.partialorder %v1862, 0.0
        %v1873 = vand.u32 %v1862, 2147483648
        %v1874 = vsel %vm1872, %v1873, %v1871
        %v1875 = vmul.f32 %v1844, 2.144507
        %vm1876 = vcmp.gt.f32.partialorder %v1844, 0.0
        %vm1877 = vcmp.le.f32.partialorder %v1849, %v1875
        %vm1878 = vmand %vm1876, %vm1877
        %v1879 = vsub.f32 0.0, %v1875
        %vm1880 = vcmp.gt.f32.partialorder %v1849, %v1879
        %vm1881 = vmand %vm1878, %vm1880
        %vm1882 = vcmp.gt.f32.partialorder %v1859, 0.01
        %vm1883 = vmand %vm1881, %vm1882
        %vm1884 = vcmp.le.f32.partialorder %v1859, 100.0
        %vm1885 = vmand %vm1883, %vm1884
        %v1886 = vadd.f32 %v1859, %v1521
        %v1887 = vmul.f32 %v1211, 2.0
        %v1888 = vmul.f32 %v1365, %v1844
        %v1889 = vmul.f32 %v1520, %v1849
        %v1890 = vadd.f32 %v1888, %v1889
        %v1891 = vmul.f32 %v1874, %v1890
        %v1892 = vmul.f32 %v1887, %v1891
        %v1893 = vsub.f32 %v1886, %v1892
        %v1894 = vadd.f32 %v1859, %v1839
        %v1895 = vmul.f32 %v1529, 2.0
        %v1896 = vmul.f32 %v1683, %v1844
        %v1897 = vmul.f32 %v1838, %v1849
        %v1898 = vadd.f32 %v1896, %v1897
        %v1899 = vmul.f32 %v1874, %v1898
        %v1900 = vmul.f32 %v1895, %v1899
        %v1901 = vsub.f32 %v1894, %v1900
        %v1902 = vmul.f32 %v1187, 0.9885817
        %v1903 = vmul.f32 %v1189, -0.15068571
        %v1904 = vadd.f32 %v1902, %v1903
        %v1905 = vadd.f32 %v1904, %v1843
        %v1906 = vmul.f32 %v1194, 0.9885817
        %v1907 = vmul.f32 %v1196, -0.15068571
        %v1908 = vadd.f32 %v1906, %v1907
        %v1909 = vadd.f32 %v1908, %v1848
        %v1910 = vmul.f32 %v1201, 0.9885817
        %v1911 = vmul.f32 %v1203, -0.15068571
        %v1912 = vadd.f32 %v1910, %v1911
        %v1913 = vadd.f32 %v1912, %v1853
        %v1914 = vmul.f32 %v1905, %v1905
        %v1915 = vmul.f32 %v1909, %v1909
        %v1916 = vadd.f32 %v1914, %v1915
        %v1917 = vmul.f32 %v1913, %v1913
        %v1918 = vadd.f32 %v1916, %v1917
        %v1919 = vadd.f32 %v1916, 1e-20
        %v1920 = vrcp.pop %v1919
        %v1921 = vmul.f32 %v1918, %v1920
        %v1922 = vrsqrt.pop %v1921
        %v1923 = vmul.f32 %v1922, %v1921
        %v1924 = vmul.f32 %v1923, %v1922
        %v1925 = vmul.f32 0.5, %v1924
        %v1926 = vsub.f32 1.5, %v1925
        %v1927 = vmul.f32 %v1922, %v1926
        %v1928 = vmul.f32 %v1921, %v1927
        %vm1929 = vcmp.eq.f32.partialorder %v1921, inf
        %v1930 = vsel %vm1929, %v1921, %v1928
        %vm1931 = vcmp.eq.f32.partialorder %v1921, 0.0
        %v1932 = vand.u32 %v1921, 2147483648
        %v1933 = vsel %vm1931, %v1932, %v1930
        %v1934 = vmul.f32 %v1905, 2.144507
        %vm1935 = vcmp.gt.f32.partialorder %v1905, 0.0
        %vm1936 = vcmp.le.f32.partialorder %v1909, %v1934
        %vm1937 = vmand %vm1935, %vm1936
        %v1938 = vsub.f32 0.0, %v1934
        %vm1939 = vcmp.gt.f32.partialorder %v1909, %v1938
        %vm1940 = vmand %vm1937, %vm1939
        %vm1941 = vcmp.gt.f32.partialorder %v1918, 0.01
        %vm1942 = vmand %vm1940, %vm1941
        %vm1943 = vcmp.le.f32.partialorder %v1918, 100.0
        %vm1944 = vmand %vm1942, %vm1943
        %v1945 = vadd.f32 %v1918, %v1521
        %v1946 = vmul.f32 %v1365, %v1905
        %v1947 = vmul.f32 %v1520, %v1909
        %v1948 = vadd.f32 %v1946, %v1947
        %v1949 = vmul.f32 %v1933, %v1948
        %v1950 = vmul.f32 %v1887, %v1949
        %v1951 = vsub.f32 %v1945, %v1950
        %v1952 = vadd.f32 %v1918, %v1839
        %v1953 = vmul.f32 %v1683, %v1905
        %v1954 = vmul.f32 %v1838, %v1909
        %v1955 = vadd.f32 %v1953, %v1954
        %v1956 = vmul.f32 %v1933, %v1955
        %v1957 = vmul.f32 %v1895, %v1956
        %v1958 = vsub.f32 %v1952, %v1957
        %v1959 = vmin.f32 %v1893, %v1951
        %v1960 = vmin.f32 %v1901, %v1958
        %vm1961 = vmand %vm1885, %vm1944
        %v1962 = vmul.f32 %v1187, 0.99182034
        %v1963 = vmul.f32 %v1189, -0.12764165
        %v1964 = vadd.f32 %v1962, %v1963
        %v1965 = vadd.f32 %v1964, %v1843
        %v1966 = vmul.f32 %v1194, 0.99182034
        %v1967 = vmul.f32 %v1196, -0.12764165
        %v1968 = vadd.f32 %v1966, %v1967
        %v1969 = vadd.f32 %v1968, %v1848
        %v1970 = vmul.f32 %v1201, 0.99182034
        %v1971 = vmul.f32 %v1203, -0.12764165
        %v1972 = vadd.f32 %v1970, %v1971
        %v1973 = vadd.f32 %v1972, %v1853
        %v1974 = vmul.f32 %v1965, %v1965
        %v1975 = vmul.f32 %v1969, %v1969
        %v1976 = vadd.f32 %v1974, %v1975
        %v1977 = vmul.f32 %v1973, %v1973
        %v1978 = vadd.f32 %v1976, %v1977
        %v1979 = vadd.f32 %v1976, 1e-20
        %v1980 = vrcp.pop %v1979
        %v1981 = vmul.f32 %v1978, %v1980
        %v1982 = vrsqrt.pop %v1981
        %v1983 = vmul.f32 %v1982, %v1981
        %v1984 = vmul.f32 %v1983, %v1982
        %v1985 = vmul.f32 0.5, %v1984
        %v1986 = vsub.f32 1.5, %v1985
        %v1987 = vmul.f32 %v1982, %v1986
        %v1988 = vmul.f32 %v1981, %v1987
        %vm1989 = vcmp.eq.f32.partialorder %v1981, inf
        %v1990 = vsel %vm1989, %v1981, %v1988
        %vm1991 = vcmp.eq.f32.partialorder %v1981, 0.0
        %v1992 = vand.u32 %v1981, 2147483648
        %v1993 = vsel %vm1991, %v1992, %v1990
        %v1994 = vmul.f32 %v1965, 2.144507
        %vm1995 = vcmp.gt.f32.partialorder %v1965, 0.0
        %vm1996 = vcmp.le.f32.partialorder %v1969, %v1994
        %vm1997 = vmand %vm1995, %vm1996
        %v1998 = vsub.f32 0.0, %v1994
        %vm1999 = vcmp.gt.f32.partialorder %v1969, %v1998
        %vm2000 = vmand %vm1997, %vm1999
        %vm2001 = vcmp.gt.f32.partialorder %v1978, 0.01
        %vm2002 = vmand %vm2000, %vm2001
        %vm2003 = vcmp.le.f32.partialorder %v1978, 100.0
        %vm2004 = vmand %vm2002, %vm2003
        %v2005 = vadd.f32 %v1978, %v1521
        %v2006 = vmul.f32 %v1365, %v1965
        %v2007 = vmul.f32 %v1520, %v1969
        %v2008 = vadd.f32 %v2006, %v2007
        %v2009 = vmul.f32 %v1993, %v2008
        %v2010 = vmul.f32 %v1887, %v2009
        %v2011 = vsub.f32 %v2005, %v2010
        %v2012 = vadd.f32 %v1978, %v1839
        %v2013 = vmul.f32 %v1683, %v1965
        %v2014 = vmul.f32 %v1838, %v1969
        %v2015 = vadd.f32 %v2013, %v2014
        %v2016 = vmul.f32 %v1993, %v2015
        %v2017 = vmul.f32 %v1895, %v2016
        %v2018 = vsub.f32 %v2012, %v2017
        %v2019 = vmin.f32 %v1959, %v2011
        %v2020 = vmin.f32 %v1960, %v2018
        %vm2021 = vmand %vm1961, %vm2004
        %v2022 = vmul.f32 %v1187, 0.9945219
        %v2023 = vmul.f32 %v1189, -0.104528464
        %v2024 = vadd.f32 %v2022, %v2023
        %v2025 = vadd.f32 %v2024, %v1843
        %v2026 = vmul.f32 %v1194, 0.9945219
        %v2027 = vmul.f32 %v1196, -0.104528464
        %v2028 = vadd.f32 %v2026, %v2027
        %v2029 = vadd.f32 %v2028, %v1848
        %v2030 = vmul.f32 %v1201, 0.9945219
        %v2031 = vmul.f32 %v1203, -0.104528464
        %v2032 = vadd.f32 %v2030, %v2031
        %v2033 = vadd.f32 %v2032, %v1853
        %v2034 = vmul.f32 %v2025, %v2025
        %v2035 = vmul.f32 %v2029, %v2029
        %v2036 = vadd.f32 %v2034, %v2035
        %v2037 = vmul.f32 %v2033, %v2033
        %v2038 = vadd.f32 %v2036, %v2037
        %v2039 = vadd.f32 %v2036, 1e-20
        %v2040 = vrcp.pop %v2039
        %v2041 = vmul.f32 %v2038, %v2040
        %v2042 = vrsqrt.pop %v2041
        %v2043 = vmul.f32 %v2042, %v2041
        %v2044 = vmul.f32 %v2043, %v2042
        %v2045 = vmul.f32 0.5, %v2044
        %v2046 = vsub.f32 1.5, %v2045
        %v2047 = vmul.f32 %v2042, %v2046
        %v2048 = vmul.f32 %v2041, %v2047
        %vm2049 = vcmp.eq.f32.partialorder %v2041, inf
        %v2050 = vsel %vm2049, %v2041, %v2048
        %vm2051 = vcmp.eq.f32.partialorder %v2041, 0.0
        %v2052 = vand.u32 %v2041, 2147483648
        %v2053 = vsel %vm2051, %v2052, %v2050
        %v2054 = vmul.f32 %v2025, 2.144507
        %vm2055 = vcmp.gt.f32.partialorder %v2025, 0.0
        %vm2056 = vcmp.le.f32.partialorder %v2029, %v2054
        %vm2057 = vmand %vm2055, %vm2056
        %v2058 = vsub.f32 0.0, %v2054
        %vm2059 = vcmp.gt.f32.partialorder %v2029, %v2058
        %vm2060 = vmand %vm2057, %vm2059
        %vm2061 = vcmp.gt.f32.partialorder %v2038, 0.01
        %vm2062 = vmand %vm2060, %vm2061
        %vm2063 = vcmp.le.f32.partialorder %v2038, 100.0
        %vm2064 = vmand %vm2062, %vm2063
        %v2065 = vadd.f32 %v2038, %v1521
        %v2066 = vmul.f32 %v1365, %v2025
        %v2067 = vmul.f32 %v1520, %v2029
        %v2068 = vadd.f32 %v2066, %v2067
        %v2069 = vmul.f32 %v2053, %v2068
        %v2070 = vmul.f32 %v1887, %v2069
        %v2071 = vsub.f32 %v2065, %v2070
        %v2072 = vadd.f32 %v2038, %v1839
        %v2073 = vmul.f32 %v1683, %v2025
        %v2074 = vmul.f32 %v1838, %v2029
        %v2075 = vadd.f32 %v2073, %v2074
        %v2076 = vmul.f32 %v2053, %v2075
        %v2077 = vmul.f32 %v1895, %v2076
        %v2078 = vsub.f32 %v2072, %v2077
        %v2079 = vmin.f32 %v2019, %v2071
        %v2080 = vmin.f32 %v2020, %v2078
        %vm2081 = vmand %vm2021, %vm2064
        %v2082 = vmul.f32 %v1187, 0.9966849
        %v2083 = vmul.f32 %v1189, -0.08135867
        %v2084 = vadd.f32 %v2082, %v2083
        %v2085 = vadd.f32 %v2084, %v1843
        %v2086 = vmul.f32 %v1194, 0.9966849
        %v2087 = vmul.f32 %v1196, -0.08135867
        %v2088 = vadd.f32 %v2086, %v2087
        %v2089 = vadd.f32 %v2088, %v1848
        %v2090 = vmul.f32 %v1201, 0.9966849
        %v2091 = vmul.f32 %v1203, -0.08135867
        %v2092 = vadd.f32 %v2090, %v2091
        %v2093 = vadd.f32 %v2092, %v1853
        %v2094 = vmul.f32 %v2085, %v2085
        %v2095 = vmul.f32 %v2089, %v2089
        %v2096 = vadd.f32 %v2094, %v2095
        %v2097 = vmul.f32 %v2093, %v2093
        %v2098 = vadd.f32 %v2096, %v2097
        %v2099 = vadd.f32 %v2096, 1e-20
        %v2100 = vrcp.pop %v2099
        %v2101 = vmul.f32 %v2098, %v2100
        %v2102 = vrsqrt.pop %v2101
        %v2103 = vmul.f32 %v2102, %v2101
        %v2104 = vmul.f32 %v2103, %v2102
        %v2105 = vmul.f32 0.5, %v2104
        %v2106 = vsub.f32 1.5, %v2105
        %v2107 = vmul.f32 %v2102, %v2106
        %v2108 = vmul.f32 %v2101, %v2107
        %vm2109 = vcmp.eq.f32.partialorder %v2101, inf
        %v2110 = vsel %vm2109, %v2101, %v2108
        %vm2111 = vcmp.eq.f32.partialorder %v2101, 0.0
        %v2112 = vand.u32 %v2101, 2147483648
        %v2113 = vsel %vm2111, %v2112, %v2110
        %v2114 = vmul.f32 %v2085, 2.144507
        %vm2115 = vcmp.gt.f32.partialorder %v2085, 0.0
        %vm2116 = vcmp.le.f32.partialorder %v2089, %v2114
        %vm2117 = vmand %vm2115, %vm2116
        %v2118 = vsub.f32 0.0, %v2114
        %vm2119 = vcmp.gt.f32.partialorder %v2089, %v2118
        %vm2120 = vmand %vm2117, %vm2119
        %vm2121 = vcmp.gt.f32.partialorder %v2098, 0.01
        %vm2122 = vmand %vm2120, %vm2121
        %vm2123 = vcmp.le.f32.partialorder %v2098, 100.0
        %vm2124 = vmand %vm2122, %vm2123
        %v2125 = vadd.f32 %v2098, %v1521
        %v2126 = vmul.f32 %v1365, %v2085
        %v2127 = vmul.f32 %v1520, %v2089
        %v2128 = vadd.f32 %v2126, %v2127
        %v2129 = vmul.f32 %v2113, %v2128
        %v2130 = vmul.f32 %v1887, %v2129
        %v2131 = vsub.f32 %v2125, %v2130
        %v2132 = vadd.f32 %v2098, %v1839
        %v2133 = vmul.f32 %v1683, %v2085
        %v2134 = vmul.f32 %v1838, %v2089
        %v2135 = vadd.f32 %v2133, %v2134
        %v2136 = vmul.f32 %v2113, %v2135
        %v2137 = vmul.f32 %v1895, %v2136
        %v2138 = vsub.f32 %v2132, %v2137
        %v2139 = vmin.f32 %v2079, %v2131
        %v2140 = vmin.f32 %v2080, %v2138
        %vm2141 = vmand %vm2081, %vm2124
        %v2142 = vmul.f32 %v1187, 0.9983082
        %v2143 = vmul.f32 %v1189, -0.05814483
        %v2144 = vadd.f32 %v2142, %v2143
        %v2145 = vadd.f32 %v2144, %v1843
        %v2146 = vmul.f32 %v1194, 0.9983082
        %v2147 = vmul.f32 %v1196, -0.05814483
        %v2148 = vadd.f32 %v2146, %v2147
        %v2149 = vadd.f32 %v2148, %v1848
        %v2150 = vmul.f32 %v1201, 0.9983082
        %v2151 = vmul.f32 %v1203, -0.05814483
        %v2152 = vadd.f32 %v2150, %v2151
        %v2153 = vadd.f32 %v2152, %v1853
        %v2154 = vmul.f32 %v2145, %v2145
        %v2155 = vmul.f32 %v2149, %v2149
        %v2156 = vadd.f32 %v2154, %v2155
        %v2157 = vmul.f32 %v2153, %v2153
        %v2158 = vadd.f32 %v2156, %v2157
        %v2159 = vadd.f32 %v2156, 1e-20
        %v2160 = vrcp.pop %v2159
        %v2161 = vmul.f32 %v2158, %v2160
        %v2162 = vrsqrt.pop %v2161
        %v2163 = vmul.f32 %v2162, %v2161
        %v2164 = vmul.f32 %v2163, %v2162
        %v2165 = vmul.f32 0.5, %v2164
        %v2166 = vsub.f32 1.5, %v2165
        %v2167 = vmul.f32 %v2162, %v2166
        %v2168 = vmul.f32 %v2161, %v2167
        %vm2169 = vcmp.eq.f32.partialorder %v2161, inf
        %v2170 = vsel %vm2169, %v2161, %v2168
        %vm2171 = vcmp.eq.f32.partialorder %v2161, 0.0
        %v2172 = vand.u32 %v2161, 2147483648
        %v2173 = vsel %vm2171, %v2172, %v2170
        %v2174 = vmul.f32 %v2145, 2.144507
        %vm2175 = vcmp.gt.f32.partialorder %v2145, 0.0
        %vm2176 = vcmp.le.f32.partialorder %v2149, %v2174
        %vm2177 = vmand %vm2175, %vm2176
        %v2178 = vsub.f32 0.0, %v2174
        %vm2179 = vcmp.gt.f32.partialorder %v2149, %v2178
        %vm2180 = vmand %vm2177, %vm2179
        %vm2181 = vcmp.gt.f32.partialorder %v2158, 0.01
        %vm2182 = vmand %vm2180, %vm2181
        %vm2183 = vcmp.le.f32.partialorder %v2158, 100.0
        %vm2184 = vmand %vm2182, %vm2183
        %v2185 = vadd.f32 %v2158, %v1521
        %v2186 = vmul.f32 %v1365, %v2145
        %v2187 = vmul.f32 %v1520, %v2149
        %v2188 = vadd.f32 %v2186, %v2187
        %v2189 = vmul.f32 %v2173, %v2188
        %v2190 = vmul.f32 %v1887, %v2189
        %v2191 = vsub.f32 %v2185, %v2190
        %v2192 = vadd.f32 %v2158, %v1839
        %v2193 = vmul.f32 %v1683, %v2145
        %v2194 = vmul.f32 %v1838, %v2149
        %v2195 = vadd.f32 %v2193, %v2194
        %v2196 = vmul.f32 %v2173, %v2195
        %v2197 = vmul.f32 %v1895, %v2196
        %v2198 = vsub.f32 %v2192, %v2197
        %v2199 = vmin.f32 %v2139, %v2191
        %v2200 = vmin.f32 %v2140, %v2198
        %vm2201 = vmand %vm2141, %vm2184
        %v2202 = vmul.f32 %v1187, 0.99939084
        %v2203 = vmul.f32 %v1189, -0.034899496
        %v2204 = vadd.f32 %v2202, %v2203
        %v2205 = vadd.f32 %v2204, %v1843
        %v2206 = vmul.f32 %v1194, 0.99939084
        %v2207 = vmul.f32 %v1196, -0.034899496
        %v2208 = vadd.f32 %v2206, %v2207
        %v2209 = vadd.f32 %v2208, %v1848
        %v2210 = vmul.f32 %v1201, 0.99939084
        %v2211 = vmul.f32 %v1203, -0.034899496
        %v2212 = vadd.f32 %v2210, %v2211
        %v2213 = vadd.f32 %v2212, %v1853
        %v2214 = vmul.f32 %v2205, %v2205
        %v2215 = vmul.f32 %v2209, %v2209
        %v2216 = vadd.f32 %v2214, %v2215
        %v2217 = vmul.f32 %v2213, %v2213
        %v2218 = vadd.f32 %v2216, %v2217
        %v2219 = vadd.f32 %v2216, 1e-20
        %v2220 = vrcp.pop %v2219
        %v2221 = vmul.f32 %v2218, %v2220
        %v2222 = vrsqrt.pop %v2221
        %v2223 = vmul.f32 %v2222, %v2221
        %v2224 = vmul.f32 %v2223, %v2222
        %v2225 = vmul.f32 0.5, %v2224
        %v2226 = vsub.f32 1.5, %v2225
        %v2227 = vmul.f32 %v2222, %v2226
        %v2228 = vmul.f32 %v2221, %v2227
        %vm2229 = vcmp.eq.f32.partialorder %v2221, inf
        %v2230 = vsel %vm2229, %v2221, %v2228
        %vm2231 = vcmp.eq.f32.partialorder %v2221, 0.0
        %v2232 = vand.u32 %v2221, 2147483648
        %v2233 = vsel %vm2231, %v2232, %v2230
        %v2234 = vmul.f32 %v2205, 2.144507
        %vm2235 = vcmp.gt.f32.partialorder %v2205, 0.0
        %vm2236 = vcmp.le.f32.partialorder %v2209, %v2234
        %vm2237 = vmand %vm2235, %vm2236
        %v2238 = vsub.f32 0.0, %v2234
        %vm2239 = vcmp.gt.f32.partialorder %v2209, %v2238
        %vm2240 = vmand %vm2237, %vm2239
        %vm2241 = vcmp.gt.f32.partialorder %v2218, 0.01
        %vm2242 = vmand %vm2240, %vm2241
        %vm2243 = vcmp.le.f32.partialorder %v2218, 100.0
        %vm2244 = vmand %vm2242, %vm2243
        %v2245 = vadd.f32 %v2218, %v1521
        %v2246 = vmul.f32 %v1365, %v2205
        %v2247 = vmul.f32 %v1520, %v2209
        %v2248 = vadd.f32 %v2246, %v2247
        %v2249 = vmul.f32 %v2233, %v2248
        %v2250 = vmul.f32 %v1887, %v2249
        %v2251 = vsub.f32 %v2245, %v2250
        %v2252 = vadd.f32 %v2218, %v1839
        %v2253 = vmul.f32 %v1683, %v2205
        %v2254 = vmul.f32 %v1838, %v2209
        %v2255 = vadd.f32 %v2253, %v2254
        %v2256 = vmul.f32 %v2233, %v2255
        %v2257 = vmul.f32 %v1895, %v2256
        %v2258 = vsub.f32 %v2252, %v2257
        %v2259 = vmin.f32 %v2199, %v2251
        %v2260 = vmin.f32 %v2200, %v2258
        %vm2261 = vmand %vm2201, %vm2244
        %v2262 = vmul.f32 %v1187, 0.9999323
        %v2263 = vmul.f32 %v1189, -0.011635266
        %v2264 = vadd.f32 %v2262, %v2263
        %v2265 = vadd.f32 %v2264, %v1843
        %v2266 = vmul.f32 %v1194, 0.9999323
        %v2267 = vmul.f32 %v1196, -0.011635266
        %v2268 = vadd.f32 %v2266, %v2267
        %v2269 = vadd.f32 %v2268, %v1848
        %v2270 = vmul.f32 %v1201, 0.9999323
        %v2271 = vmul.f32 %v1203, -0.011635266
        %v2272 = vadd.f32 %v2270, %v2271
        %v2273 = vadd.f32 %v2272, %v1853
        %v2274 = vmul.f32 %v2265, %v2265
        %v2275 = vmul.f32 %v2269, %v2269
        %v2276 = vadd.f32 %v2274, %v2275
        %v2277 = vmul.f32 %v2273, %v2273
        %v2278 = vadd.f32 %v2276, %v2277
        %v2279 = vadd.f32 %v2276, 1e-20
        %v2280 = vrcp.pop %v2279
        %v2281 = vmul.f32 %v2278, %v2280
        %v2282 = vrsqrt.pop %v2281
        %v2283 = vmul.f32 %v2282, %v2281
        %v2284 = vmul.f32 %v2283, %v2282
        %v2285 = vmul.f32 0.5, %v2284
        %v2286 = vsub.f32 1.5, %v2285
        %v2287 = vmul.f32 %v2282, %v2286
        %v2288 = vmul.f32 %v2281, %v2287
        %vm2289 = vcmp.eq.f32.partialorder %v2281, inf
        %v2290 = vsel %vm2289, %v2281, %v2288
        %vm2291 = vcmp.eq.f32.partialorder %v2281, 0.0
        %v2292 = vand.u32 %v2281, 2147483648
        %v2293 = vsel %vm2291, %v2292, %v2290
        %v2294 = vmul.f32 %v2265, 2.144507
        %vm2295 = vcmp.gt.f32.partialorder %v2265, 0.0
        %vm2296 = vcmp.le.f32.partialorder %v2269, %v2294
        %vm2297 = vmand %vm2295, %vm2296
        %v2298 = vsub.f32 0.0, %v2294
        %vm2299 = vcmp.gt.f32.partialorder %v2269, %v2298
        %vm2300 = vmand %vm2297, %vm2299
        %vm2301 = vcmp.gt.f32.partialorder %v2278, 0.01
        %vm2302 = vmand %vm2300, %vm2301
        %vm2303 = vcmp.le.f32.partialorder %v2278, 100.0
        %vm2304 = vmand %vm2302, %vm2303
        %v2305 = vadd.f32 %v2278, %v1521
        %v2306 = vmul.f32 %v1365, %v2265
        %v2307 = vmul.f32 %v1520, %v2269
        %v2308 = vadd.f32 %v2306, %v2307
        %v2309 = vmul.f32 %v2293, %v2308
        %v2310 = vmul.f32 %v1887, %v2309
        %v2311 = vsub.f32 %v2305, %v2310
        %v2312 = vadd.f32 %v2278, %v1839
        %v2313 = vmul.f32 %v1683, %v2265
        %v2314 = vmul.f32 %v1838, %v2269
        %v2315 = vadd.f32 %v2313, %v2314
        %v2316 = vmul.f32 %v2293, %v2315
        %v2317 = vmul.f32 %v1895, %v2316
        %v2318 = vsub.f32 %v2312, %v2317
        %v2319 = vmin.f32 %v2259, %v2311
        %v2320 = vmin.f32 %v2260, %v2318
        %vm2321 = vmand %vm2261, %vm2304
        %v2322 = vmul.f32 %v1189, 0.011635266
        %v2323 = vadd.f32 %v2262, %v2322
        %v2324 = vadd.f32 %v2323, %v1843
        %v2325 = vmul.f32 %v1196, 0.011635266
        %v2326 = vadd.f32 %v2266, %v2325
        %v2327 = vadd.f32 %v2326, %v1848
        %v2328 = vmul.f32 %v1203, 0.011635266
        %v2329 = vadd.f32 %v2270, %v2328
        %v2330 = vadd.f32 %v2329, %v1853
        %v2331 = vmul.f32 %v2324, %v2324
        %v2332 = vmul.f32 %v2327, %v2327
        %v2333 = vadd.f32 %v2331, %v2332
        %v2334 = vmul.f32 %v2330, %v2330
        %v2335 = vadd.f32 %v2333, %v2334
        %v2336 = vadd.f32 %v2333, 1e-20
        %v2337 = vrcp.pop %v2336
        %v2338 = vmul.f32 %v2335, %v2337
        %v2339 = vrsqrt.pop %v2338
        %v2340 = vmul.f32 %v2339, %v2338
        %v2341 = vmul.f32 %v2340, %v2339
        %v2342 = vmul.f32 0.5, %v2341
        %v2343 = vsub.f32 1.5, %v2342
        %v2344 = vmul.f32 %v2339, %v2343
        %v2345 = vmul.f32 %v2338, %v2344
        %vm2346 = vcmp.eq.f32.partialorder %v2338, inf
        %v2347 = vsel %vm2346, %v2338, %v2345
        %vm2348 = vcmp.eq.f32.partialorder %v2338, 0.0
        %v2349 = vand.u32 %v2338, 2147483648
        %v2350 = vsel %vm2348, %v2349, %v2347
        %v2351 = vmul.f32 %v2324, 2.144507
        %vm2352 = vcmp.gt.f32.partialorder %v2324, 0.0
        %vm2353 = vcmp.le.f32.partialorder %v2327, %v2351
        %vm2354 = vmand %vm2352, %vm2353
        %v2355 = vsub.f32 0.0, %v2351
        %vm2356 = vcmp.gt.f32.partialorder %v2327, %v2355
        %vm2357 = vmand %vm2354, %vm2356
        %vm2358 = vcmp.gt.f32.partialorder %v2335, 0.01
        %vm2359 = vmand %vm2357, %vm2358
        %vm2360 = vcmp.le.f32.partialorder %v2335, 100.0
        %vm2361 = vmand %vm2359, %vm2360
        %v2362 = vadd.f32 %v2335, %v1521
        %v2363 = vmul.f32 %v1365, %v2324
        %v2364 = vmul.f32 %v1520, %v2327
        %v2365 = vadd.f32 %v2363, %v2364
        %v2366 = vmul.f32 %v2350, %v2365
        %v2367 = vmul.f32 %v1887, %v2366
        %v2368 = vsub.f32 %v2362, %v2367
        %v2369 = vadd.f32 %v2335, %v1839
        %v2370 = vmul.f32 %v1683, %v2324
        %v2371 = vmul.f32 %v1838, %v2327
        %v2372 = vadd.f32 %v2370, %v2371
        %v2373 = vmul.f32 %v2350, %v2372
        %v2374 = vmul.f32 %v1895, %v2373
        %v2375 = vsub.f32 %v2369, %v2374
        %v2376 = vmin.f32 %v2319, %v2368
        %v2377 = vmin.f32 %v2320, %v2375
        %vm2378 = vmand %vm2321, %vm2361
        %v2379 = vmul.f32 %v1189, 0.034899496
        %v2380 = vadd.f32 %v2202, %v2379
        %v2381 = vadd.f32 %v2380, %v1843
        %v2382 = vmul.f32 %v1196, 0.034899496
        %v2383 = vadd.f32 %v2206, %v2382
        %v2384 = vadd.f32 %v2383, %v1848
        %v2385 = vmul.f32 %v1203, 0.034899496
        %v2386 = vadd.f32 %v2210, %v2385
        %v2387 = vadd.f32 %v2386, %v1853
        %v2388 = vmul.f32 %v2381, %v2381
        %v2389 = vmul.f32 %v2384, %v2384
        %v2390 = vadd.f32 %v2388, %v2389
        %v2391 = vmul.f32 %v2387, %v2387
        %v2392 = vadd.f32 %v2390, %v2391
        %v2393 = vadd.f32 %v2390, 1e-20
        %v2394 = vrcp.pop %v2393
        %v2395 = vmul.f32 %v2392, %v2394
        %v2396 = vrsqrt.pop %v2395
        %v2397 = vmul.f32 %v2396, %v2395
        %v2398 = vmul.f32 %v2397, %v2396
        %v2399 = vmul.f32 0.5, %v2398
        %v2400 = vsub.f32 1.5, %v2399
        %v2401 = vmul.f32 %v2396, %v2400
        %v2402 = vmul.f32 %v2395, %v2401
        %vm2403 = vcmp.eq.f32.partialorder %v2395, inf
        %v2404 = vsel %vm2403, %v2395, %v2402
        %vm2405 = vcmp.eq.f32.partialorder %v2395, 0.0
        %v2406 = vand.u32 %v2395, 2147483648
        %v2407 = vsel %vm2405, %v2406, %v2404
        %v2408 = vmul.f32 %v2381, 2.144507
        %vm2409 = vcmp.gt.f32.partialorder %v2381, 0.0
        %vm2410 = vcmp.le.f32.partialorder %v2384, %v2408
        %vm2411 = vmand %vm2409, %vm2410
        %v2412 = vsub.f32 0.0, %v2408
        %vm2413 = vcmp.gt.f32.partialorder %v2384, %v2412
        %vm2414 = vmand %vm2411, %vm2413
        %vm2415 = vcmp.gt.f32.partialorder %v2392, 0.01
        %vm2416 = vmand %vm2414, %vm2415
        %vm2417 = vcmp.le.f32.partialorder %v2392, 100.0
        %vm2418 = vmand %vm2416, %vm2417
        %v2419 = vadd.f32 %v2392, %v1521
        %v2420 = vmul.f32 %v1365, %v2381
        %v2421 = vmul.f32 %v1520, %v2384
        %v2422 = vadd.f32 %v2420, %v2421
        %v2423 = vmul.f32 %v2407, %v2422
        %v2424 = vmul.f32 %v1887, %v2423
        %v2425 = vsub.f32 %v2419, %v2424
        %v2426 = vadd.f32 %v2392, %v1839
        %v2427 = vmul.f32 %v1683, %v2381
        %v2428 = vmul.f32 %v1838, %v2384
        %v2429 = vadd.f32 %v2427, %v2428
        %v2430 = vmul.f32 %v2407, %v2429
        %v2431 = vmul.f32 %v1895, %v2430
        %v2432 = vsub.f32 %v2426, %v2431
        %v2433 = vmin.f32 %v2376, %v2425
        %v2434 = vmin.f32 %v2377, %v2432
        %vm2435 = vmand %vm2378, %vm2418
        %v2436 = vmul.f32 %v1189, 0.05814483
        %v2437 = vadd.f32 %v2142, %v2436
        %v2438 = vadd.f32 %v2437, %v1843
        %v2439 = vmul.f32 %v1196, 0.05814483
        %v2440 = vadd.f32 %v2146, %v2439
        %v2441 = vadd.f32 %v2440, %v1848
        %v2442 = vmul.f32 %v1203, 0.05814483
        %v2443 = vadd.f32 %v2150, %v2442
        %v2444 = vadd.f32 %v2443, %v1853
        %v2445 = vmul.f32 %v2438, %v2438
        %v2446 = vmul.f32 %v2441, %v2441
        %v2447 = vadd.f32 %v2445, %v2446
        %v2448 = vmul.f32 %v2444, %v2444
        %v2449 = vadd.f32 %v2447, %v2448
        %v2450 = vadd.f32 %v2447, 1e-20
        %v2451 = vrcp.pop %v2450
        %v2452 = vmul.f32 %v2449, %v2451
        %v2453 = vrsqrt.pop %v2452
        %v2454 = vmul.f32 %v2453, %v2452
        %v2455 = vmul.f32 %v2454, %v2453
        %v2456 = vmul.f32 0.5, %v2455
        %v2457 = vsub.f32 1.5, %v2456
        %v2458 = vmul.f32 %v2453, %v2457
        %v2459 = vmul.f32 %v2452, %v2458
        %vm2460 = vcmp.eq.f32.partialorder %v2452, inf
        %v2461 = vsel %vm2460, %v2452, %v2459
        %vm2462 = vcmp.eq.f32.partialorder %v2452, 0.0
        %v2463 = vand.u32 %v2452, 2147483648
        %v2464 = vsel %vm2462, %v2463, %v2461
        %v2465 = vmul.f32 %v2438, 2.144507
        %vm2466 = vcmp.gt.f32.partialorder %v2438, 0.0
        %vm2467 = vcmp.le.f32.partialorder %v2441, %v2465
        %vm2468 = vmand %vm2466, %vm2467
        %v2469 = vsub.f32 0.0, %v2465
        %vm2470 = vcmp.gt.f32.partialorder %v2441, %v2469
        %vm2471 = vmand %vm2468, %vm2470
        %vm2472 = vcmp.gt.f32.partialorder %v2449, 0.01
        %vm2473 = vmand %vm2471, %vm2472
        %vm2474 = vcmp.le.f32.partialorder %v2449, 100.0
        %vm2475 = vmand %vm2473, %vm2474
        %v2476 = vadd.f32 %v2449, %v1521
        %v2477 = vmul.f32 %v1365, %v2438
        %v2478 = vmul.f32 %v1520, %v2441
        %v2479 = vadd.f32 %v2477, %v2478
        %v2480 = vmul.f32 %v2464, %v2479
        %v2481 = vmul.f32 %v1887, %v2480
        %v2482 = vsub.f32 %v2476, %v2481
        %v2483 = vadd.f32 %v2449, %v1839
        %v2484 = vmul.f32 %v1683, %v2438
        %v2485 = vmul.f32 %v1838, %v2441
        %v2486 = vadd.f32 %v2484, %v2485
        %v2487 = vmul.f32 %v2464, %v2486
        %v2488 = vmul.f32 %v1895, %v2487
        %v2489 = vsub.f32 %v2483, %v2488
        %v2490 = vmin.f32 %v2433, %v2482
        %v2491 = vmin.f32 %v2434, %v2489
        %vm2492 = vmand %vm2435, %vm2475
        %v2493 = vmul.f32 %v1189, 0.08135867
        %v2494 = vadd.f32 %v2082, %v2493
        %v2495 = vadd.f32 %v2494, %v1843
        %v2496 = vmul.f32 %v1196, 0.08135867
        %v2497 = vadd.f32 %v2086, %v2496
        %v2498 = vadd.f32 %v2497, %v1848
        %v2499 = vmul.f32 %v1203, 0.08135867
        %v2500 = vadd.f32 %v2090, %v2499
        %v2501 = vadd.f32 %v2500, %v1853
        %v2502 = vmul.f32 %v2495, %v2495
        %v2503 = vmul.f32 %v2498, %v2498
        %v2504 = vadd.f32 %v2502, %v2503
        %v2505 = vmul.f32 %v2501, %v2501
        %v2506 = vadd.f32 %v2504, %v2505
        %v2507 = vadd.f32 %v2504, 1e-20
        %v2508 = vrcp.pop %v2507
        %v2509 = vmul.f32 %v2506, %v2508
        %v2510 = vrsqrt.pop %v2509
        %v2511 = vmul.f32 %v2510, %v2509
        %v2512 = vmul.f32 %v2511, %v2510
        %v2513 = vmul.f32 0.5, %v2512
        %v2514 = vsub.f32 1.5, %v2513
        %v2515 = vmul.f32 %v2510, %v2514
        %v2516 = vmul.f32 %v2509, %v2515
        %vm2517 = vcmp.eq.f32.partialorder %v2509, inf
        %v2518 = vsel %vm2517, %v2509, %v2516
        %vm2519 = vcmp.eq.f32.partialorder %v2509, 0.0
        %v2520 = vand.u32 %v2509, 2147483648
        %v2521 = vsel %vm2519, %v2520, %v2518
        %v2522 = vmul.f32 %v2495, 2.144507
        %vm2523 = vcmp.gt.f32.partialorder %v2495, 0.0
        %vm2524 = vcmp.le.f32.partialorder %v2498, %v2522
        %vm2525 = vmand %vm2523, %vm2524
        %v2526 = vsub.f32 0.0, %v2522
        %vm2527 = vcmp.gt.f32.partialorder %v2498, %v2526
        %vm2528 = vmand %vm2525, %vm2527
        %vm2529 = vcmp.gt.f32.partialorder %v2506, 0.01
        %vm2530 = vmand %vm2528, %vm2529
        %vm2531 = vcmp.le.f32.partialorder %v2506, 100.0
        %vm2532 = vmand %vm2530, %vm2531
        %v2533 = vadd.f32 %v2506, %v1521
        %v2534 = vmul.f32 %v1365, %v2495
        %v2535 = vmul.f32 %v1520, %v2498
        %v2536 = vadd.f32 %v2534, %v2535
        %v2537 = vmul.f32 %v2521, %v2536
        %v2538 = vmul.f32 %v1887, %v2537
        %v2539 = vsub.f32 %v2533, %v2538
        %v2540 = vadd.f32 %v2506, %v1839
        %v2541 = vmul.f32 %v1683, %v2495
        %v2542 = vmul.f32 %v1838, %v2498
        %v2543 = vadd.f32 %v2541, %v2542
        %v2544 = vmul.f32 %v2521, %v2543
        %v2545 = vmul.f32 %v1895, %v2544
        %v2546 = vsub.f32 %v2540, %v2545
        %v2547 = vmin.f32 %v2490, %v2539
        %v2548 = vmin.f32 %v2491, %v2546
        %vm2549 = vmand %vm2492, %vm2532
        %v2550 = vmul.f32 %v1189, 0.104528464
        %v2551 = vadd.f32 %v2022, %v2550
        %v2552 = vadd.f32 %v2551, %v1843
        %v2553 = vmul.f32 %v1196, 0.104528464
        %v2554 = vadd.f32 %v2026, %v2553
        %v2555 = vadd.f32 %v2554, %v1848
        %v2556 = vmul.f32 %v1203, 0.104528464
        %v2557 = vadd.f32 %v2030, %v2556
        %v2558 = vadd.f32 %v2557, %v1853
        %v2559 = vmul.f32 %v2552, %v2552
        %v2560 = vmul.f32 %v2555, %v2555
        %v2561 = vadd.f32 %v2559, %v2560
        %v2562 = vmul.f32 %v2558, %v2558
        %v2563 = vadd.f32 %v2561, %v2562
        %v2564 = vadd.f32 %v2561, 1e-20
        %v2565 = vrcp.pop %v2564
        %v2566 = vmul.f32 %v2563, %v2565
        %v2567 = vrsqrt.pop %v2566
        %v2568 = vmul.f32 %v2567, %v2566
        %v2569 = vmul.f32 %v2568, %v2567
        %v2570 = vmul.f32 0.5, %v2569
        %v2571 = vsub.f32 1.5, %v2570
        %v2572 = vmul.f32 %v2567, %v2571
        %v2573 = vmul.f32 %v2566, %v2572
        %vm2574 = vcmp.eq.f32.partialorder %v2566, inf
        %v2575 = vsel %vm2574, %v2566, %v2573
        %vm2576 = vcmp.eq.f32.partialorder %v2566, 0.0
        %v2577 = vand.u32 %v2566, 2147483648
        %v2578 = vsel %vm2576, %v2577, %v2575
        %v2579 = vmul.f32 %v2552, 2.144507
        %vm2580 = vcmp.gt.f32.partialorder %v2552, 0.0
        %vm2581 = vcmp.le.f32.partialorder %v2555, %v2579
        %vm2582 = vmand %vm2580, %vm2581
        %v2583 = vsub.f32 0.0, %v2579
        %vm2584 = vcmp.gt.f32.partialorder %v2555, %v2583
        %vm2585 = vmand %vm2582, %vm2584
        %vm2586 = vcmp.gt.f32.partialorder %v2563, 0.01
        %vm2587 = vmand %vm2585, %vm2586
        %vm2588 = vcmp.le.f32.partialorder %v2563, 100.0
        %vm2589 = vmand %vm2587, %vm2588
        %v2590 = vadd.f32 %v2563, %v1521
        %v2591 = vmul.f32 %v1365, %v2552
        %v2592 = vmul.f32 %v1520, %v2555
        %v2593 = vadd.f32 %v2591, %v2592
        %v2594 = vmul.f32 %v2578, %v2593
        %v2595 = vmul.f32 %v1887, %v2594
        %v2596 = vsub.f32 %v2590, %v2595
        %v2597 = vadd.f32 %v2563, %v1839
        %v2598 = vmul.f32 %v1683, %v2552
        %v2599 = vmul.f32 %v1838, %v2555
        %v2600 = vadd.f32 %v2598, %v2599
        %v2601 = vmul.f32 %v2578, %v2600
        %v2602 = vmul.f32 %v1895, %v2601
        %v2603 = vsub.f32 %v2597, %v2602
        %v2604 = vmin.f32 %v2547, %v2596
        %v2605 = vmin.f32 %v2548, %v2603
        %vm2606 = vmand %vm2549, %vm2589
        %v2607 = vmul.f32 %v1189, 0.12764165
        %v2608 = vadd.f32 %v1962, %v2607
        %v2609 = vadd.f32 %v2608, %v1843
        %v2610 = vmul.f32 %v1196, 0.12764165
        %v2611 = vadd.f32 %v1966, %v2610
        %v2612 = vadd.f32 %v2611, %v1848
        %v2613 = vmul.f32 %v1203, 0.12764165
        %v2614 = vadd.f32 %v1970, %v2613
        %v2615 = vadd.f32 %v2614, %v1853
        %v2616 = vmul.f32 %v2609, %v2609
        %v2617 = vmul.f32 %v2612, %v2612
        %v2618 = vadd.f32 %v2616, %v2617
        %v2619 = vmul.f32 %v2615, %v2615
        %v2620 = vadd.f32 %v2618, %v2619
        %v2621 = vadd.f32 %v2618, 1e-20
        %v2622 = vrcp.pop %v2621
        %v2623 = vmul.f32 %v2620, %v2622
        %v2624 = vrsqrt.pop %v2623
        %v2625 = vmul.f32 %v2624, %v2623
        %v2626 = vmul.f32 %v2625, %v2624
        %v2627 = vmul.f32 0.5, %v2626
        %v2628 = vsub.f32 1.5, %v2627
        %v2629 = vmul.f32 %v2624, %v2628
        %v2630 = vmul.f32 %v2623, %v2629
        %vm2631 = vcmp.eq.f32.partialorder %v2623, inf
        %v2632 = vsel %vm2631, %v2623, %v2630
        %vm2633 = vcmp.eq.f32.partialorder %v2623, 0.0
        %v2634 = vand.u32 %v2623, 2147483648
        %v2635 = vsel %vm2633, %v2634, %v2632
        %v2636 = vmul.f32 %v2609, 2.144507
        %vm2637 = vcmp.gt.f32.partialorder %v2609, 0.0
        %vm2638 = vcmp.le.f32.partialorder %v2612, %v2636
        %vm2639 = vmand %vm2637, %vm2638
        %v2640 = vsub.f32 0.0, %v2636
        %vm2641 = vcmp.gt.f32.partialorder %v2612, %v2640
        %vm2642 = vmand %vm2639, %vm2641
        %vm2643 = vcmp.gt.f32.partialorder %v2620, 0.01
        %vm2644 = vmand %vm2642, %vm2643
        %vm2645 = vcmp.le.f32.partialorder %v2620, 100.0
        %vm2646 = vmand %vm2644, %vm2645
        %v2647 = vadd.f32 %v2620, %v1521
        %v2648 = vmul.f32 %v1365, %v2609
        %v2649 = vmul.f32 %v1520, %v2612
        %v2650 = vadd.f32 %v2648, %v2649
        %v2651 = vmul.f32 %v2635, %v2650
        %v2652 = vmul.f32 %v1887, %v2651
        %v2653 = vsub.f32 %v2647, %v2652
        %v2654 = vadd.f32 %v2620, %v1839
        %v2655 = vmul.f32 %v1683, %v2609
        %v2656 = vmul.f32 %v1838, %v2612
        %v2657 = vadd.f32 %v2655, %v2656
        %v2658 = vmul.f32 %v2635, %v2657
        %v2659 = vmul.f32 %v1895, %v2658
        %v2660 = vsub.f32 %v2654, %v2659
        %v2661 = vmin.f32 %v2604, %v2653
        %v2662 = vmin.f32 %v2605, %v2660
        %vm2663 = vmand %vm2606, %vm2646
        %v2664 = vmul.f32 %v1189, 0.15068571
        %v2665 = vadd.f32 %v1902, %v2664
        %v2666 = vadd.f32 %v2665, %v1843
        %v2667 = vmul.f32 %v1196, 0.15068571
        %v2668 = vadd.f32 %v1906, %v2667
        %v2669 = vadd.f32 %v2668, %v1848
        %v2670 = vmul.f32 %v1203, 0.15068571
        %v2671 = vadd.f32 %v1910, %v2670
        %v2672 = vadd.f32 %v2671, %v1853
        %v2673 = vmul.f32 %v2666, %v2666
        %v2674 = vmul.f32 %v2669, %v2669
        %v2675 = vadd.f32 %v2673, %v2674
        %v2676 = vmul.f32 %v2672, %v2672
        %v2677 = vadd.f32 %v2675, %v2676
        %v2678 = vadd.f32 %v2675, 1e-20
        %v2679 = vrcp.pop %v2678
        %v2680 = vmul.f32 %v2677, %v2679
        %v2681 = vrsqrt.pop %v2680
        %v2682 = vmul.f32 %v2681, %v2680
        %v2683 = vmul.f32 %v2682, %v2681
        %v2684 = vmul.f32 0.5, %v2683
        %v2685 = vsub.f32 1.5, %v2684
        %v2686 = vmul.f32 %v2681, %v2685
        %v2687 = vmul.f32 %v2680, %v2686
        %vm2688 = vcmp.eq.f32.partialorder %v2680, inf
        %v2689 = vsel %vm2688, %v2680, %v2687
        %vm2690 = vcmp.eq.f32.partialorder %v2680, 0.0
        %v2691 = vand.u32 %v2680, 2147483648
        %v2692 = vsel %vm2690, %v2691, %v2689
        %v2693 = vmul.f32 %v2666, 2.144507
        %vm2694 = vcmp.gt.f32.partialorder %v2666, 0.0
        %vm2695 = vcmp.le.f32.partialorder %v2669, %v2693
        %vm2696 = vmand %vm2694, %vm2695
        %v2697 = vsub.f32 0.0, %v2693
        %vm2698 = vcmp.gt.f32.partialorder %v2669, %v2697
        %vm2699 = vmand %vm2696, %vm2698
        %vm2700 = vcmp.gt.f32.partialorder %v2677, 0.01
        %vm2701 = vmand %vm2699, %vm2700
        %vm2702 = vcmp.le.f32.partialorder %v2677, 100.0
        %vm2703 = vmand %vm2701, %vm2702
        %v2704 = vadd.f32 %v2677, %v1521
        %v2705 = vmul.f32 %v1365, %v2666
        %v2706 = vmul.f32 %v1520, %v2669
        %v2707 = vadd.f32 %v2705, %v2706
        %v2708 = vmul.f32 %v2692, %v2707
        %v2709 = vmul.f32 %v1887, %v2708
        %v2710 = vsub.f32 %v2704, %v2709
        %v2711 = vadd.f32 %v2677, %v1839
        %v2712 = vmul.f32 %v1683, %v2666
        %v2713 = vmul.f32 %v1838, %v2669
        %v2714 = vadd.f32 %v2712, %v2713
        %v2715 = vmul.f32 %v2692, %v2714
        %v2716 = vmul.f32 %v1895, %v2715
        %v2717 = vsub.f32 %v2711, %v2716
        %v2718 = vmin.f32 %v2661, %v2710
        %v2719 = vmin.f32 %v2662, %v2717
        %vm2720 = vmand %vm2663, %vm2703
        %v2721 = vmul.f32 %v1189, 0.17364818
        %v2722 = vadd.f32 %v1840, %v2721
        %v2723 = vadd.f32 %v2722, %v1843
        %v2724 = vmul.f32 %v1196, 0.17364818
        %v2725 = vadd.f32 %v1845, %v2724
        %v2726 = vadd.f32 %v2725, %v1848
        %v2727 = vmul.f32 %v1203, 0.17364818
        %v2728 = vadd.f32 %v1850, %v2727
        %v2729 = vadd.f32 %v2728, %v1853
        %v2730 = vmul.f32 %v2723, %v2723
        %v2731 = vmul.f32 %v2726, %v2726
        %v2732 = vadd.f32 %v2730, %v2731
        %v2733 = vmul.f32 %v2729, %v2729
        %v2734 = vadd.f32 %v2732, %v2733
        %v2735 = vadd.f32 %v2732, 1e-20
        %v2736 = vrcp.pop %v2735
        %v2737 = vmul.f32 %v2734, %v2736
        %v2738 = vrsqrt.pop %v2737
        %v2739 = vmul.f32 %v2738, %v2737
        %v2740 = vmul.f32 %v2739, %v2738
        %v2741 = vmul.f32 0.5, %v2740
        %v2742 = vsub.f32 1.5, %v2741
        %v2743 = vmul.f32 %v2738, %v2742
        %v2744 = vmul.f32 %v2737, %v2743
        %vm2745 = vcmp.eq.f32.partialorder %v2737, inf
        %v2746 = vsel %vm2745, %v2737, %v2744
        %vm2747 = vcmp.eq.f32.partialorder %v2737, 0.0
        %v2748 = vand.u32 %v2737, 2147483648
        %v2749 = vsel %vm2747, %v2748, %v2746
        %v2750 = vmul.f32 %v2723, 2.144507
        %vm2751 = vcmp.gt.f32.partialorder %v2723, 0.0
        %vm2752 = vcmp.le.f32.partialorder %v2726, %v2750
        %vm2753 = vmand %vm2751, %vm2752
        %v2754 = vsub.f32 0.0, %v2750
        %vm2755 = vcmp.gt.f32.partialorder %v2726, %v2754
        %vm2756 = vmand %vm2753, %vm2755
        %vm2757 = vcmp.gt.f32.partialorder %v2734, 0.01
        %vm2758 = vmand %vm2756, %vm2757
        %vm2759 = vcmp.le.f32.partialorder %v2734, 100.0
        %vm2760 = vmand %vm2758, %vm2759
        %v2761 = vadd.f32 %v2734, %v1521
        %v2762 = vmul.f32 %v1365, %v2723
        %v2763 = vmul.f32 %v1520, %v2726
        %v2764 = vadd.f32 %v2762, %v2763
        %v2765 = vmul.f32 %v2749, %v2764
        %v2766 = vmul.f32 %v1887, %v2765
        %v2767 = vsub.f32 %v2761, %v2766
        %v2768 = vadd.f32 %v2734, %v1839
        %v2769 = vmul.f32 %v1683, %v2723
        %v2770 = vmul.f32 %v1838, %v2726
        %v2771 = vadd.f32 %v2769, %v2770
        %v2772 = vmul.f32 %v2749, %v2771
        %v2773 = vmul.f32 %v1895, %v2772
        %v2774 = vsub.f32 %v2768, %v2773
        %v2775 = vmin.f32 %v2718, %v2767
        %v2776 = vmin.f32 %v2719, %v2774
        %vm2777 = vmand %vm2720, %vm2760
        %v2778 = vsel %vm2777, %v850, 0.0
        %v2779 = vld [vmem:[%s703] sm:$0xff]
        %v2780 = vld [vmem:[%s713] sm:$0xff]
        %v2781 = vsub.f32 64.0, %v2779
        %v2782 = vmul.f32 %v2781, 0.035452
        %v2783 = vsub.f32 %v2782, 1.134464
        %v2784 = vsub.f32 64.0, %v2780
        %v2785 = vmul.f32 %v2784, 0.1546875
        %v2786 = vadd.f32 %v2785, 0.1
        %v2787 = vmul.f32 %v858, %v858
        %v2788 = vmul.f32 %v2786, %v2786
        %v2789 = vadd.f32 %v2787, %v2788
        %v2790 = vmul.f32 %v858, 2.0
        %v2791 = vmul.f32 %v2790, %v2786
        %v2792 = vsub.f32 %v2783, %v855
        %v2793 = vmul.f32 %v2792, 0.017453292
        %v2794 = vand.u32 2147483647, %v2793
        %vm2795 = vcmp.le.f32.partialorder %v2794, 0.7853982
        %vm2796 = vcmp.lt.s32.totalorder %v2793, 0
        %v2797 = vand.u32 %v2793, 2139095040
        %v2798 = vshrl.u32 %v2797, 23
        %v2799 = vsub.s32 %v2798, 127
        %v2800 = vand.u32 2147483647, %v2793
        %v2801 = vand.u32 %v2800, 8388607
        %v2802 = vor.u32 %v2801, 8388608
        %v2803 = vsub.s32 0, %v2802
        %v2804 = vadd.s32 %v2799, 1
        %vm2805 = vcmp.gt.s32.totalorder %v2804, 0
        %v2806 = vsel %vm2805, %v2804, 0
        %v2807 = vshrl.u32 %v2806, 5
        %v2808 = vand.u32 %v2806, 31
        %v2809 = vsub.s32 32, %v2808
        %v2810 = vshrl.u32 683565275, %v2809
        %v2811 = vshll.u32 683565275, %v2808
        %v2812 = vshrl.u32 2475754826, %v2809
        %v2813 = vor.u32 %v2811, %v2812
        %v2814 = vshll.u32 2475754826, %v2808
        %v2815 = vshrl.u32 2131351028, %v2809
        %v2816 = vor.u32 %v2814, %v2815
        %v2817 = vshll.u32 2131351028, %v2808
        %v2818 = vshrl.u32 2102212464, %v2809
        %v2819 = vor.u32 %v2817, %v2818
        %v2820 = vshll.u32 2102212464, %v2808
        %v2821 = vshrl.u32 920167782, %v2809
        %v2822 = vor.u32 %v2820, %v2821
        %v2823 = vshll.u32 920167782, %v2808
        %v2824 = vshrl.u32 1326507024, %v2809
        %v2825 = vor.u32 %v2823, %v2824
        %vm2826 = vcmp.lt.s32.totalorder %v2807, 1
        %vm2827 = vcmp.lt.s32.totalorder %v2807, 2
        %vm2828 = vcmp.lt.s32.totalorder %v2807, 3
        %vm2829 = vcmp.lt.s32.totalorder %v2807, 4
        %v2830 = vsel %vm2826, %v2810, %v2813
        %v2831 = vsel %vm2829, %v2819, 2102212464
        %v2832 = vsel %vm2828, %v2816, %v2831
        %v2833 = vsel %vm2827, %v2830, %v2832
        %v2834 = vsel %vm2826, %v2813, %v2816
        %v2835 = vsel %vm2829, %v2822, 920167782
        %v2836 = vsel %vm2828, %v2819, %v2835
        %v2837 = vsel %vm2827, %v2834, %v2836
        %v2838 = vsel %vm2826, %v2816, %v2819
        %v2839 = vsel %vm2829, %v2825, 1326507024
        %v2840 = vsel %vm2828, %v2822, %v2839
        %v2841 = vsel %vm2827, %v2838, %v2840
        %v2842 = vshll.u32 %v2802, 8
        %v2843 = vand.u32 %v2842, 65535
        %v2844 = vshrl.u32 %v2842, 16
        %v2845 = vand.u32 %v2841, 65535
        %v2846 = vshrl.u32 %v2841, 16
        %v2847 = vmul.u32 %v2843, %v2845
        %v2848 = vmul.u32 %v2843, %v2846
        %v2849 = vmul.u32 %v2844, %v2845
        %v2850 = vmul.u32 %v2844, %v2846
        %v2851 = vshll.u32 %v2848, 16
        %v2852 = vshrl.u32 %v2848, 16
        %v2853 = vshll.u32 %v2849, 16
        %v2854 = vshrl.u32 %v2849, 16
        %vm2855 = vc.u32 %v2847, %v2851
        %v2856 = vsel %vm2855, 1, 0
        %v2857 = vadd.s32 %v2847, %v2851
        %v2858 = vadd.s32 %v2850, %v2856
        %vm2859 = vc.u32 %v2857, %v2853
        %v2860 = vsel %vm2859, 1, 0
        %v2861 = vadd.s32 %v2857, %v2853
        %v2862 = vadd.s32 %v2858, %v2860
        %v2863 = vadd.s32 %v2862, %v2852
        %v2864 = vadd.s32 %v2863, %v2854
        %v2865 = vand.u32 %v2842, 65535
        %v2866 = vshrl.u32 %v2842, 16
        %v2867 = vand.u32 %v2837, 65535
        %v2868 = vshrl.u32 %v2837, 16
        %v2869 = vmul.u32 %v2865, %v2867
        %v2870 = vmul.u32 %v2865, %v2868
        %v2871 = vmul.u32 %v2866, %v2867
        %v2872 = vmul.u32 %v2866, %v2868
        %v2873 = vshll.u32 %v2870, 16
        %v2874 = vshrl.u32 %v2870, 16
        %v2875 = vshll.u32 %v2871, 16
        %v2876 = vshrl.u32 %v2871, 16
        %vm2877 = vc.u32 %v2869, %v2873
        %v2878 = vsel %vm2877, 1, 0
        %v2879 = vadd.s32 %v2869, %v2873
        %v2880 = vadd.s32 %v2872, %v2878
        %vm2881 = vc.u32 %v2879, %v2875
        %v2882 = vsel %vm2881, 1, 0
        %v2883 = vadd.s32 %v2879, %v2875
        %v2884 = vadd.s32 %v2880, %v2882
        %v2885 = vadd.s32 %v2884, %v2874
        %v2886 = vadd.s32 %v2885, %v2876
        %v2887 = vmul.u32 %v2842, %v2833
        %v2888 = vadd.s32 %v2864, %v2883
        %vm2889 = vc.u32 %v2864, %v2883
        %v2890 = vadd.s32 %v2886, 1
        %v2891 = vsel %vm2889, %v2890, %v2886
        %v2892 = vadd.s32 %v2887, %v2891
        %v2893 = vadd.s32 %v2892, 536870912
        %v2894 = vshrl.u32 %v2893, 30
        %v2895 = vshll.u32 %v2894, 30
        %v2896 = vsub.s32 %v2892, %v2895
        %vm2897 = vcmp.lt.s32.totalorder %v2896, 0
        %v2898 = vsub.s32 0, %v2896
        %v2899 = vsel %vm2897, %v2898, %v2896
        %v2900 = vclz %v2899
        %v2901 = vsub.s32 %v2900, 2
        %vm2902 = vcmp.gt.s32.totalorder 0, %v2901
        %v2903 = vsel %vm2902, 0, %v2901
        %v2904 = vsub.s32 32, %v2903
        %v2905 = vshll.u32 %v2896, %v2903
        %v2906 = vshrl.u32 %v2888, %v2904
        %v2907 = vor.u32 %v2905, %v2906
        %v2908 = vsub.s32 4294967266, %v2903
        %v2909 = vadd.s32 %v2908, 127
        %v2910 = vshll.u32 %v2909, 23
        %v2911 = vor.u32 4788187, %v2910
        %v2912 = vand.u32 2147483647, %v2911
        %v2914 = vcvt.s32.f32 %v2907
        %v2915 = vmul.f32 %v2914, %v2912
        %v2916 = vxor.u32 %v2915, 2147483648
        %v2917 = vsel %vm2796, %v2916, %v2915
        %v2918 = vsub.s32 4, %v2894
        %v2919 = vsel %vm2796, %v2918, %v2894
        %v2920 = vsel %vm2795, %v2793, %v2917
        %v2921 = vsel %vm2795, 0, %v2919
        %v2922 = vmul.f32 %v2920, %v2920
        %v2923 = vmul.f32 %v2922, -0.001358992
        %v2924 = vadd.f32 %v2923, 0.041655596
        %v2925 = vmul.f32 %v2922, %v2924
        %v2926 = vadd.f32 %v2925, -0.4999988
        %v2927 = vmul.f32 %v2922, %v2926
        %v2928 = vadd.f32 1.0, %v2927
        %v2929 = vmul.f32 %v2920, %v2920
        %v2930 = vmul.f32 %v2929, -0.00019511016
        %v2931 = vadd.f32 %v2930, 0.008332121
        %v2932 = vmul.f32 %v2929, %v2931
        %v2933 = vadd.f32 %v2932, -0.16666654
        %v2934 = vmul.f32 %v2929, %v2933
        %v2935 = vadd.f32 %v2934, 1.0
        %v2936 = vmul.f32 %v2935, %v2920
        %vm2937 = vweird.f32 %v2793
        %v2938 = vand.u32 %v2921, 3
        %vm2939 = vcmp.lt.s32.totalorder %v2938, 2
        %vm2940 = vcmp.eq.s32.totalorder %v2938, 0
        %v2941 = vxor.u32 %v2936, 2147483648
        %v2942 = vsel %vm2940, %v2928, %v2941
        %vm2943 = vcmp.eq.s32.totalorder %v2938, 2
        %v2944 = vxor.u32 %v2928, 2147483648
        %v2945 = vsel %vm2943, %v2944, %v2936
        %v2946 = vsel %vm2939, %v2942, %v2945
        %v2947 = vsel %vm2937, nan, %v2946
        %v2948 = vmul.f32 %v2791, %v2947
        %v2949 = vsub.f32 %v2789, %v2948
        %v2950 = vld [vmem:[%s723] sm:$0xff]
        %v2951 = vld [vmem:[%s733] sm:$0xff]
        %v2952 = vsub.f32 64.0, %v2950
        %v2953 = vmul.f32 %v2952, 0.035452
        %v2954 = vsub.f32 %v2953, 1.134464
        %v2955 = vsub.f32 64.0, %v2951
        %v2956 = vmul.f32 %v2955, 0.1546875
        %v2957 = vadd.f32 %v2956, 0.1
        %v2958 = vmul.f32 %v2957, %v2957
        %v2959 = vadd.f32 %v2787, %v2958
        %v2960 = vmul.f32 %v2790, %v2957
        %v2961 = vsub.f32 %v2954, %v855
        %v2962 = vmul.f32 %v2961, 0.017453292
        %v2963 = vand.u32 2147483647, %v2962
        %vm2964 = vcmp.le.f32.partialorder %v2963, 0.7853982
        %vm2965 = vcmp.lt.s32.totalorder %v2962, 0
        %v2966 = vand.u32 %v2962, 2139095040
        %v2967 = vshrl.u32 %v2966, 23
        %v2968 = vsub.s32 %v2967, 127
        %v2969 = vand.u32 2147483647, %v2962
        %v2970 = vand.u32 %v2969, 8388607
        %v2971 = vor.u32 %v2970, 8388608
        %v2972 = vsub.s32 0, %v2971
        %v2973 = vadd.s32 %v2968, 1
        %vm2974 = vcmp.gt.s32.totalorder %v2973, 0
        %v2975 = vsel %vm2974, %v2973, 0
        %v2976 = vshrl.u32 %v2975, 5
        %v2977 = vand.u32 %v2975, 31
        %v2978 = vsub.s32 32, %v2977
        %v2979 = vshrl.u32 683565275, %v2978
        %v2980 = vshll.u32 683565275, %v2977
        %v2981 = vshrl.u32 2475754826, %v2978
        %v2982 = vor.u32 %v2980, %v2981
        %v2983 = vshll.u32 2475754826, %v2977
        %v2984 = vshrl.u32 2131351028, %v2978
        %v2985 = vor.u32 %v2983, %v2984
        %v2986 = vshll.u32 2131351028, %v2977
        %v2987 = vshrl.u32 2102212464, %v2978
        %v2988 = vor.u32 %v2986, %v2987
        %v2989 = vshll.u32 2102212464, %v2977
        %v2990 = vshrl.u32 920167782, %v2978
        %v2991 = vor.u32 %v2989, %v2990
        %v2992 = vshll.u32 920167782, %v2977
        %v2993 = vshrl.u32 1326507024, %v2978
        %v2994 = vor.u32 %v2992, %v2993
        %vm2995 = vcmp.lt.s32.totalorder %v2976, 1
        %vm2996 = vcmp.lt.s32.totalorder %v2976, 2
        %vm2997 = vcmp.lt.s32.totalorder %v2976, 3
        %vm2998 = vcmp.lt.s32.totalorder %v2976, 4
        %v2999 = vsel %vm2995, %v2979, %v2982
        %v3000 = vsel %vm2998, %v2988, 2102212464
        %v3001 = vsel %vm2997, %v2985, %v3000
        %v3002 = vsel %vm2996, %v2999, %v3001
        %v3003 = vsel %vm2995, %v2982, %v2985
        %v3004 = vsel %vm2998, %v2991, 920167782
        %v3005 = vsel %vm2997, %v2988, %v3004
        %v3006 = vsel %vm2996, %v3003, %v3005
        %v3007 = vsel %vm2995, %v2985, %v2988
        %v3008 = vsel %vm2998, %v2994, 1326507024
        %v3009 = vsel %vm2997, %v2991, %v3008
        %v3010 = vsel %vm2996, %v3007, %v3009
        %v3011 = vshll.u32 %v2971, 8
        %v3012 = vand.u32 %v3011, 65535
        %v3013 = vshrl.u32 %v3011, 16
        %v3014 = vand.u32 %v3010, 65535
        %v3015 = vshrl.u32 %v3010, 16
        %v3016 = vmul.u32 %v3012, %v3014
        %v3017 = vmul.u32 %v3012, %v3015
        %v3018 = vmul.u32 %v3013, %v3014
        %v3019 = vmul.u32 %v3013, %v3015
        %v3020 = vshll.u32 %v3017, 16
        %v3021 = vshrl.u32 %v3017, 16
        %v3022 = vshll.u32 %v3018, 16
        %v3023 = vshrl.u32 %v3018, 16
        %vm3024 = vc.u32 %v3016, %v3020
        %v3025 = vsel %vm3024, 1, 0
        %v3026 = vadd.s32 %v3016, %v3020
        %v3027 = vadd.s32 %v3019, %v3025
        %vm3028 = vc.u32 %v3026, %v3022
        %v3029 = vsel %vm3028, 1, 0
        %v3030 = vadd.s32 %v3026, %v3022
        %v3031 = vadd.s32 %v3027, %v3029
        %v3032 = vadd.s32 %v3031, %v3021
        %v3033 = vadd.s32 %v3032, %v3023
        %v3034 = vand.u32 %v3011, 65535
        %v3035 = vshrl.u32 %v3011, 16
        %v3036 = vand.u32 %v3006, 65535
        %v3037 = vshrl.u32 %v3006, 16
        %v3038 = vmul.u32 %v3034, %v3036
        %v3039 = vmul.u32 %v3034, %v3037
        %v3040 = vmul.u32 %v3035, %v3036
        %v3041 = vmul.u32 %v3035, %v3037
        %v3042 = vshll.u32 %v3039, 16
        %v3043 = vshrl.u32 %v3039, 16
        %v3044 = vshll.u32 %v3040, 16
        %v3045 = vshrl.u32 %v3040, 16
        %vm3046 = vc.u32 %v3038, %v3042
        %v3047 = vsel %vm3046, 1, 0
        %v3048 = vadd.s32 %v3038, %v3042
        %v3049 = vadd.s32 %v3041, %v3047
        %vm3050 = vc.u32 %v3048, %v3044
        %v3051 = vsel %vm3050, 1, 0
        %v3052 = vadd.s32 %v3048, %v3044
        %v3053 = vadd.s32 %v3049, %v3051
        %v3054 = vadd.s32 %v3053, %v3043
        %v3055 = vadd.s32 %v3054, %v3045
        %v3056 = vmul.u32 %v3011, %v3002
        %v3057 = vadd.s32 %v3033, %v3052
        %vm3058 = vc.u32 %v3033, %v3052
        %v3059 = vadd.s32 %v3055, 1
        %v3060 = vsel %vm3058, %v3059, %v3055
        %v3061 = vadd.s32 %v3056, %v3060
        %v3062 = vadd.s32 %v3061, 536870912
        %v3063 = vshrl.u32 %v3062, 30
        %v3064 = vshll.u32 %v3063, 30
        %v3065 = vsub.s32 %v3061, %v3064
        %vm3066 = vcmp.lt.s32.totalorder %v3065, 0
        %v3067 = vsub.s32 0, %v3065
        %v3068 = vsel %vm3066, %v3067, %v3065
        %v3069 = vclz %v3068
        %v3070 = vsub.s32 %v3069, 2
        %vm3071 = vcmp.gt.s32.totalorder 0, %v3070
        %v3072 = vsel %vm3071, 0, %v3070
        %v3073 = vsub.s32 32, %v3072
        %v3074 = vshll.u32 %v3065, %v3072
        %v3075 = vshrl.u32 %v3057, %v3073
        %v3076 = vor.u32 %v3074, %v3075
        %v3077 = vsub.s32 4294967266, %v3072
        %v3078 = vadd.s32 %v3077, 127
        %v3079 = vshll.u32 %v3078, 23
        %v3080 = vor.u32 4788187, %v3079
        %v3081 = vand.u32 2147483647, %v3080
        %v3083 = vcvt.s32.f32 %v3076
        %v3084 = vmul.f32 %v3083, %v3081
        %v3085 = vxor.u32 %v3084, 2147483648
        %v3086 = vsel %vm2965, %v3085, %v3084
        %v3087 = vsub.s32 4, %v3063
        %v3088 = vsel %vm2965, %v3087, %v3063
        %v3089 = vsel %vm2964, %v2962, %v3086
        %v3090 = vsel %vm2964, 0, %v3088
        %v3091 = vmul.f32 %v3089, %v3089
        %v3092 = vmul.f32 %v3091, -0.001358992
        %v3093 = vadd.f32 %v3092, 0.041655596
        %v3094 = vmul.f32 %v3091, %v3093
        %v3095 = vadd.f32 %v3094, -0.4999988
        %v3096 = vmul.f32 %v3091, %v3095
        %v3097 = vadd.f32 1.0, %v3096
        %v3098 = vmul.f32 %v3089, %v3089
        %v3099 = vmul.f32 %v3098, -0.00019511016
        %v3100 = vadd.f32 %v3099, 0.008332121
        %v3101 = vmul.f32 %v3098, %v3100
        %v3102 = vadd.f32 %v3101, -0.16666654
        %v3103 = vmul.f32 %v3098, %v3102
        %v3104 = vadd.f32 %v3103, 1.0
        %v3105 = vmul.f32 %v3104, %v3089
        %vm3106 = vweird.f32 %v2962
        %v3107 = vand.u32 %v3090, 3
        %vm3108 = vcmp.lt.s32.totalorder %v3107, 2
        %vm3109 = vcmp.eq.s32.totalorder %v3107, 0
        %v3110 = vxor.u32 %v3105, 2147483648
        %v3111 = vsel %vm3109, %v3097, %v3110
        %vm3112 = vcmp.eq.s32.totalorder %v3107, 2
        %v3113 = vxor.u32 %v3097, 2147483648
        %v3114 = vsel %vm3112, %v3113, %v3105
        %v3115 = vsel %vm3108, %v3111, %v3114
        %v3116 = vsel %vm3106, nan, %v3115
        %v3117 = vmul.f32 %v2960, %v3116
        %v3118 = vsub.f32 %v2959, %v3117
        %v3119 = vmul.f32 %v2775, %v2778
        %v3120 = vmul.f32 %v2776, %v2778
        %v3121 = vmul.f32 %v2949, %v850
        %v3122 = vmul.f32 %v3118, %v850
        %s3123 = scalar_lea.vmem %s643, 8 [#allocation6]
        %v3124 = vld [vmem:[%s3123] sm:$0xff]
        %s3125 = scalar_lea.vmem %s653, 8 [#allocation7]
        %v3126 = vld [vmem:[%s3125] sm:$0xff]
        %v3127 = vsub.f32 64.0, %v3124
        %v3128 = vmul.f32 %v3127, 0.035452
        %v3129 = vsub.f32 %v3128, 1.134464
        %v3130 = vsub.f32 64.0, %v3126
        %v3131 = vmul.f32 %v3130, 0.1546875
        %v3132 = vadd.f32 %v3131, 0.1
        %v3133 = vand.u32 2147483647, %v3129
        %vm3134 = vcmp.le.f32.partialorder %v3133, 0.7853982
        %vm3135 = vcmp.lt.s32.totalorder %v3129, 0
        %v3136 = vand.u32 %v3129, 2139095040
        %v3137 = vshrl.u32 %v3136, 23
        %v3138 = vsub.s32 %v3137, 127
        %v3139 = vand.u32 2147483647, %v3129
        %v3140 = vand.u32 %v3139, 8388607
        %v3141 = vor.u32 %v3140, 8388608
        %v3142 = vsub.s32 0, %v3141
        %v3143 = vadd.s32 %v3138, 1
        %vm3144 = vcmp.gt.s32.totalorder %v3143, 0
        %v3145 = vsel %vm3144, %v3143, 0
        %v3146 = vshrl.u32 %v3145, 5
        %v3147 = vand.u32 %v3145, 31
        %v3148 = vsub.s32 32, %v3147
        %v3149 = vshrl.u32 683565275, %v3148
        %v3150 = vshll.u32 683565275, %v3147
        %v3151 = vshrl.u32 2475754826, %v3148
        %v3152 = vor.u32 %v3150, %v3151
        %v3153 = vshll.u32 2475754826, %v3147
        %v3154 = vshrl.u32 2131351028, %v3148
        %v3155 = vor.u32 %v3153, %v3154
        %v3156 = vshll.u32 2131351028, %v3147
        %v3157 = vshrl.u32 2102212464, %v3148
        %v3158 = vor.u32 %v3156, %v3157
        %v3159 = vshll.u32 2102212464, %v3147
        %v3160 = vshrl.u32 920167782, %v3148
        %v3161 = vor.u32 %v3159, %v3160
        %v3162 = vshll.u32 920167782, %v3147
        %v3163 = vshrl.u32 1326507024, %v3148
        %v3164 = vor.u32 %v3162, %v3163
        %vm3165 = vcmp.lt.s32.totalorder %v3146, 1
        %vm3166 = vcmp.lt.s32.totalorder %v3146, 2
        %vm3167 = vcmp.lt.s32.totalorder %v3146, 3
        %vm3168 = vcmp.lt.s32.totalorder %v3146, 4
        %v3169 = vsel %vm3165, %v3149, %v3152
        %v3170 = vsel %vm3168, %v3158, 2102212464
        %v3171 = vsel %vm3167, %v3155, %v3170
        %v3172 = vsel %vm3166, %v3169, %v3171
        %v3173 = vsel %vm3165, %v3152, %v3155
        %v3174 = vsel %vm3168, %v3161, 920167782
        %v3175 = vsel %vm3167, %v3158, %v3174
        %v3176 = vsel %vm3166, %v3173, %v3175
        %v3177 = vsel %vm3165, %v3155, %v3158
        %v3178 = vsel %vm3168, %v3164, 1326507024
        %v3179 = vsel %vm3167, %v3161, %v3178
        %v3180 = vsel %vm3166, %v3177, %v3179
        %v3181 = vshll.u32 %v3141, 8
        %v3182 = vand.u32 %v3181, 65535
        %v3183 = vshrl.u32 %v3181, 16
        %v3184 = vand.u32 %v3180, 65535
        %v3185 = vshrl.u32 %v3180, 16
        %v3186 = vmul.u32 %v3182, %v3184
        %v3187 = vmul.u32 %v3182, %v3185
        %v3188 = vmul.u32 %v3183, %v3184
        %v3189 = vmul.u32 %v3183, %v3185
        %v3190 = vshll.u32 %v3187, 16
        %v3191 = vshrl.u32 %v3187, 16
        %v3192 = vshll.u32 %v3188, 16
        %v3193 = vshrl.u32 %v3188, 16
        %vm3194 = vc.u32 %v3186, %v3190
        %v3195 = vsel %vm3194, 1, 0
        %v3196 = vadd.s32 %v3186, %v3190
        %v3197 = vadd.s32 %v3189, %v3195
        %vm3198 = vc.u32 %v3196, %v3192
        %v3199 = vsel %vm3198, 1, 0
        %v3200 = vadd.s32 %v3196, %v3192
        %v3201 = vadd.s32 %v3197, %v3199
        %v3202 = vadd.s32 %v3201, %v3191
        %v3203 = vadd.s32 %v3202, %v3193
        %v3204 = vand.u32 %v3181, 65535
        %v3205 = vshrl.u32 %v3181, 16
        %v3206 = vand.u32 %v3176, 65535
        %v3207 = vshrl.u32 %v3176, 16
        %v3208 = vmul.u32 %v3204, %v3206
        %v3209 = vmul.u32 %v3204, %v3207
        %v3210 = vmul.u32 %v3205, %v3206
        %v3211 = vmul.u32 %v3205, %v3207
        %v3212 = vshll.u32 %v3209, 16
        %v3213 = vshrl.u32 %v3209, 16
        %v3214 = vshll.u32 %v3210, 16
        %v3215 = vshrl.u32 %v3210, 16
        %vm3216 = vc.u32 %v3208, %v3212
        %v3217 = vsel %vm3216, 1, 0
        %v3218 = vadd.s32 %v3208, %v3212
        %v3219 = vadd.s32 %v3211, %v3217
        %vm3220 = vc.u32 %v3218, %v3214
        %v3221 = vsel %vm3220, 1, 0
        %v3222 = vadd.s32 %v3218, %v3214
        %v3223 = vadd.s32 %v3219, %v3221
        %v3224 = vadd.s32 %v3223, %v3213
        %v3225 = vadd.s32 %v3224, %v3215
        %v3226 = vmul.u32 %v3181, %v3172
        %v3227 = vadd.s32 %v3203, %v3222
        %vm3228 = vc.u32 %v3203, %v3222
        %v3229 = vadd.s32 %v3225, 1
        %v3230 = vsel %vm3228, %v3229, %v3225
        %v3231 = vadd.s32 %v3226, %v3230
        %v3232 = vadd.s32 %v3231, 536870912
        %v3233 = vshrl.u32 %v3232, 30
        %v3234 = vshll.u32 %v3233, 30
        %v3235 = vsub.s32 %v3231, %v3234
        %vm3236 = vcmp.lt.s32.totalorder %v3235, 0
        %v3237 = vsub.s32 0, %v3235
        %v3238 = vsel %vm3236, %v3237, %v3235
        %v3239 = vclz %v3238
        %v3240 = vsub.s32 %v3239, 2
        %vm3241 = vcmp.gt.s32.totalorder 0, %v3240
        %v3242 = vsel %vm3241, 0, %v3240
        %v3243 = vsub.s32 32, %v3242
        %v3244 = vshll.u32 %v3235, %v3242
        %v3245 = vshrl.u32 %v3227, %v3243
        %v3246 = vor.u32 %v3244, %v3245
        %v3247 = vsub.s32 4294967266, %v3242
        %v3248 = vadd.s32 %v3247, 127
        %v3249 = vshll.u32 %v3248, 23
        %v3250 = vor.u32 4788187, %v3249
        %v3251 = vand.u32 2147483647, %v3250
        %v3253 = vcvt.s32.f32 %v3246
        %v3254 = vmul.f32 %v3253, %v3251
        %v3255 = vxor.u32 %v3254, 2147483648
        %v3256 = vsel %vm3135, %v3255, %v3254
        %v3257 = vsub.s32 4, %v3233
        %v3258 = vsel %vm3135, %v3257, %v3233
        %v3259 = vsel %vm3134, %v3129, %v3256
        %v3260 = vsel %vm3134, 0, %v3258
        %v3261 = vmul.f32 %v3259, %v3259
        %v3262 = vmul.f32 %v3261, -0.001358992
        %v3263 = vadd.f32 %v3262, 0.041655596
        %v3264 = vmul.f32 %v3261, %v3263
        %v3265 = vadd.f32 %v3264, -0.4999988
        %v3266 = vmul.f32 %v3261, %v3265
        %v3267 = vadd.f32 1.0, %v3266
        %v3268 = vmul.f32 %v3259, %v3259
        %v3269 = vmul.f32 %v3268, -0.00019511016
        %v3270 = vadd.f32 %v3269, 0.008332121
        %v3271 = vmul.f32 %v3268, %v3270
        %v3272 = vadd.f32 %v3271, -0.16666654
        %v3273 = vmul.f32 %v3268, %v3272
        %v3274 = vadd.f32 %v3273, 1.0
        %v3275 = vmul.f32 %v3274, %v3259
        %vm3276 = vweird.f32 %v3129
        %v3277 = vand.u32 %v3260, 3
        %vm3278 = vcmp.lt.s32.totalorder %v3277, 2
        %vm3279 = vcmp.eq.s32.totalorder %v3277, 0
        %v3280 = vxor.u32 %v3275, 2147483648
        %v3281 = vsel %vm3279, %v3267, %v3280
        %vm3282 = vcmp.eq.s32.totalorder %v3277, 2
        %v3283 = vxor.u32 %v3267, 2147483648
        %v3284 = vsel %vm3282, %v3283, %v3275
        %v3285 = vsel %vm3278, %v3281, %v3284
        %v3286 = vsel %vm3276, nan, %v3285
        %v3287 = vand.u32 2147483647, %v3129
        %vm3288 = vcmp.le.f32.partialorder %v3287, 0.7853982
        %vm3289 = vcmp.lt.s32.totalorder %v3129, 0
        %v3290 = vand.u32 %v3129, 2139095040
        %v3291 = vshrl.u32 %v3290, 23
        %v3292 = vsub.s32 %v3291, 127
        %v3293 = vand.u32 2147483647, %v3129
        %v3294 = vand.u32 %v3293, 8388607
        %v3295 = vor.u32 %v3294, 8388608
        %v3296 = vsub.s32 0, %v3295
        %v3297 = vadd.s32 %v3292, 1
        %vm3298 = vcmp.gt.s32.totalorder %v3297, 0
        %v3299 = vsel %vm3298, %v3297, 0
        %v3300 = vshrl.u32 %v3299, 5
        %v3301 = vand.u32 %v3299, 31
        %v3302 = vsub.s32 32, %v3301
        %v3303 = vshrl.u32 683565275, %v3302
        %v3304 = vshll.u32 683565275, %v3301
        %v3305 = vshrl.u32 2475754826, %v3302
        %v3306 = vor.u32 %v3304, %v3305
        %v3307 = vshll.u32 2475754826, %v3301
        %v3308 = vshrl.u32 2131351028, %v3302
        %v3309 = vor.u32 %v3307, %v3308
        %v3310 = vshll.u32 2131351028, %v3301
        %v3311 = vshrl.u32 2102212464, %v3302
        %v3312 = vor.u32 %v3310, %v3311
        %v3313 = vshll.u32 2102212464, %v3301
        %v3314 = vshrl.u32 920167782, %v3302
        %v3315 = vor.u32 %v3313, %v3314
        %v3316 = vshll.u32 920167782, %v3301
        %v3317 = vshrl.u32 1326507024, %v3302
        %v3318 = vor.u32 %v3316, %v3317
        %vm3319 = vcmp.lt.s32.totalorder %v3300, 1
        %vm3320 = vcmp.lt.s32.totalorder %v3300, 2
        %vm3321 = vcmp.lt.s32.totalorder %v3300, 3
        %vm3322 = vcmp.lt.s32.totalorder %v3300, 4
        %v3323 = vsel %vm3319, %v3303, %v3306
        %v3324 = vsel %vm3322, %v3312, 2102212464
        %v3325 = vsel %vm3321, %v3309, %v3324
        %v3326 = vsel %vm3320, %v3323, %v3325
        %v3327 = vsel %vm3319, %v3306, %v3309
        %v3328 = vsel %vm3322, %v3315, 920167782
        %v3329 = vsel %vm3321, %v3312, %v3328
        %v3330 = vsel %vm3320, %v3327, %v3329
        %v3331 = vsel %vm3319, %v3309, %v3312
        %v3332 = vsel %vm3322, %v3318, 1326507024
        %v3333 = vsel %vm3321, %v3315, %v3332
        %v3334 = vsel %vm3320, %v3331, %v3333
        %v3335 = vshll.u32 %v3295, 8
        %v3336 = vand.u32 %v3335, 65535
        %v3337 = vshrl.u32 %v3335, 16
        %v3338 = vand.u32 %v3334, 65535
        %v3339 = vshrl.u32 %v3334, 16
        %v3340 = vmul.u32 %v3336, %v3338
        %v3341 = vmul.u32 %v3336, %v3339
        %v3342 = vmul.u32 %v3337, %v3338
        %v3343 = vmul.u32 %v3337, %v3339
        %v3344 = vshll.u32 %v3341, 16
        %v3345 = vshrl.u32 %v3341, 16
        %v3346 = vshll.u32 %v3342, 16
        %v3347 = vshrl.u32 %v3342, 16
        %vm3348 = vc.u32 %v3340, %v3344
        %v3349 = vsel %vm3348, 1, 0
        %v3350 = vadd.s32 %v3340, %v3344
        %v3351 = vadd.s32 %v3343, %v3349
        %vm3352 = vc.u32 %v3350, %v3346
        %v3353 = vsel %vm3352, 1, 0
        %v3354 = vadd.s32 %v3350, %v3346
        %v3355 = vadd.s32 %v3351, %v3353
        %v3356 = vadd.s32 %v3355, %v3345
        %v3357 = vadd.s32 %v3356, %v3347
        %v3358 = vand.u32 %v3335, 65535
        %v3359 = vshrl.u32 %v3335, 16
        %v3360 = vand.u32 %v3330, 65535
        %v3361 = vshrl.u32 %v3330, 16
        %v3362 = vmul.u32 %v3358, %v3360
        %v3363 = vmul.u32 %v3358, %v3361
        %v3364 = vmul.u32 %v3359, %v3360
        %v3365 = vmul.u32 %v3359, %v3361
        %v3366 = vshll.u32 %v3363, 16
        %v3367 = vshrl.u32 %v3363, 16
        %v3368 = vshll.u32 %v3364, 16
        %v3369 = vshrl.u32 %v3364, 16
        %vm3370 = vc.u32 %v3362, %v3366
        %v3371 = vsel %vm3370, 1, 0
        %v3372 = vadd.s32 %v3362, %v3366
        %v3373 = vadd.s32 %v3365, %v3371
        %vm3374 = vc.u32 %v3372, %v3368
        %v3375 = vsel %vm3374, 1, 0
        %v3376 = vadd.s32 %v3372, %v3368
        %v3377 = vadd.s32 %v3373, %v3375
        %v3378 = vadd.s32 %v3377, %v3367
        %v3379 = vadd.s32 %v3378, %v3369
        %v3380 = vmul.u32 %v3335, %v3326
        %v3381 = vadd.s32 %v3357, %v3376
        %vm3382 = vc.u32 %v3357, %v3376
        %v3383 = vadd.s32 %v3379, 1
        %v3384 = vsel %vm3382, %v3383, %v3379
        %v3385 = vadd.s32 %v3380, %v3384
        %v3386 = vadd.s32 %v3385, 536870912
        %v3387 = vshrl.u32 %v3386, 30
        %v3388 = vshll.u32 %v3387, 30
        %v3389 = vsub.s32 %v3385, %v3388
        %vm3390 = vcmp.lt.s32.totalorder %v3389, 0
        %v3391 = vsub.s32 0, %v3389
        %v3392 = vsel %vm3390, %v3391, %v3389
        %v3393 = vclz %v3392
        %v3394 = vsub.s32 %v3393, 2
        %vm3395 = vcmp.gt.s32.totalorder 0, %v3394
        %v3396 = vsel %vm3395, 0, %v3394
        %v3397 = vsub.s32 32, %v3396
        %v3398 = vshll.u32 %v3389, %v3396
        %v3399 = vshrl.u32 %v3381, %v3397
        %v3400 = vor.u32 %v3398, %v3399
        %v3401 = vsub.s32 4294967266, %v3396
        %v3402 = vadd.s32 %v3401, 127
        %v3403 = vshll.u32 %v3402, 23
        %v3404 = vor.u32 4788187, %v3403
        %v3405 = vand.u32 2147483647, %v3404
        %v3407 = vcvt.s32.f32 %v3400
        %v3408 = vmul.f32 %v3407, %v3405
        %v3409 = vxor.u32 %v3408, 2147483648
        %v3410 = vsel %vm3289, %v3409, %v3408
        %v3411 = vsub.s32 4, %v3387
        %v3412 = vsel %vm3289, %v3411, %v3387
        %v3413 = vsel %vm3288, %v3129, %v3410
        %v3414 = vsel %vm3288, 0, %v3412
        %v3415 = vmul.f32 %v3413, %v3413
        %v3416 = vmul.f32 %v3415, -0.001358992
        %v3417 = vadd.f32 %v3416, 0.041655596
        %v3418 = vmul.f32 %v3415, %v3417
        %v3419 = vadd.f32 %v3418, -0.4999988
        %v3420 = vmul.f32 %v3415, %v3419
        %v3421 = vadd.f32 1.0, %v3420
        %v3422 = vmul.f32 %v3413, %v3413
        %v3423 = vmul.f32 %v3422, -0.00019511016
        %v3424 = vadd.f32 %v3423, 0.008332121
        %v3425 = vmul.f32 %v3422, %v3424
        %v3426 = vadd.f32 %v3425, -0.16666654
        %v3427 = vmul.f32 %v3422, %v3426
        %v3428 = vadd.f32 %v3427, 1.0
        %v3429 = vmul.f32 %v3428, %v3413
        %vm3430 = vweird.f32 %v3129
        %v3431 = vadd.s32 %v3414, 3
        %v3432 = vand.u32 %v3431, 3
        %vm3433 = vcmp.lt.s32.totalorder %v3432, 2
        %vm3434 = vcmp.eq.s32.totalorder %v3432, 0
        %v3435 = vxor.u32 %v3429, 2147483648
        %v3436 = vsel %vm3434, %v3421, %v3435
        %vm3437 = vcmp.eq.s32.totalorder %v3432, 2
        %v3438 = vxor.u32 %v3421, 2147483648
        %v3439 = vsel %vm3437, %v3438, %v3429
        %v3440 = vsel %vm3433, %v3436, %v3439
        %v3441 = vsel %vm3430, nan, %v3440
        %v3442 = vmul.f32 %v3132, %v3286
        %v3443 = vmul.f32 %v3132, %v3441
        %v3444 = vsub.f32 0.0, %v3132
        %s3445 = sld [smem:[#allocation2 + $0xc]]
        %s3446 = sld [smem:[#allocation2 + $0xd]]
        %s3447 = sld [smem:[#allocation2 + $0xe]]
        %s3448 = sld [smem:[#allocation2 + $0xf]]
        %s3449 = sld [smem:[#allocation2 + $0x10]]
        %s3450 = sld [smem:[#allocation2 + $0x11]]
        %s3451 = sld [smem:[#allocation2 + $0x12]]
        %s3452 = sld [smem:[#allocation2 + $0x13]]
        %s3453 = sld [smem:[#allocation2 + $0x14]]
        %s3454 = sld [smem:[#allocation2 + $0x15]]
        %s3455 = sld [smem:[#allocation2 + $0x16]]
        %s3456 = sld [smem:[#allocation2 + $0x17]]
        %v3457 = vstv %s3445
        %v3458 = vmul.f32 %v3457, %v3442
        %v3459 = vstv %s3446
        %v3460 = vmul.f32 %v3459, %v3443
        %v3461 = vadd.f32 %v3458, %v3460
        %v3462 = vstv %s3447
        %v3463 = vmul.f32 %v3462, %v3444
        %v3464 = vstv %s3448
        %v3465 = vmul.f32 %v3464, %v3442
        %v3466 = vstv %s3449
        %v3467 = vmul.f32 %v3466, %v3443
        %v3468 = vadd.f32 %v3465, %v3467
        %v3469 = vstv %s3450
        %v3470 = vmul.f32 %v3469, %v3444
        %v3471 = vstv %s3451
        %v3472 = vmul.f32 %v3471, %v3442
        %v3473 = vstv %s3452
        %v3474 = vmul.f32 %v3473, %v3443
        %v3475 = vadd.f32 %v3472, %v3474
        %v3476 = vstv %s3453
        %v3477 = vmul.f32 %v3476, %v3444
        %s3478 = scalar_lea.vmem %s663, 8 [#allocation9]
        %v3479 = vld [vmem:[%s3478] sm:$0xff]
        %s3480 = scalar_lea.vmem %s673, 8 [#allocation10]
        %v3481 = vld [vmem:[%s3480] sm:$0xff]
        %v3482 = vsub.f32 64.0, %v3479
        %v3483 = vmul.f32 %v3482, 0.035452
        %v3484 = vsub.f32 %v3483, 1.134464
        %v3485 = vsub.f32 64.0, %v3481
        %v3486 = vmul.f32 %v3485, 0.1546875
        %v3487 = vadd.f32 %v3486, 0.1
        %v3488 = vand.u32 2147483647, %v3484
        %vm3489 = vcmp.le.f32.partialorder %v3488, 0.7853982
        %vm3490 = vcmp.lt.s32.totalorder %v3484, 0
        %v3491 = vand.u32 %v3484, 2139095040
        %v3492 = vshrl.u32 %v3491, 23
        %v3493 = vsub.s32 %v3492, 127
        %v3494 = vand.u32 2147483647, %v3484
        %v3495 = vand.u32 %v3494, 8388607
        %v3496 = vor.u32 %v3495, 8388608
        %v3497 = vsub.s32 0, %v3496
        %v3498 = vadd.s32 %v3493, 1
        %vm3499 = vcmp.gt.s32.totalorder %v3498, 0
        %v3500 = vsel %vm3499, %v3498, 0
        %v3501 = vshrl.u32 %v3500, 5
        %v3502 = vand.u32 %v3500, 31
        %v3503 = vsub.s32 32, %v3502
        %v3504 = vshrl.u32 683565275, %v3503
        %v3505 = vshll.u32 683565275, %v3502
        %v3506 = vshrl.u32 2475754826, %v3503
        %v3507 = vor.u32 %v3505, %v3506
        %v3508 = vshll.u32 2475754826, %v3502
        %v3509 = vshrl.u32 2131351028, %v3503
        %v3510 = vor.u32 %v3508, %v3509
        %v3511 = vshll.u32 2131351028, %v3502
        %v3512 = vshrl.u32 2102212464, %v3503
        %v3513 = vor.u32 %v3511, %v3512
        %v3514 = vshll.u32 2102212464, %v3502
        %v3515 = vshrl.u32 920167782, %v3503
        %v3516 = vor.u32 %v3514, %v3515
        %v3517 = vshll.u32 920167782, %v3502
        %v3518 = vshrl.u32 1326507024, %v3503
        %v3519 = vor.u32 %v3517, %v3518
        %vm3520 = vcmp.lt.s32.totalorder %v3501, 1
        %vm3521 = vcmp.lt.s32.totalorder %v3501, 2
        %vm3522 = vcmp.lt.s32.totalorder %v3501, 3
        %vm3523 = vcmp.lt.s32.totalorder %v3501, 4
        %v3524 = vsel %vm3520, %v3504, %v3507
        %v3525 = vsel %vm3523, %v3513, 2102212464
        %v3526 = vsel %vm3522, %v3510, %v3525
        %v3527 = vsel %vm3521, %v3524, %v3526
        %v3528 = vsel %vm3520, %v3507, %v3510
        %v3529 = vsel %vm3523, %v3516, 920167782
        %v3530 = vsel %vm3522, %v3513, %v3529
        %v3531 = vsel %vm3521, %v3528, %v3530
        %v3532 = vsel %vm3520, %v3510, %v3513
        %v3533 = vsel %vm3523, %v3519, 1326507024
        %v3534 = vsel %vm3522, %v3516, %v3533
        %v3535 = vsel %vm3521, %v3532, %v3534
        %v3536 = vshll.u32 %v3496, 8
        %v3537 = vand.u32 %v3536, 65535
        %v3538 = vshrl.u32 %v3536, 16
        %v3539 = vand.u32 %v3535, 65535
        %v3540 = vshrl.u32 %v3535, 16
        %v3541 = vmul.u32 %v3537, %v3539
        %v3542 = vmul.u32 %v3537, %v3540
        %v3543 = vmul.u32 %v3538, %v3539
        %v3544 = vmul.u32 %v3538, %v3540
        %v3545 = vshll.u32 %v3542, 16
        %v3546 = vshrl.u32 %v3542, 16
        %v3547 = vshll.u32 %v3543, 16
        %v3548 = vshrl.u32 %v3543, 16
        %vm3549 = vc.u32 %v3541, %v3545
        %v3550 = vsel %vm3549, 1, 0
        %v3551 = vadd.s32 %v3541, %v3545
        %v3552 = vadd.s32 %v3544, %v3550
        %vm3553 = vc.u32 %v3551, %v3547
        %v3554 = vsel %vm3553, 1, 0
        %v3555 = vadd.s32 %v3551, %v3547
        %v3556 = vadd.s32 %v3552, %v3554
        %v3557 = vadd.s32 %v3556, %v3546
        %v3558 = vadd.s32 %v3557, %v3548
        %v3559 = vand.u32 %v3536, 65535
        %v3560 = vshrl.u32 %v3536, 16
        %v3561 = vand.u32 %v3531, 65535
        %v3562 = vshrl.u32 %v3531, 16
        %v3563 = vmul.u32 %v3559, %v3561
        %v3564 = vmul.u32 %v3559, %v3562
        %v3565 = vmul.u32 %v3560, %v3561
        %v3566 = vmul.u32 %v3560, %v3562
        %v3567 = vshll.u32 %v3564, 16
        %v3568 = vshrl.u32 %v3564, 16
        %v3569 = vshll.u32 %v3565, 16
        %v3570 = vshrl.u32 %v3565, 16
        %vm3571 = vc.u32 %v3563, %v3567
        %v3572 = vsel %vm3571, 1, 0
        %v3573 = vadd.s32 %v3563, %v3567
        %v3574 = vadd.s32 %v3566, %v3572
        %vm3575 = vc.u32 %v3573, %v3569
        %v3576 = vsel %vm3575, 1, 0
        %v3577 = vadd.s32 %v3573, %v3569
        %v3578 = vadd.s32 %v3574, %v3576
        %v3579 = vadd.s32 %v3578, %v3568
        %v3580 = vadd.s32 %v3579, %v3570
        %v3581 = vmul.u32 %v3536, %v3527
        %v3582 = vadd.s32 %v3558, %v3577
        %vm3583 = vc.u32 %v3558, %v3577
        %v3584 = vadd.s32 %v3580, 1
        %v3585 = vsel %vm3583, %v3584, %v3580
        %v3586 = vadd.s32 %v3581, %v3585
        %v3587 = vadd.s32 %v3586, 536870912
        %v3588 = vshrl.u32 %v3587, 30
        %v3589 = vshll.u32 %v3588, 30
        %v3590 = vsub.s32 %v3586, %v3589
        %vm3591 = vcmp.lt.s32.totalorder %v3590, 0
        %v3592 = vsub.s32 0, %v3590
        %v3593 = vsel %vm3591, %v3592, %v3590
        %v3594 = vclz %v3593
        %v3595 = vsub.s32 %v3594, 2
        %vm3596 = vcmp.gt.s32.totalorder 0, %v3595
        %v3597 = vsel %vm3596, 0, %v3595
        %v3598 = vsub.s32 32, %v3597
        %v3599 = vshll.u32 %v3590, %v3597
        %v3600 = vshrl.u32 %v3582, %v3598
        %v3601 = vor.u32 %v3599, %v3600
        %v3602 = vsub.s32 4294967266, %v3597
        %v3603 = vadd.s32 %v3602, 127
        %v3604 = vshll.u32 %v3603, 23
        %v3605 = vor.u32 4788187, %v3604
        %v3606 = vand.u32 2147483647, %v3605
        %v3608 = vcvt.s32.f32 %v3601
        %v3609 = vmul.f32 %v3608, %v3606
        %v3610 = vxor.u32 %v3609, 2147483648
        %v3611 = vsel %vm3490, %v3610, %v3609
        %v3612 = vsub.s32 4, %v3588
        %v3613 = vsel %vm3490, %v3612, %v3588
        %v3614 = vsel %vm3489, %v3484, %v3611
        %v3615 = vsel %vm3489, 0, %v3613
        %v3616 = vmul.f32 %v3614, %v3614
        %v3617 = vmul.f32 %v3616, -0.001358992
        %v3618 = vadd.f32 %v3617, 0.041655596
        %v3619 = vmul.f32 %v3616, %v3618
        %v3620 = vadd.f32 %v3619, -0.4999988
        %v3621 = vmul.f32 %v3616, %v3620
        %v3622 = vadd.f32 1.0, %v3621
        %v3623 = vmul.f32 %v3614, %v3614
        %v3624 = vmul.f32 %v3623, -0.00019511016
        %v3625 = vadd.f32 %v3624, 0.008332121
        %v3626 = vmul.f32 %v3623, %v3625
        %v3627 = vadd.f32 %v3626, -0.16666654
        %v3628 = vmul.f32 %v3623, %v3627
        %v3629 = vadd.f32 %v3628, 1.0
        %v3630 = vmul.f32 %v3629, %v3614
        %vm3631 = vweird.f32 %v3484
        %v3632 = vand.u32 %v3615, 3
        %vm3633 = vcmp.lt.s32.totalorder %v3632, 2
        %vm3634 = vcmp.eq.s32.totalorder %v3632, 0
        %v3635 = vxor.u32 %v3630, 2147483648
        %v3636 = vsel %vm3634, %v3622, %v3635
        %vm3637 = vcmp.eq.s32.totalorder %v3632, 2
        %v3638 = vxor.u32 %v3622, 2147483648
        %v3639 = vsel %vm3637, %v3638, %v3630
        %v3640 = vsel %vm3633, %v3636, %v3639
        %v3641 = vsel %vm3631, nan, %v3640
        %v3642 = vand.u32 2147483647, %v3484
        %vm3643 = vcmp.le.f32.partialorder %v3642, 0.7853982
        %vm3644 = vcmp.lt.s32.totalorder %v3484, 0
        %v3645 = vand.u32 %v3484, 2139095040
        %v3646 = vshrl.u32 %v3645, 23
        %v3647 = vsub.s32 %v3646, 127
        %v3648 = vand.u32 2147483647, %v3484
        %v3649 = vand.u32 %v3648, 8388607
        %v3650 = vor.u32 %v3649, 8388608
        %v3651 = vsub.s32 0, %v3650
        %v3652 = vadd.s32 %v3647, 1
        %vm3653 = vcmp.gt.s32.totalorder %v3652, 0
        %v3654 = vsel %vm3653, %v3652, 0
        %v3655 = vshrl.u32 %v3654, 5
        %v3656 = vand.u32 %v3654, 31
        %v3657 = vsub.s32 32, %v3656
        %v3658 = vshrl.u32 683565275, %v3657
        %v3659 = vshll.u32 683565275, %v3656
        %v3660 = vshrl.u32 2475754826, %v3657
        %v3661 = vor.u32 %v3659, %v3660
        %v3662 = vshll.u32 2475754826, %v3656
        %v3663 = vshrl.u32 2131351028, %v3657
        %v3664 = vor.u32 %v3662, %v3663
        %v3665 = vshll.u32 2131351028, %v3656
        %v3666 = vshrl.u32 2102212464, %v3657
        %v3667 = vor.u32 %v3665, %v3666
        %v3668 = vshll.u32 2102212464, %v3656
        %v3669 = vshrl.u32 920167782, %v3657
        %v3670 = vor.u32 %v3668, %v3669
        %v3671 = vshll.u32 920167782, %v3656
        %v3672 = vshrl.u32 1326507024, %v3657
        %v3673 = vor.u32 %v3671, %v3672
        %vm3674 = vcmp.lt.s32.totalorder %v3655, 1
        %vm3675 = vcmp.lt.s32.totalorder %v3655, 2
        %vm3676 = vcmp.lt.s32.totalorder %v3655, 3
        %vm3677 = vcmp.lt.s32.totalorder %v3655, 4
        %v3678 = vsel %vm3674, %v3658, %v3661
        %v3679 = vsel %vm3677, %v3667, 2102212464
        %v3680 = vsel %vm3676, %v3664, %v3679
        %v3681 = vsel %vm3675, %v3678, %v3680
        %v3682 = vsel %vm3674, %v3661, %v3664
        %v3683 = vsel %vm3677, %v3670, 920167782
        %v3684 = vsel %vm3676, %v3667, %v3683
        %v3685 = vsel %vm3675, %v3682, %v3684
        %v3686 = vsel %vm3674, %v3664, %v3667
        %v3687 = vsel %vm3677, %v3673, 1326507024
        %v3688 = vsel %vm3676, %v3670, %v3687
        %v3689 = vsel %vm3675, %v3686, %v3688
        %v3690 = vshll.u32 %v3650, 8
        %v3691 = vand.u32 %v3690, 65535
        %v3692 = vshrl.u32 %v3690, 16
        %v3693 = vand.u32 %v3689, 65535
        %v3694 = vshrl.u32 %v3689, 16
        %v3695 = vmul.u32 %v3691, %v3693
        %v3696 = vmul.u32 %v3691, %v3694
        %v3697 = vmul.u32 %v3692, %v3693
        %v3698 = vmul.u32 %v3692, %v3694
        %v3699 = vshll.u32 %v3696, 16
        %v3700 = vshrl.u32 %v3696, 16
        %v3701 = vshll.u32 %v3697, 16
        %v3702 = vshrl.u32 %v3697, 16
        %vm3703 = vc.u32 %v3695, %v3699
        %v3704 = vsel %vm3703, 1, 0
        %v3705 = vadd.s32 %v3695, %v3699
        %v3706 = vadd.s32 %v3698, %v3704
        %vm3707 = vc.u32 %v3705, %v3701
        %v3708 = vsel %vm3707, 1, 0
        %v3709 = vadd.s32 %v3705, %v3701
        %v3710 = vadd.s32 %v3706, %v3708
        %v3711 = vadd.s32 %v3710, %v3700
        %v3712 = vadd.s32 %v3711, %v3702
        %v3713 = vand.u32 %v3690, 65535
        %v3714 = vshrl.u32 %v3690, 16
        %v3715 = vand.u32 %v3685, 65535
        %v3716 = vshrl.u32 %v3685, 16
        %v3717 = vmul.u32 %v3713, %v3715
        %v3718 = vmul.u32 %v3713, %v3716
        %v3719 = vmul.u32 %v3714, %v3715
        %v3720 = vmul.u32 %v3714, %v3716
        %v3721 = vshll.u32 %v3718, 16
        %v3722 = vshrl.u32 %v3718, 16
        %v3723 = vshll.u32 %v3719, 16
        %v3724 = vshrl.u32 %v3719, 16
        %vm3725 = vc.u32 %v3717, %v3721
        %v3726 = vsel %vm3725, 1, 0
        %v3727 = vadd.s32 %v3717, %v3721
        %v3728 = vadd.s32 %v3720, %v3726
        %vm3729 = vc.u32 %v3727, %v3723
        %v3730 = vsel %vm3729, 1, 0
        %v3731 = vadd.s32 %v3727, %v3723
        %v3732 = vadd.s32 %v3728, %v3730
        %v3733 = vadd.s32 %v3732, %v3722
        %v3734 = vadd.s32 %v3733, %v3724
        %v3735 = vmul.u32 %v3690, %v3681
        %v3736 = vadd.s32 %v3712, %v3731
        %vm3737 = vc.u32 %v3712, %v3731
        %v3738 = vadd.s32 %v3734, 1
        %v3739 = vsel %vm3737, %v3738, %v3734
        %v3740 = vadd.s32 %v3735, %v3739
        %v3741 = vadd.s32 %v3740, 536870912
        %v3742 = vshrl.u32 %v3741, 30
        %v3743 = vshll.u32 %v3742, 30
        %v3744 = vsub.s32 %v3740, %v3743
        %vm3745 = vcmp.lt.s32.totalorder %v3744, 0
        %v3746 = vsub.s32 0, %v3744
        %v3747 = vsel %vm3745, %v3746, %v3744
        %v3748 = vclz %v3747
        %v3749 = vsub.s32 %v3748, 2
        %vm3750 = vcmp.gt.s32.totalorder 0, %v3749
        %v3751 = vsel %vm3750, 0, %v3749
        %v3752 = vsub.s32 32, %v3751
        %v3753 = vshll.u32 %v3744, %v3751
        %v3754 = vshrl.u32 %v3736, %v3752
        %v3755 = vor.u32 %v3753, %v3754
        %v3756 = vsub.s32 4294967266, %v3751
        %v3757 = vadd.s32 %v3756, 127
        %v3758 = vshll.u32 %v3757, 23
        %v3759 = vor.u32 4788187, %v3758
        %v3760 = vand.u32 2147483647, %v3759
        %v3762 = vcvt.s32.f32 %v3755
        %v3763 = vmul.f32 %v3762, %v3760
        %v3764 = vxor.u32 %v3763, 2147483648
        %v3765 = vsel %vm3644, %v3764, %v3763
        %v3766 = vsub.s32 4, %v3742
        %v3767 = vsel %vm3644, %v3766, %v3742
        %v3768 = vsel %vm3643, %v3484, %v3765
        %v3769 = vsel %vm3643, 0, %v3767
        %v3770 = vmul.f32 %v3768, %v3768
        %v3771 = vmul.f32 %v3770, -0.001358992
        %v3772 = vadd.f32 %v3771, 0.041655596
        %v3773 = vmul.f32 %v3770, %v3772
        %v3774 = vadd.f32 %v3773, -0.4999988
        %v3775 = vmul.f32 %v3770, %v3774
        %v3776 = vadd.f32 1.0, %v3775
        %v3777 = vmul.f32 %v3768, %v3768
        %v3778 = vmul.f32 %v3777, -0.00019511016
        %v3779 = vadd.f32 %v3778, 0.008332121
        %v3780 = vmul.f32 %v3777, %v3779
        %v3781 = vadd.f32 %v3780, -0.16666654
        %v3782 = vmul.f32 %v3777, %v3781
        %v3783 = vadd.f32 %v3782, 1.0
        %v3784 = vmul.f32 %v3783, %v3768
        %vm3785 = vweird.f32 %v3484
        %v3786 = vadd.s32 %v3769, 3
        %v3787 = vand.u32 %v3786, 3
        %vm3788 = vcmp.lt.s32.totalorder %v3787, 2
        %vm3789 = vcmp.eq.s32.totalorder %v3787, 0
        %v3790 = vxor.u32 %v3784, 2147483648
        %v3791 = vsel %vm3789, %v3776, %v3790
        %vm3792 = vcmp.eq.s32.totalorder %v3787, 2
        %v3793 = vxor.u32 %v3776, 2147483648
        %v3794 = vsel %vm3792, %v3793, %v3784
        %v3795 = vsel %vm3788, %v3791, %v3794
        %v3796 = vsel %vm3785, nan, %v3795
        %v3797 = vmul.f32 %v3487, %v3487
        %s3798 = scalar_lea.vmem %s683, 8 [#allocation12]
        %v3799 = vld [vmem:[%s3798] sm:$0xff]
        %s3800 = scalar_lea.vmem %s693, 8 [#allocation13]
        %v3801 = vld [vmem:[%s3800] sm:$0xff]
        %v3802 = vsub.f32 64.0, %v3799
        %v3803 = vmul.f32 %v3802, 0.035452
        %v3804 = vsub.f32 %v3803, 1.134464
        %v3805 = vsub.f32 64.0, %v3801
        %v3806 = vmul.f32 %v3805, 0.1546875
        %v3807 = vadd.f32 %v3806, 0.1
        %v3808 = vand.u32 2147483647, %v3804
        %vm3809 = vcmp.le.f32.partialorder %v3808, 0.7853982
        %vm3810 = vcmp.lt.s32.totalorder %v3804, 0
        %v3811 = vand.u32 %v3804, 2139095040
        %v3812 = vshrl.u32 %v3811, 23
        %v3813 = vsub.s32 %v3812, 127
        %v3814 = vand.u32 2147483647, %v3804
        %v3815 = vand.u32 %v3814, 8388607
        %v3816 = vor.u32 %v3815, 8388608
        %v3817 = vsub.s32 0, %v3816
        %v3818 = vadd.s32 %v3813, 1
        %vm3819 = vcmp.gt.s32.totalorder %v3818, 0
        %v3820 = vsel %vm3819, %v3818, 0
        %v3821 = vshrl.u32 %v3820, 5
        %v3822 = vand.u32 %v3820, 31
        %v3823 = vsub.s32 32, %v3822
        %v3824 = vshrl.u32 683565275, %v3823
        %v3825 = vshll.u32 683565275, %v3822
        %v3826 = vshrl.u32 2475754826, %v3823
        %v3827 = vor.u32 %v3825, %v3826
        %v3828 = vshll.u32 2475754826, %v3822
        %v3829 = vshrl.u32 2131351028, %v3823
        %v3830 = vor.u32 %v3828, %v3829
        %v3831 = vshll.u32 2131351028, %v3822
        %v3832 = vshrl.u32 2102212464, %v3823
        %v3833 = vor.u32 %v3831, %v3832
        %v3834 = vshll.u32 2102212464, %v3822
        %v3835 = vshrl.u32 920167782, %v3823
        %v3836 = vor.u32 %v3834, %v3835
        %v3837 = vshll.u32 920167782, %v3822
        %v3838 = vshrl.u32 1326507024, %v3823
        %v3839 = vor.u32 %v3837, %v3838
        %vm3840 = vcmp.lt.s32.totalorder %v3821, 1
        %vm3841 = vcmp.lt.s32.totalorder %v3821, 2
        %vm3842 = vcmp.lt.s32.totalorder %v3821, 3
        %vm3843 = vcmp.lt.s32.totalorder %v3821, 4
        %v3844 = vsel %vm3840, %v3824, %v3827
        %v3845 = vsel %vm3843, %v3833, 2102212464
        %v3846 = vsel %vm3842, %v3830, %v3845
        %v3847 = vsel %vm3841, %v3844, %v3846
        %v3848 = vsel %vm3840, %v3827, %v3830
        %v3849 = vsel %vm3843, %v3836, 920167782
        %v3850 = vsel %vm3842, %v3833, %v3849
        %v3851 = vsel %vm3841, %v3848, %v3850
        %v3852 = vsel %vm3840, %v3830, %v3833
        %v3853 = vsel %vm3843, %v3839, 1326507024
        %v3854 = vsel %vm3842, %v3836, %v3853
        %v3855 = vsel %vm3841, %v3852, %v3854
        %v3856 = vshll.u32 %v3816, 8
        %v3857 = vand.u32 %v3856, 65535
        %v3858 = vshrl.u32 %v3856, 16
        %v3859 = vand.u32 %v3855, 65535
        %v3860 = vshrl.u32 %v3855, 16
        %v3861 = vmul.u32 %v3857, %v3859
        %v3862 = vmul.u32 %v3857, %v3860
        %v3863 = vmul.u32 %v3858, %v3859
        %v3864 = vmul.u32 %v3858, %v3860
        %v3865 = vshll.u32 %v3862, 16
        %v3866 = vshrl.u32 %v3862, 16
        %v3867 = vshll.u32 %v3863, 16
        %v3868 = vshrl.u32 %v3863, 16
        %vm3869 = vc.u32 %v3861, %v3865
        %v3870 = vsel %vm3869, 1, 0
        %v3871 = vadd.s32 %v3861, %v3865
        %v3872 = vadd.s32 %v3864, %v3870
        %vm3873 = vc.u32 %v3871, %v3867
        %v3874 = vsel %vm3873, 1, 0
        %v3875 = vadd.s32 %v3871, %v3867
        %v3876 = vadd.s32 %v3872, %v3874
        %v3877 = vadd.s32 %v3876, %v3866
        %v3878 = vadd.s32 %v3877, %v3868
        %v3879 = vand.u32 %v3856, 65535
        %v3880 = vshrl.u32 %v3856, 16
        %v3881 = vand.u32 %v3851, 65535
        %v3882 = vshrl.u32 %v3851, 16
        %v3883 = vmul.u32 %v3879, %v3881
        %v3884 = vmul.u32 %v3879, %v3882
        %v3885 = vmul.u32 %v3880, %v3881
        %v3886 = vmul.u32 %v3880, %v3882
        %v3887 = vshll.u32 %v3884, 16
        %v3888 = vshrl.u32 %v3884, 16
        %v3889 = vshll.u32 %v3885, 16
        %v3890 = vshrl.u32 %v3885, 16
        %vm3891 = vc.u32 %v3883, %v3887
        %v3892 = vsel %vm3891, 1, 0
        %v3893 = vadd.s32 %v3883, %v3887
        %v3894 = vadd.s32 %v3886, %v3892
        %vm3895 = vc.u32 %v3893, %v3889
        %v3896 = vsel %vm3895, 1, 0
        %v3897 = vadd.s32 %v3893, %v3889
        %v3898 = vadd.s32 %v3894, %v3896
        %v3899 = vadd.s32 %v3898, %v3888
        %v3900 = vadd.s32 %v3899, %v3890
        %v3901 = vmul.u32 %v3856, %v3847
        %v3902 = vadd.s32 %v3878, %v3897
        %vm3903 = vc.u32 %v3878, %v3897
        %v3904 = vadd.s32 %v3900, 1
        %v3905 = vsel %vm3903, %v3904, %v3900
        %v3906 = vadd.s32 %v3901, %v3905
        %v3907 = vadd.s32 %v3906, 536870912
        %v3908 = vshrl.u32 %v3907, 30
        %v3909 = vshll.u32 %v3908, 30
        %v3910 = vsub.s32 %v3906, %v3909
        %vm3911 = vcmp.lt.s32.totalorder %v3910, 0
        %v3912 = vsub.s32 0, %v3910
        %v3913 = vsel %vm3911, %v3912, %v3910
        %v3914 = vclz %v3913
        %v3915 = vsub.s32 %v3914, 2
        %vm3916 = vcmp.gt.s32.totalorder 0, %v3915
        %v3917 = vsel %vm3916, 0, %v3915
        %v3918 = vsub.s32 32, %v3917
        %v3919 = vshll.u32 %v3910, %v3917
        %v3920 = vshrl.u32 %v3902, %v3918
        %v3921 = vor.u32 %v3919, %v3920
        %v3922 = vsub.s32 4294967266, %v3917
        %v3923 = vadd.s32 %v3922, 127
        %v3924 = vshll.u32 %v3923, 23
        %v3925 = vor.u32 4788187, %v3924
        %v3926 = vand.u32 2147483647, %v3925
        %v3928 = vcvt.s32.f32 %v3921
        %v3929 = vmul.f32 %v3928, %v3926
        %v3930 = vxor.u32 %v3929, 2147483648
        %v3931 = vsel %vm3810, %v3930, %v3929
        %v3932 = vsub.s32 4, %v3908
        %v3933 = vsel %vm3810, %v3932, %v3908
        %v3934 = vsel %vm3809, %v3804, %v3931
        %v3935 = vsel %vm3809, 0, %v3933
        %v3936 = vmul.f32 %v3934, %v3934
        %v3937 = vmul.f32 %v3936, -0.001358992
        %v3938 = vadd.f32 %v3937, 0.041655596
        %v3939 = vmul.f32 %v3936, %v3938
        %v3940 = vadd.f32 %v3939, -0.4999988
        %v3941 = vmul.f32 %v3936, %v3940
        %v3942 = vadd.f32 1.0, %v3941
        %v3943 = vmul.f32 %v3934, %v3934
        %v3944 = vmul.f32 %v3943, -0.00019511016
        %v3945 = vadd.f32 %v3944, 0.008332121
        %v3946 = vmul.f32 %v3943, %v3945
        %v3947 = vadd.f32 %v3946, -0.16666654
        %v3948 = vmul.f32 %v3943, %v3947
        %v3949 = vadd.f32 %v3948, 1.0
        %v3950 = vmul.f32 %v3949, %v3934
        %vm3951 = vweird.f32 %v3804
        %v3952 = vand.u32 %v3935, 3
        %vm3953 = vcmp.lt.s32.totalorder %v3952, 2
        %vm3954 = vcmp.eq.s32.totalorder %v3952, 0
        %v3955 = vxor.u32 %v3950, 2147483648
        %v3956 = vsel %vm3954, %v3942, %v3955
        %vm3957 = vcmp.eq.s32.totalorder %v3952, 2
        %v3958 = vxor.u32 %v3942, 2147483648
        %v3959 = vsel %vm3957, %v3958, %v3950
        %v3960 = vsel %vm3953, %v3956, %v3959
        %v3961 = vsel %vm3951, nan, %v3960
        %v3962 = vand.u32 2147483647, %v3804
        %vm3963 = vcmp.le.f32.partialorder %v3962, 0.7853982
        %vm3964 = vcmp.lt.s32.totalorder %v3804, 0
        %v3965 = vand.u32 %v3804, 2139095040
        %v3966 = vshrl.u32 %v3965, 23
        %v3967 = vsub.s32 %v3966, 127
        %v3968 = vand.u32 2147483647, %v3804
        %v3969 = vand.u32 %v3968, 8388607
        %v3970 = vor.u32 %v3969, 8388608
        %v3971 = vsub.s32 0, %v3970
        %v3972 = vadd.s32 %v3967, 1
        %vm3973 = vcmp.gt.s32.totalorder %v3972, 0
        %v3974 = vsel %vm3973, %v3972, 0
        %v3975 = vshrl.u32 %v3974, 5
        %v3976 = vand.u32 %v3974, 31
        %v3977 = vsub.s32 32, %v3976
        %v3978 = vshrl.u32 683565275, %v3977
        %v3979 = vshll.u32 683565275, %v3976
        %v3980 = vshrl.u32 2475754826, %v3977
        %v3981 = vor.u32 %v3979, %v3980
        %v3982 = vshll.u32 2475754826, %v3976
        %v3983 = vshrl.u32 2131351028, %v3977
        %v3984 = vor.u32 %v3982, %v3983
        %v3985 = vshll.u32 2131351028, %v3976
        %v3986 = vshrl.u32 2102212464, %v3977
        %v3987 = vor.u32 %v3985, %v3986
        %v3988 = vshll.u32 2102212464, %v3976
        %v3989 = vshrl.u32 920167782, %v3977
        %v3990 = vor.u32 %v3988, %v3989
        %v3991 = vshll.u32 920167782, %v3976
        %v3992 = vshrl.u32 1326507024, %v3977
        %v3993 = vor.u32 %v3991, %v3992
        %vm3994 = vcmp.lt.s32.totalorder %v3975, 1
        %vm3995 = vcmp.lt.s32.totalorder %v3975, 2
        %vm3996 = vcmp.lt.s32.totalorder %v3975, 3
        %vm3997 = vcmp.lt.s32.totalorder %v3975, 4
        %v3998 = vsel %vm3994, %v3978, %v3981
        %v3999 = vsel %vm3997, %v3987, 2102212464
        %v4000 = vsel %vm3996, %v3984, %v3999
        %v4001 = vsel %vm3995, %v3998, %v4000
        %v4002 = vsel %vm3994, %v3981, %v3984
        %v4003 = vsel %vm3997, %v3990, 920167782
        %v4004 = vsel %vm3996, %v3987, %v4003
        %v4005 = vsel %vm3995, %v4002, %v4004
        %v4006 = vsel %vm3994, %v3984, %v3987
        %v4007 = vsel %vm3997, %v3993, 1326507024
        %v4008 = vsel %vm3996, %v3990, %v4007
        %v4009 = vsel %vm3995, %v4006, %v4008
        %v4010 = vshll.u32 %v3970, 8
        %v4011 = vand.u32 %v4010, 65535
        %v4012 = vshrl.u32 %v4010, 16
        %v4013 = vand.u32 %v4009, 65535
        %v4014 = vshrl.u32 %v4009, 16
        %v4015 = vmul.u32 %v4011, %v4013
        %v4016 = vmul.u32 %v4011, %v4014
        %v4017 = vmul.u32 %v4012, %v4013
        %v4018 = vmul.u32 %v4012, %v4014
        %v4019 = vshll.u32 %v4016, 16
        %v4020 = vshrl.u32 %v4016, 16
        %v4021 = vshll.u32 %v4017, 16
        %v4022 = vshrl.u32 %v4017, 16
        %vm4023 = vc.u32 %v4015, %v4019
        %v4024 = vsel %vm4023, 1, 0
        %v4025 = vadd.s32 %v4015, %v4019
        %v4026 = vadd.s32 %v4018, %v4024
        %vm4027 = vc.u32 %v4025, %v4021
        %v4028 = vsel %vm4027, 1, 0
        %v4029 = vadd.s32 %v4025, %v4021
        %v4030 = vadd.s32 %v4026, %v4028
        %v4031 = vadd.s32 %v4030, %v4020
        %v4032 = vadd.s32 %v4031, %v4022
        %v4033 = vand.u32 %v4010, 65535
        %v4034 = vshrl.u32 %v4010, 16
        %v4035 = vand.u32 %v4005, 65535
        %v4036 = vshrl.u32 %v4005, 16
        %v4037 = vmul.u32 %v4033, %v4035
        %v4038 = vmul.u32 %v4033, %v4036
        %v4039 = vmul.u32 %v4034, %v4035
        %v4040 = vmul.u32 %v4034, %v4036
        %v4041 = vshll.u32 %v4038, 16
        %v4042 = vshrl.u32 %v4038, 16
        %v4043 = vshll.u32 %v4039, 16
        %v4044 = vshrl.u32 %v4039, 16
        %vm4045 = vc.u32 %v4037, %v4041
        %v4046 = vsel %vm4045, 1, 0
        %v4047 = vadd.s32 %v4037, %v4041
        %v4048 = vadd.s32 %v4040, %v4046
        %vm4049 = vc.u32 %v4047, %v4043
        %v4050 = vsel %vm4049, 1, 0
        %v4051 = vadd.s32 %v4047, %v4043
        %v4052 = vadd.s32 %v4048, %v4050
        %v4053 = vadd.s32 %v4052, %v4042
        %v4054 = vadd.s32 %v4053, %v4044
        %v4055 = vmul.u32 %v4010, %v4001
        %v4056 = vadd.s32 %v4032, %v4051
        %vm4057 = vc.u32 %v4032, %v4051
        %v4058 = vadd.s32 %v4054, 1
        %v4059 = vsel %vm4057, %v4058, %v4054
        %v4060 = vadd.s32 %v4055, %v4059
        %v4061 = vadd.s32 %v4060, 536870912
        %v4062 = vshrl.u32 %v4061, 30
        %v4063 = vshll.u32 %v4062, 30
        %v4064 = vsub.s32 %v4060, %v4063
        %vm4065 = vcmp.lt.s32.totalorder %v4064, 0
        %v4066 = vsub.s32 0, %v4064
        %v4067 = vsel %vm4065, %v4066, %v4064
        %v4068 = vclz %v4067
        %v4069 = vsub.s32 %v4068, 2
        %vm4070 = vcmp.gt.s32.totalorder 0, %v4069
        %v4071 = vsel %vm4070, 0, %v4069
        %v4072 = vsub.s32 32, %v4071
        %v4073 = vshll.u32 %v4064, %v4071
        %v4074 = vshrl.u32 %v4056, %v4072
        %v4075 = vor.u32 %v4073, %v4074
        %v4076 = vsub.s32 4294967266, %v4071
        %v4077 = vadd.s32 %v4076, 127
        %v4078 = vshll.u32 %v4077, 23
        %v4079 = vor.u32 4788187, %v4078
        %v4080 = vand.u32 2147483647, %v4079
        %v4082 = vcvt.s32.f32 %v4075
        %v4083 = vmul.f32 %v4082, %v4080
        %v4084 = vxor.u32 %v4083, 2147483648
        %v4085 = vsel %vm3964, %v4084, %v4083
        %v4086 = vsub.s32 4, %v4062
        %v4087 = vsel %vm3964, %v4086, %v4062
        %v4088 = vsel %vm3963, %v3804, %v4085
        %v4089 = vsel %vm3963, 0, %v4087
        %v4090 = vmul.f32 %v4088, %v4088
        %v4091 = vmul.f32 %v4090, -0.001358992
        %v4092 = vadd.f32 %v4091, 0.041655596
        %v4093 = vmul.f32 %v4090, %v4092
        %v4094 = vadd.f32 %v4093, -0.4999988
        %v4095 = vmul.f32 %v4090, %v4094
        %v4096 = vadd.f32 1.0, %v4095
        %v4097 = vmul.f32 %v4088, %v4088
        %v4098 = vmul.f32 %v4097, -0.00019511016
        %v4099 = vadd.f32 %v4098, 0.008332121
        %v4100 = vmul.f32 %v4097, %v4099
        %v4101 = vadd.f32 %v4100, -0.16666654
        %v4102 = vmul.f32 %v4097, %v4101
        %v4103 = vadd.f32 %v4102, 1.0
        %v4104 = vmul.f32 %v4103, %v4088
        %vm4105 = vweird.f32 %v3804
        %v4106 = vadd.s32 %v4089, 3
        %v4107 = vand.u32 %v4106, 3
        %vm4108 = vcmp.lt.s32.totalorder %v4107, 2
        %vm4109 = vcmp.eq.s32.totalorder %v4107, 0
        %v4110 = vxor.u32 %v4104, 2147483648
        %v4111 = vsel %vm4109, %v4096, %v4110
        %vm4112 = vcmp.eq.s32.totalorder %v4107, 2
        %v4113 = vxor.u32 %v4096, 2147483648
        %v4114 = vsel %vm4112, %v4113, %v4104
        %v4115 = vsel %vm4108, %v4111, %v4114
        %v4116 = vsel %vm4105, nan, %v4115
        %v4117 = vmul.f32 %v3807, %v3807
        %v4118 = vmul.f32 %v3461, 0.9848077
        %v4119 = vmul.f32 %v3463, -0.17364818
        %v4120 = vadd.f32 %v4118, %v4119
        %v4121 = vstv %s3454
        %v4122 = vadd.f32 %v4120, %v4121
        %v4123 = vmul.f32 %v3468, 0.9848077
        %v4124 = vmul.f32 %v3470, -0.17364818
        %v4125 = vadd.f32 %v4123, %v4124
        %v4126 = vstv %s3455
        %v4127 = vadd.f32 %v4125, %v4126
        %v4128 = vmul.f32 %v3475, 0.9848077
        %v4129 = vmul.f32 %v3477, -0.17364818
        %v4130 = vadd.f32 %v4128, %v4129
        %v4131 = vstv %s3456
        %v4132 = vadd.f32 %v4130, %v4131
        %v4133 = vmul.f32 %v4122, %v4122
        %v4134 = vmul.f32 %v4127, %v4127
        %v4135 = vadd.f32 %v4133, %v4134
        %v4136 = vmul.f32 %v4132, %v4132
        %v4137 = vadd.f32 %v4135, %v4136
        %v4138 = vadd.f32 %v4135, 1e-20
        %v4139 = vrcp.pop %v4138
        %v4140 = vmul.f32 %v4137, %v4139
        %v4141 = vrsqrt.pop %v4140
        %v4142 = vmul.f32 %v4141, %v4140
        %v4143 = vmul.f32 %v4142, %v4141
        %v4144 = vmul.f32 0.5, %v4143
        %v4145 = vsub.f32 1.5, %v4144
        %v4146 = vmul.f32 %v4141, %v4145
        %v4147 = vmul.f32 %v4140, %v4146
        %vm4148 = vcmp.eq.f32.partialorder %v4140, inf
        %v4149 = vsel %vm4148, %v4140, %v4147
        %vm4150 = vcmp.eq.f32.partialorder %v4140, 0.0
        %v4151 = vand.u32 %v4140, 2147483648
        %v4152 = vsel %vm4150, %v4151, %v4149
        %v4153 = vmul.f32 %v4122, 2.144507
        %vm4154 = vcmp.gt.f32.partialorder %v4122, 0.0
        %vm4155 = vcmp.le.f32.partialorder %v4127, %v4153
        %vm4156 = vmand %vm4154, %vm4155
        %v4157 = vsub.f32 0.0, %v4153
        %vm4158 = vcmp.gt.f32.partialorder %v4127, %v4157
        %vm4159 = vmand %vm4156, %vm4158
        %vm4160 = vcmp.gt.f32.partialorder %v4137, 0.01
        %vm4161 = vmand %vm4159, %vm4160
        %vm4162 = vcmp.le.f32.partialorder %v4137, 100.0
        %vm4163 = vmand %vm4161, %vm4162
        %v4164 = vadd.f32 %v4137, %v3797
        %v4165 = vmul.f32 %v3487, 2.0
        %v4166 = vmul.f32 %v3641, %v4122
        %v4167 = vmul.f32 %v3796, %v4127
        %v4168 = vadd.f32 %v4166, %v4167
        %v4169 = vmul.f32 %v4152, %v4168
        %v4170 = vmul.f32 %v4165, %v4169
        %v4171 = vsub.f32 %v4164, %v4170
        %v4172 = vadd.f32 %v4137, %v4117
        %v4173 = vmul.f32 %v3807, 2.0
        %v4174 = vmul.f32 %v3961, %v4122
        %v4175 = vmul.f32 %v4116, %v4127
        %v4176 = vadd.f32 %v4174, %v4175
        %v4177 = vmul.f32 %v4152, %v4176
        %v4178 = vmul.f32 %v4173, %v4177
        %v4179 = vsub.f32 %v4172, %v4178
        %v4180 = vmul.f32 %v3461, 0.9885817
        %v4181 = vmul.f32 %v3463, -0.15068571
        %v4182 = vadd.f32 %v4180, %v4181
        %v4183 = vadd.f32 %v4182, %v4121
        %v4184 = vmul.f32 %v3468, 0.9885817
        %v4185 = vmul.f32 %v3470, -0.15068571
        %v4186 = vadd.f32 %v4184, %v4185
        %v4187 = vadd.f32 %v4186, %v4126
        %v4188 = vmul.f32 %v3475, 0.9885817
        %v4189 = vmul.f32 %v3477, -0.15068571
        %v4190 = vadd.f32 %v4188, %v4189
        %v4191 = vadd.f32 %v4190, %v4131
        %v4192 = vmul.f32 %v4183, %v4183
        %v4193 = vmul.f32 %v4187, %v4187
        %v4194 = vadd.f32 %v4192, %v4193
        %v4195 = vmul.f32 %v4191, %v4191
        %v4196 = vadd.f32 %v4194, %v4195
        %v4197 = vadd.f32 %v4194, 1e-20
        %v4198 = vrcp.pop %v4197
        %v4199 = vmul.f32 %v4196, %v4198
        %v4200 = vrsqrt.pop %v4199
        %v4201 = vmul.f32 %v4200, %v4199
        %v4202 = vmul.f32 %v4201, %v4200
        %v4203 = vmul.f32 0.5, %v4202
        %v4204 = vsub.f32 1.5, %v4203
        %v4205 = vmul.f32 %v4200, %v4204
        %v4206 = vmul.f32 %v4199, %v4205
        %vm4207 = vcmp.eq.f32.partialorder %v4199, inf
        %v4208 = vsel %vm4207, %v4199, %v4206
        %vm4209 = vcmp.eq.f32.partialorder %v4199, 0.0
        %v4210 = vand.u32 %v4199, 2147483648
        %v4211 = vsel %vm4209, %v4210, %v4208
        %v4212 = vmul.f32 %v4183, 2.144507
        %vm4213 = vcmp.gt.f32.partialorder %v4183, 0.0
        %vm4214 = vcmp.le.f32.partialorder %v4187, %v4212
        %vm4215 = vmand %vm4213, %vm4214
        %v4216 = vsub.f32 0.0, %v4212
        %vm4217 = vcmp.gt.f32.partialorder %v4187, %v4216
        %vm4218 = vmand %vm4215, %vm4217
        %vm4219 = vcmp.gt.f32.partialorder %v4196, 0.01
        %vm4220 = vmand %vm4218, %vm4219
        %vm4221 = vcmp.le.f32.partialorder %v4196, 100.0
        %vm4222 = vmand %vm4220, %vm4221
        %v4223 = vadd.f32 %v4196, %v3797
        %v4224 = vmul.f32 %v3641, %v4183
        %v4225 = vmul.f32 %v3796, %v4187
        %v4226 = vadd.f32 %v4224, %v4225
        %v4227 = vmul.f32 %v4211, %v4226
        %v4228 = vmul.f32 %v4165, %v4227
        %v4229 = vsub.f32 %v4223, %v4228
        %v4230 = vadd.f32 %v4196, %v4117
        %v4231 = vmul.f32 %v3961, %v4183
        %v4232 = vmul.f32 %v4116, %v4187
        %v4233 = vadd.f32 %v4231, %v4232
        %v4234 = vmul.f32 %v4211, %v4233
        %v4235 = vmul.f32 %v4173, %v4234
        %v4236 = vsub.f32 %v4230, %v4235
        %v4237 = vmin.f32 %v4171, %v4229
        %v4238 = vmin.f32 %v4179, %v4236
        %vm4239 = vmand %vm4163, %vm4222
        %v4240 = vmul.f32 %v3461, 0.99182034
        %v4241 = vmul.f32 %v3463, -0.12764165
        %v4242 = vadd.f32 %v4240, %v4241
        %v4243 = vadd.f32 %v4242, %v4121
        %v4244 = vmul.f32 %v3468, 0.99182034
        %v4245 = vmul.f32 %v3470, -0.12764165
        %v4246 = vadd.f32 %v4244, %v4245
        %v4247 = vadd.f32 %v4246, %v4126
        %v4248 = vmul.f32 %v3475, 0.99182034
        %v4249 = vmul.f32 %v3477, -0.12764165
        %v4250 = vadd.f32 %v4248, %v4249
        %v4251 = vadd.f32 %v4250, %v4131
        %v4252 = vmul.f32 %v4243, %v4243
        %v4253 = vmul.f32 %v4247, %v4247
        %v4254 = vadd.f32 %v4252, %v4253
        %v4255 = vmul.f32 %v4251, %v4251
        %v4256 = vadd.f32 %v4254, %v4255
        %v4257 = vadd.f32 %v4254, 1e-20
        %v4258 = vrcp.pop %v4257
        %v4259 = vmul.f32 %v4256, %v4258
        %v4260 = vrsqrt.pop %v4259
        %v4261 = vmul.f32 %v4260, %v4259
        %v4262 = vmul.f32 %v4261, %v4260
        %v4263 = vmul.f32 0.5, %v4262
        %v4264 = vsub.f32 1.5, %v4263
        %v4265 = vmul.f32 %v4260, %v4264
        %v4266 = vmul.f32 %v4259, %v4265
        %vm4267 = vcmp.eq.f32.partialorder %v4259, inf
        %v4268 = vsel %vm4267, %v4259, %v4266
        %vm4269 = vcmp.eq.f32.partialorder %v4259, 0.0
        %v4270 = vand.u32 %v4259, 2147483648
        %v4271 = vsel %vm4269, %v4270, %v4268
        %v4272 = vmul.f32 %v4243, 2.144507
        %vm4273 = vcmp.gt.f32.partialorder %v4243, 0.0
        %vm4274 = vcmp.le.f32.partialorder %v4247, %v4272
        %vm4275 = vmand %vm4273, %vm4274
        %v4276 = vsub.f32 0.0, %v4272
        %vm4277 = vcmp.gt.f32.partialorder %v4247, %v4276
        %vm4278 = vmand %vm4275, %vm4277
        %vm4279 = vcmp.gt.f32.partialorder %v4256, 0.01
        %vm4280 = vmand %vm4278, %vm4279
        %vm4281 = vcmp.le.f32.partialorder %v4256, 100.0
        %vm4282 = vmand %vm4280, %vm4281
        %v4283 = vadd.f32 %v4256, %v3797
        %v4284 = vmul.f32 %v3641, %v4243
        %v4285 = vmul.f32 %v3796, %v4247
        %v4286 = vadd.f32 %v4284, %v4285
        %v4287 = vmul.f32 %v4271, %v4286
        %v4288 = vmul.f32 %v4165, %v4287
        %v4289 = vsub.f32 %v4283, %v4288
        %v4290 = vadd.f32 %v4256, %v4117
        %v4291 = vmul.f32 %v3961, %v4243
        %v4292 = vmul.f32 %v4116, %v4247
        %v4293 = vadd.f32 %v4291, %v4292
        %v4294 = vmul.f32 %v4271, %v4293
        %v4295 = vmul.f32 %v4173, %v4294
        %v4296 = vsub.f32 %v4290, %v4295
        %v4297 = vmin.f32 %v4237, %v4289
        %v4298 = vmin.f32 %v4238, %v4296
        %vm4299 = vmand %vm4239, %vm4282
        %v4300 = vmul.f32 %v3461, 0.9945219
        %v4301 = vmul.f32 %v3463, -0.104528464
        %v4302 = vadd.f32 %v4300, %v4301
        %v4303 = vadd.f32 %v4302, %v4121
        %v4304 = vmul.f32 %v3468, 0.9945219
        %v4305 = vmul.f32 %v3470, -0.104528464
        %v4306 = vadd.f32 %v4304, %v4305
        %v4307 = vadd.f32 %v4306, %v4126
        %v4308 = vmul.f32 %v3475, 0.9945219
        %v4309 = vmul.f32 %v3477, -0.104528464
        %v4310 = vadd.f32 %v4308, %v4309
        %v4311 = vadd.f32 %v4310, %v4131
        %v4312 = vmul.f32 %v4303, %v4303
        %v4313 = vmul.f32 %v4307, %v4307
        %v4314 = vadd.f32 %v4312, %v4313
        %v4315 = vmul.f32 %v4311, %v4311
        %v4316 = vadd.f32 %v4314, %v4315
        %v4317 = vadd.f32 %v4314, 1e-20
        %v4318 = vrcp.pop %v4317
        %v4319 = vmul.f32 %v4316, %v4318
        %v4320 = vrsqrt.pop %v4319
        %v4321 = vmul.f32 %v4320, %v4319
        %v4322 = vmul.f32 %v4321, %v4320
        %v4323 = vmul.f32 0.5, %v4322
        %v4324 = vsub.f32 1.5, %v4323
        %v4325 = vmul.f32 %v4320, %v4324
        %v4326 = vmul.f32 %v4319, %v4325
        %vm4327 = vcmp.eq.f32.partialorder %v4319, inf
        %v4328 = vsel %vm4327, %v4319, %v4326
        %vm4329 = vcmp.eq.f32.partialorder %v4319, 0.0
        %v4330 = vand.u32 %v4319, 2147483648
        %v4331 = vsel %vm4329, %v4330, %v4328
        %v4332 = vmul.f32 %v4303, 2.144507
        %vm4333 = vcmp.gt.f32.partialorder %v4303, 0.0
        %vm4334 = vcmp.le.f32.partialorder %v4307, %v4332
        %vm4335 = vmand %vm4333, %vm4334
        %v4336 = vsub.f32 0.0, %v4332
        %vm4337 = vcmp.gt.f32.partialorder %v4307, %v4336
        %vm4338 = vmand %vm4335, %vm4337
        %vm4339 = vcmp.gt.f32.partialorder %v4316, 0.01
        %vm4340 = vmand %vm4338, %vm4339
        %vm4341 = vcmp.le.f32.partialorder %v4316, 100.0
        %vm4342 = vmand %vm4340, %vm4341
        %v4343 = vadd.f32 %v4316, %v3797
        %v4344 = vmul.f32 %v3641, %v4303
        %v4345 = vmul.f32 %v3796, %v4307
        %v4346 = vadd.f32 %v4344, %v4345
        %v4347 = vmul.f32 %v4331, %v4346
        %v4348 = vmul.f32 %v4165, %v4347
        %v4349 = vsub.f32 %v4343, %v4348
        %v4350 = vadd.f32 %v4316, %v4117
        %v4351 = vmul.f32 %v3961, %v4303
        %v4352 = vmul.f32 %v4116, %v4307
        %v4353 = vadd.f32 %v4351, %v4352
        %v4354 = vmul.f32 %v4331, %v4353
        %v4355 = vmul.f32 %v4173, %v4354
        %v4356 = vsub.f32 %v4350, %v4355
        %v4357 = vmin.f32 %v4297, %v4349
        %v4358 = vmin.f32 %v4298, %v4356
        %vm4359 = vmand %vm4299, %vm4342
        %v4360 = vmul.f32 %v3461, 0.9966849
        %v4361 = vmul.f32 %v3463, -0.08135867
        %v4362 = vadd.f32 %v4360, %v4361
        %v4363 = vadd.f32 %v4362, %v4121
        %v4364 = vmul.f32 %v3468, 0.9966849
        %v4365 = vmul.f32 %v3470, -0.08135867
        %v4366 = vadd.f32 %v4364, %v4365
        %v4367 = vadd.f32 %v4366, %v4126
        %v4368 = vmul.f32 %v3475, 0.9966849
        %v4369 = vmul.f32 %v3477, -0.08135867
        %v4370 = vadd.f32 %v4368, %v4369
        %v4371 = vadd.f32 %v4370, %v4131
        %v4372 = vmul.f32 %v4363, %v4363
        %v4373 = vmul.f32 %v4367, %v4367
        %v4374 = vadd.f32 %v4372, %v4373
        %v4375 = vmul.f32 %v4371, %v4371
        %v4376 = vadd.f32 %v4374, %v4375
        %v4377 = vadd.f32 %v4374, 1e-20
        %v4378 = vrcp.pop %v4377
        %v4379 = vmul.f32 %v4376, %v4378
        %v4380 = vrsqrt.pop %v4379
        %v4381 = vmul.f32 %v4380, %v4379
        %v4382 = vmul.f32 %v4381, %v4380
        %v4383 = vmul.f32 0.5, %v4382
        %v4384 = vsub.f32 1.5, %v4383
        %v4385 = vmul.f32 %v4380, %v4384
        %v4386 = vmul.f32 %v4379, %v4385
        %vm4387 = vcmp.eq.f32.partialorder %v4379, inf
        %v4388 = vsel %vm4387, %v4379, %v4386
        %vm4389 = vcmp.eq.f32.partialorder %v4379, 0.0
        %v4390 = vand.u32 %v4379, 2147483648
        %v4391 = vsel %vm4389, %v4390, %v4388
        %v4392 = vmul.f32 %v4363, 2.144507
        %vm4393 = vcmp.gt.f32.partialorder %v4363, 0.0
        %vm4394 = vcmp.le.f32.partialorder %v4367, %v4392
        %vm4395 = vmand %vm4393, %vm4394
        %v4396 = vsub.f32 0.0, %v4392
        %vm4397 = vcmp.gt.f32.partialorder %v4367, %v4396
        %vm4398 = vmand %vm4395, %vm4397
        %vm4399 = vcmp.gt.f32.partialorder %v4376, 0.01
        %vm4400 = vmand %vm4398, %vm4399
        %vm4401 = vcmp.le.f32.partialorder %v4376, 100.0
        %vm4402 = vmand %vm4400, %vm4401
        %v4403 = vadd.f32 %v4376, %v3797
        %v4404 = vmul.f32 %v3641, %v4363
        %v4405 = vmul.f32 %v3796, %v4367
        %v4406 = vadd.f32 %v4404, %v4405
        %v4407 = vmul.f32 %v4391, %v4406
        %v4408 = vmul.f32 %v4165, %v4407
        %v4409 = vsub.f32 %v4403, %v4408
        %v4410 = vadd.f32 %v4376, %v4117
        %v4411 = vmul.f32 %v3961, %v4363
        %v4412 = vmul.f32 %v4116, %v4367
        %v4413 = vadd.f32 %v4411, %v4412
        %v4414 = vmul.f32 %v4391, %v4413
        %v4415 = vmul.f32 %v4173, %v4414
        %v4416 = vsub.f32 %v4410, %v4415
        %v4417 = vmin.f32 %v4357, %v4409
        %v4418 = vmin.f32 %v4358, %v4416
        %vm4419 = vmand %vm4359, %vm4402
        %v4420 = vmul.f32 %v3461, 0.9983082
        %v4421 = vmul.f32 %v3463, -0.05814483
        %v4422 = vadd.f32 %v4420, %v4421
        %v4423 = vadd.f32 %v4422, %v4121
        %v4424 = vmul.f32 %v3468, 0.9983082
        %v4425 = vmul.f32 %v3470, -0.05814483
        %v4426 = vadd.f32 %v4424, %v4425
        %v4427 = vadd.f32 %v4426, %v4126
        %v4428 = vmul.f32 %v3475, 0.9983082
        %v4429 = vmul.f32 %v3477, -0.05814483
        %v4430 = vadd.f32 %v4428, %v4429
        %v4431 = vadd.f32 %v4430, %v4131
        %v4432 = vmul.f32 %v4423, %v4423
        %v4433 = vmul.f32 %v4427, %v4427
        %v4434 = vadd.f32 %v4432, %v4433
        %v4435 = vmul.f32 %v4431, %v4431
        %v4436 = vadd.f32 %v4434, %v4435
        %v4437 = vadd.f32 %v4434, 1e-20
        %v4438 = vrcp.pop %v4437
        %v4439 = vmul.f32 %v4436, %v4438
        %v4440 = vrsqrt.pop %v4439
        %v4441 = vmul.f32 %v4440, %v4439
        %v4442 = vmul.f32 %v4441, %v4440
        %v4443 = vmul.f32 0.5, %v4442
        %v4444 = vsub.f32 1.5, %v4443
        %v4445 = vmul.f32 %v4440, %v4444
        %v4446 = vmul.f32 %v4439, %v4445
        %vm4447 = vcmp.eq.f32.partialorder %v4439, inf
        %v4448 = vsel %vm4447, %v4439, %v4446
        %vm4449 = vcmp.eq.f32.partialorder %v4439, 0.0
        %v4450 = vand.u32 %v4439, 2147483648
        %v4451 = vsel %vm4449, %v4450, %v4448
        %v4452 = vmul.f32 %v4423, 2.144507
        %vm4453 = vcmp.gt.f32.partialorder %v4423, 0.0
        %vm4454 = vcmp.le.f32.partialorder %v4427, %v4452
        %vm4455 = vmand %vm4453, %vm4454
        %v4456 = vsub.f32 0.0, %v4452
        %vm4457 = vcmp.gt.f32.partialorder %v4427, %v4456
        %vm4458 = vmand %vm4455, %vm4457
        %vm4459 = vcmp.gt.f32.partialorder %v4436, 0.01
        %vm4460 = vmand %vm4458, %vm4459
        %vm4461 = vcmp.le.f32.partialorder %v4436, 100.0
        %vm4462 = vmand %vm4460, %vm4461
        %v4463 = vadd.f32 %v4436, %v3797
        %v4464 = vmul.f32 %v3641, %v4423
        %v4465 = vmul.f32 %v3796, %v4427
        %v4466 = vadd.f32 %v4464, %v4465
        %v4467 = vmul.f32 %v4451, %v4466
        %v4468 = vmul.f32 %v4165, %v4467
        %v4469 = vsub.f32 %v4463, %v4468
        %v4470 = vadd.f32 %v4436, %v4117
        %v4471 = vmul.f32 %v3961, %v4423
        %v4472 = vmul.f32 %v4116, %v4427
        %v4473 = vadd.f32 %v4471, %v4472
        %v4474 = vmul.f32 %v4451, %v4473
        %v4475 = vmul.f32 %v4173, %v4474
        %v4476 = vsub.f32 %v4470, %v4475
        %v4477 = vmin.f32 %v4417, %v4469
        %v4478 = vmin.f32 %v4418, %v4476
        %vm4479 = vmand %vm4419, %vm4462
        %v4480 = vmul.f32 %v3461, 0.99939084
        %v4481 = vmul.f32 %v3463, -0.034899496
        %v4482 = vadd.f32 %v4480, %v4481
        %v4483 = vadd.f32 %v4482, %v4121
        %v4484 = vmul.f32 %v3468, 0.99939084
        %v4485 = vmul.f32 %v3470, -0.034899496
        %v4486 = vadd.f32 %v4484, %v4485
        %v4487 = vadd.f32 %v4486, %v4126
        %v4488 = vmul.f32 %v3475, 0.99939084
        %v4489 = vmul.f32 %v3477, -0.034899496
        %v4490 = vadd.f32 %v4488, %v4489
        %v4491 = vadd.f32 %v4490, %v4131
        %v4492 = vmul.f32 %v4483, %v4483
        %v4493 = vmul.f32 %v4487, %v4487
        %v4494 = vadd.f32 %v4492, %v4493
        %v4495 = vmul.f32 %v4491, %v4491
        %v4496 = vadd.f32 %v4494, %v4495
        %v4497 = vadd.f32 %v4494, 1e-20
        %v4498 = vrcp.pop %v4497
        %v4499 = vmul.f32 %v4496, %v4498
        %v4500 = vrsqrt.pop %v4499
        %v4501 = vmul.f32 %v4500, %v4499
        %v4502 = vmul.f32 %v4501, %v4500
        %v4503 = vmul.f32 0.5, %v4502
        %v4504 = vsub.f32 1.5, %v4503
        %v4505 = vmul.f32 %v4500, %v4504
        %v4506 = vmul.f32 %v4499, %v4505
        %vm4507 = vcmp.eq.f32.partialorder %v4499, inf
        %v4508 = vsel %vm4507, %v4499, %v4506
        %vm4509 = vcmp.eq.f32.partialorder %v4499, 0.0
        %v4510 = vand.u32 %v4499, 2147483648
        %v4511 = vsel %vm4509, %v4510, %v4508
        %v4512 = vmul.f32 %v4483, 2.144507
        %vm4513 = vcmp.gt.f32.partialorder %v4483, 0.0
        %vm4514 = vcmp.le.f32.partialorder %v4487, %v4512
        %vm4515 = vmand %vm4513, %vm4514
        %v4516 = vsub.f32 0.0, %v4512
        %vm4517 = vcmp.gt.f32.partialorder %v4487, %v4516
        %vm4518 = vmand %vm4515, %vm4517
        %vm4519 = vcmp.gt.f32.partialorder %v4496, 0.01
        %vm4520 = vmand %vm4518, %vm4519
        %vm4521 = vcmp.le.f32.partialorder %v4496, 100.0
        %vm4522 = vmand %vm4520, %vm4521
        %v4523 = vadd.f32 %v4496, %v3797
        %v4524 = vmul.f32 %v3641, %v4483
        %v4525 = vmul.f32 %v3796, %v4487
        %v4526 = vadd.f32 %v4524, %v4525
        %v4527 = vmul.f32 %v4511, %v4526
        %v4528 = vmul.f32 %v4165, %v4527
        %v4529 = vsub.f32 %v4523, %v4528
        %v4530 = vadd.f32 %v4496, %v4117
        %v4531 = vmul.f32 %v3961, %v4483
        %v4532 = vmul.f32 %v4116, %v4487
        %v4533 = vadd.f32 %v4531, %v4532
        %v4534 = vmul.f32 %v4511, %v4533
        %v4535 = vmul.f32 %v4173, %v4534
        %v4536 = vsub.f32 %v4530, %v4535
        %v4537 = vmin.f32 %v4477, %v4529
        %v4538 = vmin.f32 %v4478, %v4536
        %vm4539 = vmand %vm4479, %vm4522
        %v4540 = vmul.f32 %v3461, 0.9999323
        %v4541 = vmul.f32 %v3463, -0.011635266
        %v4542 = vadd.f32 %v4540, %v4541
        %v4543 = vadd.f32 %v4542, %v4121
        %v4544 = vmul.f32 %v3468, 0.9999323
        %v4545 = vmul.f32 %v3470, -0.011635266
        %v4546 = vadd.f32 %v4544, %v4545
        %v4547 = vadd.f32 %v4546, %v4126
        %v4548 = vmul.f32 %v3475, 0.9999323
        %v4549 = vmul.f32 %v3477, -0.011635266
        %v4550 = vadd.f32 %v4548, %v4549
        %v4551 = vadd.f32 %v4550, %v4131
        %v4552 = vmul.f32 %v4543, %v4543
        %v4553 = vmul.f32 %v4547, %v4547
        %v4554 = vadd.f32 %v4552, %v4553
        %v4555 = vmul.f32 %v4551, %v4551
        %v4556 = vadd.f32 %v4554, %v4555
        %v4557 = vadd.f32 %v4554, 1e-20
        %v4558 = vrcp.pop %v4557
        %v4559 = vmul.f32 %v4556, %v4558
        %v4560 = vrsqrt.pop %v4559
        %v4561 = vmul.f32 %v4560, %v4559
        %v4562 = vmul.f32 %v4561, %v4560
        %v4563 = vmul.f32 0.5, %v4562
        %v4564 = vsub.f32 1.5, %v4563
        %v4565 = vmul.f32 %v4560, %v4564
        %v4566 = vmul.f32 %v4559, %v4565
        %vm4567 = vcmp.eq.f32.partialorder %v4559, inf
        %v4568 = vsel %vm4567, %v4559, %v4566
        %vm4569 = vcmp.eq.f32.partialorder %v4559, 0.0
        %v4570 = vand.u32 %v4559, 2147483648
        %v4571 = vsel %vm4569, %v4570, %v4568
        %v4572 = vmul.f32 %v4543, 2.144507
        %vm4573 = vcmp.gt.f32.partialorder %v4543, 0.0
        %vm4574 = vcmp.le.f32.partialorder %v4547, %v4572
        %vm4575 = vmand %vm4573, %vm4574
        %v4576 = vsub.f32 0.0, %v4572
        %vm4577 = vcmp.gt.f32.partialorder %v4547, %v4576
        %vm4578 = vmand %vm4575, %vm4577
        %vm4579 = vcmp.gt.f32.partialorder %v4556, 0.01
        %vm4580 = vmand %vm4578, %vm4579
        %vm4581 = vcmp.le.f32.partialorder %v4556, 100.0
        %vm4582 = vmand %vm4580, %vm4581
        %v4583 = vadd.f32 %v4556, %v3797
        %v4584 = vmul.f32 %v3641, %v4543
        %v4585 = vmul.f32 %v3796, %v4547
        %v4586 = vadd.f32 %v4584, %v4585
        %v4587 = vmul.f32 %v4571, %v4586
        %v4588 = vmul.f32 %v4165, %v4587
        %v4589 = vsub.f32 %v4583, %v4588
        %v4590 = vadd.f32 %v4556, %v4117
        %v4591 = vmul.f32 %v3961, %v4543
        %v4592 = vmul.f32 %v4116, %v4547
        %v4593 = vadd.f32 %v4591, %v4592
        %v4594 = vmul.f32 %v4571, %v4593
        %v4595 = vmul.f32 %v4173, %v4594
        %v4596 = vsub.f32 %v4590, %v4595
        %v4597 = vmin.f32 %v4537, %v4589
        %v4598 = vmin.f32 %v4538, %v4596
        %vm4599 = vmand %vm4539, %vm4582
        %v4600 = vmul.f32 %v3463, 0.011635266
        %v4601 = vadd.f32 %v4540, %v4600
        %v4602 = vadd.f32 %v4601, %v4121
        %v4603 = vmul.f32 %v3470, 0.011635266
        %v4604 = vadd.f32 %v4544, %v4603
        %v4605 = vadd.f32 %v4604, %v4126
        %v4606 = vmul.f32 %v3477, 0.011635266
        %v4607 = vadd.f32 %v4548, %v4606
        %v4608 = vadd.f32 %v4607, %v4131
        %v4609 = vmul.f32 %v4602, %v4602
        %v4610 = vmul.f32 %v4605, %v4605
        %v4611 = vadd.f32 %v4609, %v4610
        %v4612 = vmul.f32 %v4608, %v4608
        %v4613 = vadd.f32 %v4611, %v4612
        %v4614 = vadd.f32 %v4611, 1e-20
        %v4615 = vrcp.pop %v4614
        %v4616 = vmul.f32 %v4613, %v4615
        %v4617 = vrsqrt.pop %v4616
        %v4618 = vmul.f32 %v4617, %v4616
        %v4619 = vmul.f32 %v4618, %v4617
        %v4620 = vmul.f32 0.5, %v4619
        %v4621 = vsub.f32 1.5, %v4620
        %v4622 = vmul.f32 %v4617, %v4621
        %v4623 = vmul.f32 %v4616, %v4622
        %vm4624 = vcmp.eq.f32.partialorder %v4616, inf
        %v4625 = vsel %vm4624, %v4616, %v4623
        %vm4626 = vcmp.eq.f32.partialorder %v4616, 0.0
        %v4627 = vand.u32 %v4616, 2147483648
        %v4628 = vsel %vm4626, %v4627, %v4625
        %v4629 = vmul.f32 %v4602, 2.144507
        %vm4630 = vcmp.gt.f32.partialorder %v4602, 0.0
        %vm4631 = vcmp.le.f32.partialorder %v4605, %v4629
        %vm4632 = vmand %vm4630, %vm4631
        %v4633 = vsub.f32 0.0, %v4629
        %vm4634 = vcmp.gt.f32.partialorder %v4605, %v4633
        %vm4635 = vmand %vm4632, %vm4634
        %vm4636 = vcmp.gt.f32.partialorder %v4613, 0.01
        %vm4637 = vmand %vm4635, %vm4636
        %vm4638 = vcmp.le.f32.partialorder %v4613, 100.0
        %vm4639 = vmand %vm4637, %vm4638
        %v4640 = vadd.f32 %v4613, %v3797
        %v4641 = vmul.f32 %v3641, %v4602
        %v4642 = vmul.f32 %v3796, %v4605
        %v4643 = vadd.f32 %v4641, %v4642
        %v4644 = vmul.f32 %v4628, %v4643
        %v4645 = vmul.f32 %v4165, %v4644
        %v4646 = vsub.f32 %v4640, %v4645
        %v4647 = vadd.f32 %v4613, %v4117
        %v4648 = vmul.f32 %v3961, %v4602
        %v4649 = vmul.f32 %v4116, %v4605
        %v4650 = vadd.f32 %v4648, %v4649
        %v4651 = vmul.f32 %v4628, %v4650
        %v4652 = vmul.f32 %v4173, %v4651
        %v4653 = vsub.f32 %v4647, %v4652
        %v4654 = vmin.f32 %v4597, %v4646
        %v4655 = vmin.f32 %v4598, %v4653
        %vm4656 = vmand %vm4599, %vm4639
        %v4657 = vmul.f32 %v3463, 0.034899496
        %v4658 = vadd.f32 %v4480, %v4657
        %v4659 = vadd.f32 %v4658, %v4121
        %v4660 = vmul.f32 %v3470, 0.034899496
        %v4661 = vadd.f32 %v4484, %v4660
        %v4662 = vadd.f32 %v4661, %v4126
        %v4663 = vmul.f32 %v3477, 0.034899496
        %v4664 = vadd.f32 %v4488, %v4663
        %v4665 = vadd.f32 %v4664, %v4131
        %v4666 = vmul.f32 %v4659, %v4659
        %v4667 = vmul.f32 %v4662, %v4662
        %v4668 = vadd.f32 %v4666, %v4667
        %v4669 = vmul.f32 %v4665, %v4665
        %v4670 = vadd.f32 %v4668, %v4669
        %v4671 = vadd.f32 %v4668, 1e-20
        %v4672 = vrcp.pop %v4671
        %v4673 = vmul.f32 %v4670, %v4672
        %v4674 = vrsqrt.pop %v4673
        %v4675 = vmul.f32 %v4674, %v4673
        %v4676 = vmul.f32 %v4675, %v4674
        %v4677 = vmul.f32 0.5, %v4676
        %v4678 = vsub.f32 1.5, %v4677
        %v4679 = vmul.f32 %v4674, %v4678
        %v4680 = vmul.f32 %v4673, %v4679
        %vm4681 = vcmp.eq.f32.partialorder %v4673, inf
        %v4682 = vsel %vm4681, %v4673, %v4680
        %vm4683 = vcmp.eq.f32.partialorder %v4673, 0.0
        %v4684 = vand.u32 %v4673, 2147483648
        %v4685 = vsel %vm4683, %v4684, %v4682
        %v4686 = vmul.f32 %v4659, 2.144507
        %vm4687 = vcmp.gt.f32.partialorder %v4659, 0.0
        %vm4688 = vcmp.le.f32.partialorder %v4662, %v4686
        %vm4689 = vmand %vm4687, %vm4688
        %v4690 = vsub.f32 0.0, %v4686
        %vm4691 = vcmp.gt.f32.partialorder %v4662, %v4690
        %vm4692 = vmand %vm4689, %vm4691
        %vm4693 = vcmp.gt.f32.partialorder %v4670, 0.01
        %vm4694 = vmand %vm4692, %vm4693
        %vm4695 = vcmp.le.f32.partialorder %v4670, 100.0
        %vm4696 = vmand %vm4694, %vm4695
        %v4697 = vadd.f32 %v4670, %v3797
        %v4698 = vmul.f32 %v3641, %v4659
        %v4699 = vmul.f32 %v3796, %v4662
        %v4700 = vadd.f32 %v4698, %v4699
        %v4701 = vmul.f32 %v4685, %v4700
        %v4702 = vmul.f32 %v4165, %v4701
        %v4703 = vsub.f32 %v4697, %v4702
        %v4704 = vadd.f32 %v4670, %v4117
        %v4705 = vmul.f32 %v3961, %v4659
        %v4706 = vmul.f32 %v4116, %v4662
        %v4707 = vadd.f32 %v4705, %v4706
        %v4708 = vmul.f32 %v4685, %v4707
        %v4709 = vmul.f32 %v4173, %v4708
        %v4710 = vsub.f32 %v4704, %v4709
        %v4711 = vmin.f32 %v4654, %v4703
        %v4712 = vmin.f32 %v4655, %v4710
        %vm4713 = vmand %vm4656, %vm4696
        %v4714 = vmul.f32 %v3463, 0.05814483
        %v4715 = vadd.f32 %v4420, %v4714
        %v4716 = vadd.f32 %v4715, %v4121
        %v4717 = vmul.f32 %v3470, 0.05814483
        %v4718 = vadd.f32 %v4424, %v4717
        %v4719 = vadd.f32 %v4718, %v4126
        %v4720 = vmul.f32 %v3477, 0.05814483
        %v4721 = vadd.f32 %v4428, %v4720
        %v4722 = vadd.f32 %v4721, %v4131
        %v4723 = vmul.f32 %v4716, %v4716
        %v4724 = vmul.f32 %v4719, %v4719
        %v4725 = vadd.f32 %v4723, %v4724
        %v4726 = vmul.f32 %v4722, %v4722
        %v4727 = vadd.f32 %v4725, %v4726
        %v4728 = vadd.f32 %v4725, 1e-20
        %v4729 = vrcp.pop %v4728
        %v4730 = vmul.f32 %v4727, %v4729
        %v4731 = vrsqrt.pop %v4730
        %v4732 = vmul.f32 %v4731, %v4730
        %v4733 = vmul.f32 %v4732, %v4731
        %v4734 = vmul.f32 0.5, %v4733
        %v4735 = vsub.f32 1.5, %v4734
        %v4736 = vmul.f32 %v4731, %v4735
        %v4737 = vmul.f32 %v4730, %v4736
        %vm4738 = vcmp.eq.f32.partialorder %v4730, inf
        %v4739 = vsel %vm4738, %v4730, %v4737
        %vm4740 = vcmp.eq.f32.partialorder %v4730, 0.0
        %v4741 = vand.u32 %v4730, 2147483648
        %v4742 = vsel %vm4740, %v4741, %v4739
        %v4743 = vmul.f32 %v4716, 2.144507
        %vm4744 = vcmp.gt.f32.partialorder %v4716, 0.0
        %vm4745 = vcmp.le.f32.partialorder %v4719, %v4743
        %vm4746 = vmand %vm4744, %vm4745
        %v4747 = vsub.f32 0.0, %v4743
        %vm4748 = vcmp.gt.f32.partialorder %v4719, %v4747
        %vm4749 = vmand %vm4746, %vm4748
        %vm4750 = vcmp.gt.f32.partialorder %v4727, 0.01
        %vm4751 = vmand %vm4749, %vm4750
        %vm4752 = vcmp.le.f32.partialorder %v4727, 100.0
        %vm4753 = vmand %vm4751, %vm4752
        %v4754 = vadd.f32 %v4727, %v3797
        %v4755 = vmul.f32 %v3641, %v4716
        %v4756 = vmul.f32 %v3796, %v4719
        %v4757 = vadd.f32 %v4755, %v4756
        %v4758 = vmul.f32 %v4742, %v4757
        %v4759 = vmul.f32 %v4165, %v4758
        %v4760 = vsub.f32 %v4754, %v4759
        %v4761 = vadd.f32 %v4727, %v4117
        %v4762 = vmul.f32 %v3961, %v4716
        %v4763 = vmul.f32 %v4116, %v4719
        %v4764 = vadd.f32 %v4762, %v4763
        %v4765 = vmul.f32 %v4742, %v4764
        %v4766 = vmul.f32 %v4173, %v4765
        %v4767 = vsub.f32 %v4761, %v4766
        %v4768 = vmin.f32 %v4711, %v4760
        %v4769 = vmin.f32 %v4712, %v4767
        %vm4770 = vmand %vm4713, %vm4753
        %v4771 = vmul.f32 %v3463, 0.08135867
        %v4772 = vadd.f32 %v4360, %v4771
        %v4773 = vadd.f32 %v4772, %v4121
        %v4774 = vmul.f32 %v3470, 0.08135867
        %v4775 = vadd.f32 %v4364, %v4774
        %v4776 = vadd.f32 %v4775, %v4126
        %v4777 = vmul.f32 %v3477, 0.08135867
        %v4778 = vadd.f32 %v4368, %v4777
        %v4779 = vadd.f32 %v4778, %v4131
        %v4780 = vmul.f32 %v4773, %v4773
        %v4781 = vmul.f32 %v4776, %v4776
        %v4782 = vadd.f32 %v4780, %v4781
        %v4783 = vmul.f32 %v4779, %v4779
        %v4784 = vadd.f32 %v4782, %v4783
        %v4785 = vadd.f32 %v4782, 1e-20
        %v4786 = vrcp.pop %v4785
        %v4787 = vmul.f32 %v4784, %v4786
        %v4788 = vrsqrt.pop %v4787
        %v4789 = vmul.f32 %v4788, %v4787
        %v4790 = vmul.f32 %v4789, %v4788
        %v4791 = vmul.f32 0.5, %v4790
        %v4792 = vsub.f32 1.5, %v4791
        %v4793 = vmul.f32 %v4788, %v4792
        %v4794 = vmul.f32 %v4787, %v4793
        %vm4795 = vcmp.eq.f32.partialorder %v4787, inf
        %v4796 = vsel %vm4795, %v4787, %v4794
        %vm4797 = vcmp.eq.f32.partialorder %v4787, 0.0
        %v4798 = vand.u32 %v4787, 2147483648
        %v4799 = vsel %vm4797, %v4798, %v4796
        %v4800 = vmul.f32 %v4773, 2.144507
        %vm4801 = vcmp.gt.f32.partialorder %v4773, 0.0
        %vm4802 = vcmp.le.f32.partialorder %v4776, %v4800
        %vm4803 = vmand %vm4801, %vm4802
        %v4804 = vsub.f32 0.0, %v4800
        %vm4805 = vcmp.gt.f32.partialorder %v4776, %v4804
        %vm4806 = vmand %vm4803, %vm4805
        %vm4807 = vcmp.gt.f32.partialorder %v4784, 0.01
        %vm4808 = vmand %vm4806, %vm4807
        %vm4809 = vcmp.le.f32.partialorder %v4784, 100.0
        %vm4810 = vmand %vm4808, %vm4809
        %v4811 = vadd.f32 %v4784, %v3797
        %v4812 = vmul.f32 %v3641, %v4773
        %v4813 = vmul.f32 %v3796, %v4776
        %v4814 = vadd.f32 %v4812, %v4813
        %v4815 = vmul.f32 %v4799, %v4814
        %v4816 = vmul.f32 %v4165, %v4815
        %v4817 = vsub.f32 %v4811, %v4816
        %v4818 = vadd.f32 %v4784, %v4117
        %v4819 = vmul.f32 %v3961, %v4773
        %v4820 = vmul.f32 %v4116, %v4776
        %v4821 = vadd.f32 %v4819, %v4820
        %v4822 = vmul.f32 %v4799, %v4821
        %v4823 = vmul.f32 %v4173, %v4822
        %v4824 = vsub.f32 %v4818, %v4823
        %v4825 = vmin.f32 %v4768, %v4817
        %v4826 = vmin.f32 %v4769, %v4824
        %vm4827 = vmand %vm4770, %vm4810
        %v4828 = vmul.f32 %v3463, 0.104528464
        %v4829 = vadd.f32 %v4300, %v4828
        %v4830 = vadd.f32 %v4829, %v4121
        %v4831 = vmul.f32 %v3470, 0.104528464
        %v4832 = vadd.f32 %v4304, %v4831
        %v4833 = vadd.f32 %v4832, %v4126
        %v4834 = vmul.f32 %v3477, 0.104528464
        %v4835 = vadd.f32 %v4308, %v4834
        %v4836 = vadd.f32 %v4835, %v4131
        %v4837 = vmul.f32 %v4830, %v4830
        %v4838 = vmul.f32 %v4833, %v4833
        %v4839 = vadd.f32 %v4837, %v4838
        %v4840 = vmul.f32 %v4836, %v4836
        %v4841 = vadd.f32 %v4839, %v4840
        %v4842 = vadd.f32 %v4839, 1e-20
        %v4843 = vrcp.pop %v4842
        %v4844 = vmul.f32 %v4841, %v4843
        %v4845 = vrsqrt.pop %v4844
        %v4846 = vmul.f32 %v4845, %v4844
        %v4847 = vmul.f32 %v4846, %v4845
        %v4848 = vmul.f32 0.5, %v4847
        %v4849 = vsub.f32 1.5, %v4848
        %v4850 = vmul.f32 %v4845, %v4849
        %v4851 = vmul.f32 %v4844, %v4850
        %vm4852 = vcmp.eq.f32.partialorder %v4844, inf
        %v4853 = vsel %vm4852, %v4844, %v4851
        %vm4854 = vcmp.eq.f32.partialorder %v4844, 0.0
        %v4855 = vand.u32 %v4844, 2147483648
        %v4856 = vsel %vm4854, %v4855, %v4853
        %v4857 = vmul.f32 %v4830, 2.144507
        %vm4858 = vcmp.gt.f32.partialorder %v4830, 0.0
        %vm4859 = vcmp.le.f32.partialorder %v4833, %v4857
        %vm4860 = vmand %vm4858, %vm4859
        %v4861 = vsub.f32 0.0, %v4857
        %vm4862 = vcmp.gt.f32.partialorder %v4833, %v4861
        %vm4863 = vmand %vm4860, %vm4862
        %vm4864 = vcmp.gt.f32.partialorder %v4841, 0.01
        %vm4865 = vmand %vm4863, %vm4864
        %vm4866 = vcmp.le.f32.partialorder %v4841, 100.0
        %vm4867 = vmand %vm4865, %vm4866
        %v4868 = vadd.f32 %v4841, %v3797
        %v4869 = vmul.f32 %v3641, %v4830
        %v4870 = vmul.f32 %v3796, %v4833
        %v4871 = vadd.f32 %v4869, %v4870
        %v4872 = vmul.f32 %v4856, %v4871
        %v4873 = vmul.f32 %v4165, %v4872
        %v4874 = vsub.f32 %v4868, %v4873
        %v4875 = vadd.f32 %v4841, %v4117
        %v4876 = vmul.f32 %v3961, %v4830
        %v4877 = vmul.f32 %v4116, %v4833
        %v4878 = vadd.f32 %v4876, %v4877
        %v4879 = vmul.f32 %v4856, %v4878
        %v4880 = vmul.f32 %v4173, %v4879
        %v4881 = vsub.f32 %v4875, %v4880
        %v4882 = vmin.f32 %v4825, %v4874
        %v4883 = vmin.f32 %v4826, %v4881
        %vm4884 = vmand %vm4827, %vm4867
        %v4885 = vmul.f32 %v3463, 0.12764165
        %v4886 = vadd.f32 %v4240, %v4885
        %v4887 = vadd.f32 %v4886, %v4121
        %v4888 = vmul.f32 %v3470, 0.12764165
        %v4889 = vadd.f32 %v4244, %v4888
        %v4890 = vadd.f32 %v4889, %v4126
        %v4891 = vmul.f32 %v3477, 0.12764165
        %v4892 = vadd.f32 %v4248, %v4891
        %v4893 = vadd.f32 %v4892, %v4131
        %v4894 = vmul.f32 %v4887, %v4887
        %v4895 = vmul.f32 %v4890, %v4890
        %v4896 = vadd.f32 %v4894, %v4895
        %v4897 = vmul.f32 %v4893, %v4893
        %v4898 = vadd.f32 %v4896, %v4897
        %v4899 = vadd.f32 %v4896, 1e-20
        %v4900 = vrcp.pop %v4899
        %v4901 = vmul.f32 %v4898, %v4900
        %v4902 = vrsqrt.pop %v4901
        %v4903 = vmul.f32 %v4902, %v4901
        %v4904 = vmul.f32 %v4903, %v4902
        %v4905 = vmul.f32 0.5, %v4904
        %v4906 = vsub.f32 1.5, %v4905
        %v4907 = vmul.f32 %v4902, %v4906
        %v4908 = vmul.f32 %v4901, %v4907
        %vm4909 = vcmp.eq.f32.partialorder %v4901, inf
        %v4910 = vsel %vm4909, %v4901, %v4908
        %vm4911 = vcmp.eq.f32.partialorder %v4901, 0.0
        %v4912 = vand.u32 %v4901, 2147483648
        %v4913 = vsel %vm4911, %v4912, %v4910
        %v4914 = vmul.f32 %v4887, 2.144507
        %vm4915 = vcmp.gt.f32.partialorder %v4887, 0.0
        %vm4916 = vcmp.le.f32.partialorder %v4890, %v4914
        %vm4917 = vmand %vm4915, %vm4916
        %v4918 = vsub.f32 0.0, %v4914
        %vm4919 = vcmp.gt.f32.partialorder %v4890, %v4918
        %vm4920 = vmand %vm4917, %vm4919
        %vm4921 = vcmp.gt.f32.partialorder %v4898, 0.01
        %vm4922 = vmand %vm4920, %vm4921
        %vm4923 = vcmp.le.f32.partialorder %v4898, 100.0
        %vm4924 = vmand %vm4922, %vm4923
        %v4925 = vadd.f32 %v4898, %v3797
        %v4926 = vmul.f32 %v3641, %v4887
        %v4927 = vmul.f32 %v3796, %v4890
        %v4928 = vadd.f32 %v4926, %v4927
        %v4929 = vmul.f32 %v4913, %v4928
        %v4930 = vmul.f32 %v4165, %v4929
        %v4931 = vsub.f32 %v4925, %v4930
        %v4932 = vadd.f32 %v4898, %v4117
        %v4933 = vmul.f32 %v3961, %v4887
        %v4934 = vmul.f32 %v4116, %v4890
        %v4935 = vadd.f32 %v4933, %v4934
        %v4936 = vmul.f32 %v4913, %v4935
        %v4937 = vmul.f32 %v4173, %v4936
        %v4938 = vsub.f32 %v4932, %v4937
        %v4939 = vmin.f32 %v4882, %v4931
        %v4940 = vmin.f32 %v4883, %v4938
        %vm4941 = vmand %vm4884, %vm4924
        %v4942 = vmul.f32 %v3463, 0.15068571
        %v4943 = vadd.f32 %v4180, %v4942
        %v4944 = vadd.f32 %v4943, %v4121
        %v4945 = vmul.f32 %v3470, 0.15068571
        %v4946 = vadd.f32 %v4184, %v4945
        %v4947 = vadd.f32 %v4946, %v4126
        %v4948 = vmul.f32 %v3477, 0.15068571
        %v4949 = vadd.f32 %v4188, %v4948
        %v4950 = vadd.f32 %v4949, %v4131
        %v4951 = vmul.f32 %v4944, %v4944
        %v4952 = vmul.f32 %v4947, %v4947
        %v4953 = vadd.f32 %v4951, %v4952
        %v4954 = vmul.f32 %v4950, %v4950
        %v4955 = vadd.f32 %v4953, %v4954
        %v4956 = vadd.f32 %v4953, 1e-20
        %v4957 = vrcp.pop %v4956
        %v4958 = vmul.f32 %v4955, %v4957
        %v4959 = vrsqrt.pop %v4958
        %v4960 = vmul.f32 %v4959, %v4958
        %v4961 = vmul.f32 %v4960, %v4959
        %v4962 = vmul.f32 0.5, %v4961
        %v4963 = vsub.f32 1.5, %v4962
        %v4964 = vmul.f32 %v4959, %v4963
        %v4965 = vmul.f32 %v4958, %v4964
        %vm4966 = vcmp.eq.f32.partialorder %v4958, inf
        %v4967 = vsel %vm4966, %v4958, %v4965
        %vm4968 = vcmp.eq.f32.partialorder %v4958, 0.0
        %v4969 = vand.u32 %v4958, 2147483648
        %v4970 = vsel %vm4968, %v4969, %v4967
        %v4971 = vmul.f32 %v4944, 2.144507
        %vm4972 = vcmp.gt.f32.partialorder %v4944, 0.0
        %vm4973 = vcmp.le.f32.partialorder %v4947, %v4971
        %vm4974 = vmand %vm4972, %vm4973
        %v4975 = vsub.f32 0.0, %v4971
        %vm4976 = vcmp.gt.f32.partialorder %v4947, %v4975
        %vm4977 = vmand %vm4974, %vm4976
        %vm4978 = vcmp.gt.f32.partialorder %v4955, 0.01
        %vm4979 = vmand %vm4977, %vm4978
        %vm4980 = vcmp.le.f32.partialorder %v4955, 100.0
        %vm4981 = vmand %vm4979, %vm4980
        %v4982 = vadd.f32 %v4955, %v3797
        %v4983 = vmul.f32 %v3641, %v4944
        %v4984 = vmul.f32 %v3796, %v4947
        %v4985 = vadd.f32 %v4983, %v4984
        %v4986 = vmul.f32 %v4970, %v4985
        %v4987 = vmul.f32 %v4165, %v4986
        %v4988 = vsub.f32 %v4982, %v4987
        %v4989 = vadd.f32 %v4955, %v4117
        %v4990 = vmul.f32 %v3961, %v4944
        %v4991 = vmul.f32 %v4116, %v4947
        %v4992 = vadd.f32 %v4990, %v4991
        %v4993 = vmul.f32 %v4970, %v4992
        %v4994 = vmul.f32 %v4173, %v4993
        %v4995 = vsub.f32 %v4989, %v4994
        %v4996 = vmin.f32 %v4939, %v4988
        %v4997 = vmin.f32 %v4940, %v4995
        %vm4998 = vmand %vm4941, %vm4981
        %v4999 = vmul.f32 %v3463, 0.17364818
        %v5000 = vadd.f32 %v4118, %v4999
        %v5001 = vadd.f32 %v5000, %v4121
        %v5002 = vmul.f32 %v3470, 0.17364818
        %v5003 = vadd.f32 %v4123, %v5002
        %v5004 = vadd.f32 %v5003, %v4126
        %v5005 = vmul.f32 %v3477, 0.17364818
        %v5006 = vadd.f32 %v4128, %v5005
        %v5007 = vadd.f32 %v5006, %v4131
        %v5008 = vmul.f32 %v5001, %v5001
        %v5009 = vmul.f32 %v5004, %v5004
        %v5010 = vadd.f32 %v5008, %v5009
        %v5011 = vmul.f32 %v5007, %v5007
        %v5012 = vadd.f32 %v5010, %v5011
        %v5013 = vadd.f32 %v5010, 1e-20
        %v5014 = vrcp.pop %v5013
        %v5015 = vmul.f32 %v5012, %v5014
        %v5016 = vrsqrt.pop %v5015
        %v5017 = vmul.f32 %v5016, %v5015
        %v5018 = vmul.f32 %v5017, %v5016
        %v5019 = vmul.f32 0.5, %v5018
        %v5020 = vsub.f32 1.5, %v5019
        %v5021 = vmul.f32 %v5016, %v5020
        %v5022 = vmul.f32 %v5015, %v5021
        %vm5023 = vcmp.eq.f32.partialorder %v5015, inf
        %v5024 = vsel %vm5023, %v5015, %v5022
        %vm5025 = vcmp.eq.f32.partialorder %v5015, 0.0
        %v5026 = vand.u32 %v5015, 2147483648
        %v5027 = vsel %vm5025, %v5026, %v5024
        %v5028 = vmul.f32 %v5001, 2.144507
        %vm5029 = vcmp.gt.f32.partialorder %v5001, 0.0
        %vm5030 = vcmp.le.f32.partialorder %v5004, %v5028
        %vm5031 = vmand %vm5029, %vm5030
        %v5032 = vsub.f32 0.0, %v5028
        %vm5033 = vcmp.gt.f32.partialorder %v5004, %v5032
        %vm5034 = vmand %vm5031, %vm5033
        %vm5035 = vcmp.gt.f32.partialorder %v5012, 0.01
        %vm5036 = vmand %vm5034, %vm5035
        %vm5037 = vcmp.le.f32.partialorder %v5012, 100.0
        %vm5038 = vmand %vm5036, %vm5037
        %v5039 = vadd.f32 %v5012, %v3797
        %v5040 = vmul.f32 %v3641, %v5001
        %v5041 = vmul.f32 %v3796, %v5004
        %v5042 = vadd.f32 %v5040, %v5041
        %v5043 = vmul.f32 %v5027, %v5042
        %v5044 = vmul.f32 %v4165, %v5043
        %v5045 = vsub.f32 %v5039, %v5044
        %v5046 = vadd.f32 %v5012, %v4117
        %v5047 = vmul.f32 %v3961, %v5001
        %v5048 = vmul.f32 %v4116, %v5004
        %v5049 = vadd.f32 %v5047, %v5048
        %v5050 = vmul.f32 %v5027, %v5049
        %v5051 = vmul.f32 %v4173, %v5050
        %v5052 = vsub.f32 %v5046, %v5051
        %v5053 = vmin.f32 %v4996, %v5045
        %v5054 = vmin.f32 %v4997, %v5052
        %vm5055 = vmand %vm4998, %vm5038
        %v5056 = vsel %vm5055, %v850, 0.0
        %s5057 = scalar_lea.vmem %s703, 8 [#allocation15]
        %v5058 = vld [vmem:[%s5057] sm:$0xff]
        %s5059 = scalar_lea.vmem %s713, 8 [#allocation16]
        %v5060 = vld [vmem:[%s5059] sm:$0xff]
        %v5061 = vsub.f32 64.0, %v5058
        %v5062 = vmul.f32 %v5061, 0.035452
        %v5063 = vsub.f32 %v5062, 1.134464
        %v5064 = vsub.f32 64.0, %v5060
        %v5065 = vmul.f32 %v5064, 0.1546875
        %v5066 = vadd.f32 %v5065, 0.1
        %v5067 = vmul.f32 %v3132, %v3132
        %v5068 = vmul.f32 %v5066, %v5066
        %v5069 = vadd.f32 %v5067, %v5068
        %v5070 = vmul.f32 %v3132, 2.0
        %v5071 = vmul.f32 %v5070, %v5066
        %v5072 = vsub.f32 %v5063, %v3129
        %v5073 = vmul.f32 %v5072, 0.017453292
        %v5074 = vand.u32 2147483647, %v5073
        %vm5075 = vcmp.le.f32.partialorder %v5074, 0.7853982
        %vm5076 = vcmp.lt.s32.totalorder %v5073, 0
        %v5077 = vand.u32 %v5073, 2139095040
        %v5078 = vshrl.u32 %v5077, 23
        %v5079 = vsub.s32 %v5078, 127
        %v5080 = vand.u32 2147483647, %v5073
        %v5081 = vand.u32 %v5080, 8388607
        %v5082 = vor.u32 %v5081, 8388608
        %v5083 = vsub.s32 0, %v5082
        %v5084 = vadd.s32 %v5079, 1
        %vm5085 = vcmp.gt.s32.totalorder %v5084, 0
        %v5086 = vsel %vm5085, %v5084, 0
        %v5087 = vshrl.u32 %v5086, 5
        %v5088 = vand.u32 %v5086, 31
        %v5089 = vsub.s32 32, %v5088
        %v5090 = vshrl.u32 683565275, %v5089
        %v5091 = vshll.u32 683565275, %v5088
        %v5092 = vshrl.u32 2475754826, %v5089
        %v5093 = vor.u32 %v5091, %v5092
        %v5094 = vshll.u32 2475754826, %v5088
        %v5095 = vshrl.u32 2131351028, %v5089
        %v5096 = vor.u32 %v5094, %v5095
        %v5097 = vshll.u32 2131351028, %v5088
        %v5098 = vshrl.u32 2102212464, %v5089
        %v5099 = vor.u32 %v5097, %v5098
        %v5100 = vshll.u32 2102212464, %v5088
        %v5101 = vshrl.u32 920167782, %v5089
        %v5102 = vor.u32 %v5100, %v5101
        %v5103 = vshll.u32 920167782, %v5088
        %v5104 = vshrl.u32 1326507024, %v5089
        %v5105 = vor.u32 %v5103, %v5104
        %vm5106 = vcmp.lt.s32.totalorder %v5087, 1
        %vm5107 = vcmp.lt.s32.totalorder %v5087, 2
        %vm5108 = vcmp.lt.s32.totalorder %v5087, 3
        %vm5109 = vcmp.lt.s32.totalorder %v5087, 4
        %v5110 = vsel %vm5106, %v5090, %v5093
        %v5111 = vsel %vm5109, %v5099, 2102212464
        %v5112 = vsel %vm5108, %v5096, %v5111
        %v5113 = vsel %vm5107, %v5110, %v5112
        %v5114 = vsel %vm5106, %v5093, %v5096
        %v5115 = vsel %vm5109, %v5102, 920167782
        %v5116 = vsel %vm5108, %v5099, %v5115
        %v5117 = vsel %vm5107, %v5114, %v5116
        %v5118 = vsel %vm5106, %v5096, %v5099
        %v5119 = vsel %vm5109, %v5105, 1326507024
        %v5120 = vsel %vm5108, %v5102, %v5119
        %v5121 = vsel %vm5107, %v5118, %v5120
        %v5122 = vshll.u32 %v5082, 8
        %v5123 = vand.u32 %v5122, 65535
        %v5124 = vshrl.u32 %v5122, 16
        %v5125 = vand.u32 %v5121, 65535
        %v5126 = vshrl.u32 %v5121, 16
        %v5127 = vmul.u32 %v5123, %v5125
        %v5128 = vmul.u32 %v5123, %v5126
        %v5129 = vmul.u32 %v5124, %v5125
        %v5130 = vmul.u32 %v5124, %v5126
        %v5131 = vshll.u32 %v5128, 16
        %v5132 = vshrl.u32 %v5128, 16
        %v5133 = vshll.u32 %v5129, 16
        %v5134 = vshrl.u32 %v5129, 16
        %vm5135 = vc.u32 %v5127, %v5131
        %v5136 = vsel %vm5135, 1, 0
        %v5137 = vadd.s32 %v5127, %v5131
        %v5138 = vadd.s32 %v5130, %v5136
        %vm5139 = vc.u32 %v5137, %v5133
        %v5140 = vsel %vm5139, 1, 0
        %v5141 = vadd.s32 %v5137, %v5133
        %v5142 = vadd.s32 %v5138, %v5140
        %v5143 = vadd.s32 %v5142, %v5132
        %v5144 = vadd.s32 %v5143, %v5134
        %v5145 = vand.u32 %v5122, 65535
        %v5146 = vshrl.u32 %v5122, 16
        %v5147 = vand.u32 %v5117, 65535
        %v5148 = vshrl.u32 %v5117, 16
        %v5149 = vmul.u32 %v5145, %v5147
        %v5150 = vmul.u32 %v5145, %v5148
        %v5151 = vmul.u32 %v5146, %v5147
        %v5152 = vmul.u32 %v5146, %v5148
        %v5153 = vshll.u32 %v5150, 16
        %v5154 = vshrl.u32 %v5150, 16
        %v5155 = vshll.u32 %v5151, 16
        %v5156 = vshrl.u32 %v5151, 16
        %vm5157 = vc.u32 %v5149, %v5153
        %v5158 = vsel %vm5157, 1, 0
        %v5159 = vadd.s32 %v5149, %v5153
        %v5160 = vadd.s32 %v5152, %v5158
        %vm5161 = vc.u32 %v5159, %v5155
        %v5162 = vsel %vm5161, 1, 0
        %v5163 = vadd.s32 %v5159, %v5155
        %v5164 = vadd.s32 %v5160, %v5162
        %v5165 = vadd.s32 %v5164, %v5154
        %v5166 = vadd.s32 %v5165, %v5156
        %v5167 = vmul.u32 %v5122, %v5113
        %v5168 = vadd.s32 %v5144, %v5163
        %vm5169 = vc.u32 %v5144, %v5163
        %v5170 = vadd.s32 %v5166, 1
        %v5171 = vsel %vm5169, %v5170, %v5166
        %v5172 = vadd.s32 %v5167, %v5171
        %v5173 = vadd.s32 %v5172, 536870912
        %v5174 = vshrl.u32 %v5173, 30
        %v5175 = vshll.u32 %v5174, 30
        %v5176 = vsub.s32 %v5172, %v5175
        %vm5177 = vcmp.lt.s32.totalorder %v5176, 0
        %v5178 = vsub.s32 0, %v5176
        %v5179 = vsel %vm5177, %v5178, %v5176
        %v5180 = vclz %v5179
        %v5181 = vsub.s32 %v5180, 2
        %vm5182 = vcmp.gt.s32.totalorder 0, %v5181
        %v5183 = vsel %vm5182, 0, %v5181
        %v5184 = vsub.s32 32, %v5183
        %v5185 = vshll.u32 %v5176, %v5183
        %v5186 = vshrl.u32 %v5168, %v5184
        %v5187 = vor.u32 %v5185, %v5186
        %v5188 = vsub.s32 4294967266, %v5183
        %v5189 = vadd.s32 %v5188, 127
        %v5190 = vshll.u32 %v5189, 23
        %v5191 = vor.u32 4788187, %v5190
        %v5192 = vand.u32 2147483647, %v5191
        %v5194 = vcvt.s32.f32 %v5187
        %v5195 = vmul.f32 %v5194, %v5192
        %v5196 = vxor.u32 %v5195, 2147483648
        %v5197 = vsel %vm5076, %v5196, %v5195
        %v5198 = vsub.s32 4, %v5174
        %v5199 = vsel %vm5076, %v5198, %v5174
        %v5200 = vsel %vm5075, %v5073, %v5197
        %v5201 = vsel %vm5075, 0, %v5199
        %v5202 = vmul.f32 %v5200, %v5200
        %v5203 = vmul.f32 %v5202, -0.001358992
        %v5204 = vadd.f32 %v5203, 0.041655596
        %v5205 = vmul.f32 %v5202, %v5204
        %v5206 = vadd.f32 %v5205, -0.4999988
        %v5207 = vmul.f32 %v5202, %v5206
        %v5208 = vadd.f32 1.0, %v5207
        %v5209 = vmul.f32 %v5200, %v5200
        %v5210 = vmul.f32 %v5209, -0.00019511016
        %v5211 = vadd.f32 %v5210, 0.008332121
        %v5212 = vmul.f32 %v5209, %v5211
        %v5213 = vadd.f32 %v5212, -0.16666654
        %v5214 = vmul.f32 %v5209, %v5213
        %v5215 = vadd.f32 %v5214, 1.0
        %v5216 = vmul.f32 %v5215, %v5200
        %vm5217 = vweird.f32 %v5073
        %v5218 = vand.u32 %v5201, 3
        %vm5219 = vcmp.lt.s32.totalorder %v5218, 2
        %vm5220 = vcmp.eq.s32.totalorder %v5218, 0
        %v5221 = vxor.u32 %v5216, 2147483648
        %v5222 = vsel %vm5220, %v5208, %v5221
        %vm5223 = vcmp.eq.s32.totalorder %v5218, 2
        %v5224 = vxor.u32 %v5208, 2147483648
        %v5225 = vsel %vm5223, %v5224, %v5216
        %v5226 = vsel %vm5219, %v5222, %v5225
        %v5227 = vsel %vm5217, nan, %v5226
        %v5228 = vmul.f32 %v5071, %v5227
        %v5229 = vsub.f32 %v5069, %v5228
        %s5230 = scalar_lea.vmem %s723, 8 [#allocation18]
        %v5231 = vld [vmem:[%s5230] sm:$0xff]
        %s5232 = scalar_lea.vmem %s733, 8 [#allocation19]
        %v5233 = vld [vmem:[%s5232] sm:$0xff]
        %v5234 = vsub.f32 64.0, %v5231
        %v5235 = vmul.f32 %v5234, 0.035452
        %v5236 = vsub.f32 %v5235, 1.134464
        %v5237 = vsub.f32 64.0, %v5233
        %v5238 = vmul.f32 %v5237, 0.1546875
        %v5239 = vadd.f32 %v5238, 0.1
        %v5240 = vmul.f32 %v5239, %v5239
        %v5241 = vadd.f32 %v5067, %v5240
        %v5242 = vmul.f32 %v5070, %v5239
        %v5243 = vsub.f32 %v5236, %v3129
        %v5244 = vmul.f32 %v5243, 0.017453292
        %v5245 = vand.u32 2147483647, %v5244
        %vm5246 = vcmp.le.f32.partialorder %v5245, 0.7853982
        %vm5247 = vcmp.lt.s32.totalorder %v5244, 0
        %v5248 = vand.u32 %v5244, 2139095040
        %v5249 = vshrl.u32 %v5248, 23
        %v5250 = vsub.s32 %v5249, 127
        %v5251 = vand.u32 2147483647, %v5244
        %v5252 = vand.u32 %v5251, 8388607
        %v5253 = vor.u32 %v5252, 8388608
        %v5254 = vsub.s32 0, %v5253
        %v5255 = vadd.s32 %v5250, 1
        %vm5256 = vcmp.gt.s32.totalorder %v5255, 0
        %v5257 = vsel %vm5256, %v5255, 0
        %v5258 = vshrl.u32 %v5257, 5
        %v5259 = vand.u32 %v5257, 31
        %v5260 = vsub.s32 32, %v5259
        %v5261 = vshrl.u32 683565275, %v5260
        %v5262 = vshll.u32 683565275, %v5259
        %v5263 = vshrl.u32 2475754826, %v5260
        %v5264 = vor.u32 %v5262, %v5263
        %v5265 = vshll.u32 2475754826, %v5259
        %v5266 = vshrl.u32 2131351028, %v5260
        %v5267 = vor.u32 %v5265, %v5266
        %v5268 = vshll.u32 2131351028, %v5259
        %v5269 = vshrl.u32 2102212464, %v5260
        %v5270 = vor.u32 %v5268, %v5269
        %v5271 = vshll.u32 2102212464, %v5259
        %v5272 = vshrl.u32 920167782, %v5260
        %v5273 = vor.u32 %v5271, %v5272
        %v5274 = vshll.u32 920167782, %v5259
        %v5275 = vshrl.u32 1326507024, %v5260
        %v5276 = vor.u32 %v5274, %v5275
        %vm5277 = vcmp.lt.s32.totalorder %v5258, 1
        %vm5278 = vcmp.lt.s32.totalorder %v5258, 2
        %vm5279 = vcmp.lt.s32.totalorder %v5258, 3
        %vm5280 = vcmp.lt.s32.totalorder %v5258, 4
        %v5281 = vsel %vm5277, %v5261, %v5264
        %v5282 = vsel %vm5280, %v5270, 2102212464
        %v5283 = vsel %vm5279, %v5267, %v5282
        %v5284 = vsel %vm5278, %v5281, %v5283
        %v5285 = vsel %vm5277, %v5264, %v5267
        %v5286 = vsel %vm5280, %v5273, 920167782
        %v5287 = vsel %vm5279, %v5270, %v5286
        %v5288 = vsel %vm5278, %v5285, %v5287
        %v5289 = vsel %vm5277, %v5267, %v5270
        %v5290 = vsel %vm5280, %v5276, 1326507024
        %v5291 = vsel %vm5279, %v5273, %v5290
        %v5292 = vsel %vm5278, %v5289, %v5291
        %v5293 = vshll.u32 %v5253, 8
        %v5294 = vand.u32 %v5293, 65535
        %v5295 = vshrl.u32 %v5293, 16
        %v5296 = vand.u32 %v5292, 65535
        %v5297 = vshrl.u32 %v5292, 16
        %v5298 = vmul.u32 %v5294, %v5296
        %v5299 = vmul.u32 %v5294, %v5297
        %v5300 = vmul.u32 %v5295, %v5296
        %v5301 = vmul.u32 %v5295, %v5297
        %v5302 = vshll.u32 %v5299, 16
        %v5303 = vshrl.u32 %v5299, 16
        %v5304 = vshll.u32 %v5300, 16
        %v5305 = vshrl.u32 %v5300, 16
        %vm5306 = vc.u32 %v5298, %v5302
        %v5307 = vsel %vm5306, 1, 0
        %v5308 = vadd.s32 %v5298, %v5302
        %v5309 = vadd.s32 %v5301, %v5307
        %vm5310 = vc.u32 %v5308, %v5304
        %v5311 = vsel %vm5310, 1, 0
        %v5312 = vadd.s32 %v5308, %v5304
        %v5313 = vadd.s32 %v5309, %v5311
        %v5314 = vadd.s32 %v5313, %v5303
        %v5315 = vadd.s32 %v5314, %v5305
        %v5316 = vand.u32 %v5293, 65535
        %v5317 = vshrl.u32 %v5293, 16
        %v5318 = vand.u32 %v5288, 65535
        %v5319 = vshrl.u32 %v5288, 16
        %v5320 = vmul.u32 %v5316, %v5318
        %v5321 = vmul.u32 %v5316, %v5319
        %v5322 = vmul.u32 %v5317, %v5318
        %v5323 = vmul.u32 %v5317, %v5319
        %v5324 = vshll.u32 %v5321, 16
        %v5325 = vshrl.u32 %v5321, 16
        %v5326 = vshll.u32 %v5322, 16
        %v5327 = vshrl.u32 %v5322, 16
        %vm5328 = vc.u32 %v5320, %v5324
        %v5329 = vsel %vm5328, 1, 0
        %v5330 = vadd.s32 %v5320, %v5324
        %v5331 = vadd.s32 %v5323, %v5329
        %vm5332 = vc.u32 %v5330, %v5326
        %v5333 = vsel %vm5332, 1, 0
        %v5334 = vadd.s32 %v5330, %v5326
        %v5335 = vadd.s32 %v5331, %v5333
        %v5336 = vadd.s32 %v5335, %v5325
        %v5337 = vadd.s32 %v5336, %v5327
        %v5338 = vmul.u32 %v5293, %v5284
        %v5339 = vadd.s32 %v5315, %v5334
        %vm5340 = vc.u32 %v5315, %v5334
        %v5341 = vadd.s32 %v5337, 1
        %v5342 = vsel %vm5340, %v5341, %v5337
        %v5343 = vadd.s32 %v5338, %v5342
        %v5344 = vadd.s32 %v5343, 536870912
        %v5345 = vshrl.u32 %v5344, 30
        %v5346 = vshll.u32 %v5345, 30
        %v5347 = vsub.s32 %v5343, %v5346
        %vm5348 = vcmp.lt.s32.totalorder %v5347, 0
        %v5349 = vsub.s32 0, %v5347
        %v5350 = vsel %vm5348, %v5349, %v5347
        %v5351 = vclz %v5350
        %v5352 = vsub.s32 %v5351, 2
        %vm5353 = vcmp.gt.s32.totalorder 0, %v5352
        %v5354 = vsel %vm5353, 0, %v5352
        %v5355 = vsub.s32 32, %v5354
        %v5356 = vshll.u32 %v5347, %v5354
        %v5357 = vshrl.u32 %v5339, %v5355
        %v5358 = vor.u32 %v5356, %v5357
        %v5359 = vsub.s32 4294967266, %v5354
        %v5360 = vadd.s32 %v5359, 127
        %v5361 = vshll.u32 %v5360, 23
        %v5362 = vor.u32 4788187, %v5361
        %v5363 = vand.u32 2147483647, %v5362
        %v5365 = vcvt.s32.f32 %v5358
        %v5366 = vmul.f32 %v5365, %v5363
        %v5367 = vxor.u32 %v5366, 2147483648
        %v5368 = vsel %vm5247, %v5367, %v5366
        %v5369 = vsub.s32 4, %v5345
        %v5370 = vsel %vm5247, %v5369, %v5345
        %v5371 = vsel %vm5246, %v5244, %v5368
        %v5372 = vsel %vm5246, 0, %v5370
        %v5373 = vmul.f32 %v5371, %v5371
        %v5374 = vmul.f32 %v5373, -0.001358992
        %v5375 = vadd.f32 %v5374, 0.041655596
        %v5376 = vmul.f32 %v5373, %v5375
        %v5377 = vadd.f32 %v5376, -0.4999988
        %v5378 = vmul.f32 %v5373, %v5377
        %v5379 = vadd.f32 1.0, %v5378
        %v5380 = vmul.f32 %v5371, %v5371
        %v5381 = vmul.f32 %v5380, -0.00019511016
        %v5382 = vadd.f32 %v5381, 0.008332121
        %v5383 = vmul.f32 %v5380, %v5382
        %v5384 = vadd.f32 %v5383, -0.16666654
        %v5385 = vmul.f32 %v5380, %v5384
        %v5386 = vadd.f32 %v5385, 1.0
        %v5387 = vmul.f32 %v5386, %v5371
        %vm5388 = vweird.f32 %v5244
        %v5389 = vand.u32 %v5372, 3
        %vm5390 = vcmp.lt.s32.totalorder %v5389, 2
        %vm5391 = vcmp.eq.s32.totalorder %v5389, 0
        %v5392 = vxor.u32 %v5387, 2147483648
        %v5393 = vsel %vm5391, %v5379, %v5392
        %vm5394 = vcmp.eq.s32.totalorder %v5389, 2
        %v5395 = vxor.u32 %v5379, 2147483648
        %v5396 = vsel %vm5394, %v5395, %v5387
        %v5397 = vsel %vm5390, %v5393, %v5396
        %v5398 = vsel %vm5388, nan, %v5397
        %v5399 = vmul.f32 %v5242, %v5398
        %v5400 = vsub.f32 %v5241, %v5399
        %v5401 = vmul.f32 %v5053, %v5056
        %v5402 = vmul.f32 %v5054, %v5056
        %v5403 = vmul.f32 %v5229, %v850
        %v5404 = vmul.f32 %v5400, %v850
        %v5405 = vadd.f32 %v3119, %v5401
        %v5406 = vadd.f32 %v3120, %v5402
        %v5407 = vadd.f32 %v2778, %v5056
        %v5408 = vadd.f32 %v3121, %v5403
        %v5409 = vadd.f32 %v3122, %v5404
        %v5410 = vld [vmem:[%s818] sm:$0xff]
        %v5411 = vadd.f32 %v5410, %v5405
        %5412 = vst [vmem:[%s818] sm:$0xff] %v5411
        %s5413 = scalar_lea.vmem %s818, 8 [#allocation21]
        %v5414 = vld [vmem:[%s5413] sm:$0xff]
        %v5415 = vadd.f32 %v5414, %v5406
        %5416 = vst [vmem:[%s5413] sm:$0xff] %v5415
        %s5417 = scalar_lea.vmem %s818, 16 [#allocation21]
        %v5418 = vld [vmem:[%s5417] sm:$0xff]
        %v5419 = vadd.f32 %v5418, %v5407
        %5420 = vst [vmem:[%s5417] sm:$0xff] %v5419
        %s5421 = scalar_lea.vmem %s818, 24 [#allocation21]
        %v5422 = vld [vmem:[%s5421] sm:$0xff]
        %v5423 = vadd.f32 %v5422, %v5408
        %5424 = vst [vmem:[%s5421] sm:$0xff] %v5423
        %s5425 = scalar_lea.vmem %s818, 32 [#allocation21]
        %v5426 = vld [vmem:[%s5425] sm:$0xff]
        %v5427 = vadd.f32 %v5426, %v5409
        %5428 = vst [vmem:[%s5425] sm:$0xff] %v5427
        %s5429 = sand.u32 %s365, 1
        %s5430 = scalar_lea.sflag [#allocation4], %s5429
        %s5431 = sand.u32 %s365, 1
        %s5432 = smul.addr %s5431, 40
        %s5433 = scalar_lea.vmem [#allocation21], %s5432
        // Predicated region
        $region113: #{tpu_custom_call.1} parent=63 // pred_check
          %p5434 = pneg %p375
        $region114: #{tpu_custom_call.1} parent=63 // pred_check_branch
          %5436 = sbr.rel (%p5434) target = $region116
        $region115: #{tpu_custom_call.1} parent=63 // pred_region
          %s5437 = smul.u32 5, %s48
          %5439 = vsyncadd %s5430, 0
          %s5440 = smul.addr %s5437, 8
          %s5441 = scalar_lea.hbm %s11, %s5440
          %s5442 = sshll.u32 %s5433, 4
          %s5443 = int_to_ptr.vmem [resolvable:$true] %s5442
          %s5444 = sshll.u32 %s5441, 4
          %s5445 = int_to_ptr.hbm [resolvable:$true] %s5444
          %5450 = dma.vmem_to_hbm [thread:$0]  %s5443, 640, %s5445, %s5430, 128, 128, 8
        $region116: #{tpu_custom_call.1} parent=63 // pred_fallthru
          _
      $region64: #{tpu_custom_call.1} parent=5 // pred_fallthru
        _
      %p5451 = scmp.le.s32.totalorder 2, %s39
      // Predicated region
      $region117: #{tpu_custom_call.1} parent=5 // pred_check
        %p5452 = pneg %p5451
      $region118: #{tpu_custom_call.1} parent=5 // pred_check_branch
        %5454 = sbr.rel (%p5452) target = $region120
      $region119: #{tpu_custom_call.1} parent=5 // pred_region
        %s5455 = ssub.s32 %s39, 2
        // Predicated region
        $region121: #{tpu_custom_call.1} parent=119 // pred_check
          %p5456 = pneg %p381
        $region122: #{tpu_custom_call.1} parent=119 // pred_check_branch
          %5458 = sbr.rel (%p5456) target = $region124
        $region123: #{tpu_custom_call.1} parent=119 // pred_region
          %s5459 = sand.u32 %s366, 1
          %s5460 = scalar_lea.sflag [#allocation4], %s5459
          %s5461 = sand.u32 %s366, 1
          %s5462 = smul.addr %s5461, 40
          %s5463 = scalar_lea.vmem [#allocation21], %s5462
          %5465 = dma.done %s5460, 640
        $region124: #{tpu_custom_call.1} parent=119 // pred_fallthru
          _
      $region120: #{tpu_custom_call.1} parent=5 // pred_fallthru
        _
    $region6: #{tpu_custom_call.1} parent=1 // loop_footer
      %s43 = sadd.s32 1, %s39
    $region7: #{tpu_custom_call.1} parent=1 // loop_footer_branch
      %38 = sbr.rel target = $region3
    $region8: #{tpu_custom_call.1} parent=1 // loop_exit
      _
    %5466 = vsyncpa [#allocation3], 1
    %s5467 = scalar_lea.sflag [#allocation3], 1
    %5468 = vsyncpa %s5467, 1
    %5469 = vsyncpa [#allocation8], 1
    %s5470 = scalar_lea.sflag [#allocation8], 1
    %5471 = vsyncpa %s5470, 1
    %5472 = vsyncpa [#allocation11], 1
    %s5473 = scalar_lea.sflag [#allocation11], 1
    %5474 = vsyncpa %s5473, 1
    %5475 = vsyncpa [#allocation14], 1
    %s5476 = scalar_lea.sflag [#allocation14], 1
    %5477 = vsyncpa %s5476, 1
    %5478 = vsyncpa [#allocation17], 1
    %s5479 = scalar_lea.sflag [#allocation17], 1
    %5480 = vsyncpa %s5479, 1
    %5481 = vsyncpa [#allocation20], 1
    %s5482 = scalar_lea.sflag [#allocation20], 1
    %5483 = vsyncpa %s5482, 1
    %5484 = vsyncpa [#allocation4], 1
    %s5485 = scalar_lea.sflag [#allocation4], 1
    %5486 = vsyncpa %s5485, 1
    %5487 = vsyncpa [#allocation5], 1
    %s5488 = scalar_lea.sflag [#allocation5], 1
    %5489 = vsyncpa %s5488, 1

</llo_original>
